<compile_context>
chip_gen: v7x
topology: tpu7x:2x2x1
jax: 0.10.0
libtpu: 0.0.40
codegen_flags: <defaults>
</compile_context>

<pallas_src>
import functools

import numpy as np
import jax
import jax.numpy as jnp
from jax.experimental import pallas as pl
from jax.experimental.pallas import tpu as pltpu

_LANE = 128
_SUBLANE = 8

# float32 rational-polynomial erf (same approximation class XLA uses for f32
# erf) -> matches torch.nn.functional.gelu's default exact (erf-based) GELU.
_ERF_ALPHA = (0.00022905065861350646, 0.0034082910107109506,
              0.050955695062380861, 0.18520832239976145, 1.128379143519084)
_ERF_BETA = (-1.1791602954361697e-7, 0.000023547966471313185,
             0.0010179625278914885, 0.014070470171167667,
             0.11098505178285362, 0.49746925110067538, 1.0)
_SQRT2_INV = 0.7071067811865476


def _round_up(x, m):
    return (x + m - 1) // m * m


def _erf(x):
    xc = jnp.clip(x, -4.0, 4.0)
    x2 = xc * xc
    p = jnp.float32(_ERF_ALPHA[0])
    for c in _ERF_ALPHA[1:]:
        p = p * x2 + jnp.float32(c)
    q = jnp.float32(_ERF_BETA[0])
    for c in _ERF_BETA[1:]:
        q = q * x2 + jnp.float32(c)
    # Divide lands on the EUP (approx reciprocal) + 1 Newton step, not the VALU.
    r = pl.reciprocal(q, approx=True)
    r = r * (2.0 - q * r)
    return xc * p * r


def _gelu(x):
    return 0.5 * x * (1.0 + _erf(x * _SQRT2_INV))


# ----------------------------------------------------------------------------
# Pass 1: conv_a -> gelu -> conv_b -> gelu -> conv_c -> gelu -> conv_d
#         -> +residual, plus masked BN partial sums, per row-tile.
# ----------------------------------------------------------------------------
def _conv_chain_kernel(x_hbm, mask_hbm, wa_ref, ba_ref, wb_ref, bb_ref,
                       wc_ref, bc_ref, wd_ref, bd_ref,
                       h4_ref, stats_ref,
                       xwin, mwin, h1buf, h2buf, sem,
                       *, T, halo, wp, m, residual, use_pack, mxu_dtype):
    f32 = jnp.float32
    twin = T + 2 * halo
    q = wp + 1                                    # halo rows per 3x3 conv

    # Fetch this tile's halo'd input window + real-pixel-mask window from HBM.
    # (Overlapping windows are not expressible with Blocked index_maps, hence
    # manual DMA; weights/outputs still use the auto pipeline.)
    row0 = pl.multiple_of(pl.program_id(0) * T, _SUBLANE)
    cpx = pltpu.make_async_copy(x_hbm.at[pl.ds(row0, twin)], xwin, sem.at[0])
    cpm = pltpu.make_async_copy(mask_hbm.at[pl.ds(row0, twin)], mwin, sem.at[1])
    cpx.start(); cpm.start()
    cpx.wait(); cpm.wait()
    # TODO(synk): cross-step double-buffering of this window would hide the
    # input DMA, but needs per-core priming that is unsafe under "parallel"
    # grid semantics; left synchronous.

    def mm(a, b):
        return jnp.dot(a.astype(mxu_dtype), b.astype(mxu_dtype),
                       preferred_element_type=f32)

    taps = [dy * wp + dx for dy in (-1, 0, 1) for dx in (-1, 0, 1)]

    def conv3x3(src_ref, w_ref, b_ref, start, length):
        # 3x3 conv (padding=1) over the spatially pre-padded flat layout:
        # every tap is a static row-offset slice of the tile window.
        # TODO(synk): tap starts are sublane-misaligned; if the bundle dump
        # shows shifted-copy materialization, pre-shift once per dy instead.
        if use_pack:
            # Pack 9 taps x m channels into the K/lane axis (9*m <= 128): one
            # K=128 MXU matmul per conv; packing is XLU lane rolls (the
            # unrolled lanes of each tap are exactly zero, so '+' is a pack).
            packed = src_ref[pl.ds(start + taps[0], length), :]
            for k in range(1, 9):
                tap = src_ref[pl.ds(start + taps[k], length), :]
                packed = packed + pltpu.roll(tap, k * m, axis=1)
            acc = mm(packed, w_ref[...])
        else:
            # TODO(synk): for mid_channels >= 128 fold the taps into one
            # long-K contraction instead of 9 separate K=mp dots.
            acc = mm(src_ref[pl.ds(start + taps[0], length), :], w_ref[0])
            for k in range(1, 9):
                acc = acc + mm(src_ref[pl.ds(start + taps[k], length), :],
                               w_ref[k])
        return _gelu(acc + b_ref[...])

    # conv_a (1x1) + GELU over the whole window; the mask multiply recreates
    # conv_b's zero padding (image halo ring, tile margins, tail rows).
    h1buf[...] = _gelu(mm(xwin[...], wa_ref[...]) + ba_ref[...]) * mwin[...]

    # conv_b (3x3) + GELU over exactly the rows conv_c needs, masked again.
    s2, l2 = halo - q, T + halo
    h2buf[pl.ds(s2, l2), :] = (conv3x3(h1buf, wb_ref, bb_ref, s2, l2)
                               * mwin[pl.ds(s2, l2), :])

    # conv_c (3x3) + GELU, conv_d (1x1), residual add — in-register, for the
    # T output rows only (residual x is re-read here, not held live).
    h3 = conv3x3(h2buf, wc_ref, bc_ref, halo, T)
    h4 = mm(h3, wd_ref[...]) + bd_ref[...]
    if residual:
        h4 = h4 + xwin[pl.ds(halo, T), :]
    h4_ref[...] = h4

    # Single-pass masked BatchNorm partials (sum, sum of squares) over the
    # real pixels of this tile; finalized into mean/var outside the kernel.
    hm = h4 * mwin[pl.ds(halo, T), :]
    stats_ref[...] = jnp.zeros_like(stats_ref)
    stats_ref[pl.ds(0, 1), :] = jnp.sum(hm, axis=0, keepdims=True)
    stats_ref[pl.ds(1, 1), :] = jnp.sum(hm * hm, axis=0, keepdims=True)


# ----------------------------------------------------------------------------
# Pass 2 (BN finalize apply): y = gelu(h4 * scale + shift), tiled.
# ----------------------------------------------------------------------------
def _bn_gelu_kernel(h4_ref, scale_ref, shift_ref, o_ref):
    o_ref[...] = _gelu(h4_ref[...] * scale_ref[...] +
                       shift_ref[...]).astype(o_ref.dtype)


# ----------------------------------------------------------------------------
# Wrapper (layout plumbing only: NCHW <-> padded lane-dense flat layout)
# ----------------------------------------------------------------------------
def encoding_block_forward(x_nchw, params, *, residual=True, down_rate=None,
                           mxu_dtype=jnp.bfloat16, row_tile=256):
    x = jnp.transpose(x_nchw, (0, 2, 3, 1)).astype(jnp.float32)  # NCHW -> NHWC
    if down_rate is not None:
        n, h, w, c = x.shape
        assert h % down_rate == 0 and w % down_rate == 0, "avg_pool divisibility"
        x = x.reshape(n, h // down_rate, down_rate,
                      w // down_rate, down_rate, c).mean(axis=(2, 4))

    n, h, w, c = x.shape
    m = params["wa"].shape[1]
    cp = _round_up(c, _LANE)                 # lane-dense channel padding
    mp = _round_up(m, _LANE)
    hp, wp = h + 2, w + 2
    l = n * hp * wp                          # flat rows of the padded layout
    q = wp + 1
    halo = _round_up(2 * q, _SUBLANE)        # per-tile halo (two stacked 3x3)
    T = max(_SUBLANE, _round_up(min(row_tile, l), _SUBLANE))
    num_tiles = int(pl.cdiv(l, T))
    l_pad = num_tiles * T
    twin = T + 2 * halo
    pb = l_pad + 2 * halo
    n_valid = n * h * w
    use_pack = 9 * m <= _LANE

    # One-time input layout plumbing (halo ring + channel pad + row margins).
    xpad = jnp.pad(x, ((0, 0), (1, 1), (1, 1), (0, cp - c))).reshape(l, cp)
    xbuf = jnp.pad(xpad, ((halo, pb - halo - l), (0, 0)))        # (pb, cp)

    # Static real-pixel mask (1 at interior pixels, 0 at halo / margin rows).
    mnp = np.zeros((n, hp, wp), np.float32)
    mnp[:, 1:h + 1, 1:w + 1] = 1.0
    mask_np = np.zeros((pb, 1), np.float32)
    mask_np[halo:halo + l, 0] = mnp.reshape(-1)
    maskbuf = jnp.asarray(mask_np)

    def pad2(a, rows, cols):
        return jnp.pad(a, ((0, rows - a.shape[0]), (0, cols - a.shape[1])))

    wa = pad2(params["wa"], cp, mp)
    wd = pad2(params["wd"], mp, cp)
    ba = pad2(params["ba"].reshape(1, -1), 1, mp)
    bb = pad2(params["bb"].reshape(1, -1), 1, mp)
    bc = pad2(params["bc"].reshape(1, -1), 1, mp)
    bd = pad2(params["bd"].reshape(1, -1), 1, cp)
    if use_pack:
        # (tap, cin) -> row tap*m + cin of a single K=128 weight slab.
        wb = pad2(params["wb"].reshape(9 * m, m), _LANE, mp)
        wc_ = pad2(params["wc"].reshape(9 * m, m), _LANE, mp)
        w3spec = pl.BlockSpec((_LANE, mp), lambda t: (0, 0))
    else:
        wb = jnp.pad(params["wb"], ((0, 0), (0, mp - m), (0, mp - m)))
        wc_ = jnp.pad(params["wc"], ((0, 0), (0, mp - m), (0, mp - m)))
        w3spec = pl.BlockSpec((9, mp, mp), lambda t: (0, 0, 0))

    const2 = lambda t: (0, 0)
    kern1 = functools.partial(
        _conv_chain_kernel, T=T, halo=halo, wp=wp, m=m,
        residual=residual, use_pack=use_pack, mxu_dtype=mxu_dtype)

    h4_flat, partials = pl.pallas_call(
        kern1,
        out_shape=(jax.ShapeDtypeStruct((l_pad, cp), jnp.float32),
                   jax.ShapeDtypeStruct((num_tiles * 8, cp), jnp.float32)),
        grid_spec=pltpu.PrefetchScalarGridSpec(
            num_scalar_prefetch=0,
            grid=(num_tiles,),
            in_specs=[
                pl.BlockSpec(memory_space=pl.ANY),     # x (flat, halo'd, HBM)
                pl.BlockSpec(memory_space=pl.ANY),     # real-pixel mask (HBM)
                pl.BlockSpec((cp, mp), const2),        # conv_a weight
                pl.BlockSpec((1, mp), const2),         # conv_a bias
                w3spec,                                # conv_b weight
                pl.BlockSpec((1, mp), const2),         # conv_b bias
                w3spec,                                # conv_c weight
                pl.BlockSpec((1, mp), const2),         # conv_c bias
                pl.BlockSpec((mp, cp), const2),        # conv_d weight
                pl.BlockSpec((1, cp), const2),         # conv_d bias
            ],
            out_specs=[
                pl.BlockSpec((T, cp), lambda t: (t, 0)),    # h4 (pre-BN)
                pl.BlockSpec((8, cp), lambda t: (t, 0)),    # BN partial sums
            ],
            scratch_shapes=[
                pltpu.VMEM((twin, cp), jnp.float32),   # x window (+halo)
                pltpu.VMEM((twin, 1), jnp.float32),    # mask window
                pltpu.VMEM((twin, mp), jnp.float32),   # h1
                pltpu.VMEM((twin, mp), jnp.float32),   # h2
                pltpu.SemaphoreType.DMA((2,)),
            ]),
        compiler_params=pltpu.CompilerParams(
            dimension_semantics=("parallel",),
            vmem_limit_bytes=32 * 1024 * 1024),
    )(xbuf, maskbuf, wa, ba, wb, bb, wc_, bc, wd, bd)

    # BatchNorm finalize: reduce the tiny per-tile partials, fold gamma/beta.
    gamma = pad2(params["gamma"].reshape(1, -1), 1, cp)[0]
    beta = pad2(params["beta"].reshape(1, -1), 1, cp)[0]
    part = partials.reshape(num_tiles, 8, cp)
    mean = jnp.sum(part[:, 0, :], axis=0) / n_valid
    var = jnp.maximum(jnp.sum(part[:, 1, :], axis=0) / n_valid - mean * mean,
                      0.0)
    inv_std = jax.lax.rsqrt(var + 1e-5)
    scale = (gamma * inv_std).reshape(1, cp)
    shift = (beta - mean * gamma * inv_std).reshape(1, cp)
    # TODO(synk): nn.BatchNorm2d running_mean / running_var buffer updates
    # (module state) are not reproduced; this matches the train-mode forward.

    out_flat = pl.pallas_call(
        _bn_gelu_kernel,
        out_shape=jax.ShapeDtypeStruct((l_pad, cp), x_nchw.dtype),
        grid_spec=pltpu.PrefetchScalarGridSpec(
            num_scalar_prefetch=0,
            grid=(num_tiles,),
            in_specs=[pl.BlockSpec((T, cp), lambda t: (t, 0)),
                      pl.BlockSpec((1, cp), const2),
                      pl.BlockSpec((1, cp), const2)],
            out_specs=pl.BlockSpec((T, cp), lambda t: (t, 0))),
        compiler_params=pltpu.CompilerParams(
            dimension_semantics=("parallel",),
            vmem_limit_bytes=32 * 1024 * 1024),
    )(h4_flat, scale, shift)

    out = out_flat[:l].reshape(n, hp, wp, cp)[:, 1:h + 1, 1:w + 1, :c]
    return jnp.transpose(out, (0, 3, 1, 2))                     # NHWC -> NCHW


# ----------------------------------------------------------------------------
# Pure-JAX reference (correctness sanity check) and parameter init
# ----------------------------------------------------------------------------
def _reference_forward(x_nchw, params, *, residual=True, down_rate=None):
    x = jnp.transpose(x_nchw, (0, 2, 3, 1))
    if down_rate is not None:
        n, h, w, c = x.shape
        x = x.reshape(n, h // down_rate, down_rate,
                      w // down_rate, down_rate, c).mean(axis=(2, 4))
    gelu = lambda t: jax.nn.gelu(t, approximate=False)
    dn = ("NHWC", "HWIO", "NHWC")
    hi = jax.lax.Precision.HIGHEST
    m = params["wa"].shape[1]
    res = x
    h1 = gelu(jax.lax.conv_general_dilated(
        x, params["wa"].reshape(1, 1, -1, m), (1, 1), "VALID",
        dimension_numbers=dn, precision=hi) + params["ba"])
    h2 = gelu(jax.lax.conv_general_dilated(
        h1, params["wb"].reshape(3, 3, m, m), (1, 1), "SAME",
        dimension_numbers=dn, precision=hi) + params["bb"])
    h3 = gelu(jax.lax.conv_general_dilated(
        h2, params["wc"].reshape(3, 3, m, m), (1, 1), "SAME",
        dimension_numbers=dn, precision=hi) + params["bc"])
    h4 = jax.lax.conv_general_dilated(
        h3, params["wd"].reshape(1, 1, m, -1), (1, 1), "VALID",
        dimension_numbers=dn, precision=hi) + params["bd"]
    if residual:
        h4 = h4 + res
    mean = h4.mean(axis=(0, 1, 2), keepdims=True)
    var = jnp.mean(jnp.square(h4 - mean), axis=(0, 1, 2), keepdims=True)
    y = (h4 - mean) * jax.lax.rsqrt(var + 1e-5) * params["gamma"] + params["beta"]
    return jnp.transpose(gelu(y), (0, 3, 1, 2))


def init_params(key, num_channels, bottleneck_ratio):
    # Weight layouts (math layout): 1x1 convs are (Cin, Cout); 3x3 convs are
    # (tap=ky*3+kx, Cin, Cout).  PyTorch Conv2d weight (Co,Ci,kh,kw) maps via
    # transpose(2,3,1,0).reshape(9,Ci,Co).
    m = int(num_channels * bottleneck_ratio)
    ks = jax.random.split(key, 8)
    s = 0.1
    return dict(
        wa=jax.random.normal(ks[0], (num_channels, m), jnp.float32) * s,
        ba=jax.random.normal(ks[1], (m,), jnp.float32) * s,
        wb=jax.random.normal(ks[2], (9, m, m), jnp.float32) * s,
        bb=jax.random.normal(ks[3], (m,), jnp.float32) * s,
        wc=jax.random.normal(ks[4], (9, m, m), jnp.float32) * s,
        bc=jax.random.normal(ks[5], (m,), jnp.float32) * s,
        wd=jax.random.normal(ks[6], (m, num_channels), jnp.float32) * s,
        bd=jax.random.normal(ks[7], (num_channels,), jnp.float32) * s,
        gamma=jnp.ones((num_channels,), jnp.float32),
        beta=jnp.zeros((num_channels,), jnp.float32),
    )


if __name__ == "__main__":
    key = jax.random.PRNGKey(0)
    kx, kp = jax.random.split(key)

    # res=16, num_channels=4, bottleneck_ratio=2.0, kernel_size=3,
    # residual=True, down_rate=None
    N, C, H, W = 2, 4, 16, 16
    bottleneck_ratio = 2.0

    x = jax.random.normal(kx, (N, C, H, W), jnp.float32)
    params = init_params(kp, C, bottleneck_ratio)

    y_ref = _reference_forward(x, params, residual=True, down_rate=None)

    # Default path: bf16 MXU inputs, f32 accumulation (loose tolerance).
    fwd = jax.jit(functools.partial(encoding_block_forward,
                                    residual=True, down_rate=None))
    y = fwd(x, params)
    jax.block_until_ready(y)
    assert y.shape == (N, C, H, W) and y.dtype == jnp.float32
    np.testing.assert_allclose(np.asarray(y), np.asarray(y_ref),
                               rtol=5e-2, atol=5e-2)

    # Full-f32 MXU path: tight tolerance (validates tiling / tap-pack / BN).
    fwd32 = jax.jit(functools.partial(encoding_block_forward, residual=True,
                                      down_rate=None,
                                      mxu_dtype=jnp.float32))
    y32 = fwd32(x, params)
    jax.block_until_ready(y32)
    np.testing.assert_allclose(np.asarray(y32), np.asarray(y_ref),
                               rtol=2e-3, atol=2e-3)

    print("KERNEL_OK")
</pallas_src>

<mosaic_0001>
module attributes {stable_mosaic.version = 11 : i64} {
  func.func @_conv_chain_kernel(%arg0: i32, %arg1: memref<848x128xf32, #tpu.memory_space<any>>, %arg2: memref<848x1xf32, #tpu.memory_space<any>>, %arg3: memref<128x128xf32, #tpu.memory_space<vmem>>, %arg4: memref<1x128xf32, #tpu.memory_space<vmem>>, %arg5: memref<128x128xf32, #tpu.memory_space<vmem>>, %arg6: memref<1x128xf32, #tpu.memory_space<vmem>>, %arg7: memref<128x128xf32, #tpu.memory_space<vmem>>, %arg8: memref<1x128xf32, #tpu.memory_space<vmem>>, %arg9: memref<128x128xf32, #tpu.memory_space<vmem>>, %arg10: memref<1x128xf32, #tpu.memory_space<vmem>>, %arg11: memref<256x128xf32, #tpu.memory_space<vmem>>, %arg12: memref<8x128xf32, #tpu.memory_space<vmem>>, %arg13: memref<336x128xf32, #tpu.memory_space<vmem>>, %arg14: memref<336x1xf32, #tpu.memory_space<vmem>>, %arg15: memref<336x128xf32, #tpu.memory_space<vmem>>, %arg16: memref<336x128xf32, #tpu.memory_space<vmem>>, %arg17: memref<2x!tpu.dma_semaphore, #tpu.memory_space<semaphore_mem>>) attributes {dimension_semantics = [#tpu.dimension_semantics<parallel>], iteration_bounds = array<i64: 3>, scalar_prefetch = 0 : i64, scratch_operands = 5 : i64, tpu.core_type = #tpu.core_type<tc>, window_params = [{}, {}, {pipeline_mode = #tpu.pipeline_mode<synchronous>, transform_indices = @transform_2, window_bounds = array<i64: 128, 128>}, {pipeline_mode = #tpu.pipeline_mode<synchronous>, transform_indices = @transform_3, window_bounds = array<i64: 1, 128>}, {pipeline_mode = #tpu.pipeline_mode<synchronous>, transform_indices = @transform_4, window_bounds = array<i64: 128, 128>}, {pipeline_mode = #tpu.pipeline_mode<synchronous>, transform_indices = @transform_5, window_bounds = array<i64: 1, 128>}, {pipeline_mode = #tpu.pipeline_mode<synchronous>, transform_indices = @transform_6, window_bounds = array<i64: 128, 128>}, {pipeline_mode = #tpu.pipeline_mode<synchronous>, transform_indices = @transform_7, window_bounds = array<i64: 1, 128>}, {pipeline_mode = #tpu.pipeline_mode<synchronous>, transform_indices = @transform_8, window_bounds = array<i64: 128, 128>}, {pipeline_mode = #tpu.pipeline_mode<synchronous>, transform_indices = @transform_9, window_bounds = array<i64: 1, 128>}, {transform_indices = @transform_10, window_bounds = array<i64: 256, 128>}, {transform_indices = @transform_11, window_bounds = array<i64: 8, 128>}]} {
    %c256_i32 = arith.constant 256 : i32
    %0 = arith.muli %arg0, %c256_i32 : i32
    %1 = tpu.assume_multiple %0, 8 : i32
    %c0_i32 = arith.constant 0 : i32
    %c0_i32_0 = arith.constant 0 : i32
    %2 = tpu.memref_slice %arg1[%1, %c0_i32_0] : memref<848x128xf32, #tpu.memory_space<any>> -> memref<336x128xf32, #tpu.memory_space<any>>
    %3 = tpu.memref_slice %arg17[%c0_i32] : memref<2x!tpu.dma_semaphore, #tpu.memory_space<semaphore_mem>> -> memref<1x!tpu.dma_semaphore, #tpu.memory_space<semaphore_mem>>
    %4 = tpu.memref_squeeze %3 : memref<1x!tpu.dma_semaphore, #tpu.memory_space<semaphore_mem>> -> memref<!tpu.dma_semaphore, #tpu.memory_space<semaphore_mem>>
    tpu.enqueue_dma source(%2 : memref<336x128xf32, #tpu.memory_space<any>>) target(%arg13 : memref<336x128xf32, #tpu.memory_space<vmem>>) target_semaphore(%4 : memref<!tpu.dma_semaphore, #tpu.memory_space<semaphore_mem>>)
    %c1_i32 = arith.constant 1 : i32
    %c0_i32_1 = arith.constant 0 : i32
    %5 = tpu.memref_slice %arg2[%1, %c0_i32_1] : memref<848x1xf32, #tpu.memory_space<any>> -> memref<336x1xf32, #tpu.memory_space<any>>
    %6 = tpu.memref_slice %arg17[%c1_i32] : memref<2x!tpu.dma_semaphore, #tpu.memory_space<semaphore_mem>> -> memref<1x!tpu.dma_semaphore, #tpu.memory_space<semaphore_mem>>
    %7 = tpu.memref_squeeze %6 : memref<1x!tpu.dma_semaphore, #tpu.memory_space<semaphore_mem>> -> memref<!tpu.dma_semaphore, #tpu.memory_space<semaphore_mem>>
    tpu.enqueue_dma source(%5 : memref<336x1xf32, #tpu.memory_space<any>>) target(%arg14 : memref<336x1xf32, #tpu.memory_space<vmem>>) target_semaphore(%7 : memref<!tpu.dma_semaphore, #tpu.memory_space<semaphore_mem>>)
    %c0_i32_2 = arith.constant 0 : i32
    %c0_i32_3 = arith.constant 0 : i32
    %8 = tpu.memref_slice %arg1[%1, %c0_i32_3] : memref<848x128xf32, #tpu.memory_space<any>> -> memref<336x128xf32, #tpu.memory_space<any>>
    %9 = tpu.memref_slice %arg17[%c0_i32_2] : memref<2x!tpu.dma_semaphore, #tpu.memory_space<semaphore_mem>> -> memref<1x!tpu.dma_semaphore, #tpu.memory_space<semaphore_mem>>
    %10 = tpu.memref_squeeze %9 : memref<1x!tpu.dma_semaphore, #tpu.memory_space<semaphore_mem>> -> memref<!tpu.dma_semaphore, #tpu.memory_space<semaphore_mem>>
    tpu.wait_dma2 semaphore(%10 : memref<!tpu.dma_semaphore, #tpu.memory_space<semaphore_mem>>) src(%8 : memref<336x128xf32, #tpu.memory_space<any>>) dst(%arg13 : memref<336x128xf32, #tpu.memory_space<vmem>>)
    %c1_i32_4 = arith.constant 1 : i32
    %c0_i32_5 = arith.constant 0 : i32
    %11 = tpu.memref_slice %arg2[%1, %c0_i32_5] : memref<848x1xf32, #tpu.memory_space<any>> -> memref<336x1xf32, #tpu.memory_space<any>>
    %12 = tpu.memref_slice %arg17[%c1_i32_4] : memref<2x!tpu.dma_semaphore, #tpu.memory_space<semaphore_mem>> -> memref<1x!tpu.dma_semaphore, #tpu.memory_space<semaphore_mem>>
    %13 = tpu.memref_squeeze %12 : memref<1x!tpu.dma_semaphore, #tpu.memory_space<semaphore_mem>> -> memref<!tpu.dma_semaphore, #tpu.memory_space<semaphore_mem>>
    tpu.wait_dma2 semaphore(%13 : memref<!tpu.dma_semaphore, #tpu.memory_space<semaphore_mem>>) src(%11 : memref<336x1xf32, #tpu.memory_space<any>>) dst(%arg14 : memref<336x1xf32, #tpu.memory_space<vmem>>)
    %c0 = arith.constant 0 : index
    %c0_6 = arith.constant 0 : index
    %14 = vector.load %arg13[%c0, %c0_6] : memref<336x128xf32, #tpu.memory_space<vmem>>, vector<336x128xf32>
    %c0_7 = arith.constant 0 : index
    %c0_8 = arith.constant 0 : index
    %15 = vector.load %arg3[%c0_7, %c0_8] : memref<128x128xf32, #tpu.memory_space<vmem>>, vector<128x128xf32>
    %16 = arith.truncf %14 : vector<336x128xf32> to vector<336x128xbf16>
    %17 = arith.truncf %15 : vector<128x128xf32> to vector<128x128xbf16>
    %cst = arith.constant dense<0.000000e+00> : vector<336x128xf32>
    %18 = tpu.matmul %16, %17, %cst {dimension_numbers = #tpu.dot_dimension_numbers<[1], [0], [0], [1], [0, 0, 1, 1], [], []>} : vector<336x128xbf16>, vector<128x128xbf16>, vector<336x128xf32> -> vector<336x128xf32>
    %c0_9 = arith.constant 0 : index
    %c0_10 = arith.constant 0 : index
    %19 = vector.load %arg4[%c0_9, %c0_10] : memref<1x128xf32, #tpu.memory_space<vmem>>, vector<1x128xf32>
    %20 = vector.broadcast %19 : vector<1x128xf32> to vector<336x128xf32>
    %21 = arith.addf %18, %20 : vector<336x128xf32>
    %cst_11 = arith.constant 5.000000e-01 : f32
    %22 = vector.broadcast %cst_11 : f32 to vector<336x128xf32>
    %23 = arith.mulf %22, %21 : vector<336x128xf32>
    %cst_12 = arith.constant 0.707106769 : f32
    %24 = vector.broadcast %cst_12 : f32 to vector<336x128xf32>
    %25 = arith.mulf %21, %24 : vector<336x128xf32>
    %cst_13 = arith.constant -4.000000e+00 : f32
    %cst_14 = arith.constant 4.000000e+00 : f32
    %26 = vector.broadcast %cst_13 : f32 to vector<336x128xf32>
    %27 = arith.maximumf %26, %25 : vector<336x128xf32>
    %28 = vector.broadcast %cst_14 : f32 to vector<336x128xf32>
    %29 = arith.minimumf %28, %27 : vector<336x128xf32>
    %30 = arith.mulf %29, %29 : vector<336x128xf32>
    %cst_15 = arith.constant 2.29050653E-4 : f32
    %31 = vector.broadcast %cst_15 : f32 to vector<336x128xf32>
    %32 = arith.mulf %31, %30 : vector<336x128xf32>
    %cst_16 = arith.constant 0.00340829091 : f32
    %33 = vector.broadcast %cst_16 : f32 to vector<336x128xf32>
    %34 = arith.addf %32, %33 : vector<336x128xf32>
    %35 = arith.mulf %34, %30 : vector<336x128xf32>
    %cst_17 = arith.constant 0.0509556942 : f32
    %36 = vector.broadcast %cst_17 : f32 to vector<336x128xf32>
    %37 = arith.addf %35, %36 : vector<336x128xf32>
    %38 = arith.mulf %37, %30 : vector<336x128xf32>
    %cst_18 = arith.constant 0.185208321 : f32
    %39 = vector.broadcast %cst_18 : f32 to vector<336x128xf32>
    %40 = arith.addf %38, %39 : vector<336x128xf32>
    %41 = arith.mulf %40, %30 : vector<336x128xf32>
    %cst_19 = arith.constant 1.12837911 : f32
    %42 = vector.broadcast %cst_19 : f32 to vector<336x128xf32>
    %43 = arith.addf %41, %42 : vector<336x128xf32>
    %cst_20 = arith.constant -1.17916031E-7 : f32
    %44 = vector.broadcast %cst_20 : f32 to vector<336x128xf32>
    %45 = arith.mulf %44, %30 : vector<336x128xf32>
    %cst_21 = arith.constant 2.35479656E-5 : f32
    %46 = vector.broadcast %cst_21 : f32 to vector<336x128xf32>
    %47 = arith.addf %45, %46 : vector<336x128xf32>
    %48 = arith.mulf %47, %30 : vector<336x128xf32>
    %cst_22 = arith.constant 0.00101796258 : f32
    %49 = vector.broadcast %cst_22 : f32 to vector<336x128xf32>
    %50 = arith.addf %48, %49 : vector<336x128xf32>
    %51 = arith.mulf %50, %30 : vector<336x128xf32>
    %cst_23 = arith.constant 0.0140704699 : f32
    %52 = vector.broadcast %cst_23 : f32 to vector<336x128xf32>
    %53 = arith.addf %51, %52 : vector<336x128xf32>
    %54 = arith.mulf %53, %30 : vector<336x128xf32>
    %cst_24 = arith.constant 0.110985048 : f32
    %55 = vector.broadcast %cst_24 : f32 to vector<336x128xf32>
    %56 = arith.addf %54, %55 : vector<336x128xf32>
    %57 = arith.mulf %56, %30 : vector<336x128xf32>
    %cst_25 = arith.constant 0.497469246 : f32
    %58 = vector.broadcast %cst_25 : f32 to vector<336x128xf32>
    %59 = arith.addf %57, %58 : vector<336x128xf32>
    %60 = arith.mulf %59, %30 : vector<336x128xf32>
    %cst_26 = arith.constant 1.000000e+00 : f32
    %61 = vector.broadcast %cst_26 : f32 to vector<336x128xf32>
    %62 = arith.addf %60, %61 : vector<336x128xf32>
    %63 = tpu.reciprocal %62 {approx = true} : vector<336x128xf32> -> vector<336x128xf32>
    %64 = arith.mulf %62, %63 : vector<336x128xf32>
    %cst_27 = arith.constant 2.000000e+00 : f32
    %65 = vector.broadcast %cst_27 : f32 to vector<336x128xf32>
    %66 = arith.subf %65, %64 : vector<336x128xf32>
    %67 = arith.mulf %63, %66 : vector<336x128xf32>
    %68 = arith.mulf %29, %43 : vector<336x128xf32>
    %69 = arith.mulf %68, %67 : vector<336x128xf32>
    %cst_28 = arith.constant 1.000000e+00 : f32
    %70 = vector.broadcast %cst_28 : f32 to vector<336x128xf32>
    %71 = arith.addf %70, %69 : vector<336x128xf32>
    %72 = arith.mulf %23, %71 : vector<336x128xf32>
    %c0_29 = arith.constant 0 : index
    %c0_30 = arith.constant 0 : index
    %73 = vector.load %arg14[%c0_29, %c0_30] : memref<336x1xf32, #tpu.memory_space<vmem>>, vector<336x1xf32>
    %74 = vector.broadcast %73 : vector<336x1xf32> to vector<336x128xf32>
    %75 = arith.mulf %72, %74 : vector<336x128xf32>
    %c0_31 = arith.constant 0 : index
    %c0_32 = arith.constant 0 : index
    %76 = vector.load %arg15[%c0_31, %c0_32] : memref<336x128xf32, #tpu.memory_space<vmem>>, vector<336x128xf32>
    tpu.vector_store %arg15[%c0_31, %c0_32], %75 {strides = array<i32>} : memref<336x128xf32, #tpu.memory_space<vmem>>, vector<336x128xf32>,
    %c2 = arith.constant 2 : index
    %c0_33 = arith.constant 0 : index
    %77 = vector.load %arg15[%c2, %c0_33] : memref<336x128xf32, #tpu.memory_space<vmem>>, vector<296x128xf32>
    %c3 = arith.constant 3 : index
    %c0_34 = arith.constant 0 : index
    %78 = vector.load %arg15[%c3, %c0_34] : memref<336x128xf32, #tpu.memory_space<vmem>>, vector<296x128xf32>
    %c8_i32 = arith.constant 8 : i32
    %79 = tpu.dynamic_rotate %78 by %c8_i32 dim 1 : vector<296x128xf32>, i32 -> vector<296x128xf32>
    %80 = arith.addf %77, %79 : vector<296x128xf32>
    %c4 = arith.constant 4 : index
    %c0_35 = arith.constant 0 : index
    %81 = vector.load %arg15[%c4, %c0_35] : memref<336x128xf32, #tpu.memory_space<vmem>>, vector<296x128xf32>
    %c16_i32 = arith.constant 16 : i32
    %82 = tpu.dynamic_rotate %81 by %c16_i32 dim 1 : vector<296x128xf32>, i32 -> vector<296x128xf32>
    %83 = arith.addf %80, %82 : vector<296x128xf32>
    %c20 = arith.constant 20 : index
    %c0_36 = arith.constant 0 : index
    %84 = vector.load %arg15[%c20, %c0_36] : memref<336x128xf32, #tpu.memory_space<vmem>>, vector<296x128xf32>
    %c24_i32 = arith.constant 24 : i32
    %85 = tpu.dynamic_rotate %84 by %c24_i32 dim 1 : vector<296x128xf32>, i32 -> vector<296x128xf32>
    %86 = arith.addf %83, %85 : vector<296x128xf32>
    %c21 = arith.constant 21 : index
    %c0_37 = arith.constant 0 : index
    %87 = vector.load %arg15[%c21, %c0_37] : memref<336x128xf32, #tpu.memory_space<vmem>>, vector<296x128xf32>
    %c32_i32 = arith.constant 32 : i32
    %88 = tpu.dynamic_rotate %87 by %c32_i32 dim 1 : vector<296x128xf32>, i32 -> vector<296x128xf32>
    %89 = arith.addf %86, %88 : vector<296x128xf32>
    %c22 = arith.constant 22 : index
    %c0_38 = arith.constant 0 : index
    %90 = vector.load %arg15[%c22, %c0_38] : memref<336x128xf32, #tpu.memory_space<vmem>>, vector<296x128xf32>
    %c40_i32 = arith.constant 40 : i32
    %91 = tpu.dynamic_rotate %90 by %c40_i32 dim 1 : vector<296x128xf32>, i32 -> vector<296x128xf32>
    %92 = arith.addf %89, %91 : vector<296x128xf32>
    %c38 = arith.constant 38 : index
    %c0_39 = arith.constant 0 : index
    %93 = vector.load %arg15[%c38, %c0_39] : memref<336x128xf32, #tpu.memory_space<vmem>>, vector<296x128xf32>
    %c48_i32 = arith.constant 48 : i32
    %94 = tpu.dynamic_rotate %93 by %c48_i32 dim 1 : vector<296x128xf32>, i32 -> vector<296x128xf32>
    %95 = arith.addf %92, %94 : vector<296x128xf32>
    %c39 = arith.constant 39 : index
    %c0_40 = arith.constant 0 : index
    %96 = vector.load %arg15[%c39, %c0_40] : memref<336x128xf32, #tpu.memory_space<vmem>>, vector<296x128xf32>
    %c56_i32 = arith.constant 56 : i32
    %97 = tpu.dynamic_rotate %96 by %c56_i32 dim 1 : vector<296x128xf32>, i32 -> vector<296x128xf32>
    %98 = arith.addf %95, %97 : vector<296x128xf32>
    %c40 = arith.constant 40 : index
    %c0_41 = arith.constant 0 : index
    %99 = vector.load %arg15[%c40, %c0_41] : memref<336x128xf32, #tpu.memory_space<vmem>>, vector<296x128xf32>
    %c64_i32 = arith.constant 64 : i32
    %100 = tpu.dynamic_rotate %99 by %c64_i32 dim 1 : vector<296x128xf32>, i32 -> vector<296x128xf32>
    %101 = arith.addf %98, %100 : vector<296x128xf32>
    %c0_42 = arith.constant 0 : index
    %c0_43 = arith.constant 0 : index
    %102 = vector.load %arg5[%c0_42, %c0_43] : memref<128x128xf32, #tpu.memory_space<vmem>>, vector<128x128xf32>
    %103 = arith.truncf %101 : vector<296x128xf32> to vector<296x128xbf16>
    %104 = arith.truncf %102 : vector<128x128xf32> to vector<128x128xbf16>
    %cst_44 = arith.constant dense<0.000000e+00> : vector<296x128xf32>
    %105 = tpu.matmul %103, %104, %cst_44 {dimension_numbers = #tpu.dot_dimension_numbers<[1], [0], [0], [1], [0, 0, 1, 1], [], []>} : vector<296x128xbf16>, vector<128x128xbf16>, vector<296x128xf32> -> vector<296x128xf32>
    %c0_45 = arith.constant 0 : index
    %c0_46 = arith.constant 0 : index
    %106 = vector.load %arg6[%c0_45, %c0_46] : memref<1x128xf32, #tpu.memory_space<vmem>>, vector<1x128xf32>
    %107 = vector.broadcast %106 : vector<1x128xf32> to vector<296x128xf32>
    %108 = arith.addf %105, %107 : vector<296x128xf32>
    %cst_47 = arith.constant 5.000000e-01 : f32
    %109 = vector.broadcast %cst_47 : f32 to vector<296x128xf32>
    %110 = arith.mulf %109, %108 : vector<296x128xf32>
    %cst_48 = arith.constant 0.707106769 : f32
    %111 = vector.broadcast %cst_48 : f32 to vector<296x128xf32>
    %112 = arith.mulf %108, %111 : vector<296x128xf32>
    %cst_49 = arith.constant -4.000000e+00 : f32
    %cst_50 = arith.constant 4.000000e+00 : f32
    %113 = vector.broadcast %cst_49 : f32 to vector<296x128xf32>
    %114 = arith.maximumf %113, %112 : vector<296x128xf32>
    %115 = vector.broadcast %cst_50 : f32 to vector<296x128xf32>
    %116 = arith.minimumf %115, %114 : vector<296x128xf32>
    %117 = arith.mulf %116, %116 : vector<296x128xf32>
    %cst_51 = arith.constant 2.29050653E-4 : f32
    %118 = vector.broadcast %cst_51 : f32 to vector<296x128xf32>
    %119 = arith.mulf %118, %117 : vector<296x128xf32>
    %cst_52 = arith.constant 0.00340829091 : f32
    %120 = vector.broadcast %cst_52 : f32 to vector<296x128xf32>
    %121 = arith.addf %119, %120 : vector<296x128xf32>
    %122 = arith.mulf %121, %117 : vector<296x128xf32>
    %cst_53 = arith.constant 0.0509556942 : f32
    %123 = vector.broadcast %cst_53 : f32 to vector<296x128xf32>
    %124 = arith.addf %122, %123 : vector<296x128xf32>
    %125 = arith.mulf %124, %117 : vector<296x128xf32>
    %cst_54 = arith.constant 0.185208321 : f32
    %126 = vector.broadcast %cst_54 : f32 to vector<296x128xf32>
    %127 = arith.addf %125, %126 : vector<296x128xf32>
    %128 = arith.mulf %127, %117 : vector<296x128xf32>
    %cst_55 = arith.constant 1.12837911 : f32
    %129 = vector.broadcast %cst_55 : f32 to vector<296x128xf32>
    %130 = arith.addf %128, %129 : vector<296x128xf32>
    %cst_56 = arith.constant -1.17916031E-7 : f32
    %131 = vector.broadcast %cst_56 : f32 to vector<296x128xf32>
    %132 = arith.mulf %131, %117 : vector<296x128xf32>
    %cst_57 = arith.constant 2.35479656E-5 : f32
    %133 = vector.broadcast %cst_57 : f32 to vector<296x128xf32>
    %134 = arith.addf %132, %133 : vector<296x128xf32>
    %135 = arith.mulf %134, %117 : vector<296x128xf32>
    %cst_58 = arith.constant 0.00101796258 : f32
    %136 = vector.broadcast %cst_58 : f32 to vector<296x128xf32>
    %137 = arith.addf %135, %136 : vector<296x128xf32>
    %138 = arith.mulf %137, %117 : vector<296x128xf32>
    %cst_59 = arith.constant 0.0140704699 : f32
    %139 = vector.broadcast %cst_59 : f32 to vector<296x128xf32>
    %140 = arith.addf %138, %139 : vector<296x128xf32>
    %141 = arith.mulf %140, %117 : vector<296x128xf32>
    %cst_60 = arith.constant 0.110985048 : f32
    %142 = vector.broadcast %cst_60 : f32 to vector<296x128xf32>
    %143 = arith.addf %141, %142 : vector<296x128xf32>
    %144 = arith.mulf %143, %117 : vector<296x128xf32>
    %cst_61 = arith.constant 0.497469246 : f32
    %145 = vector.broadcast %cst_61 : f32 to vector<296x128xf32>
    %146 = arith.addf %144, %145 : vector<296x128xf32>
    %147 = arith.mulf %146, %117 : vector<296x128xf32>
    %cst_62 = arith.constant 1.000000e+00 : f32
    %148 = vector.broadcast %cst_62 : f32 to vector<296x128xf32>
    %149 = arith.addf %147, %148 : vector<296x128xf32>
    %150 = tpu.reciprocal %149 {approx = true} : vector<296x128xf32> -> vector<296x128xf32>
    %151 = arith.mulf %149, %150 : vector<296x128xf32>
    %cst_63 = arith.constant 2.000000e+00 : f32
    %152 = vector.broadcast %cst_63 : f32 to vector<296x128xf32>
    %153 = arith.subf %152, %151 : vector<296x128xf32>
    %154 = arith.mulf %150, %153 : vector<296x128xf32>
    %155 = arith.mulf %116, %130 : vector<296x128xf32>
    %156 = arith.mulf %155, %154 : vector<296x128xf32>
    %cst_64 = arith.constant 1.000000e+00 : f32
    %157 = vector.broadcast %cst_64 : f32 to vector<296x128xf32>
    %158 = arith.addf %157, %156 : vector<296x128xf32>
    %159 = arith.mulf %110, %158 : vector<296x128xf32>
    %c21_65 = arith.constant 21 : index
    %c0_66 = arith.constant 0 : index
    %160 = vector.load %arg14[%c21_65, %c0_66] : memref<336x1xf32, #tpu.memory_space<vmem>>, vector<296x1xf32>
    %161 = vector.broadcast %160 : vector<296x1xf32> to vector<296x128xf32>
    %162 = arith.mulf %159, %161 : vector<296x128xf32>
    %c21_67 = arith.constant 21 : index
    %c0_68 = arith.constant 0 : index
    %163 = vector.load %arg16[%c21_67, %c0_68] : memref<336x128xf32, #tpu.memory_space<vmem>>, vector<296x128xf32>
    tpu.vector_store %arg16[%c21_67, %c0_68], %162 {strides = array<i32>} : memref<336x128xf32, #tpu.memory_space<vmem>>, vector<296x128xf32>,
    %c21_69 = arith.constant 21 : index
    %c0_70 = arith.constant 0 : index
    %164 = vector.load %arg16[%c21_69, %c0_70] : memref<336x128xf32, #tpu.memory_space<vmem>>, vector<256x128xf32>
    %c22_71 = arith.constant 22 : index
    %c0_72 = arith.constant 0 : index
    %165 = vector.load %arg16[%c22_71, %c0_72] : memref<336x128xf32, #tpu.memory_space<vmem>>, vector<256x128xf32>
    %c8_i32_73 = arith.constant 8 : i32
    %166 = tpu.dynamic_rotate %165 by %c8_i32_73 dim 1 : vector<256x128xf32>, i32 -> vector<256x128xf32>
    %167 = arith.addf %164, %166 : vector<256x128xf32>
    %c23 = arith.constant 23 : index
    %c0_74 = arith.constant 0 : index
    %168 = vector.load %arg16[%c23, %c0_74] : memref<336x128xf32, #tpu.memory_space<vmem>>, vector<256x128xf32>
    %c16_i32_75 = arith.constant 16 : i32
    %169 = tpu.dynamic_rotate %168 by %c16_i32_75 dim 1 : vector<256x128xf32>, i32 -> vector<256x128xf32>
    %170 = arith.addf %167, %169 : vector<256x128xf32>
    %c39_76 = arith.constant 39 : index
    %c0_77 = arith.constant 0 : index
    %171 = vector.load %arg16[%c39_76, %c0_77] : memref<336x128xf32, #tpu.memory_space<vmem>>, vector<256x128xf32>
    %c24_i32_78 = arith.constant 24 : i32
    %172 = tpu.dynamic_rotate %171 by %c24_i32_78 dim 1 : vector<256x128xf32>, i32 -> vector<256x128xf32>
    %173 = arith.addf %170, %172 : vector<256x128xf32>
    %c40_79 = arith.constant 40 : index
    %c0_80 = arith.constant 0 : index
    %174 = vector.load %arg16[%c40_79, %c0_80] : memref<336x128xf32, #tpu.memory_space<vmem>>, vector<256x128xf32>
    %c32_i32_81 = arith.constant 32 : i32
    %175 = tpu.dynamic_rotate %174 by %c32_i32_81 dim 1 : vector<256x128xf32>, i32 -> vector<256x128xf32>
    %176 = arith.addf %173, %175 : vector<256x128xf32>
    %c41 = arith.constant 41 : index
    %c0_82 = arith.constant 0 : index
    %177 = vector.load %arg16[%c41, %c0_82] : memref<336x128xf32, #tpu.memory_space<vmem>>, vector<256x128xf32>
    %c40_i32_83 = arith.constant 40 : i32
    %178 = tpu.dynamic_rotate %177 by %c40_i32_83 dim 1 : vector<256x128xf32>, i32 -> vector<256x128xf32>
    %179 = arith.addf %176, %178 : vector<256x128xf32>
    %c57 = arith.constant 57 : index
    %c0_84 = arith.constant 0 : index
    %180 = vector.load %arg16[%c57, %c0_84] : memref<336x128xf32, #tpu.memory_space<vmem>>, vector<256x128xf32>
    %c48_i32_85 = arith.constant 48 : i32
    %181 = tpu.dynamic_rotate %180 by %c48_i32_85 dim 1 : vector<256x128xf32>, i32 -> vector<256x128xf32>
    %182 = arith.addf %179, %181 : vector<256x128xf32>
    %c58 = arith.constant 58 : index
    %c0_86 = arith.constant 0 : index
    %183 = vector.load %arg16[%c58, %c0_86] : memref<336x128xf32, #tpu.memory_space<vmem>>, vector<256x128xf32>
    %c56_i32_87 = arith.constant 56 : i32
    %184 = tpu.dynamic_rotate %183 by %c56_i32_87 dim 1 : vector<256x128xf32>, i32 -> vector<256x128xf32>
    %185 = arith.addf %182, %184 : vector<256x128xf32>
    %c59 = arith.constant 59 : index
    %c0_88 = arith.constant 0 : index
    %186 = vector.load %arg16[%c59, %c0_88] : memref<336x128xf32, #tpu.memory_space<vmem>>, vector<256x128xf32>
    %c64_i32_89 = arith.constant 64 : i32
    %187 = tpu.dynamic_rotate %186 by %c64_i32_89 dim 1 : vector<256x128xf32>, i32 -> vector<256x128xf32>
    %188 = arith.addf %185, %187 : vector<256x128xf32>
    %c0_90 = arith.constant 0 : index
    %c0_91 = arith.constant 0 : index
    %189 = vector.load %arg7[%c0_90, %c0_91] : memref<128x128xf32, #tpu.memory_space<vmem>>, vector<128x128xf32>
    %190 = arith.truncf %188 : vector<256x128xf32> to vector<256x128xbf16>
    %191 = arith.truncf %189 : vector<128x128xf32> to vector<128x128xbf16>
    %cst_92 = arith.constant dense<0.000000e+00> : vector<256x128xf32>
    %192 = tpu.matmul %190, %191, %cst_92 {dimension_numbers = #tpu.dot_dimension_numbers<[1], [0], [0], [1], [0, 0, 1, 1], [], []>} : vector<256x128xbf16>, vector<128x128xbf16>, vector<256x128xf32> -> vector<256x128xf32>
    %c0_93 = arith.constant 0 : index
    %c0_94 = arith.constant 0 : index
    %193 = vector.load %arg8[%c0_93, %c0_94] : memref<1x128xf32, #tpu.memory_space<vmem>>, vector<1x128xf32>
    %194 = vector.broadcast %193 : vector<1x128xf32> to vector<256x128xf32>
    %195 = arith.addf %192, %194 : vector<256x128xf32>
    %cst_95 = arith.constant 5.000000e-01 : f32
    %196 = vector.broadcast %cst_95 : f32 to vector<256x128xf32>
    %197 = arith.mulf %196, %195 : vector<256x128xf32>
    %cst_96 = arith.constant 0.707106769 : f32
    %198 = vector.broadcast %cst_96 : f32 to vector<256x128xf32>
    %199 = arith.mulf %195, %198 : vector<256x128xf32>
    %cst_97 = arith.constant -4.000000e+00 : f32
    %cst_98 = arith.constant 4.000000e+00 : f32
    %200 = vector.broadcast %cst_97 : f32 to vector<256x128xf32>
    %201 = arith.maximumf %200, %199 : vector<256x128xf32>
    %202 = vector.broadcast %cst_98 : f32 to vector<256x128xf32>
    %203 = arith.minimumf %202, %201 : vector<256x128xf32>
    %204 = arith.mulf %203, %203 : vector<256x128xf32>
    %cst_99 = arith.constant 2.29050653E-4 : f32
    %205 = vector.broadcast %cst_99 : f32 to vector<256x128xf32>
    %206 = arith.mulf %205, %204 : vector<256x128xf32>
    %cst_100 = arith.constant 0.00340829091 : f32
    %207 = vector.broadcast %cst_100 : f32 to vector<256x128xf32>
    %208 = arith.addf %206, %207 : vector<256x128xf32>
    %209 = arith.mulf %208, %204 : vector<256x128xf32>
    %cst_101 = arith.constant 0.0509556942 : f32
    %210 = vector.broadcast %cst_101 : f32 to vector<256x128xf32>
    %211 = arith.addf %209, %210 : vector<256x128xf32>
    %212 = arith.mulf %211, %204 : vector<256x128xf32>
    %cst_102 = arith.constant 0.185208321 : f32
    %213 = vector.broadcast %cst_102 : f32 to vector<256x128xf32>
    %214 = arith.addf %212, %213 : vector<256x128xf32>
    %215 = arith.mulf %214, %204 : vector<256x128xf32>
    %cst_103 = arith.constant 1.12837911 : f32
    %216 = vector.broadcast %cst_103 : f32 to vector<256x128xf32>
    %217 = arith.addf %215, %216 : vector<256x128xf32>
    %cst_104 = arith.constant -1.17916031E-7 : f32
    %218 = vector.broadcast %cst_104 : f32 to vector<256x128xf32>
    %219 = arith.mulf %218, %204 : vector<256x128xf32>
    %cst_105 = arith.constant 2.35479656E-5 : f32
    %220 = vector.broadcast %cst_105 : f32 to vector<256x128xf32>
    %221 = arith.addf %219, %220 : vector<256x128xf32>
    %222 = arith.mulf %221, %204 : vector<256x128xf32>
    %cst_106 = arith.constant 0.00101796258 : f32
    %223 = vector.broadcast %cst_106 : f32 to vector<256x128xf32>
    %224 = arith.addf %222, %223 : vector<256x128xf32>
    %225 = arith.mulf %224, %204 : vector<256x128xf32>
    %cst_107 = arith.constant 0.0140704699 : f32
    %226 = vector.broadcast %cst_107 : f32 to vector<256x128xf32>
    %227 = arith.addf %225, %226 : vector<256x128xf32>
    %228 = arith.mulf %227, %204 : vector<256x128xf32>
    %cst_108 = arith.constant 0.110985048 : f32
    %229 = vector.broadcast %cst_108 : f32 to vector<256x128xf32>
    %230 = arith.addf %228, %229 : vector<256x128xf32>
    %231 = arith.mulf %230, %204 : vector<256x128xf32>
    %cst_109 = arith.constant 0.497469246 : f32
    %232 = vector.broadcast %cst_109 : f32 to vector<256x128xf32>
    %233 = arith.addf %231, %232 : vector<256x128xf32>
    %234 = arith.mulf %233, %204 : vector<256x128xf32>
    %cst_110 = arith.constant 1.000000e+00 : f32
    %235 = vector.broadcast %cst_110 : f32 to vector<256x128xf32>
    %236 = arith.addf %234, %235 : vector<256x128xf32>
    %237 = tpu.reciprocal %236 {approx = true} : vector<256x128xf32> -> vector<256x128xf32>
    %238 = arith.mulf %236, %237 : vector<256x128xf32>
    %cst_111 = arith.constant 2.000000e+00 : f32
    %239 = vector.broadcast %cst_111 : f32 to vector<256x128xf32>
    %240 = arith.subf %239, %238 : vector<256x128xf32>
    %241 = arith.mulf %237, %240 : vector<256x128xf32>
    %242 = arith.mulf %203, %217 : vector<256x128xf32>
    %243 = arith.mulf %242, %241 : vector<256x128xf32>
    %cst_112 = arith.constant 1.000000e+00 : f32
    %244 = vector.broadcast %cst_112 : f32 to vector<256x128xf32>
    %245 = arith.addf %244, %243 : vector<256x128xf32>
    %246 = arith.mulf %197, %245 : vector<256x128xf32>
    %c0_113 = arith.constant 0 : index
    %c0_114 = arith.constant 0 : index
    %247 = vector.load %arg9[%c0_113, %c0_114] : memref<128x128xf32, #tpu.memory_space<vmem>>, vector<128x128xf32>
    %248 = arith.truncf %246 : vector<256x128xf32> to vector<256x128xbf16>
    %249 = arith.truncf %247 : vector<128x128xf32> to vector<128x128xbf16>
    %cst_115 = arith.constant dense<0.000000e+00> : vector<256x128xf32>
    %250 = tpu.matmul %248, %249, %cst_115 {dimension_numbers = #tpu.dot_dimension_numbers<[1], [0], [0], [1], [0, 0, 1, 1], [], []>} : vector<256x128xbf16>, vector<128x128xbf16>, vector<256x128xf32> -> vector<256x128xf32>
    %c0_116 = arith.constant 0 : index
    %c0_117 = arith.constant 0 : index
    %251 = vector.load %arg10[%c0_116, %c0_117] : memref<1x128xf32, #tpu.memory_space<vmem>>, vector<1x128xf32>
    %252 = vector.broadcast %251 : vector<1x128xf32> to vector<256x128xf32>
    %253 = arith.addf %250, %252 : vector<256x128xf32>
    %c40_118 = arith.constant 40 : index
    %c0_119 = arith.constant 0 : index
    %254 = vector.load %arg13[%c40_118, %c0_119] : memref<336x128xf32, #tpu.memory_space<vmem>>, vector<256x128xf32>
    %255 = arith.addf %253, %254 : vector<256x128xf32>
    %c0_120 = arith.constant 0 : index
    %c0_121 = arith.constant 0 : index
    %256 = vector.load %arg11[%c0_120, %c0_121] : memref<256x128xf32, #tpu.memory_space<vmem>>, vector<256x128xf32>
    tpu.vector_store %arg11[%c0_120, %c0_121], %255 {strides = array<i32>} : memref<256x128xf32, #tpu.memory_space<vmem>>, vector<256x128xf32>,
    %c40_122 = arith.constant 40 : index
    %c0_123 = arith.constant 0 : index
    %257 = vector.load %arg14[%c40_122, %c0_123] : memref<336x1xf32, #tpu.memory_space<vmem>>, vector<256x1xf32>
    %258 = vector.broadcast %257 : vector<256x1xf32> to vector<256x128xf32>
    %259 = arith.mulf %255, %258 : vector<256x128xf32>
    %cst_124 = arith.constant 0.000000e+00 : f32
    %260 = vector.broadcast %cst_124 : f32 to vector<8x128xf32>
    %c0_125 = arith.constant 0 : index
    %c0_126 = arith.constant 0 : index
    %261 = vector.load %arg12[%c0_125, %c0_126] : memref<8x128xf32, #tpu.memory_space<vmem>>, vector<8x128xf32>
    tpu.vector_store %arg12[%c0_125, %c0_126], %260 {strides = array<i32>} : memref<8x128xf32, #tpu.memory_space<vmem>>, vector<8x128xf32>,
    %cst_127 = arith.constant dense<0.000000e+00> : vector<128xf32>
    %262 = vector.multi_reduction <add>, %259, %cst_127 [0] : vector<256x128xf32> to vector<128xf32>
    %263 = vector.shape_cast %262 : vector<128xf32> to vector<1x128xf32>
    %c0_128 = arith.constant 0 : index
    %c0_129 = arith.constant 0 : index
    %264 = vector.load %arg12[%c0_128, %c0_129] : memref<8x128xf32, #tpu.memory_space<vmem>>, vector<1x128xf32>
    tpu.vector_store %arg12[%c0_128, %c0_129], %263 {strides = array<i32>} : memref<8x128xf32, #tpu.memory_space<vmem>>, vector<1x128xf32>,
    %265 = arith.mulf %259, %259 : vector<256x128xf32>
    %cst_130 = arith.constant dense<0.000000e+00> : vector<128xf32>
    %266 = vector.multi_reduction <add>, %265, %cst_130 [0] : vector<256x128xf32> to vector<128xf32>
    %267 = vector.shape_cast %266 : vector<128xf32> to vector<1x128xf32>
    %c1 = arith.constant 1 : index
    %c0_131 = arith.constant 0 : index
    %268 = vector.load %arg12[%c1, %c0_131] : memref<8x128xf32, #tpu.memory_space<vmem>>, vector<1x128xf32>
    tpu.vector_store %arg12[%c1, %c0_131], %267 {strides = array<i32>} : memref<8x128xf32, #tpu.memory_space<vmem>>, vector<1x128xf32>,
    return
  }
  func.func @transform_2(%arg0: i32) -> (i32, i32) {
    %c0_i32 = arith.constant 0 : i32
    %c0_i32_0 = arith.constant 0 : i32
    %c0_i32_1 = arith.constant 0 : i32
    return %c0_i32, %c0_i32_0 : i32, i32
  }
  func.func @transform_3(%arg0: i32) -> (i32, i32) {
    %c0_i32 = arith.constant 0 : i32
    %c0_i32_0 = arith.constant 0 : i32
    %c0_i32_1 = arith.constant 0 : i32
    return %c0_i32, %c0_i32_0 : i32, i32
  }
  func.func @transform_4(%arg0: i32) -> (i32, i32) {
    %c0_i32 = arith.constant 0 : i32
    %c0_i32_0 = arith.constant 0 : i32
    %c0_i32_1 = arith.constant 0 : i32
    return %c0_i32, %c0_i32_0 : i32, i32
  }
  func.func @transform_5(%arg0: i32) -> (i32, i32) {
    %c0_i32 = arith.constant 0 : i32
    %c0_i32_0 = arith.constant 0 : i32
    %c0_i32_1 = arith.constant 0 : i32
    return %c0_i32, %c0_i32_0 : i32, i32
  }
  func.func @transform_6(%arg0: i32) -> (i32, i32) {
    %c0_i32 = arith.constant 0 : i32
    %c0_i32_0 = arith.constant 0 : i32
    %c0_i32_1 = arith.constant 0 : i32
    return %c0_i32, %c0_i32_0 : i32, i32
  }
  func.func @transform_7(%arg0: i32) -> (i32, i32) {
    %c0_i32 = arith.constant 0 : i32
    %c0_i32_0 = arith.constant 0 : i32
    %c0_i32_1 = arith.constant 0 : i32
    return %c0_i32, %c0_i32_0 : i32, i32
  }
  func.func @transform_8(%arg0: i32) -> (i32, i32) {
    %c0_i32 = arith.constant 0 : i32
    %c0_i32_0 = arith.constant 0 : i32
    %c0_i32_1 = arith.constant 0 : i32
    return %c0_i32, %c0_i32_0 : i32, i32
  }
  func.func @transform_9(%arg0: i32) -> (i32, i32) {
    %c0_i32 = arith.constant 0 : i32
    %c0_i32_0 = arith.constant 0 : i32
    %c0_i32_1 = arith.constant 0 : i32
    return %c0_i32, %c0_i32_0 : i32, i32
  }
  func.func @transform_10(%arg0: i32) -> (i32, i32) {
    %c0_i32 = arith.constant 0 : i32
    %c0_i32_0 = arith.constant 0 : i32
    return %arg0, %c0_i32 : i32, i32
  }
  func.func @transform_11(%arg0: i32) -> (i32, i32) {
    %c0_i32 = arith.constant 0 : i32
    %c0_i32_0 = arith.constant 0 : i32
    return %arg0, %c0_i32 : i32, i32
  }
}

module attributes {stable_mosaic.version = 11 : i64} {
  func.func @_bn_gelu_kernel(%arg0: i32, %arg1: memref<256x128xf32, #tpu.memory_space<vmem>>, %arg2: memref<1x128xf32, #tpu.memory_space<vmem>>, %arg3: memref<1x128xf32, #tpu.memory_space<vmem>>, %arg4: memref<256x128xf32, #tpu.memory_space<vmem>>) attributes {dimension_semantics = [#tpu.dimension_semantics<parallel>], iteration_bounds = array<i64: 3>, scalar_prefetch = 0 : i64, scratch_operands = 0 : i64, tpu.core_type = #tpu.core_type<tc>, window_params = [{transform_indices = @transform_0, window_bounds = array<i64: 256, 128>}, {pipeline_mode = #tpu.pipeline_mode<synchronous>, transform_indices = @transform_1, window_bounds = array<i64: 1, 128>}, {pipeline_mode = #tpu.pipeline_mode<synchronous>, transform_indices = @transform_2, window_bounds = array<i64: 1, 128>}, {transform_indices = @transform_3, window_bounds = array<i64: 256, 128>}]} {
    %c0 = arith.constant 0 : index
    %c0_0 = arith.constant 0 : index
    %0 = vector.load %arg1[%c0, %c0_0] : memref<256x128xf32, #tpu.memory_space<vmem>>, vector<256x128xf32>
    %c0_1 = arith.constant 0 : index
    %c0_2 = arith.constant 0 : index
    %1 = vector.load %arg2[%c0_1, %c0_2] : memref<1x128xf32, #tpu.memory_space<vmem>>, vector<1x128xf32>
    %2 = vector.broadcast %1 : vector<1x128xf32> to vector<256x128xf32>
    %3 = arith.mulf %0, %2 : vector<256x128xf32>
    %c0_3 = arith.constant 0 : index
    %c0_4 = arith.constant 0 : index
    %4 = vector.load %arg3[%c0_3, %c0_4] : memref<1x128xf32, #tpu.memory_space<vmem>>, vector<1x128xf32>
    %5 = vector.broadcast %4 : vector<1x128xf32> to vector<256x128xf32>
    %6 = arith.addf %3, %5 : vector<256x128xf32>
    %cst = arith.constant 5.000000e-01 : f32
    %7 = vector.broadcast %cst : f32 to vector<256x128xf32>
    %8 = arith.mulf %7, %6 : vector<256x128xf32>
    %cst_5 = arith.constant 0.707106769 : f32
    %9 = vector.broadcast %cst_5 : f32 to vector<256x128xf32>
    %10 = arith.mulf %6, %9 : vector<256x128xf32>
    %cst_6 = arith.constant -4.000000e+00 : f32
    %cst_7 = arith.constant 4.000000e+00 : f32
    %11 = vector.broadcast %cst_6 : f32 to vector<256x128xf32>
    %12 = arith.maximumf %11, %10 : vector<256x128xf32>
    %13 = vector.broadcast %cst_7 : f32 to vector<256x128xf32>
    %14 = arith.minimumf %13, %12 : vector<256x128xf32>
    %15 = arith.mulf %14, %14 : vector<256x128xf32>
    %cst_8 = arith.constant 2.29050653E-4 : f32
    %16 = vector.broadcast %cst_8 : f32 to vector<256x128xf32>
    %17 = arith.mulf %16, %15 : vector<256x128xf32>
    %cst_9 = arith.constant 0.00340829091 : f32
    %18 = vector.broadcast %cst_9 : f32 to vector<256x128xf32>
    %19 = arith.addf %17, %18 : vector<256x128xf32>
    %20 = arith.mulf %19, %15 : vector<256x128xf32>
    %cst_10 = arith.constant 0.0509556942 : f32
    %21 = vector.broadcast %cst_10 : f32 to vector<256x128xf32>
    %22 = arith.addf %20, %21 : vector<256x128xf32>
    %23 = arith.mulf %22, %15 : vector<256x128xf32>
    %cst_11 = arith.constant 0.185208321 : f32
    %24 = vector.broadcast %cst_11 : f32 to vector<256x128xf32>
    %25 = arith.addf %23, %24 : vector<256x128xf32>
    %26 = arith.mulf %25, %15 : vector<256x128xf32>
    %cst_12 = arith.constant 1.12837911 : f32
    %27 = vector.broadcast %cst_12 : f32 to vector<256x128xf32>
    %28 = arith.addf %26, %27 : vector<256x128xf32>
    %cst_13 = arith.constant -1.17916031E-7 : f32
    %29 = vector.broadcast %cst_13 : f32 to vector<256x128xf32>
    %30 = arith.mulf %29, %15 : vector<256x128xf32>
    %cst_14 = arith.constant 2.35479656E-5 : f32
    %31 = vector.broadcast %cst_14 : f32 to vector<256x128xf32>
    %32 = arith.addf %30, %31 : vector<256x128xf32>
    %33 = arith.mulf %32, %15 : vector<256x128xf32>
    %cst_15 = arith.constant 0.00101796258 : f32
    %34 = vector.broadcast %cst_15 : f32 to vector<256x128xf32>
    %35 = arith.addf %33, %34 : vector<256x128xf32>
    %36 = arith.mulf %35, %15 : vector<256x128xf32>
    %cst_16 = arith.constant 0.0140704699 : f32
    %37 = vector.broadcast %cst_16 : f32 to vector<256x128xf32>
    %38 = arith.addf %36, %37 : vector<256x128xf32>
    %39 = arith.mulf %38, %15 : vector<256x128xf32>
    %cst_17 = arith.constant 0.110985048 : f32
    %40 = vector.broadcast %cst_17 : f32 to vector<256x128xf32>
    %41 = arith.addf %39, %40 : vector<256x128xf32>
    %42 = arith.mulf %41, %15 : vector<256x128xf32>
    %cst_18 = arith.constant 0.497469246 : f32
    %43 = vector.broadcast %cst_18 : f32 to vector<256x128xf32>
    %44 = arith.addf %42, %43 : vector<256x128xf32>
    %45 = arith.mulf %44, %15 : vector<256x128xf32>
    %cst_19 = arith.constant 1.000000e+00 : f32
    %46 = vector.broadcast %cst_19 : f32 to vector<256x128xf32>
    %47 = arith.addf %45, %46 : vector<256x128xf32>
    %48 = tpu.reciprocal %47 {approx = true} : vector<256x128xf32> -> vector<256x128xf32>
    %49 = arith.mulf %47, %48 : vector<256x128xf32>
    %cst_20 = arith.constant 2.000000e+00 : f32
    %50 = vector.broadcast %cst_20 : f32 to vector<256x128xf32>
    %51 = arith.subf %50, %49 : vector<256x128xf32>
    %52 = arith.mulf %48, %51 : vector<256x128xf32>
    %53 = arith.mulf %14, %28 : vector<256x128xf32>
    %54 = arith.mulf %53, %52 : vector<256x128xf32>
    %cst_21 = arith.constant 1.000000e+00 : f32
    %55 = vector.broadcast %cst_21 : f32 to vector<256x128xf32>
    %56 = arith.addf %55, %54 : vector<256x128xf32>
    %57 = arith.mulf %8, %56 : vector<256x128xf32>
    %c0_22 = arith.constant 0 : index
    %c0_23 = arith.constant 0 : index
    %58 = vector.load %arg4[%c0_22, %c0_23] : memref<256x128xf32, #tpu.memory_space<vmem>>, vector<256x128xf32>
    tpu.vector_store %arg4[%c0_22, %c0_23], %57 {strides = array<i32>} : memref<256x128xf32, #tpu.memory_space<vmem>>, vector<256x128xf32>,
    return
  }
  func.func @transform_0(%arg0: i32) -> (i32, i32) {
    %c0_i32 = arith.constant 0 : i32
    %c0_i32_0 = arith.constant 0 : i32
    return %arg0, %c0_i32 : i32, i32
  }
  func.func @transform_1(%arg0: i32) -> (i32, i32) {
    %c0_i32 = arith.constant 0 : i32
    %c0_i32_0 = arith.constant 0 : i32
    %c0_i32_1 = arith.constant 0 : i32
    return %c0_i32, %c0_i32_0 : i32, i32
  }
  func.func @transform_2(%arg0: i32) -> (i32, i32) {
    %c0_i32 = arith.constant 0 : i32
    %c0_i32_0 = arith.constant 0 : i32
    %c0_i32_1 = arith.constant 0 : i32
    return %c0_i32, %c0_i32_0 : i32, i32
  }
  func.func @transform_3(%arg0: i32) -> (i32, i32) {
    %c0_i32 = arith.constant 0 : i32
    %c0_i32_0 = arith.constant 0 : i32
    return %arg0, %c0_i32 : i32, i32
  }
}

</mosaic_0001>

<llo_original>
// kernel: encoding_block_forward.3
$region0: #{encoding_block_forward.3}
  #allocation0 [shape = 'u32[]', space=smem, size = 0x4, offset = 0x4, fixed_abs, tag = 'smem constant byte address 0x4 - core index']
  #allocation1 [shape = 'u32[144,128]{1,0:T(1,128)}', space=vmem, size = 0x12000, scoped, tag = 'internal scratch']
  %s0 = inlined_call_operand.vmem [shape: f32[768,128], index: 0, kind: input, shape index: {}]
  %s1 = inlined_call_operand.vmem [shape: f32[1,128], index: 1, kind: input, shape index: {}]
  %s2 = inlined_call_operand.vmem [shape: f32[1,128], index: 2, kind: input, shape index: {}]
  %s3 = inlined_call_operand.vmem [shape: f32[768,128], index: 3, kind: output, shape index: {}]
  %s4 = sld [smem:[#allocation0]]
  $region45: #{encoding_block_forward.3} parent=0
    _
  %s6 = ssub.s32 1, %s4
  %s7 = scalar_select 0, %s6, %s4
  loop: start=0, step=1, limit=5
  $region2: #{encoding_block_forward.3} parent=0 // loop_pre_header
    _
  $region3: #{encoding_block_forward.3} parent=0 // loop_header
    %s9 = sphi 0, %s13
    %p10 = scmp.ge.s32.totalorder %s9, 5
    %s19 = sphi 0, %s21
    %s22 = sphi 0, %s19
    %s23 = sphi 0, %s22
    %s39 = sphi 0, %s23
    %s43 = sphi 0, %s43
    %s45 = sphi 0, %s43
    %s46 = sphi 0, %s45
    %s60 = sphi 0, %s46
    %s64 = sphi 0, %s64
    %s66 = sphi 0, %s64
    %s67 = sphi 0, %s66
    %s81 = sphi 0, %s67
    %s87 = sphi 0, %s89
    %s90 = sphi 0, %s87
    %s91 = sphi 0, %s90
    %s107 = sphi 0, %s91
  $region4: #{encoding_block_forward.3} parent=0 // loop_header_branch
    %12 = sbr.rel (%p10) target = $region8
  $region5: #{encoding_block_forward.3} parent=0 // loop_body
    %s14 = ssub.s32 %s9, 1
    %s15 = ssub.s32 %s9, 2
    %s16 = sadd.s32 %s9, 1
    %s17 = ssub.s32 %s9, %s16
    %p18 = scmp.eq.s32.totalorder %s17, 0
    %s20 = sadd.s32 %s19, 1
    %s21 = scalar_select %p18, %s19, %s20
    %p24 = pneg %p18
    %p25 = scmp.eq.s32.totalorder %s9, 2
    %p26 = por %p24, %p25
    %p27 = scmp.ne.s32.totalorder %s19, %s22
    %p28 = scmp.eq.s32.totalorder %s9, 0
    %p29 = por %p27, %p28
    %p30 = scmp.ne.s32.totalorder %s19, %s22
    %p31 = scmp.eq.s32.totalorder %s14, 2
    %p32 = por %p30, %p31
    %p33 = scmp.ne.s32.totalorder %s22, %s23
    %p34 = scmp.eq.s32.totalorder %s14, 0
    %p35 = por %p33, %p34
    %p36 = scmp.ne.s32.totalorder %s22, %s23
    %p37 = scmp.eq.s32.totalorder %s15, 2
    %p38 = por %p36, %p37
    %p40 = scmp.ne.s32.totalorder %s23, %s39
    %p41 = scmp.eq.s32.totalorder %s15, 0
    %p42 = por %p40, %p41
    %s44 = sadd.s32 %s43, 1
    %p47 = scmp.eq.s32.totalorder %s9, 2
    %p48 = scmp.ne.s32.totalorder %s43, %s45
    %p49 = scmp.eq.s32.totalorder %s9, 0
    %p50 = por %p48, %p49
    %p51 = scmp.ne.s32.totalorder %s43, %s45
    %p52 = scmp.eq.s32.totalorder %s14, 2
    %p53 = por %p51, %p52
    %p54 = scmp.ne.s32.totalorder %s45, %s46
    %p55 = scmp.eq.s32.totalorder %s14, 0
    %p56 = por %p54, %p55
    %p57 = scmp.ne.s32.totalorder %s45, %s46
    %p58 = scmp.eq.s32.totalorder %s15, 2
    %p59 = por %p57, %p58
    %p61 = scmp.ne.s32.totalorder %s46, %s60
    %p62 = scmp.eq.s32.totalorder %s15, 0
    %p63 = por %p61, %p62
    %s65 = sadd.s32 %s64, 1
    %p68 = scmp.eq.s32.totalorder %s9, 2
    %p69 = scmp.ne.s32.totalorder %s64, %s66
    %p70 = scmp.eq.s32.totalorder %s9, 0
    %p71 = por %p69, %p70
    %p72 = scmp.ne.s32.totalorder %s64, %s66
    %p73 = scmp.eq.s32.totalorder %s14, 2
    %p74 = por %p72, %p73
    %p75 = scmp.ne.s32.totalorder %s66, %s67
    %p76 = scmp.eq.s32.totalorder %s14, 0
    %p77 = por %p75, %p76
    %p78 = scmp.ne.s32.totalorder %s66, %s67
    %p79 = scmp.eq.s32.totalorder %s15, 2
    %p80 = por %p78, %p79
    %p82 = scmp.ne.s32.totalorder %s67, %s81
    %p83 = scmp.eq.s32.totalorder %s15, 0
    %p84 = por %p82, %p83
    %s85 = ssub.s32 %s9, %s16
    %p86 = scmp.eq.s32.totalorder %s85, 0
    %s88 = sadd.s32 %s87, 1
    %s89 = scalar_select %p86, %s87, %s88
    %p92 = pneg %p86
    %p93 = scmp.eq.s32.totalorder %s9, 2
    %p94 = por %p92, %p93
    %p95 = scmp.ne.s32.totalorder %s87, %s90
    %p96 = scmp.eq.s32.totalorder %s9, 0
    %p97 = por %p95, %p96
    %p98 = scmp.ne.s32.totalorder %s87, %s90
    %p99 = scmp.eq.s32.totalorder %s14, 2
    %p100 = por %p98, %p99
    %p101 = scmp.ne.s32.totalorder %s90, %s91
    %p102 = scmp.eq.s32.totalorder %s14, 0
    %p103 = por %p101, %p102
    %p104 = scmp.ne.s32.totalorder %s90, %s91
    %p105 = scmp.eq.s32.totalorder %s15, 2
    %p106 = por %p104, %p105
    %p108 = scmp.ne.s32.totalorder %s91, %s107
    %p109 = scmp.eq.s32.totalorder %s15, 0
    %p110 = por %p108, %p109
    %p111 = scmp.le.s32.totalorder 1, %s9
    %p112 = scmp.lt.s32.totalorder %s9, 4
    %p113 = pnand %p111, %p112
    %p114 = pneg %p113
    // Predicated region
    $region9: #{encoding_block_forward.3} parent=5 // pred_check
      _
    $region10: #{encoding_block_forward.3} parent=5 // pred_check_branch
      %116 = sbr.rel (%p113) target = $region12
    $region11: #{encoding_block_forward.3} parent=5 // pred_region
      %s117 = ssub.s32 %s9, 1
      // Predicated region
      $region13: #{encoding_block_forward.3} parent=11 // pred_check
        %p118 = pneg %p56
      $region14: #{encoding_block_forward.3} parent=11 // pred_check_branch
        %120 = sbr.rel (%p118) target = $region16
      $region15: #{encoding_block_forward.3} parent=11 // pred_region
        _
      $region16: #{encoding_block_forward.3} parent=11 // pred_fallthru
        _
      // Predicated region
      $region17: #{encoding_block_forward.3} parent=11 // pred_check
        %p121 = pneg %p77
      $region18: #{encoding_block_forward.3} parent=11 // pred_check_branch
        %123 = sbr.rel (%p121) target = $region20
      $region19: #{encoding_block_forward.3} parent=11 // pred_region
        _
      $region20: #{encoding_block_forward.3} parent=11 // pred_fallthru
        _
    $region12: #{encoding_block_forward.3} parent=5 // pred_fallthru
      _
    %p124 = scmp.lt.s32.totalorder %s9, 3
    // Predicated region
    $region21: #{encoding_block_forward.3} parent=5 // pred_check
      %p125 = pneg %p124
    $region22: #{encoding_block_forward.3} parent=5 // pred_check_branch
      %127 = sbr.rel (%p125) target = $region24
    $region23: #{encoding_block_forward.3} parent=5 // pred_region
      // Predicated region
      $region25: #{encoding_block_forward.3} parent=23 // pred_check
        %p128 = pneg %p29
      $region26: #{encoding_block_forward.3} parent=23 // pred_check_branch
        %130 = sbr.rel (%p128) target = $region28
      $region27: #{encoding_block_forward.3} parent=23 // pred_region
        %s131 = smul.u32 32, %s9
        %p132 = scmp.lt.s32.totalorder %s131, 95
        %s133 = scalar_select %p132, %s131, 95
        %s134 = smul.addr %s133, 8
        %s135 = scalar_lea.vmem %s0, %s134
        %s136 = smul.u32 32, %s9
      $region28: #{encoding_block_forward.3} parent=23 // pred_fallthru
        _
    $region24: #{encoding_block_forward.3} parent=5 // pred_fallthru
      _
    %p137 = scmp.le.s32.totalorder 1, %s9
    %p138 = scmp.lt.s32.totalorder %s9, 4
    %p139 = pnand %p137, %p138
    %p140 = pneg %p139
    // Predicated region
    $region29: #{encoding_block_forward.3} parent=5 // pred_check
      _
    $region30: #{encoding_block_forward.3} parent=5 // pred_check_branch
      %142 = sbr.rel (%p139) target = $region32
    $region31: #{encoding_block_forward.3} parent=5 // pred_region
      %s143 = ssub.s32 %s9, 1
      %s144 = smul.u32 32, %s14
      %p145 = scmp.lt.s32.totalorder %s144, 95
      %s146 = scalar_select %p145, %s144, 95
      %s147 = smul.addr %s146, 8
      %s148 = scalar_lea.vmem %s0, %s147
      %p149 = pneg %p35
      %p150 = pneg %p32
      %p151 = pneg %p56
      %p152 = pneg %p53
      %p153 = pneg %p77
      %p154 = pneg %p74
      %p155 = pneg %p103
      %p156 = pneg %p100
      %s157 = smul.u32 32, %s14
      %p158 = scmp.lt.s32.totalorder %s157, 95
      %s159 = scalar_select %p158, %s157, 95
      %s160 = smul.addr %s159, 8
      %s161 = scalar_lea.vmem %s3, %s160
      %s162 = smul.u32 32, %s14
      %p163 = scmp.lt.s32.totalorder %s162, 95
      %s164 = scalar_select %p163, %s162, 95
      %s165 = smul.addr %s164, 8
      %s166 = scalar_lea.vmem %s0, %s165
      %s167 = smul.u32 32, %s14
      %s168 = smul.u32 32, %s14
      %p169 = scmp.lt.s32.totalorder %s168, 95
      %s170 = scalar_select %p169, %s168, 95
      %s171 = smul.addr %s170, 8
      %s172 = scalar_lea.vmem %s3, %s171
      %s173 = smul.u32 32, %s14
      %v174 = vld [vmem:[%s166] sm:$0xff]
      %v175 = vld [vmem:[%s166 + $0x8] sm:$0xff]
      %v176 = vld [vmem:[%s166 + $0x10] sm:$0xff]
      %v177 = vld [vmem:[%s166 + $0x18] sm:$0xff]
      %v178 = vld [vmem:[%s166 + $0x20] sm:$0xff]
      %v179 = vld [vmem:[%s166 + $0x28] sm:$0xff]
      %v180 = vld [vmem:[%s166 + $0x30] sm:$0xff]
      %v181 = vld [vmem:[%s166 + $0x38] sm:$0xff]
      %v182 = vld [vmem:[%s166 + $0x40] sm:$0xff]
      %v183 = vld [vmem:[%s166 + $0x48] sm:$0xff]
      %v184 = vld [vmem:[%s166 + $0x50] sm:$0xff]
      %v185 = vld [vmem:[%s166 + $0x58] sm:$0xff]
      %v186 = vld [vmem:[%s166 + $0x60] sm:$0xff]
      %v187 = vld [vmem:[%s166 + $0x68] sm:$0xff]
      %v188 = vld [vmem:[%s166 + $0x70] sm:$0xff]
      %v189 = vld [vmem:[%s166 + $0x78] sm:$0xff]
      %v190 = vld [vmem:[%s166 + $0x80] sm:$0xff]
      %v191 = vld [vmem:[%s166 + $0x88] sm:$0xff]
      %v192 = vld [vmem:[%s166 + $0x90] sm:$0xff]
      %v193 = vld [vmem:[%s166 + $0x98] sm:$0xff]
      %v194 = vld [vmem:[%s166 + $0xa0] sm:$0xff]
      %v195 = vld [vmem:[%s166 + $0xa8] sm:$0xff]
      %v196 = vld [vmem:[%s166 + $0xb0] sm:$0xff]
      %v197 = vld [vmem:[%s166 + $0xb8] sm:$0xff]
      %v198 = vld [vmem:[%s166 + $0xc0] sm:$0xff]
      %v199 = vld [vmem:[%s166 + $0xc8] sm:$0xff]
      %v200 = vld [vmem:[%s166 + $0xd0] sm:$0xff]
      %v201 = vld [vmem:[%s166 + $0xd8] sm:$0xff]
      %v202 = vld [vmem:[%s166 + $0xe0] sm:$0xff]
      %v203 = vld [vmem:[%s166 + $0xe8] sm:$0xff]
      %v204 = vld [vmem:[%s166 + $0xf0] sm:$0xff]
      %v205 = vld [vmem:[%s166 + $0xf8] sm:$0xff]
      %v206 = vld [vmem:[%s1] sm:$0x1]
      %v208 = vlaneseq
      %v209 = vshrl.u32 %v208, 7
      %v210 = vsub.s32 0, %v209
      %v211 = vrot.slane %v206, %v210
      %v213 = vmul.f32 %v174, %v211
      %v214 = vmul.f32 %v175, %v211
      %v215 = vmul.f32 %v176, %v211
      %v216 = vmul.f32 %v177, %v211
      %v217 = vmul.f32 %v178, %v211
      %v218 = vmul.f32 %v179, %v211
      %v219 = vmul.f32 %v180, %v211
      %v220 = vmul.f32 %v181, %v211
      %v221 = vmul.f32 %v182, %v211
      %v222 = vmul.f32 %v183, %v211
      %v223 = vmul.f32 %v184, %v211
      %v224 = vmul.f32 %v185, %v211
      %v225 = vmul.f32 %v186, %v211
      %v226 = vmul.f32 %v187, %v211
      %v227 = vmul.f32 %v188, %v211
      %v228 = vmul.f32 %v189, %v211
      %v229 = vmul.f32 %v190, %v211
      %v230 = vmul.f32 %v191, %v211
      %v231 = vmul.f32 %v192, %v211
      %v232 = vmul.f32 %v193, %v211
      %v233 = vmul.f32 %v194, %v211
      %v234 = vmul.f32 %v195, %v211
      %v235 = vmul.f32 %v196, %v211
      %v236 = vmul.f32 %v197, %v211
      %v237 = vmul.f32 %v198, %v211
      %v238 = vmul.f32 %v199, %v211
      %v239 = vmul.f32 %v200, %v211
      %v240 = vmul.f32 %v201, %v211
      %v241 = vmul.f32 %v202, %v211
      %v242 = vmul.f32 %v203, %v211
      %v243 = vmul.f32 %v204, %v211
      %v244 = vmul.f32 %v205, %v211
      %v245 = vld [vmem:[%s2] sm:$0x1]
      %v247 = vlaneseq
      %v248 = vshrl.u32 %v247, 7
      %v249 = vsub.s32 0, %v248
      %v250 = vrot.slane %v245, %v249
      %v252 = vadd.f32 %v213, %v250
      %v253 = vadd.f32 %v214, %v250
      %v254 = vadd.f32 %v215, %v250
      %v255 = vadd.f32 %v216, %v250
      %v256 = vadd.f32 %v217, %v250
      %v257 = vadd.f32 %v218, %v250
      %v258 = vadd.f32 %v219, %v250
      %v259 = vadd.f32 %v220, %v250
      %v260 = vadd.f32 %v221, %v250
      %v261 = vadd.f32 %v222, %v250
      %v262 = vadd.f32 %v223, %v250
      %v263 = vadd.f32 %v224, %v250
      %v264 = vadd.f32 %v225, %v250
      %v265 = vadd.f32 %v226, %v250
      %v266 = vadd.f32 %v227, %v250
      %v267 = vadd.f32 %v228, %v250
      %v268 = vadd.f32 %v229, %v250
      %v269 = vadd.f32 %v230, %v250
      %v270 = vadd.f32 %v231, %v250
      %v271 = vadd.f32 %v232, %v250
      %v272 = vadd.f32 %v233, %v250
      %v273 = vadd.f32 %v234, %v250
      %v274 = vadd.f32 %v235, %v250
      %v275 = vadd.f32 %v236, %v250
      %v276 = vadd.f32 %v237, %v250
      %v277 = vadd.f32 %v238, %v250
      %v278 = vadd.f32 %v239, %v250
      %v279 = vadd.f32 %v240, %v250
      %v280 = vadd.f32 %v241, %v250
      %v281 = vadd.f32 %v242, %v250
      %v282 = vadd.f32 %v243, %v250
      %v283 = vadd.f32 %v244, %v250
      %v284 = vmul.f32 %v252, 0.5
      %v285 = vmul.f32 %v253, 0.5
      %v286 = vmul.f32 %v254, 0.5
      %v287 = vmul.f32 %v255, 0.5
      %v288 = vmul.f32 %v256, 0.5
      %v289 = vmul.f32 %v257, 0.5
      %v290 = vmul.f32 %v258, 0.5
      %v291 = vmul.f32 %v259, 0.5
      %v292 = vmul.f32 %v260, 0.5
      %v293 = vmul.f32 %v261, 0.5
      %v294 = vmul.f32 %v262, 0.5
      %v295 = vmul.f32 %v263, 0.5
      %v296 = vmul.f32 %v264, 0.5
      %v297 = vmul.f32 %v265, 0.5
      %v298 = vmul.f32 %v266, 0.5
      %v299 = vmul.f32 %v267, 0.5
      %v300 = vmul.f32 %v268, 0.5
      %v301 = vmul.f32 %v269, 0.5
      %v302 = vmul.f32 %v270, 0.5
      %v303 = vmul.f32 %v271, 0.5
      %v304 = vmul.f32 %v272, 0.5
      %v305 = vmul.f32 %v273, 0.5
      %v306 = vmul.f32 %v274, 0.5
      %v307 = vmul.f32 %v275, 0.5
      %v308 = vmul.f32 %v276, 0.5
      %v309 = vmul.f32 %v277, 0.5
      %v310 = vmul.f32 %v278, 0.5
      %v311 = vmul.f32 %v279, 0.5
      %v312 = vmul.f32 %v280, 0.5
      %v313 = vmul.f32 %v281, 0.5
      %v314 = vmul.f32 %v282, 0.5
      %v315 = vmul.f32 %v283, 0.5
      %v316 = vmul.f32 %v252, 0.70710677
      %v317 = vmul.f32 %v253, 0.70710677
      %v318 = vmul.f32 %v254, 0.70710677
      %v319 = vmul.f32 %v255, 0.70710677
      %v320 = vmul.f32 %v256, 0.70710677
      %v321 = vmul.f32 %v257, 0.70710677
      %v322 = vmul.f32 %v258, 0.70710677
      %v323 = vmul.f32 %v259, 0.70710677
      %v324 = vmul.f32 %v260, 0.70710677
      %v325 = vmul.f32 %v261, 0.70710677
      %v326 = vmul.f32 %v262, 0.70710677
      %v327 = vmul.f32 %v263, 0.70710677
      %v328 = vmul.f32 %v264, 0.70710677
      %v329 = vmul.f32 %v265, 0.70710677
      %v330 = vmul.f32 %v266, 0.70710677
      %v331 = vmul.f32 %v267, 0.70710677
      %v332 = vmul.f32 %v268, 0.70710677
      %v333 = vmul.f32 %v269, 0.70710677
      %v334 = vmul.f32 %v270, 0.70710677
      %v335 = vmul.f32 %v271, 0.70710677
      %v336 = vmul.f32 %v272, 0.70710677
      %v337 = vmul.f32 %v273, 0.70710677
      %v338 = vmul.f32 %v274, 0.70710677
      %v339 = vmul.f32 %v275, 0.70710677
      %v340 = vmul.f32 %v276, 0.70710677
      %v341 = vmul.f32 %v277, 0.70710677
      %v342 = vmul.f32 %v278, 0.70710677
      %v343 = vmul.f32 %v279, 0.70710677
      %v344 = vmul.f32 %v280, 0.70710677
      %v345 = vmul.f32 %v281, 0.70710677
      %v346 = vmul.f32 %v282, 0.70710677
      %v347 = vmul.f32 %v283, 0.70710677
      %v348 = vmax.f32 %v316, -4.0
      %v349 = vmax.f32 %v317, -4.0
      %v350 = vmax.f32 %v318, -4.0
      %v351 = vmax.f32 %v319, -4.0
      %v352 = vmax.f32 %v320, -4.0
      %v353 = vmax.f32 %v321, -4.0
      %v354 = vmax.f32 %v322, -4.0
      %v355 = vmax.f32 %v323, -4.0
      %v356 = vmax.f32 %v324, -4.0
      %v357 = vmax.f32 %v325, -4.0
      %v358 = vmax.f32 %v326, -4.0
      %v359 = vmax.f32 %v327, -4.0
      %v360 = vmax.f32 %v328, -4.0
      %v361 = vmax.f32 %v329, -4.0
      %v362 = vmax.f32 %v330, -4.0
      %v363 = vmax.f32 %v331, -4.0
      %v364 = vmax.f32 %v332, -4.0
      %v365 = vmax.f32 %v333, -4.0
      %v366 = vmax.f32 %v334, -4.0
      %v367 = vmax.f32 %v335, -4.0
      %v368 = vmax.f32 %v336, -4.0
      %v369 = vmax.f32 %v337, -4.0
      %v370 = vmax.f32 %v338, -4.0
      %v371 = vmax.f32 %v339, -4.0
      %v372 = vmax.f32 %v340, -4.0
      %v373 = vmax.f32 %v341, -4.0
      %v374 = vmax.f32 %v342, -4.0
      %v375 = vmax.f32 %v343, -4.0
      %v376 = vmax.f32 %v344, -4.0
      %v377 = vmax.f32 %v345, -4.0
      %v378 = vmax.f32 %v346, -4.0
      %v379 = vmax.f32 %v347, -4.0
      %v380 = vmin.f32 %v348, 4.0
      %v381 = vmin.f32 %v349, 4.0
      %v382 = vmin.f32 %v350, 4.0
      %v383 = vmin.f32 %v351, 4.0
      %v384 = vmin.f32 %v352, 4.0
      %v385 = vmin.f32 %v353, 4.0
      %v386 = vmin.f32 %v354, 4.0
      %v387 = vmin.f32 %v355, 4.0
      %v388 = vmin.f32 %v356, 4.0
      %v389 = vmin.f32 %v357, 4.0
      %v390 = vmin.f32 %v358, 4.0
      %v391 = vmin.f32 %v359, 4.0
      %v392 = vmin.f32 %v360, 4.0
      %v393 = vmin.f32 %v361, 4.0
      %v394 = vmin.f32 %v362, 4.0
      %v395 = vmin.f32 %v363, 4.0
      %v396 = vmin.f32 %v364, 4.0
      %v397 = vmin.f32 %v365, 4.0
      %v398 = vmin.f32 %v366, 4.0
      %v399 = vmin.f32 %v367, 4.0
      %v400 = vmin.f32 %v368, 4.0
      %v401 = vmin.f32 %v369, 4.0
      %v402 = vmin.f32 %v370, 4.0
      %v403 = vmin.f32 %v371, 4.0
      %v404 = vmin.f32 %v372, 4.0
      %v405 = vmin.f32 %v373, 4.0
      %v406 = vmin.f32 %v374, 4.0
      %v407 = vmin.f32 %v375, 4.0
      %v408 = vmin.f32 %v376, 4.0
      %v409 = vmin.f32 %v377, 4.0
      %v410 = vmin.f32 %v378, 4.0
      %v411 = vmin.f32 %v379, 4.0
      %v412 = vmul.f32 %v380, %v380
      %v413 = vmul.f32 %v381, %v381
      %v414 = vmul.f32 %v382, %v382
      %v415 = vmul.f32 %v383, %v383
      %v416 = vmul.f32 %v384, %v384
      %v417 = vmul.f32 %v385, %v385
      %v418 = vmul.f32 %v386, %v386
      %v419 = vmul.f32 %v387, %v387
      %v420 = vmul.f32 %v388, %v388
      %v421 = vmul.f32 %v389, %v389
      %v422 = vmul.f32 %v390, %v390
      %v423 = vmul.f32 %v391, %v391
      %v424 = vmul.f32 %v392, %v392
      %v425 = vmul.f32 %v393, %v393
      %v426 = vmul.f32 %v394, %v394
      %v427 = vmul.f32 %v395, %v395
      %v428 = vmul.f32 %v396, %v396
      %v429 = vmul.f32 %v397, %v397
      %v430 = vmul.f32 %v398, %v398
      %v431 = vmul.f32 %v399, %v399
      %v432 = vmul.f32 %v400, %v400
      %v433 = vmul.f32 %v401, %v401
      %v434 = vmul.f32 %v402, %v402
      %v435 = vmul.f32 %v403, %v403
      %v436 = vmul.f32 %v404, %v404
      %v437 = vmul.f32 %v405, %v405
      %v438 = vmul.f32 %v406, %v406
      %v439 = vmul.f32 %v407, %v407
      %v440 = vmul.f32 %v408, %v408
      %v441 = vmul.f32 %v409, %v409
      %v442 = vmul.f32 %v410, %v410
      %v443 = vmul.f32 %v411, %v411
      %v444 = vmul.f32 %v412, 0.00022905065
      %v445 = vmul.f32 %v413, 0.00022905065
      %v446 = vmul.f32 %v414, 0.00022905065
      %v447 = vmul.f32 %v415, 0.00022905065
      %v448 = vmul.f32 %v416, 0.00022905065
      %v449 = vmul.f32 %v417, 0.00022905065
      %v450 = vmul.f32 %v418, 0.00022905065
      %v451 = vmul.f32 %v419, 0.00022905065
      %v452 = vmul.f32 %v420, 0.00022905065
      %v453 = vmul.f32 %v421, 0.00022905065
      %v454 = vmul.f32 %v422, 0.00022905065
      %v455 = vmul.f32 %v423, 0.00022905065
      %v456 = vmul.f32 %v424, 0.00022905065
      %v457 = vmul.f32 %v425, 0.00022905065
      %v458 = vmul.f32 %v426, 0.00022905065
      %v459 = vmul.f32 %v427, 0.00022905065
      %v460 = vmul.f32 %v428, 0.00022905065
      %v461 = vmul.f32 %v429, 0.00022905065
      %v462 = vmul.f32 %v430, 0.00022905065
      %v463 = vmul.f32 %v431, 0.00022905065
      %v464 = vmul.f32 %v432, 0.00022905065
      %v465 = vmul.f32 %v433, 0.00022905065
      %v466 = vmul.f32 %v434, 0.00022905065
      %v467 = vmul.f32 %v435, 0.00022905065
      %v468 = vmul.f32 %v436, 0.00022905065
      %v469 = vmul.f32 %v437, 0.00022905065
      %v470 = vmul.f32 %v438, 0.00022905065
      %v471 = vmul.f32 %v439, 0.00022905065
      %v472 = vmul.f32 %v440, 0.00022905065
      %v473 = vmul.f32 %v441, 0.00022905065
      %v474 = vmul.f32 %v442, 0.00022905065
      %v475 = vmul.f32 %v443, 0.00022905065
      %v476 = vadd.f32 %v444, 0.003408291
      %v477 = vadd.f32 %v445, 0.003408291
      %v478 = vadd.f32 %v446, 0.003408291
      %v479 = vadd.f32 %v447, 0.003408291
      %v480 = vadd.f32 %v448, 0.003408291
      %v481 = vadd.f32 %v449, 0.003408291
      %v482 = vadd.f32 %v450, 0.003408291
      %v483 = vadd.f32 %v451, 0.003408291
      %v484 = vadd.f32 %v452, 0.003408291
      %v485 = vadd.f32 %v453, 0.003408291
      %v486 = vadd.f32 %v454, 0.003408291
      %v487 = vadd.f32 %v455, 0.003408291
      %v488 = vadd.f32 %v456, 0.003408291
      %v489 = vadd.f32 %v457, 0.003408291
      %v490 = vadd.f32 %v458, 0.003408291
      %v491 = vadd.f32 %v459, 0.003408291
      %v492 = vadd.f32 %v460, 0.003408291
      %v493 = vadd.f32 %v461, 0.003408291
      %v494 = vadd.f32 %v462, 0.003408291
      %v495 = vadd.f32 %v463, 0.003408291
      %v496 = vadd.f32 %v464, 0.003408291
      %v497 = vadd.f32 %v465, 0.003408291
      %v498 = vadd.f32 %v466, 0.003408291
      %v499 = vadd.f32 %v467, 0.003408291
      %v500 = vadd.f32 %v468, 0.003408291
      %v501 = vadd.f32 %v469, 0.003408291
      %v502 = vadd.f32 %v470, 0.003408291
      %v503 = vadd.f32 %v471, 0.003408291
      %v504 = vadd.f32 %v472, 0.003408291
      %v505 = vadd.f32 %v473, 0.003408291
      %v506 = vadd.f32 %v474, 0.003408291
      %v507 = vadd.f32 %v475, 0.003408291
      %v508 = vmul.f32 %v476, %v412
      %v509 = vmul.f32 %v477, %v413
      %v510 = vmul.f32 %v478, %v414
      %v511 = vmul.f32 %v479, %v415
      %v512 = vmul.f32 %v480, %v416
      %v513 = vmul.f32 %v481, %v417
      %v514 = vmul.f32 %v482, %v418
      %v515 = vmul.f32 %v483, %v419
      %v516 = vmul.f32 %v484, %v420
      %v517 = vmul.f32 %v485, %v421
      %v518 = vmul.f32 %v486, %v422
      %v519 = vmul.f32 %v487, %v423
      %v520 = vmul.f32 %v488, %v424
      %v521 = vmul.f32 %v489, %v425
      %v522 = vmul.f32 %v490, %v426
      %v523 = vmul.f32 %v491, %v427
      %v524 = vmul.f32 %v492, %v428
      %v525 = vmul.f32 %v493, %v429
      %v526 = vmul.f32 %v494, %v430
      %v527 = vmul.f32 %v495, %v431
      %v528 = vmul.f32 %v496, %v432
      %v529 = vmul.f32 %v497, %v433
      %v530 = vmul.f32 %v498, %v434
      %v531 = vmul.f32 %v499, %v435
      %v532 = vmul.f32 %v500, %v436
      %v533 = vmul.f32 %v501, %v437
      %v534 = vmul.f32 %v502, %v438
      %v535 = vmul.f32 %v503, %v439
      %v536 = vmul.f32 %v504, %v440
      %v537 = vmul.f32 %v505, %v441
      %v538 = vmul.f32 %v506, %v442
      %v539 = vmul.f32 %v507, %v443
      %v540 = vadd.f32 %v508, 0.050955694
      %v541 = vadd.f32 %v509, 0.050955694
      %v542 = vadd.f32 %v510, 0.050955694
      %v543 = vadd.f32 %v511, 0.050955694
      %v544 = vadd.f32 %v512, 0.050955694
      %v545 = vadd.f32 %v513, 0.050955694
      %v546 = vadd.f32 %v514, 0.050955694
      %v547 = vadd.f32 %v515, 0.050955694
      %v548 = vadd.f32 %v516, 0.050955694
      %v549 = vadd.f32 %v517, 0.050955694
      %v550 = vadd.f32 %v518, 0.050955694
      %v551 = vadd.f32 %v519, 0.050955694
      %v552 = vadd.f32 %v520, 0.050955694
      %v553 = vadd.f32 %v521, 0.050955694
      %v554 = vadd.f32 %v522, 0.050955694
      %v555 = vadd.f32 %v523, 0.050955694
      %v556 = vadd.f32 %v524, 0.050955694
      %v557 = vadd.f32 %v525, 0.050955694
      %v558 = vadd.f32 %v526, 0.050955694
      %v559 = vadd.f32 %v527, 0.050955694
      %v560 = vadd.f32 %v528, 0.050955694
      %v561 = vadd.f32 %v529, 0.050955694
      %v562 = vadd.f32 %v530, 0.050955694
      %v563 = vadd.f32 %v531, 0.050955694
      %v564 = vadd.f32 %v532, 0.050955694
      %v565 = vadd.f32 %v533, 0.050955694
      %v566 = vadd.f32 %v534, 0.050955694
      %v567 = vadd.f32 %v535, 0.050955694
      %v568 = vadd.f32 %v536, 0.050955694
      %v569 = vadd.f32 %v537, 0.050955694
      %v570 = vadd.f32 %v538, 0.050955694
      %v571 = vadd.f32 %v539, 0.050955694
      %v572 = vmul.f32 %v540, %v412
      %v573 = vmul.f32 %v541, %v413
      %v574 = vmul.f32 %v542, %v414
      %v575 = vmul.f32 %v543, %v415
      %v576 = vmul.f32 %v544, %v416
      %v577 = vmul.f32 %v545, %v417
      %v578 = vmul.f32 %v546, %v418
      %v579 = vmul.f32 %v547, %v419
      %v580 = vmul.f32 %v548, %v420
      %v581 = vmul.f32 %v549, %v421
      %v582 = vmul.f32 %v550, %v422
      %v583 = vmul.f32 %v551, %v423
      %v584 = vmul.f32 %v552, %v424
      %v585 = vmul.f32 %v553, %v425
      %v586 = vmul.f32 %v554, %v426
      %v587 = vmul.f32 %v555, %v427
      %v588 = vmul.f32 %v556, %v428
      %v589 = vmul.f32 %v557, %v429
      %v590 = vmul.f32 %v558, %v430
      %v591 = vmul.f32 %v559, %v431
      %v592 = vmul.f32 %v560, %v432
      %v593 = vmul.f32 %v561, %v433
      %v594 = vmul.f32 %v562, %v434
      %v595 = vmul.f32 %v563, %v435
      %v596 = vmul.f32 %v564, %v436
      %v597 = vmul.f32 %v565, %v437
      %v598 = vmul.f32 %v566, %v438
      %v599 = vmul.f32 %v567, %v439
      %v600 = vmul.f32 %v568, %v440
      %v601 = vmul.f32 %v569, %v441
      %v602 = vmul.f32 %v570, %v442
      %v603 = vmul.f32 %v571, %v443
      %v604 = vadd.f32 %v572, 0.18520832
      %v605 = vadd.f32 %v573, 0.18520832
      %v606 = vadd.f32 %v574, 0.18520832
      %v607 = vadd.f32 %v575, 0.18520832
      %v608 = vadd.f32 %v576, 0.18520832
      %v609 = vadd.f32 %v577, 0.18520832
      %v610 = vadd.f32 %v578, 0.18520832
      %v611 = vadd.f32 %v579, 0.18520832
      %v612 = vadd.f32 %v580, 0.18520832
      %v613 = vadd.f32 %v581, 0.18520832
      %v614 = vadd.f32 %v582, 0.18520832
      %v615 = vadd.f32 %v583, 0.18520832
      %v616 = vadd.f32 %v584, 0.18520832
      %v617 = vadd.f32 %v585, 0.18520832
      %v618 = vadd.f32 %v586, 0.18520832
      %v619 = vadd.f32 %v587, 0.18520832
      %v620 = vadd.f32 %v588, 0.18520832
      %v621 = vadd.f32 %v589, 0.18520832
      %v622 = vadd.f32 %v590, 0.18520832
      %v623 = vadd.f32 %v591, 0.18520832
      %v624 = vadd.f32 %v592, 0.18520832
      %v625 = vadd.f32 %v593, 0.18520832
      %v626 = vadd.f32 %v594, 0.18520832
      %v627 = vadd.f32 %v595, 0.18520832
      %v628 = vadd.f32 %v596, 0.18520832
      %v629 = vadd.f32 %v597, 0.18520832
      %v630 = vadd.f32 %v598, 0.18520832
      %v631 = vadd.f32 %v599, 0.18520832
      %v632 = vadd.f32 %v600, 0.18520832
      %v633 = vadd.f32 %v601, 0.18520832
      %v634 = vadd.f32 %v602, 0.18520832
      %v635 = vadd.f32 %v603, 0.18520832
      %v636 = vmul.f32 %v604, %v412
      %v637 = vmul.f32 %v605, %v413
      %v638 = vmul.f32 %v606, %v414
      %v639 = vmul.f32 %v607, %v415
      %v640 = vmul.f32 %v608, %v416
      %v641 = vmul.f32 %v609, %v417
      %v642 = vmul.f32 %v610, %v418
      %v643 = vmul.f32 %v611, %v419
      %v644 = vmul.f32 %v612, %v420
      %v645 = vmul.f32 %v613, %v421
      %v646 = vmul.f32 %v614, %v422
      %v647 = vmul.f32 %v615, %v423
      %v648 = vmul.f32 %v616, %v424
      %v649 = vmul.f32 %v617, %v425
      %v650 = vmul.f32 %v618, %v426
      %v651 = vmul.f32 %v619, %v427
      %v652 = vmul.f32 %v620, %v428
      %v653 = vmul.f32 %v621, %v429
      %v654 = vmul.f32 %v622, %v430
      %v655 = vmul.f32 %v623, %v431
      %v656 = vmul.f32 %v624, %v432
      %v657 = vmul.f32 %v625, %v433
      %v658 = vmul.f32 %v626, %v434
      %v659 = vmul.f32 %v627, %v435
      %v660 = vmul.f32 %v628, %v436
      %v661 = vmul.f32 %v629, %v437
      %v662 = vmul.f32 %v630, %v438
      %v663 = vmul.f32 %v631, %v439
      %v664 = vmul.f32 %v632, %v440
      %v665 = vmul.f32 %v633, %v441
      %v666 = vmul.f32 %v634, %v442
      %v667 = vmul.f32 %v635, %v443
      %v668 = vadd.f32 %v636, 1.1283791
      %v669 = vadd.f32 %v637, 1.1283791
      %v670 = vadd.f32 %v638, 1.1283791
      %v671 = vadd.f32 %v639, 1.1283791
      %v672 = vadd.f32 %v640, 1.1283791
      %v673 = vadd.f32 %v641, 1.1283791
      %v674 = vadd.f32 %v642, 1.1283791
      %v675 = vadd.f32 %v643, 1.1283791
      %v676 = vadd.f32 %v644, 1.1283791
      %v677 = vadd.f32 %v645, 1.1283791
      %v678 = vadd.f32 %v646, 1.1283791
      %v679 = vadd.f32 %v647, 1.1283791
      %v680 = vadd.f32 %v648, 1.1283791
      %v681 = vadd.f32 %v649, 1.1283791
      %v682 = vadd.f32 %v650, 1.1283791
      %v683 = vadd.f32 %v651, 1.1283791
      %v684 = vadd.f32 %v652, 1.1283791
      %v685 = vadd.f32 %v653, 1.1283791
      %v686 = vadd.f32 %v654, 1.1283791
      %v687 = vadd.f32 %v655, 1.1283791
      %v688 = vadd.f32 %v656, 1.1283791
      %v689 = vadd.f32 %v657, 1.1283791
      %v690 = vadd.f32 %v658, 1.1283791
      %v691 = vadd.f32 %v659, 1.1283791
      %v692 = vadd.f32 %v660, 1.1283791
      %v693 = vadd.f32 %v661, 1.1283791
      %v694 = vadd.f32 %v662, 1.1283791
      %v695 = vadd.f32 %v663, 1.1283791
      %v696 = vadd.f32 %v664, 1.1283791
      %v697 = vadd.f32 %v665, 1.1283791
      %v698 = vadd.f32 %v666, 1.1283791
      %v699 = vadd.f32 %v667, 1.1283791
      %v700 = vmul.f32 %v412, -1.1791603e-07
      %v701 = vmul.f32 %v413, -1.1791603e-07
      %v702 = vmul.f32 %v414, -1.1791603e-07
      %v703 = vmul.f32 %v415, -1.1791603e-07
      %v704 = vmul.f32 %v416, -1.1791603e-07
      %v705 = vmul.f32 %v417, -1.1791603e-07
      %v706 = vmul.f32 %v418, -1.1791603e-07
      %v707 = vmul.f32 %v419, -1.1791603e-07
      %v708 = vmul.f32 %v420, -1.1791603e-07
      %v709 = vmul.f32 %v421, -1.1791603e-07
      %v710 = vmul.f32 %v422, -1.1791603e-07
      %v711 = vmul.f32 %v423, -1.1791603e-07
      %v712 = vmul.f32 %v424, -1.1791603e-07
      %v713 = vmul.f32 %v425, -1.1791603e-07
      %v714 = vmul.f32 %v426, -1.1791603e-07
      %v715 = vmul.f32 %v427, -1.1791603e-07
      %v716 = vmul.f32 %v428, -1.1791603e-07
      %v717 = vmul.f32 %v429, -1.1791603e-07
      %v718 = vmul.f32 %v430, -1.1791603e-07
      %v719 = vmul.f32 %v431, -1.1791603e-07
      %v720 = vmul.f32 %v432, -1.1791603e-07
      %v721 = vmul.f32 %v433, -1.1791603e-07
      %v722 = vmul.f32 %v434, -1.1791603e-07
      %v723 = vmul.f32 %v435, -1.1791603e-07
      %v724 = vmul.f32 %v436, -1.1791603e-07
      %v725 = vmul.f32 %v437, -1.1791603e-07
      %v726 = vmul.f32 %v438, -1.1791603e-07
      %v727 = vmul.f32 %v439, -1.1791603e-07
      %v728 = vmul.f32 %v440, -1.1791603e-07
      %v729 = vmul.f32 %v441, -1.1791603e-07
      %v730 = vmul.f32 %v442, -1.1791603e-07
      %v731 = vmul.f32 %v443, -1.1791603e-07
      %v732 = vadd.f32 %v700, 2.3547966e-05
      %v733 = vadd.f32 %v701, 2.3547966e-05
      %v734 = vadd.f32 %v702, 2.3547966e-05
      %v735 = vadd.f32 %v703, 2.3547966e-05
      %v736 = vadd.f32 %v704, 2.3547966e-05
      %v737 = vadd.f32 %v705, 2.3547966e-05
      %v738 = vadd.f32 %v706, 2.3547966e-05
      %v739 = vadd.f32 %v707, 2.3547966e-05
      %v740 = vadd.f32 %v708, 2.3547966e-05
      %v741 = vadd.f32 %v709, 2.3547966e-05
      %v742 = vadd.f32 %v710, 2.3547966e-05
      %v743 = vadd.f32 %v711, 2.3547966e-05
      %v744 = vadd.f32 %v712, 2.3547966e-05
      %v745 = vadd.f32 %v713, 2.3547966e-05
      %v746 = vadd.f32 %v714, 2.3547966e-05
      %v747 = vadd.f32 %v715, 2.3547966e-05
      %v748 = vadd.f32 %v716, 2.3547966e-05
      %v749 = vadd.f32 %v717, 2.3547966e-05
      %v750 = vadd.f32 %v718, 2.3547966e-05
      %v751 = vadd.f32 %v719, 2.3547966e-05
      %v752 = vadd.f32 %v720, 2.3547966e-05
      %v753 = vadd.f32 %v721, 2.3547966e-05
      %v754 = vadd.f32 %v722, 2.3547966e-05
      %v755 = vadd.f32 %v723, 2.3547966e-05
      %v756 = vadd.f32 %v724, 2.3547966e-05
      %v757 = vadd.f32 %v725, 2.3547966e-05
      %v758 = vadd.f32 %v726, 2.3547966e-05
      %v759 = vadd.f32 %v727, 2.3547966e-05
      %v760 = vadd.f32 %v728, 2.3547966e-05
      %v761 = vadd.f32 %v729, 2.3547966e-05
      %v762 = vadd.f32 %v730, 2.3547966e-05
      %v763 = vadd.f32 %v731, 2.3547966e-05
      %v764 = vmul.f32 %v732, %v412
      %v765 = vmul.f32 %v733, %v413
      %v766 = vmul.f32 %v734, %v414
      %v767 = vmul.f32 %v735, %v415
      %v768 = vmul.f32 %v736, %v416
      %v769 = vmul.f32 %v737, %v417
      %v770 = vmul.f32 %v738, %v418
      %v771 = vmul.f32 %v739, %v419
      %v772 = vmul.f32 %v740, %v420
      %v773 = vmul.f32 %v741, %v421
      %v774 = vmul.f32 %v742, %v422
      %v775 = vmul.f32 %v743, %v423
      %v776 = vmul.f32 %v744, %v424
      %v777 = vmul.f32 %v745, %v425
      %v778 = vmul.f32 %v746, %v426
      %v779 = vmul.f32 %v747, %v427
      %v780 = vmul.f32 %v748, %v428
      %v781 = vmul.f32 %v749, %v429
      %v782 = vmul.f32 %v750, %v430
      %v783 = vmul.f32 %v751, %v431
      %v784 = vmul.f32 %v752, %v432
      %v785 = vmul.f32 %v753, %v433
      %v786 = vmul.f32 %v754, %v434
      %v787 = vmul.f32 %v755, %v435
      %v788 = vmul.f32 %v756, %v436
      %v789 = vmul.f32 %v757, %v437
      %v790 = vmul.f32 %v758, %v438
      %v791 = vmul.f32 %v759, %v439
      %v792 = vmul.f32 %v760, %v440
      %v793 = vmul.f32 %v761, %v441
      %v794 = vmul.f32 %v762, %v442
      %v795 = vmul.f32 %v763, %v443
      %v796 = vadd.f32 %v764, 0.0010179626
      %v797 = vadd.f32 %v765, 0.0010179626
      %v798 = vadd.f32 %v766, 0.0010179626
      %v799 = vadd.f32 %v767, 0.0010179626
      %v800 = vadd.f32 %v768, 0.0010179626
      %v801 = vadd.f32 %v769, 0.0010179626
      %v802 = vadd.f32 %v770, 0.0010179626
      %v803 = vadd.f32 %v771, 0.0010179626
      %v804 = vadd.f32 %v772, 0.0010179626
      %v805 = vadd.f32 %v773, 0.0010179626
      %v806 = vadd.f32 %v774, 0.0010179626
      %v807 = vadd.f32 %v775, 0.0010179626
      %v808 = vadd.f32 %v776, 0.0010179626
      %v809 = vadd.f32 %v777, 0.0010179626
      %v810 = vadd.f32 %v778, 0.0010179626
      %v811 = vadd.f32 %v779, 0.0010179626
      %v812 = vadd.f32 %v780, 0.0010179626
      %v813 = vadd.f32 %v781, 0.0010179626
      %v814 = vadd.f32 %v782, 0.0010179626
      %v815 = vadd.f32 %v783, 0.0010179626
      %v816 = vadd.f32 %v784, 0.0010179626
      %v817 = vadd.f32 %v785, 0.0010179626
      %v818 = vadd.f32 %v786, 0.0010179626
      %v819 = vadd.f32 %v787, 0.0010179626
      %v820 = vadd.f32 %v788, 0.0010179626
      %v821 = vadd.f32 %v789, 0.0010179626
      %v822 = vadd.f32 %v790, 0.0010179626
      %v823 = vadd.f32 %v791, 0.0010179626
      %v824 = vadd.f32 %v792, 0.0010179626
      %v825 = vadd.f32 %v793, 0.0010179626
      %v826 = vadd.f32 %v794, 0.0010179626
      %v827 = vadd.f32 %v795, 0.0010179626
      %v828 = vmul.f32 %v796, %v412
      %v829 = vmul.f32 %v797, %v413
      %v830 = vmul.f32 %v798, %v414
      %v831 = vmul.f32 %v799, %v415
      %v832 = vmul.f32 %v800, %v416
      %v833 = vmul.f32 %v801, %v417
      %v834 = vmul.f32 %v802, %v418
      %v835 = vmul.f32 %v803, %v419
      %v836 = vmul.f32 %v804, %v420
      %v837 = vmul.f32 %v805, %v421
      %v838 = vmul.f32 %v806, %v422
      %v839 = vmul.f32 %v807, %v423
      %v840 = vmul.f32 %v808, %v424
      %v841 = vmul.f32 %v809, %v425
      %v842 = vmul.f32 %v810, %v426
      %v843 = vmul.f32 %v811, %v427
      %v844 = vmul.f32 %v812, %v428
      %v845 = vmul.f32 %v813, %v429
      %v846 = vmul.f32 %v814, %v430
      %v847 = vmul.f32 %v815, %v431
      %v848 = vmul.f32 %v816, %v432
      %v849 = vmul.f32 %v817, %v433
      %v850 = vmul.f32 %v818, %v434
      %v851 = vmul.f32 %v819, %v435
      %v852 = vmul.f32 %v820, %v436
      %v853 = vmul.f32 %v821, %v437
      %v854 = vmul.f32 %v822, %v438
      %v855 = vmul.f32 %v823, %v439
      %v856 = vmul.f32 %v824, %v440
      %v857 = vmul.f32 %v825, %v441
      %v858 = vmul.f32 %v826, %v442
      %v859 = vmul.f32 %v827, %v443
      %v860 = vadd.f32 %v828, 0.01407047
      %v861 = vadd.f32 %v829, 0.01407047
      %v862 = vadd.f32 %v830, 0.01407047
      %v863 = vadd.f32 %v831, 0.01407047
      %v864 = vadd.f32 %v832, 0.01407047
      %v865 = vadd.f32 %v833, 0.01407047
      %v866 = vadd.f32 %v834, 0.01407047
      %v867 = vadd.f32 %v835, 0.01407047
      %v868 = vadd.f32 %v836, 0.01407047
      %v869 = vadd.f32 %v837, 0.01407047
      %v870 = vadd.f32 %v838, 0.01407047
      %v871 = vadd.f32 %v839, 0.01407047
      %v872 = vadd.f32 %v840, 0.01407047
      %v873 = vadd.f32 %v841, 0.01407047
      %v874 = vadd.f32 %v842, 0.01407047
      %v875 = vadd.f32 %v843, 0.01407047
      %v876 = vadd.f32 %v844, 0.01407047
      %v877 = vadd.f32 %v845, 0.01407047
      %v878 = vadd.f32 %v846, 0.01407047
      %v879 = vadd.f32 %v847, 0.01407047
      %v880 = vadd.f32 %v848, 0.01407047
      %v881 = vadd.f32 %v849, 0.01407047
      %v882 = vadd.f32 %v850, 0.01407047
      %v883 = vadd.f32 %v851, 0.01407047
      %v884 = vadd.f32 %v852, 0.01407047
      %v885 = vadd.f32 %v853, 0.01407047
      %v886 = vadd.f32 %v854, 0.01407047
      %v887 = vadd.f32 %v855, 0.01407047
      %v888 = vadd.f32 %v856, 0.01407047
      %v889 = vadd.f32 %v857, 0.01407047
      %v890 = vadd.f32 %v858, 0.01407047
      %v891 = vadd.f32 %v859, 0.01407047
      %v892 = vmul.f32 %v860, %v412
      %v893 = vmul.f32 %v861, %v413
      %v894 = vmul.f32 %v862, %v414
      %v895 = vmul.f32 %v863, %v415
      %v896 = vmul.f32 %v864, %v416
      %v897 = vmul.f32 %v865, %v417
      %v898 = vmul.f32 %v866, %v418
      %v899 = vmul.f32 %v867, %v419
      %v900 = vmul.f32 %v868, %v420
      %v901 = vmul.f32 %v869, %v421
      %v902 = vmul.f32 %v870, %v422
      %v903 = vmul.f32 %v871, %v423
      %v904 = vmul.f32 %v872, %v424
      %v905 = vmul.f32 %v873, %v425
      %v906 = vmul.f32 %v874, %v426
      %v907 = vmul.f32 %v875, %v427
      %v908 = vmul.f32 %v876, %v428
      %v909 = vmul.f32 %v877, %v429
      %v910 = vmul.f32 %v878, %v430
      %v911 = vmul.f32 %v879, %v431
      %v912 = vmul.f32 %v880, %v432
      %v913 = vmul.f32 %v881, %v433
      %v914 = vmul.f32 %v882, %v434
      %v915 = vmul.f32 %v883, %v435
      %v916 = vmul.f32 %v884, %v436
      %v917 = vmul.f32 %v885, %v437
      %v918 = vmul.f32 %v886, %v438
      %v919 = vmul.f32 %v887, %v439
      %v920 = vmul.f32 %v888, %v440
      %v921 = vmul.f32 %v889, %v441
      %v922 = vmul.f32 %v890, %v442
      %v923 = vmul.f32 %v891, %v443
      %v924 = vadd.f32 %v892, 0.11098505
      %v925 = vadd.f32 %v893, 0.11098505
      %v926 = vadd.f32 %v894, 0.11098505
      %v927 = vadd.f32 %v895, 0.11098505
      %v928 = vadd.f32 %v896, 0.11098505
      %v929 = vadd.f32 %v897, 0.11098505
      %v930 = vadd.f32 %v898, 0.11098505
      %v931 = vadd.f32 %v899, 0.11098505
      %v932 = vadd.f32 %v900, 0.11098505
      %v933 = vadd.f32 %v901, 0.11098505
      %v934 = vadd.f32 %v902, 0.11098505
      %v935 = vadd.f32 %v903, 0.11098505
      %v936 = vadd.f32 %v904, 0.11098505
      %v937 = vadd.f32 %v905, 0.11098505
      %v938 = vadd.f32 %v906, 0.11098505
      %v939 = vadd.f32 %v907, 0.11098505
      %v940 = vadd.f32 %v908, 0.11098505
      %v941 = vadd.f32 %v909, 0.11098505
      %v942 = vadd.f32 %v910, 0.11098505
      %v943 = vadd.f32 %v911, 0.11098505
      %v944 = vadd.f32 %v912, 0.11098505
      %v945 = vadd.f32 %v913, 0.11098505
      %v946 = vadd.f32 %v914, 0.11098505
      %v947 = vadd.f32 %v915, 0.11098505
      %v948 = vadd.f32 %v916, 0.11098505
      %v949 = vadd.f32 %v917, 0.11098505
      %v950 = vadd.f32 %v918, 0.11098505
      %v951 = vadd.f32 %v919, 0.11098505
      %v952 = vadd.f32 %v920, 0.11098505
      %v953 = vadd.f32 %v921, 0.11098505
      %v954 = vadd.f32 %v922, 0.11098505
      %v955 = vadd.f32 %v923, 0.11098505
      %v956 = vmul.f32 %v924, %v412
      %v957 = vmul.f32 %v925, %v413
      %v958 = vmul.f32 %v926, %v414
      %v959 = vmul.f32 %v927, %v415
      %v960 = vmul.f32 %v928, %v416
      %v961 = vmul.f32 %v929, %v417
      %v962 = vmul.f32 %v930, %v418
      %v963 = vmul.f32 %v931, %v419
      %v964 = vmul.f32 %v932, %v420
      %v965 = vmul.f32 %v933, %v421
      %v966 = vmul.f32 %v934, %v422
      %v967 = vmul.f32 %v935, %v423
      %v968 = vmul.f32 %v936, %v424
      %v969 = vmul.f32 %v937, %v425
      %v970 = vmul.f32 %v938, %v426
      %v971 = vmul.f32 %v939, %v427
      %v972 = vmul.f32 %v940, %v428
      %v973 = vmul.f32 %v941, %v429
      %v974 = vmul.f32 %v942, %v430
      %v975 = vmul.f32 %v943, %v431
      %v976 = vmul.f32 %v944, %v432
      %v977 = vmul.f32 %v945, %v433
      %v978 = vmul.f32 %v946, %v434
      %v979 = vmul.f32 %v947, %v435
      %v980 = vmul.f32 %v948, %v436
      %v981 = vmul.f32 %v949, %v437
      %v982 = vmul.f32 %v950, %v438
      %v983 = vmul.f32 %v951, %v439
      %v984 = vmul.f32 %v952, %v440
      %v985 = vmul.f32 %v953, %v441
      %v986 = vmul.f32 %v954, %v442
      %v987 = vmul.f32 %v955, %v443
      %v988 = vadd.f32 %v956, 0.49746925
      %v989 = vadd.f32 %v957, 0.49746925
      %v990 = vadd.f32 %v958, 0.49746925
      %v991 = vadd.f32 %v959, 0.49746925
      %v992 = vadd.f32 %v960, 0.49746925
      %v993 = vadd.f32 %v961, 0.49746925
      %v994 = vadd.f32 %v962, 0.49746925
      %v995 = vadd.f32 %v963, 0.49746925
      %v996 = vadd.f32 %v964, 0.49746925
      %v997 = vadd.f32 %v965, 0.49746925
      %v998 = vadd.f32 %v966, 0.49746925
      %v999 = vadd.f32 %v967, 0.49746925
      %v1000 = vadd.f32 %v968, 0.49746925
      %v1001 = vadd.f32 %v969, 0.49746925
      %v1002 = vadd.f32 %v970, 0.49746925
      %v1003 = vadd.f32 %v971, 0.49746925
      %v1004 = vadd.f32 %v972, 0.49746925
      %v1005 = vadd.f32 %v973, 0.49746925
      %v1006 = vadd.f32 %v974, 0.49746925
      %v1007 = vadd.f32 %v975, 0.49746925
      %v1008 = vadd.f32 %v976, 0.49746925
      %v1009 = vadd.f32 %v977, 0.49746925
      %v1010 = vadd.f32 %v978, 0.49746925
      %v1011 = vadd.f32 %v979, 0.49746925
      %v1012 = vadd.f32 %v980, 0.49746925
      %v1013 = vadd.f32 %v981, 0.49746925
      %v1014 = vadd.f32 %v982, 0.49746925
      %v1015 = vadd.f32 %v983, 0.49746925
      %v1016 = vadd.f32 %v984, 0.49746925
      %v1017 = vadd.f32 %v985, 0.49746925
      %v1018 = vadd.f32 %v986, 0.49746925
      %v1019 = vadd.f32 %v987, 0.49746925
      %v1020 = vmul.f32 %v988, %v412
      %v1021 = vmul.f32 %v989, %v413
      %v1022 = vmul.f32 %v990, %v414
      %v1023 = vmul.f32 %v991, %v415
      %v1024 = vmul.f32 %v992, %v416
      %v1025 = vmul.f32 %v993, %v417
      %v1026 = vmul.f32 %v994, %v418
      %v1027 = vmul.f32 %v995, %v419
      %v1028 = vmul.f32 %v996, %v420
      %v1029 = vmul.f32 %v997, %v421
      %v1030 = vmul.f32 %v998, %v422
      %v1031 = vmul.f32 %v999, %v423
      %v1032 = vmul.f32 %v1000, %v424
      %v1033 = vmul.f32 %v1001, %v425
      %v1034 = vmul.f32 %v1002, %v426
      %v1035 = vmul.f32 %v1003, %v427
      %v1036 = vmul.f32 %v1004, %v428
      %v1037 = vmul.f32 %v1005, %v429
      %v1038 = vmul.f32 %v1006, %v430
      %v1039 = vmul.f32 %v1007, %v431
      %v1040 = vmul.f32 %v1008, %v432
      %v1041 = vmul.f32 %v1009, %v433
      %v1042 = vmul.f32 %v1010, %v434
      %v1043 = vmul.f32 %v1011, %v435
      %v1044 = vmul.f32 %v1012, %v436
      %v1045 = vmul.f32 %v1013, %v437
      %v1046 = vmul.f32 %v1014, %v438
      %v1047 = vmul.f32 %v1015, %v439
      %v1048 = vmul.f32 %v1016, %v440
      %v1049 = vmul.f32 %v1017, %v441
      %v1050 = vmul.f32 %v1018, %v442
      %v1051 = vmul.f32 %v1019, %v443
      %v1052 = vadd.f32 %v1020, 1.0
      %v1053 = vadd.f32 %v1021, 1.0
      %v1054 = vadd.f32 %v1022, 1.0
      %v1055 = vadd.f32 %v1023, 1.0
      %v1056 = vadd.f32 %v1024, 1.0
      %v1057 = vadd.f32 %v1025, 1.0
      %v1058 = vadd.f32 %v1026, 1.0
      %v1059 = vadd.f32 %v1027, 1.0
      %v1060 = vadd.f32 %v1028, 1.0
      %v1061 = vadd.f32 %v1029, 1.0
      %v1062 = vadd.f32 %v1030, 1.0
      %v1063 = vadd.f32 %v1031, 1.0
      %v1064 = vadd.f32 %v1032, 1.0
      %v1065 = vadd.f32 %v1033, 1.0
      %v1066 = vadd.f32 %v1034, 1.0
      %v1067 = vadd.f32 %v1035, 1.0
      %v1068 = vadd.f32 %v1036, 1.0
      %v1069 = vadd.f32 %v1037, 1.0
      %v1070 = vadd.f32 %v1038, 1.0
      %v1071 = vadd.f32 %v1039, 1.0
      %v1072 = vadd.f32 %v1040, 1.0
      %v1073 = vadd.f32 %v1041, 1.0
      %v1074 = vadd.f32 %v1042, 1.0
      %v1075 = vadd.f32 %v1043, 1.0
      %v1076 = vadd.f32 %v1044, 1.0
      %v1077 = vadd.f32 %v1045, 1.0
      %v1078 = vadd.f32 %v1046, 1.0
      %v1079 = vadd.f32 %v1047, 1.0
      %v1080 = vadd.f32 %v1048, 1.0
      %v1081 = vadd.f32 %v1049, 1.0
      %v1082 = vadd.f32 %v1050, 1.0
      %v1083 = vadd.f32 %v1051, 1.0
      %v1084 = vrcp.pop %v1052
      %v1085 = vrcp.pop %v1053
      %v1086 = vrcp.pop %v1054
      %v1087 = vrcp.pop %v1055
      %v1088 = vrcp.pop %v1056
      %v1089 = vrcp.pop %v1057
      %v1090 = vrcp.pop %v1058
      %v1091 = vrcp.pop %v1059
      %v1092 = vrcp.pop %v1060
      %v1093 = vrcp.pop %v1061
      %v1094 = vrcp.pop %v1062
      %v1095 = vrcp.pop %v1063
      %v1096 = vrcp.pop %v1064
      %v1097 = vrcp.pop %v1065
      %v1098 = vrcp.pop %v1066
      %v1099 = vrcp.pop %v1067
      %v1100 = vrcp.pop %v1068
      %v1101 = vrcp.pop %v1069
      %v1102 = vrcp.pop %v1070
      %v1103 = vrcp.pop %v1071
      %v1104 = vrcp.pop %v1072
      %v1105 = vrcp.pop %v1073
      %v1106 = vrcp.pop %v1074
      %v1107 = vrcp.pop %v1075
      %v1108 = vrcp.pop %v1076
      %v1109 = vrcp.pop %v1077
      %v1110 = vrcp.pop %v1078
      %v1111 = vrcp.pop %v1079
      %v1112 = vrcp.pop %v1080
      %v1113 = vrcp.pop %v1081
      %v1114 = vrcp.pop %v1082
      %v1115 = vrcp.pop %v1083
      %v1116 = vmul.f32 %v1052, %v1084
      %v1117 = vmul.f32 %v1053, %v1085
      %v1118 = vmul.f32 %v1054, %v1086
      %v1119 = vmul.f32 %v1055, %v1087
      %v1120 = vmul.f32 %v1056, %v1088
      %v1121 = vmul.f32 %v1057, %v1089
      %v1122 = vmul.f32 %v1058, %v1090
      %v1123 = vmul.f32 %v1059, %v1091
      %v1124 = vmul.f32 %v1060, %v1092
      %v1125 = vmul.f32 %v1061, %v1093
      %v1126 = vmul.f32 %v1062, %v1094
      %v1127 = vmul.f32 %v1063, %v1095
      %v1128 = vmul.f32 %v1064, %v1096
      %v1129 = vmul.f32 %v1065, %v1097
      %v1130 = vmul.f32 %v1066, %v1098
      %v1131 = vmul.f32 %v1067, %v1099
      %v1132 = vmul.f32 %v1068, %v1100
      %v1133 = vmul.f32 %v1069, %v1101
      %v1134 = vmul.f32 %v1070, %v1102
      %v1135 = vmul.f32 %v1071, %v1103
      %v1136 = vmul.f32 %v1072, %v1104
      %v1137 = vmul.f32 %v1073, %v1105
      %v1138 = vmul.f32 %v1074, %v1106
      %v1139 = vmul.f32 %v1075, %v1107
      %v1140 = vmul.f32 %v1076, %v1108
      %v1141 = vmul.f32 %v1077, %v1109
      %v1142 = vmul.f32 %v1078, %v1110
      %v1143 = vmul.f32 %v1079, %v1111
      %v1144 = vmul.f32 %v1080, %v1112
      %v1145 = vmul.f32 %v1081, %v1113
      %v1146 = vmul.f32 %v1082, %v1114
      %v1147 = vmul.f32 %v1083, %v1115
      %v1148 = vsub.f32 2.0, %v1116
      %v1149 = vsub.f32 2.0, %v1117
      %v1150 = vsub.f32 2.0, %v1118
      %v1151 = vsub.f32 2.0, %v1119
      %v1152 = vsub.f32 2.0, %v1120
      %v1153 = vsub.f32 2.0, %v1121
      %v1154 = vsub.f32 2.0, %v1122
      %v1155 = vsub.f32 2.0, %v1123
      %v1156 = vsub.f32 2.0, %v1124
      %v1157 = vsub.f32 2.0, %v1125
      %v1158 = vsub.f32 2.0, %v1126
      %v1159 = vsub.f32 2.0, %v1127
      %v1160 = vsub.f32 2.0, %v1128
      %v1161 = vsub.f32 2.0, %v1129
      %v1162 = vsub.f32 2.0, %v1130
      %v1163 = vsub.f32 2.0, %v1131
      %v1164 = vsub.f32 2.0, %v1132
      %v1165 = vsub.f32 2.0, %v1133
      %v1166 = vsub.f32 2.0, %v1134
      %v1167 = vsub.f32 2.0, %v1135
      %v1168 = vsub.f32 2.0, %v1136
      %v1169 = vsub.f32 2.0, %v1137
      %v1170 = vsub.f32 2.0, %v1138
      %v1171 = vsub.f32 2.0, %v1139
      %v1172 = vsub.f32 2.0, %v1140
      %v1173 = vsub.f32 2.0, %v1141
      %v1174 = vsub.f32 2.0, %v1142
      %v1175 = vsub.f32 2.0, %v1143
      %v1176 = vsub.f32 2.0, %v1144
      %v1177 = vsub.f32 2.0, %v1145
      %v1178 = vsub.f32 2.0, %v1146
      %v1179 = vsub.f32 2.0, %v1147
      %v1180 = vmul.f32 %v1084, %v1148
      %v1181 = vmul.f32 %v1085, %v1149
      %v1182 = vmul.f32 %v1086, %v1150
      %v1183 = vmul.f32 %v1087, %v1151
      %v1184 = vmul.f32 %v1088, %v1152
      %v1185 = vmul.f32 %v1089, %v1153
      %v1186 = vmul.f32 %v1090, %v1154
      %v1187 = vmul.f32 %v1091, %v1155
      %v1188 = vmul.f32 %v1092, %v1156
      %v1189 = vmul.f32 %v1093, %v1157
      %v1190 = vmul.f32 %v1094, %v1158
      %v1191 = vmul.f32 %v1095, %v1159
      %v1192 = vmul.f32 %v1096, %v1160
      %v1193 = vmul.f32 %v1097, %v1161
      %v1194 = vmul.f32 %v1098, %v1162
      %v1195 = vmul.f32 %v1099, %v1163
      %v1196 = vmul.f32 %v1100, %v1164
      %v1197 = vmul.f32 %v1101, %v1165
      %v1198 = vmul.f32 %v1102, %v1166
      %v1199 = vmul.f32 %v1103, %v1167
      %v1200 = vmul.f32 %v1104, %v1168
      %v1201 = vmul.f32 %v1105, %v1169
      %v1202 = vmul.f32 %v1106, %v1170
      %v1203 = vmul.f32 %v1107, %v1171
      %v1204 = vmul.f32 %v1108, %v1172
      %v1205 = vmul.f32 %v1109, %v1173
      %v1206 = vmul.f32 %v1110, %v1174
      %v1207 = vmul.f32 %v1111, %v1175
      %v1208 = vmul.f32 %v1112, %v1176
      %v1209 = vmul.f32 %v1113, %v1177
      %v1210 = vmul.f32 %v1114, %v1178
      %v1211 = vmul.f32 %v1115, %v1179
      %v1212 = vmul.f32 %v380, %v668
      %v1213 = vmul.f32 %v381, %v669
      %v1214 = vmul.f32 %v382, %v670
      %v1215 = vmul.f32 %v383, %v671
      %v1216 = vmul.f32 %v384, %v672
      %v1217 = vmul.f32 %v385, %v673
      %v1218 = vmul.f32 %v386, %v674
      %v1219 = vmul.f32 %v387, %v675
      %v1220 = vmul.f32 %v388, %v676
      %v1221 = vmul.f32 %v389, %v677
      %v1222 = vmul.f32 %v390, %v678
      %v1223 = vmul.f32 %v391, %v679
      %v1224 = vmul.f32 %v392, %v680
      %v1225 = vmul.f32 %v393, %v681
      %v1226 = vmul.f32 %v394, %v682
      %v1227 = vmul.f32 %v395, %v683
      %v1228 = vmul.f32 %v396, %v684
      %v1229 = vmul.f32 %v397, %v685
      %v1230 = vmul.f32 %v398, %v686
      %v1231 = vmul.f32 %v399, %v687
      %v1232 = vmul.f32 %v400, %v688
      %v1233 = vmul.f32 %v401, %v689
      %v1234 = vmul.f32 %v402, %v690
      %v1235 = vmul.f32 %v403, %v691
      %v1236 = vmul.f32 %v404, %v692
      %v1237 = vmul.f32 %v405, %v693
      %v1238 = vmul.f32 %v406, %v694
      %v1239 = vmul.f32 %v407, %v695
      %v1240 = vmul.f32 %v408, %v696
      %v1241 = vmul.f32 %v409, %v697
      %v1242 = vmul.f32 %v410, %v698
      %v1243 = vmul.f32 %v411, %v699
      %v1244 = vmul.f32 %v1212, %v1180
      %v1245 = vmul.f32 %v1213, %v1181
      %v1246 = vmul.f32 %v1214, %v1182
      %v1247 = vmul.f32 %v1215, %v1183
      %v1248 = vmul.f32 %v1216, %v1184
      %v1249 = vmul.f32 %v1217, %v1185
      %v1250 = vmul.f32 %v1218, %v1186
      %v1251 = vmul.f32 %v1219, %v1187
      %v1252 = vmul.f32 %v1220, %v1188
      %v1253 = vmul.f32 %v1221, %v1189
      %v1254 = vmul.f32 %v1222, %v1190
      %v1255 = vmul.f32 %v1223, %v1191
      %v1256 = vmul.f32 %v1224, %v1192
      %v1257 = vmul.f32 %v1225, %v1193
      %v1258 = vmul.f32 %v1226, %v1194
      %v1259 = vmul.f32 %v1227, %v1195
      %v1260 = vmul.f32 %v1228, %v1196
      %v1261 = vmul.f32 %v1229, %v1197
      %v1262 = vmul.f32 %v1230, %v1198
      %v1263 = vmul.f32 %v1231, %v1199
      %v1264 = vmul.f32 %v1232, %v1200
      %v1265 = vmul.f32 %v1233, %v1201
      %v1266 = vmul.f32 %v1234, %v1202
      %v1267 = vmul.f32 %v1235, %v1203
      %v1268 = vmul.f32 %v1236, %v1204
      %v1269 = vmul.f32 %v1237, %v1205
      %v1270 = vmul.f32 %v1238, %v1206
      %v1271 = vmul.f32 %v1239, %v1207
      %v1272 = vmul.f32 %v1240, %v1208
      %v1273 = vmul.f32 %v1241, %v1209
      %v1274 = vmul.f32 %v1242, %v1210
      %v1275 = vmul.f32 %v1243, %v1211
      %v1276 = vadd.f32 %v1244, 1.0
      %v1277 = vadd.f32 %v1245, 1.0
      %v1278 = vadd.f32 %v1246, 1.0
      %v1279 = vadd.f32 %v1247, 1.0
      %v1280 = vadd.f32 %v1248, 1.0
      %v1281 = vadd.f32 %v1249, 1.0
      %v1282 = vadd.f32 %v1250, 1.0
      %v1283 = vadd.f32 %v1251, 1.0
      %v1284 = vadd.f32 %v1252, 1.0
      %v1285 = vadd.f32 %v1253, 1.0
      %v1286 = vadd.f32 %v1254, 1.0
      %v1287 = vadd.f32 %v1255, 1.0
      %v1288 = vadd.f32 %v1256, 1.0
      %v1289 = vadd.f32 %v1257, 1.0
      %v1290 = vadd.f32 %v1258, 1.0
      %v1291 = vadd.f32 %v1259, 1.0
      %v1292 = vadd.f32 %v1260, 1.0
      %v1293 = vadd.f32 %v1261, 1.0
      %v1294 = vadd.f32 %v1262, 1.0
      %v1295 = vadd.f32 %v1263, 1.0
      %v1296 = vadd.f32 %v1264, 1.0
      %v1297 = vadd.f32 %v1265, 1.0
      %v1298 = vadd.f32 %v1266, 1.0
      %v1299 = vadd.f32 %v1267, 1.0
      %v1300 = vadd.f32 %v1268, 1.0
      %v1301 = vadd.f32 %v1269, 1.0
      %v1302 = vadd.f32 %v1270, 1.0
      %v1303 = vadd.f32 %v1271, 1.0
      %v1304 = vadd.f32 %v1272, 1.0
      %v1305 = vadd.f32 %v1273, 1.0
      %v1306 = vadd.f32 %v1274, 1.0
      %v1307 = vadd.f32 %v1275, 1.0
      %v1308 = vmul.f32 %v284, %v1276
      %v1309 = vmul.f32 %v285, %v1277
      %v1310 = vmul.f32 %v286, %v1278
      %v1311 = vmul.f32 %v287, %v1279
      %v1312 = vmul.f32 %v288, %v1280
      %v1313 = vmul.f32 %v289, %v1281
      %v1314 = vmul.f32 %v290, %v1282
      %v1315 = vmul.f32 %v291, %v1283
      %v1316 = vmul.f32 %v292, %v1284
      %v1317 = vmul.f32 %v293, %v1285
      %v1318 = vmul.f32 %v294, %v1286
      %v1319 = vmul.f32 %v295, %v1287
      %v1320 = vmul.f32 %v296, %v1288
      %v1321 = vmul.f32 %v297, %v1289
      %v1322 = vmul.f32 %v298, %v1290
      %v1323 = vmul.f32 %v299, %v1291
      %v1324 = vmul.f32 %v300, %v1292
      %v1325 = vmul.f32 %v301, %v1293
      %v1326 = vmul.f32 %v302, %v1294
      %v1327 = vmul.f32 %v303, %v1295
      %v1328 = vmul.f32 %v304, %v1296
      %v1329 = vmul.f32 %v305, %v1297
      %v1330 = vmul.f32 %v306, %v1298
      %v1331 = vmul.f32 %v307, %v1299
      %v1332 = vmul.f32 %v308, %v1300
      %v1333 = vmul.f32 %v309, %v1301
      %v1334 = vmul.f32 %v310, %v1302
      %v1335 = vmul.f32 %v311, %v1303
      %v1336 = vmul.f32 %v312, %v1304
      %v1337 = vmul.f32 %v313, %v1305
      %v1338 = vmul.f32 %v314, %v1306
      %v1339 = vmul.f32 %v315, %v1307
      %1340 = vst [vmem:[%s172] sm:$0xff] %v1308
      %1341 = vst [vmem:[%s172 + $0x8] sm:$0xff] %v1309
      %1342 = vst [vmem:[%s172 + $0x10] sm:$0xff] %v1310
      %1343 = vst [vmem:[%s172 + $0x18] sm:$0xff] %v1311
      %1344 = vst [vmem:[%s172 + $0x20] sm:$0xff] %v1312
      %1345 = vst [vmem:[%s172 + $0x28] sm:$0xff] %v1313
      %1346 = vst [vmem:[%s172 + $0x30] sm:$0xff] %v1314
      %1347 = vst [vmem:[%s172 + $0x38] sm:$0xff] %v1315
      %1348 = vst [vmem:[%s172 + $0x40] sm:$0xff] %v1316
      %1349 = vst [vmem:[%s172 + $0x48] sm:$0xff] %v1317
      %1350 = vst [vmem:[%s172 + $0x50] sm:$0xff] %v1318
      %1351 = vst [vmem:[%s172 + $0x58] sm:$0xff] %v1319
      %1352 = vst [vmem:[%s172 + $0x60] sm:$0xff] %v1320
      %1353 = vst [vmem:[%s172 + $0x68] sm:$0xff] %v1321
      %1354 = vst [vmem:[%s172 + $0x70] sm:$0xff] %v1322
      %1355 = vst [vmem:[%s172 + $0x78] sm:$0xff] %v1323
      %1356 = vst [vmem:[%s172 + $0x80] sm:$0xff] %v1324
      %1357 = vst [vmem:[%s172 + $0x88] sm:$0xff] %v1325
      %1358 = vst [vmem:[%s172 + $0x90] sm:$0xff] %v1326
      %1359 = vst [vmem:[%s172 + $0x98] sm:$0xff] %v1327
      %1360 = vst [vmem:[%s172 + $0xa0] sm:$0xff] %v1328
      %1361 = vst [vmem:[%s172 + $0xa8] sm:$0xff] %v1329
      %1362 = vst [vmem:[%s172 + $0xb0] sm:$0xff] %v1330
      %1363 = vst [vmem:[%s172 + $0xb8] sm:$0xff] %v1331
      %1364 = vst [vmem:[%s172 + $0xc0] sm:$0xff] %v1332
      %1365 = vst [vmem:[%s172 + $0xc8] sm:$0xff] %v1333
      %1366 = vst [vmem:[%s172 + $0xd0] sm:$0xff] %v1334
      %1367 = vst [vmem:[%s172 + $0xd8] sm:$0xff] %v1335
      %1368 = vst [vmem:[%s172 + $0xe0] sm:$0xff] %v1336
      %1369 = vst [vmem:[%s172 + $0xe8] sm:$0xff] %v1337
      %1370 = vst [vmem:[%s172 + $0xf0] sm:$0xff] %v1338
      %1371 = vst [vmem:[%s172 + $0xf8] sm:$0xff] %v1339
      %s1372 = smul.u32 32, %s14
      %p1373 = scmp.lt.s32.totalorder %s1372, 95
      %s1374 = scalar_select %p1373, %s1372, 95
      %s1375 = smul.addr %s1374, 8
      %s1376 = scalar_lea.vmem %s3, %s1375
      // Predicated region
      $region33: #{encoding_block_forward.3} parent=31 // pred_check
        %p1377 = pneg %p100
      $region34: #{encoding_block_forward.3} parent=31 // pred_check_branch
        %1379 = sbr.rel (%p1377) target = $region36
      $region35: #{encoding_block_forward.3} parent=31 // pred_region
        %s1380 = smul.u32 32, %s14
      $region36: #{encoding_block_forward.3} parent=31 // pred_fallthru
        _
    $region32: #{encoding_block_forward.3} parent=5 // pred_fallthru
      _
    %p1381 = scmp.le.s32.totalorder 2, %s9
    // Predicated region
    $region37: #{encoding_block_forward.3} parent=5 // pred_check
      %p1382 = pneg %p1381
    $region38: #{encoding_block_forward.3} parent=5 // pred_check_branch
      %1384 = sbr.rel (%p1382) target = $region40
    $region39: #{encoding_block_forward.3} parent=5 // pred_region
      %s1385 = ssub.s32 %s9, 2
      // Predicated region
      $region41: #{encoding_block_forward.3} parent=39 // pred_check
        %p1386 = pneg %p106
      $region42: #{encoding_block_forward.3} parent=39 // pred_check_branch
        %1388 = sbr.rel (%p1386) target = $region44
      $region43: #{encoding_block_forward.3} parent=39 // pred_region
        %s1389 = smul.u32 32, %s15
        %p1390 = scmp.lt.s32.totalorder %s1389, 95
        %s1391 = scalar_select %p1390, %s1389, 95
        %s1392 = smul.addr %s1391, 8
        %s1393 = scalar_lea.vmem %s3, %s1392
      $region44: #{encoding_block_forward.3} parent=39 // pred_fallthru
        _
    $region40: #{encoding_block_forward.3} parent=5 // pred_fallthru
      _
  $region6: #{encoding_block_forward.3} parent=0 // loop_footer
    %s13 = sadd.s32 1, %s9
  $region7: #{encoding_block_forward.3} parent=0 // loop_footer_branch
    %8 = sbr.rel target = $region3
  $region8: #{encoding_block_forward.3} parent=0 // loop_exit
    _

// kernel: encoding_block_forward.2
$region0: #{encoding_block_forward.2}
  #allocation0 [shape = 'u32[]', space=smem, size = 0x4, offset = 0x4, fixed_abs, tag = 'smem constant byte address 0x4 - core index']
  #allocation1 [shape = 'u32[144,128]{1,0:T(1,128)}', space=vmem, size = 0x12000, scoped, tag = 'internal scratch']
  #allocation2 [shape = 'f32[336,128]{1,0:T(8,128)}', space=vmem, size = 0x2a000, scoped, tag = 'scratch operand']
  #allocation3 [shape = 'f32[336,1]{1,0:T(8,128)}', space=vmem, size = 0x2a000, scoped, tag = 'scratch operand']
  #allocation4 [shape = 'f32[336,128]{1,0:T(8,128)}', space=vmem, size = 0x2a000, scoped, tag = 'scratch operand']
  #allocation5 [shape = 'f32[336,128]{1,0:T(8,128)}', space=vmem, size = 0x2a000, scoped, tag = 'scratch operand']
  #allocation6 [shape = 's32[2]{0}', space=sflag, size = 0x8, scoped, tag = 'scratch operand']
  #allocation7 [shape = 's32[]', space=sflag, size = 0x4, offset = 0, fixed_abs, tag = 'sflag constant byte address 0x0 - dummy sync flag']
  #allocation8 [shape = 's32[]', space=sflag, size = 0x4, offset = 0, fixed_abs, tag = 'sflag constant byte address 0x0 - dummy sync flag']
  %s0 = inlined_call_operand.vmem [shape: f32[848,128], index: 0, kind: input, shape index: {}]
  %s1 = inlined_call_operand.vmem [shape: f32[848,1], index: 1, kind: input, shape index: {}]
  %s2 = inlined_call_operand.vmem [shape: f32[128,128], index: 2, kind: input, shape index: {}]
  %s3 = inlined_call_operand.vmem [shape: f32[1,128], index: 3, kind: input, shape index: {}]
  %s4 = inlined_call_operand.vmem [shape: f32[128,128], index: 4, kind: input, shape index: {}]
  %s5 = inlined_call_operand.vmem [shape: f32[1,128], index: 5, kind: input, shape index: {}]
  %s6 = inlined_call_operand.vmem [shape: f32[128,128], index: 6, kind: input, shape index: {}]
  %s7 = inlined_call_operand.vmem [shape: f32[1,128], index: 7, kind: input, shape index: {}]
  %s8 = inlined_call_operand.vmem [shape: f32[128,128], index: 8, kind: input, shape index: {}]
  %s9 = inlined_call_operand.vmem [shape: f32[1,128], index: 9, kind: input, shape index: {}]
  %s10 = inlined_call_operand.vmem [shape: f32[768,128], index: 10, kind: output, shape index: {0}]
  %s11 = inlined_call_operand.vmem [shape: f32[24,128], index: 11, kind: output, shape index: {1}]
  %12 = xla_tuple %s10, %s11
  %s13 = sld [smem:[#allocation0]]
  $region141: #{encoding_block_forward.2} parent=0
    _
  %s15 = ssub.s32 1, %s13
  %s16 = scalar_select 0, %s15, %s13
  loop: start=0, step=1, limit=5
  $region2: #{encoding_block_forward.2} parent=0 // loop_pre_header
    _
  $region3: #{encoding_block_forward.2} parent=0 // loop_header
    %s18 = sphi 0, %s22
    %p19 = scmp.ge.s32.totalorder %s18, 5
    %s26 = sphi 0, %s26
    %s28 = sphi 0, %s26
    %s29 = sphi 0, %s28
    %s43 = sphi 0, %s29
    %s47 = sphi 0, %s47
    %s49 = sphi 0, %s47
    %s50 = sphi 0, %s49
    %s64 = sphi 0, %s50
    %s68 = sphi 0, %s68
    %s70 = sphi 0, %s68
    %s71 = sphi 0, %s70
    %s85 = sphi 0, %s71
    %s89 = sphi 0, %s89
    %s91 = sphi 0, %s89
    %s92 = sphi 0, %s91
    %s106 = sphi 0, %s92
    %s110 = sphi 0, %s110
    %s112 = sphi 0, %s110
    %s113 = sphi 0, %s112
    %s127 = sphi 0, %s113
    %s131 = sphi 0, %s131
    %s133 = sphi 0, %s131
    %s134 = sphi 0, %s133
    %s148 = sphi 0, %s134
    %s152 = sphi 0, %s152
    %s154 = sphi 0, %s152
    %s155 = sphi 0, %s154
    %s169 = sphi 0, %s155
    %s173 = sphi 0, %s173
    %s175 = sphi 0, %s173
    %s176 = sphi 0, %s175
    %s190 = sphi 0, %s176
    %s196 = sphi 0, %s198
    %s199 = sphi 0, %s196
    %s200 = sphi 0, %s199
    %s216 = sphi 0, %s200
    %s222 = sphi 0, %s224
    %s225 = sphi 0, %s222
    %s226 = sphi 0, %s225
    %s242 = sphi 0, %s226
  $region4: #{encoding_block_forward.2} parent=0 // loop_header_branch
    %21 = sbr.rel (%p19) target = $region8
  $region5: #{encoding_block_forward.2} parent=0 // loop_body
    %s23 = ssub.s32 %s18, 1
    %s24 = ssub.s32 %s18, 2
    %s25 = sadd.s32 %s18, 1
    %s27 = sadd.s32 %s26, 1
    %p30 = scmp.eq.s32.totalorder %s18, 2
    %p31 = scmp.ne.s32.totalorder %s26, %s28
    %p32 = scmp.eq.s32.totalorder %s18, 0
    %p33 = por %p31, %p32
    %p34 = scmp.ne.s32.totalorder %s26, %s28
    %p35 = scmp.eq.s32.totalorder %s23, 2
    %p36 = por %p34, %p35
    %p37 = scmp.ne.s32.totalorder %s28, %s29
    %p38 = scmp.eq.s32.totalorder %s23, 0
    %p39 = por %p37, %p38
    %p40 = scmp.ne.s32.totalorder %s28, %s29
    %p41 = scmp.eq.s32.totalorder %s24, 2
    %p42 = por %p40, %p41
    %p44 = scmp.ne.s32.totalorder %s29, %s43
    %p45 = scmp.eq.s32.totalorder %s24, 0
    %p46 = por %p44, %p45
    %s48 = sadd.s32 %s47, 1
    %p51 = scmp.eq.s32.totalorder %s18, 2
    %p52 = scmp.ne.s32.totalorder %s47, %s49
    %p53 = scmp.eq.s32.totalorder %s18, 0
    %p54 = por %p52, %p53
    %p55 = scmp.ne.s32.totalorder %s47, %s49
    %p56 = scmp.eq.s32.totalorder %s23, 2
    %p57 = por %p55, %p56
    %p58 = scmp.ne.s32.totalorder %s49, %s50
    %p59 = scmp.eq.s32.totalorder %s23, 0
    %p60 = por %p58, %p59
    %p61 = scmp.ne.s32.totalorder %s49, %s50
    %p62 = scmp.eq.s32.totalorder %s24, 2
    %p63 = por %p61, %p62
    %p65 = scmp.ne.s32.totalorder %s50, %s64
    %p66 = scmp.eq.s32.totalorder %s24, 0
    %p67 = por %p65, %p66
    %s69 = sadd.s32 %s68, 1
    %p72 = scmp.eq.s32.totalorder %s18, 2
    %p73 = scmp.ne.s32.totalorder %s68, %s70
    %p74 = scmp.eq.s32.totalorder %s18, 0
    %p75 = por %p73, %p74
    %p76 = scmp.ne.s32.totalorder %s68, %s70
    %p77 = scmp.eq.s32.totalorder %s23, 2
    %p78 = por %p76, %p77
    %p79 = scmp.ne.s32.totalorder %s70, %s71
    %p80 = scmp.eq.s32.totalorder %s23, 0
    %p81 = por %p79, %p80
    %p82 = scmp.ne.s32.totalorder %s70, %s71
    %p83 = scmp.eq.s32.totalorder %s24, 2
    %p84 = por %p82, %p83
    %p86 = scmp.ne.s32.totalorder %s71, %s85
    %p87 = scmp.eq.s32.totalorder %s24, 0
    %p88 = por %p86, %p87
    %s90 = sadd.s32 %s89, 1
    %p93 = scmp.eq.s32.totalorder %s18, 2
    %p94 = scmp.ne.s32.totalorder %s89, %s91
    %p95 = scmp.eq.s32.totalorder %s18, 0
    %p96 = por %p94, %p95
    %p97 = scmp.ne.s32.totalorder %s89, %s91
    %p98 = scmp.eq.s32.totalorder %s23, 2
    %p99 = por %p97, %p98
    %p100 = scmp.ne.s32.totalorder %s91, %s92
    %p101 = scmp.eq.s32.totalorder %s23, 0
    %p102 = por %p100, %p101
    %p103 = scmp.ne.s32.totalorder %s91, %s92
    %p104 = scmp.eq.s32.totalorder %s24, 2
    %p105 = por %p103, %p104
    %p107 = scmp.ne.s32.totalorder %s92, %s106
    %p108 = scmp.eq.s32.totalorder %s24, 0
    %p109 = por %p107, %p108
    %s111 = sadd.s32 %s110, 1
    %p114 = scmp.eq.s32.totalorder %s18, 2
    %p115 = scmp.ne.s32.totalorder %s110, %s112
    %p116 = scmp.eq.s32.totalorder %s18, 0
    %p117 = por %p115, %p116
    %p118 = scmp.ne.s32.totalorder %s110, %s112
    %p119 = scmp.eq.s32.totalorder %s23, 2
    %p120 = por %p118, %p119
    %p121 = scmp.ne.s32.totalorder %s112, %s113
    %p122 = scmp.eq.s32.totalorder %s23, 0
    %p123 = por %p121, %p122
    %p124 = scmp.ne.s32.totalorder %s112, %s113
    %p125 = scmp.eq.s32.totalorder %s24, 2
    %p126 = por %p124, %p125
    %p128 = scmp.ne.s32.totalorder %s113, %s127
    %p129 = scmp.eq.s32.totalorder %s24, 0
    %p130 = por %p128, %p129
    %s132 = sadd.s32 %s131, 1
    %p135 = scmp.eq.s32.totalorder %s18, 2
    %p136 = scmp.ne.s32.totalorder %s131, %s133
    %p137 = scmp.eq.s32.totalorder %s18, 0
    %p138 = por %p136, %p137
    %p139 = scmp.ne.s32.totalorder %s131, %s133
    %p140 = scmp.eq.s32.totalorder %s23, 2
    %p141 = por %p139, %p140
    %p142 = scmp.ne.s32.totalorder %s133, %s134
    %p143 = scmp.eq.s32.totalorder %s23, 0
    %p144 = por %p142, %p143
    %p145 = scmp.ne.s32.totalorder %s133, %s134
    %p146 = scmp.eq.s32.totalorder %s24, 2
    %p147 = por %p145, %p146
    %p149 = scmp.ne.s32.totalorder %s134, %s148
    %p150 = scmp.eq.s32.totalorder %s24, 0
    %p151 = por %p149, %p150
    %s153 = sadd.s32 %s152, 1
    %p156 = scmp.eq.s32.totalorder %s18, 2
    %p157 = scmp.ne.s32.totalorder %s152, %s154
    %p158 = scmp.eq.s32.totalorder %s18, 0
    %p159 = por %p157, %p158
    %p160 = scmp.ne.s32.totalorder %s152, %s154
    %p161 = scmp.eq.s32.totalorder %s23, 2
    %p162 = por %p160, %p161
    %p163 = scmp.ne.s32.totalorder %s154, %s155
    %p164 = scmp.eq.s32.totalorder %s23, 0
    %p165 = por %p163, %p164
    %p166 = scmp.ne.s32.totalorder %s154, %s155
    %p167 = scmp.eq.s32.totalorder %s24, 2
    %p168 = por %p166, %p167
    %p170 = scmp.ne.s32.totalorder %s155, %s169
    %p171 = scmp.eq.s32.totalorder %s24, 0
    %p172 = por %p170, %p171
    %s174 = sadd.s32 %s173, 1
    %p177 = scmp.eq.s32.totalorder %s18, 2
    %p178 = scmp.ne.s32.totalorder %s173, %s175
    %p179 = scmp.eq.s32.totalorder %s18, 0
    %p180 = por %p178, %p179
    %p181 = scmp.ne.s32.totalorder %s173, %s175
    %p182 = scmp.eq.s32.totalorder %s23, 2
    %p183 = por %p181, %p182
    %p184 = scmp.ne.s32.totalorder %s175, %s176
    %p185 = scmp.eq.s32.totalorder %s23, 0
    %p186 = por %p184, %p185
    %p187 = scmp.ne.s32.totalorder %s175, %s176
    %p188 = scmp.eq.s32.totalorder %s24, 2
    %p189 = por %p187, %p188
    %p191 = scmp.ne.s32.totalorder %s176, %s190
    %p192 = scmp.eq.s32.totalorder %s24, 0
    %p193 = por %p191, %p192
    %s194 = ssub.s32 %s18, %s25
    %p195 = scmp.eq.s32.totalorder %s194, 0
    %s197 = sadd.s32 %s196, 1
    %s198 = scalar_select %p195, %s196, %s197
    %p201 = pneg %p195
    %p202 = scmp.eq.s32.totalorder %s18, 2
    %p203 = por %p201, %p202
    %p204 = scmp.ne.s32.totalorder %s196, %s199
    %p205 = scmp.eq.s32.totalorder %s18, 0
    %p206 = por %p204, %p205
    %p207 = scmp.ne.s32.totalorder %s196, %s199
    %p208 = scmp.eq.s32.totalorder %s23, 2
    %p209 = por %p207, %p208
    %p210 = scmp.ne.s32.totalorder %s199, %s200
    %p211 = scmp.eq.s32.totalorder %s23, 0
    %p212 = por %p210, %p211
    %p213 = scmp.ne.s32.totalorder %s199, %s200
    %p214 = scmp.eq.s32.totalorder %s24, 2
    %p215 = por %p213, %p214
    %p217 = scmp.ne.s32.totalorder %s200, %s216
    %p218 = scmp.eq.s32.totalorder %s24, 0
    %p219 = por %p217, %p218
    %s220 = ssub.s32 %s18, %s25
    %p221 = scmp.eq.s32.totalorder %s220, 0
    %s223 = sadd.s32 %s222, 1
    %s224 = scalar_select %p221, %s222, %s223
    %p227 = pneg %p221
    %p228 = scmp.eq.s32.totalorder %s18, 2
    %p229 = por %p227, %p228
    %p230 = scmp.ne.s32.totalorder %s222, %s225
    %p231 = scmp.eq.s32.totalorder %s18, 0
    %p232 = por %p230, %p231
    %p233 = scmp.ne.s32.totalorder %s222, %s225
    %p234 = scmp.eq.s32.totalorder %s23, 2
    %p235 = por %p233, %p234
    %p236 = scmp.ne.s32.totalorder %s225, %s226
    %p237 = scmp.eq.s32.totalorder %s23, 0
    %p238 = por %p236, %p237
    %p239 = scmp.ne.s32.totalorder %s225, %s226
    %p240 = scmp.eq.s32.totalorder %s24, 2
    %p241 = por %p239, %p240
    %p243 = scmp.ne.s32.totalorder %s226, %s242
    %p244 = scmp.eq.s32.totalorder %s24, 0
    %p245 = por %p243, %p244
    %p246 = scmp.le.s32.totalorder 1, %s18
    %p247 = scmp.lt.s32.totalorder %s18, 4
    %p248 = pnand %p246, %p247
    %p249 = pneg %p248
    // Predicated region
    $region9: #{encoding_block_forward.2} parent=5 // pred_check
      _
    $region10: #{encoding_block_forward.2} parent=5 // pred_check_branch
      %251 = sbr.rel (%p248) target = $region12
    $region11: #{encoding_block_forward.2} parent=5 // pred_region
      %s252 = ssub.s32 %s18, 1
      // Predicated region
      $region13: #{encoding_block_forward.2} parent=11 // pred_check
        %p253 = pneg %p39
      $region14: #{encoding_block_forward.2} parent=11 // pred_check_branch
        %255 = sbr.rel (%p253) target = $region16
      $region15: #{encoding_block_forward.2} parent=11 // pred_region
        _
      $region16: #{encoding_block_forward.2} parent=11 // pred_fallthru
        _
      // Predicated region
      $region17: #{encoding_block_forward.2} parent=11 // pred_check
        %p256 = pneg %p60
      $region18: #{encoding_block_forward.2} parent=11 // pred_check_branch
        %258 = sbr.rel (%p256) target = $region20
      $region19: #{encoding_block_forward.2} parent=11 // pred_region
        _
      $region20: #{encoding_block_forward.2} parent=11 // pred_fallthru
        _
      // Predicated region
      $region21: #{encoding_block_forward.2} parent=11 // pred_check
        %p259 = pneg %p81
      $region22: #{encoding_block_forward.2} parent=11 // pred_check_branch
        %261 = sbr.rel (%p259) target = $region24
      $region23: #{encoding_block_forward.2} parent=11 // pred_region
        _
      $region24: #{encoding_block_forward.2} parent=11 // pred_fallthru
        _
      // Predicated region
      $region25: #{encoding_block_forward.2} parent=11 // pred_check
        %p262 = pneg %p102
      $region26: #{encoding_block_forward.2} parent=11 // pred_check_branch
        %264 = sbr.rel (%p262) target = $region28
      $region27: #{encoding_block_forward.2} parent=11 // pred_region
        _
      $region28: #{encoding_block_forward.2} parent=11 // pred_fallthru
        _
      // Predicated region
      $region29: #{encoding_block_forward.2} parent=11 // pred_check
        %p265 = pneg %p123
      $region30: #{encoding_block_forward.2} parent=11 // pred_check_branch
        %267 = sbr.rel (%p265) target = $region32
      $region31: #{encoding_block_forward.2} parent=11 // pred_region
        _
      $region32: #{encoding_block_forward.2} parent=11 // pred_fallthru
        _
      // Predicated region
      $region33: #{encoding_block_forward.2} parent=11 // pred_check
        %p268 = pneg %p144
      $region34: #{encoding_block_forward.2} parent=11 // pred_check_branch
        %270 = sbr.rel (%p268) target = $region36
      $region35: #{encoding_block_forward.2} parent=11 // pred_region
        _
      $region36: #{encoding_block_forward.2} parent=11 // pred_fallthru
        _
      // Predicated region
      $region37: #{encoding_block_forward.2} parent=11 // pred_check
        %p271 = pneg %p165
      $region38: #{encoding_block_forward.2} parent=11 // pred_check_branch
        %273 = sbr.rel (%p271) target = $region40
      $region39: #{encoding_block_forward.2} parent=11 // pred_region
        _
      $region40: #{encoding_block_forward.2} parent=11 // pred_fallthru
        _
      // Predicated region
      $region41: #{encoding_block_forward.2} parent=11 // pred_check
        %p274 = pneg %p186
      $region42: #{encoding_block_forward.2} parent=11 // pred_check_branch
        %276 = sbr.rel (%p274) target = $region44
      $region43: #{encoding_block_forward.2} parent=11 // pred_region
        _
      $region44: #{encoding_block_forward.2} parent=11 // pred_fallthru
        _
    $region12: #{encoding_block_forward.2} parent=5 // pred_fallthru
      _
    %p277 = scmp.lt.s32.totalorder %s18, 3
    // Predicated region
    $region45: #{encoding_block_forward.2} parent=5 // pred_check
      %p278 = pneg %p277
    $region46: #{encoding_block_forward.2} parent=5 // pred_check_branch
      %280 = sbr.rel (%p278) target = $region48
    $region47: #{encoding_block_forward.2} parent=5 // pred_region
      _
    $region48: #{encoding_block_forward.2} parent=5 // pred_fallthru
      _
    %p281 = scmp.le.s32.totalorder 1, %s18
    %p282 = scmp.lt.s32.totalorder %s18, 4
    %p283 = pnand %p281, %p282
    %p284 = pneg %p283
    // Predicated region
    $region49: #{encoding_block_forward.2} parent=5 // pred_check
      _
    $region50: #{encoding_block_forward.2} parent=5 // pred_check_branch
      %286 = sbr.rel (%p283) target = $region52
    $region51: #{encoding_block_forward.2} parent=5 // pred_region
      %s287 = ssub.s32 %s18, 1
      %p288 = pneg %p39
      %p289 = pneg %p36
      %p290 = pneg %p60
      %p291 = pneg %p57
      %p292 = pneg %p81
      %p293 = pneg %p78
      %p294 = pneg %p102
      %p295 = pneg %p99
      %p296 = pneg %p123
      %p297 = pneg %p120
      %p298 = pneg %p144
      %p299 = pneg %p141
      %p300 = pneg %p165
      %p301 = pneg %p162
      %p302 = pneg %p186
      %p303 = pneg %p183
      %p304 = pneg %p212
      %p305 = pneg %p209
      %s306 = smul.u32 32, %s23
      %p307 = scmp.lt.s32.totalorder %s306, 95
      %s308 = scalar_select %p307, %s306, 95
      %s309 = smul.addr %s308, 8
      %s310 = scalar_lea.vmem %s10, %s309
      %p311 = pneg %p238
      %p312 = pneg %p235
      %p313 = scmp.lt.s32.totalorder %s23, 2
      %s314 = scalar_select %p313, %s23, 2
      %s315 = smul.addr %s314, 8
      %s316 = scalar_lea.vmem %s11, %s315
      %s317 = smul.u32 32, %s23
      %p318 = scmp.lt.s32.totalorder %s317, 95
      %s319 = scalar_select %p318, %s317, 95
      %s320 = smul.addr %s319, 8
      %s321 = scalar_lea.vmem %s10, %s320
      %s322 = smul.u32 32, %s23
      %p323 = scmp.lt.s32.totalorder %s23, 2
      %s324 = scalar_select %p323, %s23, 2
      %s325 = smul.addr %s324, 8
      %s326 = scalar_lea.vmem %s11, %s325
      %s328 = smul.u32 %s23, 256
      %s329 = scalar_lea.vmem %s0, %s328
      %p331 = scmp.lt.u32.totalorder 336, 8
      %p332 = pneg %p331
      // Predicated region
      $region53: #{encoding_block_forward.2} parent=51 // pred_check
        _
      $region54: #{encoding_block_forward.2} parent=51 // pred_check_branch
        %334 = sbr.rel (%p331) target = $region56
      $region55: #{encoding_block_forward.2} parent=51 // pred_region
        %s349 = sand.u32 336, 7
        %p350 = scmp.eq.s32.totalorder %s349, 0
        // Predicated region
        $region68: #{encoding_block_forward.2} parent=55 // pred_check
          %p351 = pneg %p350
        $region69: #{encoding_block_forward.2} parent=55 // pred_check_branch
          %353 = sbr.rel (%p351) target = $region71
        $region70: #{encoding_block_forward.2} parent=55 // pred_region
          loop: start=0, step=1, limit=1
          $region72: #{encoding_block_forward.2} parent=70 // loop_pre_header
            _
          $region73: #{encoding_block_forward.2} parent=70 // loop_header
            %s355 = sphi 0, %s359
            %p356 = scmp.ge.s32.totalorder %s355, 1
            %s360 = sphi %s329, %s329
            %s361 = sphi [#allocation2], [#allocation2]
          $region74: #{encoding_block_forward.2} parent=70 // loop_header_branch
            %358 = sbr.rel (%p356) target = $region78
          $region75: #{encoding_block_forward.2} parent=70 // loop_body
            %v362 = vld [vmem:[%s360] sm:$0xff]
            %363 = vst [vmem:[%s361] sm:$0xff] %v362
            %v364 = vld [vmem:[%s360 + $0x8] sm:$0xff]
            %365 = vst [vmem:[%s361 + $0x8] sm:$0xff] %v364
            %v366 = vld [vmem:[%s360 + $0x10] sm:$0xff]
            %367 = vst [vmem:[%s361 + $0x10] sm:$0xff] %v366
            %v368 = vld [vmem:[%s360 + $0x18] sm:$0xff]
            %369 = vst [vmem:[%s361 + $0x18] sm:$0xff] %v368
            %v370 = vld [vmem:[%s360 + $0x20] sm:$0xff]
            %371 = vst [vmem:[%s361 + $0x20] sm:$0xff] %v370
            %v372 = vld [vmem:[%s360 + $0x28] sm:$0xff]
            %373 = vst [vmem:[%s361 + $0x28] sm:$0xff] %v372
            %v374 = vld [vmem:[%s360 + $0x30] sm:$0xff]
            %375 = vst [vmem:[%s361 + $0x30] sm:$0xff] %v374
            %v376 = vld [vmem:[%s360 + $0x38] sm:$0xff]
            %377 = vst [vmem:[%s361 + $0x38] sm:$0xff] %v376
            %v378 = vld [vmem:[%s360 + $0x40] sm:$0xff]
            %379 = vst [vmem:[%s361 + $0x40] sm:$0xff] %v378
            %v380 = vld [vmem:[%s360 + $0x48] sm:$0xff]
            %381 = vst [vmem:[%s361 + $0x48] sm:$0xff] %v380
            %v382 = vld [vmem:[%s360 + $0x50] sm:$0xff]
            %383 = vst [vmem:[%s361 + $0x50] sm:$0xff] %v382
            %v384 = vld [vmem:[%s360 + $0x58] sm:$0xff]
            %385 = vst [vmem:[%s361 + $0x58] sm:$0xff] %v384
            %v386 = vld [vmem:[%s360 + $0x60] sm:$0xff]
            %387 = vst [vmem:[%s361 + $0x60] sm:$0xff] %v386
            %v388 = vld [vmem:[%s360 + $0x68] sm:$0xff]
            %389 = vst [vmem:[%s361 + $0x68] sm:$0xff] %v388
            %v390 = vld [vmem:[%s360 + $0x70] sm:$0xff]
            %391 = vst [vmem:[%s361 + $0x70] sm:$0xff] %v390
            %v392 = vld [vmem:[%s360 + $0x78] sm:$0xff]
            %393 = vst [vmem:[%s361 + $0x78] sm:$0xff] %v392
            %v394 = vld [vmem:[%s360 + $0x80] sm:$0xff]
            %395 = vst [vmem:[%s361 + $0x80] sm:$0xff] %v394
            %v396 = vld [vmem:[%s360 + $0x88] sm:$0xff]
            %397 = vst [vmem:[%s361 + $0x88] sm:$0xff] %v396
            %v398 = vld [vmem:[%s360 + $0x90] sm:$0xff]
            %399 = vst [vmem:[%s361 + $0x90] sm:$0xff] %v398
            %v400 = vld [vmem:[%s360 + $0x98] sm:$0xff]
            %401 = vst [vmem:[%s361 + $0x98] sm:$0xff] %v400
            %v402 = vld [vmem:[%s360 + $0xa0] sm:$0xff]
            %403 = vst [vmem:[%s361 + $0xa0] sm:$0xff] %v402
            %v404 = vld [vmem:[%s360 + $0xa8] sm:$0xff]
            %405 = vst [vmem:[%s361 + $0xa8] sm:$0xff] %v404
            %v406 = vld [vmem:[%s360 + $0xb0] sm:$0xff]
            %407 = vst [vmem:[%s361 + $0xb0] sm:$0xff] %v406
            %v408 = vld [vmem:[%s360 + $0xb8] sm:$0xff]
            %409 = vst [vmem:[%s361 + $0xb8] sm:$0xff] %v408
            %v410 = vld [vmem:[%s360 + $0xc0] sm:$0xff]
            %411 = vst [vmem:[%s361 + $0xc0] sm:$0xff] %v410
            %v412 = vld [vmem:[%s360 + $0xc8] sm:$0xff]
            %413 = vst [vmem:[%s361 + $0xc8] sm:$0xff] %v412
            %v414 = vld [vmem:[%s360 + $0xd0] sm:$0xff]
            %415 = vst [vmem:[%s361 + $0xd0] sm:$0xff] %v414
            %v416 = vld [vmem:[%s360 + $0xd8] sm:$0xff]
            %417 = vst [vmem:[%s361 + $0xd8] sm:$0xff] %v416
            %v418 = vld [vmem:[%s360 + $0xe0] sm:$0xff]
            %419 = vst [vmem:[%s361 + $0xe0] sm:$0xff] %v418
            %v420 = vld [vmem:[%s360 + $0xe8] sm:$0xff]
            %421 = vst [vmem:[%s361 + $0xe8] sm:$0xff] %v420
            %v422 = vld [vmem:[%s360 + $0xf0] sm:$0xff]
            %423 = vst [vmem:[%s361 + $0xf0] sm:$0xff] %v422
            %v424 = vld [vmem:[%s360 + $0xf8] sm:$0xff]
            %425 = vst [vmem:[%s361 + $0xf8] sm:$0xff] %v424
            %v426 = vld [vmem:[%s360 + $0x100] sm:$0xff]
            %427 = vst [vmem:[%s361 + $0x100] sm:$0xff] %v426
            %v428 = vld [vmem:[%s360 + $0x108] sm:$0xff]
            %429 = vst [vmem:[%s361 + $0x108] sm:$0xff] %v428
            %v430 = vld [vmem:[%s360 + $0x110] sm:$0xff]
            %431 = vst [vmem:[%s361 + $0x110] sm:$0xff] %v430
            %v432 = vld [vmem:[%s360 + $0x118] sm:$0xff]
            %433 = vst [vmem:[%s361 + $0x118] sm:$0xff] %v432
            %v434 = vld [vmem:[%s360 + $0x120] sm:$0xff]
            %435 = vst [vmem:[%s361 + $0x120] sm:$0xff] %v434
            %v436 = vld [vmem:[%s360 + $0x128] sm:$0xff]
            %437 = vst [vmem:[%s361 + $0x128] sm:$0xff] %v436
            %v438 = vld [vmem:[%s360 + $0x130] sm:$0xff]
            %439 = vst [vmem:[%s361 + $0x130] sm:$0xff] %v438
            %v440 = vld [vmem:[%s360 + $0x138] sm:$0xff]
            %441 = vst [vmem:[%s361 + $0x138] sm:$0xff] %v440
            %v442 = vld [vmem:[%s360 + $0x140] sm:$0xff]
            %443 = vst [vmem:[%s361 + $0x140] sm:$0xff] %v442
            %v444 = vld [vmem:[%s360 + $0x148] sm:$0xff]
            %445 = vst [vmem:[%s361 + $0x148] sm:$0xff] %v444
          $region76: #{encoding_block_forward.2} parent=70 // loop_footer
            %s359 = sadd.s32 1, %s355
          $region77: #{encoding_block_forward.2} parent=70 // loop_footer_branch
            %354 = sbr.rel target = $region73
          $region78: #{encoding_block_forward.2} parent=70 // loop_exit
            _
        $region71: #{encoding_block_forward.2} parent=55 // pred_fallthru
          _
        %p446 = pneg %p350
        // Predicated region
        $region79: #{encoding_block_forward.2} parent=55 // pred_check
          _
        $region80: #{encoding_block_forward.2} parent=55 // pred_check_branch
          %448 = sbr.rel (%p350) target = $region82
        $region81: #{encoding_block_forward.2} parent=55 // pred_region
          %s449 = sand.u32 336, 7
        $region82: #{encoding_block_forward.2} parent=55 // pred_fallthru
          _
      $region56: #{encoding_block_forward.2} parent=51 // pred_fallthru
        _
      // Predicated region
      $region57: #{encoding_block_forward.2} parent=51 // pred_check
        %p335 = pneg %p331
      $region58: #{encoding_block_forward.2} parent=51 // pred_check_branch
        %337 = sbr.rel (%p335) target = $region60
      $region59: #{encoding_block_forward.2} parent=51 // pred_region
        %s338 = sshllo.u32 0, 336
        loop: start=0, step=1, limit=1
        $region61: #{encoding_block_forward.2} parent=59 // loop_pre_header
          _
        $region62: #{encoding_block_forward.2} parent=59 // loop_header
          %s340 = sphi 0, %s344
          %p341 = scmp.ge.s32.totalorder %s340, 1
          %s345 = sphi %s329, %s329
          %s346 = sphi [#allocation2], [#allocation2]
        $region63: #{encoding_block_forward.2} parent=59 // loop_header_branch
          %343 = sbr.rel (%p341) target = $region67
        $region64: #{encoding_block_forward.2} parent=59 // loop_body
          %v347 = vld [vmem:[%s345] sm:%s338]
          %348 = vst [vmem:[%s346] sm:%s338] %v347
        $region65: #{encoding_block_forward.2} parent=59 // loop_footer
          %s344 = sadd.s32 1, %s340
        $region66: #{encoding_block_forward.2} parent=59 // loop_footer_branch
          %339 = sbr.rel target = $region62
        $region67: #{encoding_block_forward.2} parent=59 // loop_exit
          _
      $region60: #{encoding_block_forward.2} parent=51 // pred_fallthru
        _
      // Predicated region
      $region83: #{encoding_block_forward.2} parent=51 // pred_check
        _
      $region84: #{encoding_block_forward.2} parent=51 // pred_check_branch
        %452 = sbr.rel (0) target = $region86
      $region85: #{encoding_block_forward.2} parent=51 // pred_region
        %453 = vsyncadd [#allocation6], 5376
      $region86: #{encoding_block_forward.2} parent=51 // pred_fallthru
        _
      %s454 = scalar_lea.vmem %s1, %s328
      %s455 = scalar_lea.sflag [#allocation6], 1
      %p457 = scmp.lt.u32.totalorder 336, 8
      %p458 = pneg %p457
      // Predicated region
      $region87: #{encoding_block_forward.2} parent=51 // pred_check
        _
      $region88: #{encoding_block_forward.2} parent=51 // pred_check_branch
        %460 = sbr.rel (%p457) target = $region90
      $region89: #{encoding_block_forward.2} parent=51 // pred_region
        %s475 = sand.u32 336, 7
        %p476 = scmp.eq.s32.totalorder %s475, 0
        // Predicated region
        $region102: #{encoding_block_forward.2} parent=89 // pred_check
          %p477 = pneg %p476
        $region103: #{encoding_block_forward.2} parent=89 // pred_check_branch
          %479 = sbr.rel (%p477) target = $region105
        $region104: #{encoding_block_forward.2} parent=89 // pred_region
          loop: start=0, step=1, limit=1
          $region106: #{encoding_block_forward.2} parent=104 // loop_pre_header
            _
          $region107: #{encoding_block_forward.2} parent=104 // loop_header
            %s481 = sphi 0, %s485
            %p482 = scmp.ge.s32.totalorder %s481, 1
            %s486 = sphi %s454, %s454
            %s487 = sphi [#allocation3], [#allocation3]
          $region108: #{encoding_block_forward.2} parent=104 // loop_header_branch
            %484 = sbr.rel (%p482) target = $region112
          $region109: #{encoding_block_forward.2} parent=104 // loop_body
            %v488 = vld [vmem:[%s486] sm:$0xff]
            %489 = vst [vmem:[%s487] sm:$0xff] %v488
            %v490 = vld [vmem:[%s486 + $0x8] sm:$0xff]
            %491 = vst [vmem:[%s487 + $0x8] sm:$0xff] %v490
            %v492 = vld [vmem:[%s486 + $0x10] sm:$0xff]
            %493 = vst [vmem:[%s487 + $0x10] sm:$0xff] %v492
            %v494 = vld [vmem:[%s486 + $0x18] sm:$0xff]
            %495 = vst [vmem:[%s487 + $0x18] sm:$0xff] %v494
            %v496 = vld [vmem:[%s486 + $0x20] sm:$0xff]
            %497 = vst [vmem:[%s487 + $0x20] sm:$0xff] %v496
            %v498 = vld [vmem:[%s486 + $0x28] sm:$0xff]
            %499 = vst [vmem:[%s487 + $0x28] sm:$0xff] %v498
            %v500 = vld [vmem:[%s486 + $0x30] sm:$0xff]
            %501 = vst [vmem:[%s487 + $0x30] sm:$0xff] %v500
            %v502 = vld [vmem:[%s486 + $0x38] sm:$0xff]
            %503 = vst [vmem:[%s487 + $0x38] sm:$0xff] %v502
            %v504 = vld [vmem:[%s486 + $0x40] sm:$0xff]
            %505 = vst [vmem:[%s487 + $0x40] sm:$0xff] %v504
            %v506 = vld [vmem:[%s486 + $0x48] sm:$0xff]
            %507 = vst [vmem:[%s487 + $0x48] sm:$0xff] %v506
            %v508 = vld [vmem:[%s486 + $0x50] sm:$0xff]
            %509 = vst [vmem:[%s487 + $0x50] sm:$0xff] %v508
            %v510 = vld [vmem:[%s486 + $0x58] sm:$0xff]
            %511 = vst [vmem:[%s487 + $0x58] sm:$0xff] %v510
            %v512 = vld [vmem:[%s486 + $0x60] sm:$0xff]
            %513 = vst [vmem:[%s487 + $0x60] sm:$0xff] %v512
            %v514 = vld [vmem:[%s486 + $0x68] sm:$0xff]
            %515 = vst [vmem:[%s487 + $0x68] sm:$0xff] %v514
            %v516 = vld [vmem:[%s486 + $0x70] sm:$0xff]
            %517 = vst [vmem:[%s487 + $0x70] sm:$0xff] %v516
            %v518 = vld [vmem:[%s486 + $0x78] sm:$0xff]
            %519 = vst [vmem:[%s487 + $0x78] sm:$0xff] %v518
            %v520 = vld [vmem:[%s486 + $0x80] sm:$0xff]
            %521 = vst [vmem:[%s487 + $0x80] sm:$0xff] %v520
            %v522 = vld [vmem:[%s486 + $0x88] sm:$0xff]
            %523 = vst [vmem:[%s487 + $0x88] sm:$0xff] %v522
            %v524 = vld [vmem:[%s486 + $0x90] sm:$0xff]
            %525 = vst [vmem:[%s487 + $0x90] sm:$0xff] %v524
            %v526 = vld [vmem:[%s486 + $0x98] sm:$0xff]
            %527 = vst [vmem:[%s487 + $0x98] sm:$0xff] %v526
            %v528 = vld [vmem:[%s486 + $0xa0] sm:$0xff]
            %529 = vst [vmem:[%s487 + $0xa0] sm:$0xff] %v528
            %v530 = vld [vmem:[%s486 + $0xa8] sm:$0xff]
            %531 = vst [vmem:[%s487 + $0xa8] sm:$0xff] %v530
            %v532 = vld [vmem:[%s486 + $0xb0] sm:$0xff]
            %533 = vst [vmem:[%s487 + $0xb0] sm:$0xff] %v532
            %v534 = vld [vmem:[%s486 + $0xb8] sm:$0xff]
            %535 = vst [vmem:[%s487 + $0xb8] sm:$0xff] %v534
            %v536 = vld [vmem:[%s486 + $0xc0] sm:$0xff]
            %537 = vst [vmem:[%s487 + $0xc0] sm:$0xff] %v536
            %v538 = vld [vmem:[%s486 + $0xc8] sm:$0xff]
            %539 = vst [vmem:[%s487 + $0xc8] sm:$0xff] %v538
            %v540 = vld [vmem:[%s486 + $0xd0] sm:$0xff]
            %541 = vst [vmem:[%s487 + $0xd0] sm:$0xff] %v540
            %v542 = vld [vmem:[%s486 + $0xd8] sm:$0xff]
            %543 = vst [vmem:[%s487 + $0xd8] sm:$0xff] %v542
            %v544 = vld [vmem:[%s486 + $0xe0] sm:$0xff]
            %545 = vst [vmem:[%s487 + $0xe0] sm:$0xff] %v544
            %v546 = vld [vmem:[%s486 + $0xe8] sm:$0xff]
            %547 = vst [vmem:[%s487 + $0xe8] sm:$0xff] %v546
            %v548 = vld [vmem:[%s486 + $0xf0] sm:$0xff]
            %549 = vst [vmem:[%s487 + $0xf0] sm:$0xff] %v548
            %v550 = vld [vmem:[%s486 + $0xf8] sm:$0xff]
            %551 = vst [vmem:[%s487 + $0xf8] sm:$0xff] %v550
            %v552 = vld [vmem:[%s486 + $0x100] sm:$0xff]
            %553 = vst [vmem:[%s487 + $0x100] sm:$0xff] %v552
            %v554 = vld [vmem:[%s486 + $0x108] sm:$0xff]
            %555 = vst [vmem:[%s487 + $0x108] sm:$0xff] %v554
            %v556 = vld [vmem:[%s486 + $0x110] sm:$0xff]
            %557 = vst [vmem:[%s487 + $0x110] sm:$0xff] %v556
            %v558 = vld [vmem:[%s486 + $0x118] sm:$0xff]
            %559 = vst [vmem:[%s487 + $0x118] sm:$0xff] %v558
            %v560 = vld [vmem:[%s486 + $0x120] sm:$0xff]
            %561 = vst [vmem:[%s487 + $0x120] sm:$0xff] %v560
            %v562 = vld [vmem:[%s486 + $0x128] sm:$0xff]
            %563 = vst [vmem:[%s487 + $0x128] sm:$0xff] %v562
            %v564 = vld [vmem:[%s486 + $0x130] sm:$0xff]
            %565 = vst [vmem:[%s487 + $0x130] sm:$0xff] %v564
            %v566 = vld [vmem:[%s486 + $0x138] sm:$0xff]
            %567 = vst [vmem:[%s487 + $0x138] sm:$0xff] %v566
            %v568 = vld [vmem:[%s486 + $0x140] sm:$0xff]
            %569 = vst [vmem:[%s487 + $0x140] sm:$0xff] %v568
            %v570 = vld [vmem:[%s486 + $0x148] sm:$0xff]
            %571 = vst [vmem:[%s487 + $0x148] sm:$0xff] %v570
          $region110: #{encoding_block_forward.2} parent=104 // loop_footer
            %s485 = sadd.s32 1, %s481
          $region111: #{encoding_block_forward.2} parent=104 // loop_footer_branch
            %480 = sbr.rel target = $region107
          $region112: #{encoding_block_forward.2} parent=104 // loop_exit
            _
        $region105: #{encoding_block_forward.2} parent=89 // pred_fallthru
          _
        %p572 = pneg %p476
        // Predicated region
        $region113: #{encoding_block_forward.2} parent=89 // pred_check
          _
        $region114: #{encoding_block_forward.2} parent=89 // pred_check_branch
          %574 = sbr.rel (%p476) target = $region116
        $region115: #{encoding_block_forward.2} parent=89 // pred_region
          %s575 = sand.u32 336, 7
        $region116: #{encoding_block_forward.2} parent=89 // pred_fallthru
          _
      $region90: #{encoding_block_forward.2} parent=51 // pred_fallthru
        _
      // Predicated region
      $region91: #{encoding_block_forward.2} parent=51 // pred_check
        %p461 = pneg %p457
      $region92: #{encoding_block_forward.2} parent=51 // pred_check_branch
        %463 = sbr.rel (%p461) target = $region94
      $region93: #{encoding_block_forward.2} parent=51 // pred_region
        %s464 = sshllo.u32 0, 336
        loop: start=0, step=1, limit=1
        $region95: #{encoding_block_forward.2} parent=93 // loop_pre_header
          _
        $region96: #{encoding_block_forward.2} parent=93 // loop_header
          %s466 = sphi 0, %s470
          %p467 = scmp.ge.s32.totalorder %s466, 1
          %s471 = sphi %s454, %s454
          %s472 = sphi [#allocation3], [#allocation3]
        $region97: #{encoding_block_forward.2} parent=93 // loop_header_branch
          %469 = sbr.rel (%p467) target = $region101
        $region98: #{encoding_block_forward.2} parent=93 // loop_body
          %v473 = vld [vmem:[%s471] sm:%s464]
          %474 = vst [vmem:[%s472] sm:%s464] %v473
        $region99: #{encoding_block_forward.2} parent=93 // loop_footer
          %s470 = sadd.s32 1, %s466
        $region100: #{encoding_block_forward.2} parent=93 // loop_footer_branch
          %465 = sbr.rel target = $region96
        $region101: #{encoding_block_forward.2} parent=93 // loop_exit
          _
      $region94: #{encoding_block_forward.2} parent=51 // pred_fallthru
        _
      // Predicated region
      $region117: #{encoding_block_forward.2} parent=51 // pred_check
        _
      $region118: #{encoding_block_forward.2} parent=51 // pred_check_branch
        %578 = sbr.rel (0) target = $region120
      $region119: #{encoding_block_forward.2} parent=51 // pred_region
        %579 = vsyncadd %s455, 5376
      $region120: #{encoding_block_forward.2} parent=51 // pred_fallthru
        _
      %s580 = smul.u32 336, 1
      %s581 = sshll.u32 %s580, 4
      %582 = dma.done [#allocation6], %s581
      %s583 = sshll.u32 %s580, 4
      %584 = dma.done %s455, %s583
      %v585 = vld [vmem:[#allocation2] sm:$0xff]
      %v586 = vld [vmem:[#allocation2 + $0x8] sm:$0xff]
      %v587 = vld [vmem:[#allocation2 + $0x10] sm:$0xff]
      %v588 = vld [vmem:[#allocation2 + $0x18] sm:$0xff]
      %v589 = vld [vmem:[#allocation2 + $0x20] sm:$0xff]
      %v590 = vld [vmem:[#allocation2 + $0x28] sm:$0xff]
      %v591 = vld [vmem:[#allocation2 + $0x30] sm:$0xff]
      %v592 = vld [vmem:[#allocation2 + $0x38] sm:$0xff]
      %v593 = vld [vmem:[#allocation2 + $0x40] sm:$0xff]
      %v594 = vld [vmem:[#allocation2 + $0x48] sm:$0xff]
      %v595 = vld [vmem:[#allocation2 + $0x50] sm:$0xff]
      %v596 = vld [vmem:[#allocation2 + $0x58] sm:$0xff]
      %v597 = vld [vmem:[#allocation2 + $0x60] sm:$0xff]
      %v598 = vld [vmem:[#allocation2 + $0x68] sm:$0xff]
      %v599 = vld [vmem:[#allocation2 + $0x70] sm:$0xff]
      %v600 = vld [vmem:[#allocation2 + $0x78] sm:$0xff]
      %v601 = vld [vmem:[#allocation2 + $0x80] sm:$0xff]
      %v602 = vld [vmem:[#allocation2 + $0x88] sm:$0xff]
      %v603 = vld [vmem:[#allocation2 + $0x90] sm:$0xff]
      %v604 = vld [vmem:[#allocation2 + $0x98] sm:$0xff]
      %v605 = vld [vmem:[#allocation2 + $0xa0] sm:$0xff]
      %v606 = vld [vmem:[#allocation2 + $0xa8] sm:$0xff]
      %v607 = vld [vmem:[#allocation2 + $0xb0] sm:$0xff]
      %v608 = vld [vmem:[#allocation2 + $0xb8] sm:$0xff]
      %v609 = vld [vmem:[#allocation2 + $0xc0] sm:$0xff]
      %v610 = vld [vmem:[#allocation2 + $0xc8] sm:$0xff]
      %v611 = vld [vmem:[#allocation2 + $0xd0] sm:$0xff]
      %v612 = vld [vmem:[#allocation2 + $0xd8] sm:$0xff]
      %v613 = vld [vmem:[#allocation2 + $0xe0] sm:$0xff]
      %v614 = vld [vmem:[#allocation2 + $0xe8] sm:$0xff]
      %v615 = vld [vmem:[#allocation2 + $0xf0] sm:$0xff]
      %v616 = vld [vmem:[#allocation2 + $0xf8] sm:$0xff]
      %v617 = vld [vmem:[#allocation2 + $0x100] sm:$0xff]
      %v618 = vld [vmem:[#allocation2 + $0x108] sm:$0xff]
      %v619 = vld [vmem:[#allocation2 + $0x110] sm:$0xff]
      %v620 = vld [vmem:[#allocation2 + $0x118] sm:$0xff]
      %v621 = vld [vmem:[#allocation2 + $0x120] sm:$0xff]
      %v622 = vld [vmem:[#allocation2 + $0x128] sm:$0xff]
      %v623 = vld [vmem:[#allocation2 + $0x130] sm:$0xff]
      %v624 = vld [vmem:[#allocation2 + $0x138] sm:$0xff]
      %v625 = vld [vmem:[#allocation2 + $0x140] sm:$0xff]
      %v626 = vld [vmem:[#allocation2 + $0x148] sm:$0xff]
      %v627 = vld [vmem:[%s2] sm:$0xff]
      %v628 = vld [vmem:[%s2 + $0x8] sm:$0xff]
      %v629 = vld [vmem:[%s2 + $0x10] sm:$0xff]
      %v630 = vld [vmem:[%s2 + $0x18] sm:$0xff]
      %v631 = vld [vmem:[%s2 + $0x20] sm:$0xff]
      %v632 = vld [vmem:[%s2 + $0x28] sm:$0xff]
      %v633 = vld [vmem:[%s2 + $0x30] sm:$0xff]
      %v634 = vld [vmem:[%s2 + $0x38] sm:$0xff]
      %v635 = vld [vmem:[%s2 + $0x40] sm:$0xff]
      %v636 = vld [vmem:[%s2 + $0x48] sm:$0xff]
      %v637 = vld [vmem:[%s2 + $0x50] sm:$0xff]
      %v638 = vld [vmem:[%s2 + $0x58] sm:$0xff]
      %v639 = vld [vmem:[%s2 + $0x60] sm:$0xff]
      %v640 = vld [vmem:[%s2 + $0x68] sm:$0xff]
      %v641 = vld [vmem:[%s2 + $0x70] sm:$0xff]
      %v642 = vld [vmem:[%s2 + $0x78] sm:$0xff]
      %v643 = vpack.c.bf16 %v586, %v585
      %v644 = vpack.c.bf16 %v588, %v587
      %v645 = vpack.c.bf16 %v590, %v589
      %v646 = vpack.c.bf16 %v592, %v591
      %v647 = vpack.c.bf16 %v594, %v593
      %v648 = vpack.c.bf16 %v596, %v595
      %v649 = vpack.c.bf16 %v598, %v597
      %v650 = vpack.c.bf16 %v600, %v599
      %v651 = vpack.c.bf16 %v602, %v601
      %v652 = vpack.c.bf16 %v604, %v603
      %v653 = vpack.c.bf16 %v606, %v605
      %v654 = vpack.c.bf16 %v608, %v607
      %v655 = vpack.c.bf16 %v610, %v609
      %v656 = vpack.c.bf16 %v612, %v611
      %v657 = vpack.c.bf16 %v614, %v613
      %v658 = vpack.c.bf16 %v616, %v615
      %v659 = vpack.c.bf16 %v618, %v617
      %v660 = vpack.c.bf16 %v620, %v619
      %v661 = vpack.c.bf16 %v622, %v621
      %v662 = vpack.c.bf16 %v624, %v623
      %v663 = vpack.c.bf16 %v626, %v625
      %v664 = vpack.c.bf16 %v628, %v627
      %v665 = vpack.c.bf16 %v630, %v629
      %v666 = vpack.c.bf16 %v632, %v631
      %v667 = vpack.c.bf16 %v634, %v633
      %v668 = vpack.c.bf16 %v636, %v635
      %v669 = vpack.c.bf16 %v638, %v637
      %v670 = vpack.c.bf16 %v640, %v639
      %v671 = vpack.c.bf16 %v642, %v641
      %v672 = vld [vmem:[%s3] sm:$0x1]
      %v674 = vlaneseq
      %v675 = vshrl.u32 %v674, 7
      %v676 = vsub.s32 0, %v675
      %v677 = vrot.slane %v672, %v676
      %679 = vmatprep.subr.bf16.mxu0 0
      %680 = vmatpush1.bf16.msra.mxu0 %v664
      %681 = vmatprep.subr.bf16.mxu0 0
      %682 = vmatpush1.bf16.msra.mxu0 %v665
      %683 = vmatprep.subr.bf16.mxu0 0
      %684 = vmatpush1.bf16.msra.mxu0 %v666
      %685 = vmatprep.subr.bf16.mxu0 0
      %686 = vmatpush1.bf16.msra.mxu0 %v667
      %687 = vmatprep.subr.bf16.mxu0 0
      %688 = vmatpush1.bf16.msra.mxu0 %v668
      %689 = vmatprep.subr.bf16.mxu0 0
      %690 = vmatpush1.bf16.msra.mxu0 %v669
      %691 = vmatprep.subr.bf16.mxu0 0
      %692 = vmatpush1.bf16.msra.mxu0 %v670
      %693 = vmatprep.subr.bf16.mxu0 0
      %694 = vmatpush1.bf16.msra.mxu0 %v671
      %695 = vmatprep.subr.bf16.mxu0 0
      %696 = vmatpush1.bf16.msra.mxu0 0
      %697 = vmatprep.subr.bf16.mxu0 0
      %698 = vmatpush1.bf16.msra.mxu0 0
      %699 = vmatprep.subr.bf16.mxu0 0
      %700 = vmatpush1.bf16.msra.mxu0 0
      %701 = vmatprep.subr.bf16.mxu0 0
      %702 = vmatpush1.bf16.msra.mxu0 0
      %703 = vmatprep.subr.bf16.mxu0 0
      %704 = vmatpush1.bf16.msra.mxu0 0
      %705 = vmatprep.subr.bf16.mxu0 0
      %706 = vmatpush1.bf16.msra.mxu0 0
      %707 = vmatprep.subr.bf16.mxu0 0
      %708 = vmatpush1.bf16.msra.mxu0 0
      %709 = vmatprep.subr.bf16.mxu0 0
      %710 = vmatpush1.bf16.msra.mxu0 0
      %711 = vmatprep.mubr.bf16.mxu0 0
      %712 = vmatmul.mubr.bf16.gmra.mrb[0].mxu0 %v643
      %v713 = vpop.f32.mrb[0].mxu0
      %v714 = vadd.f32 %v677, %v713
      %v715 = vpop.f32.mrb[0].mxu0
      %v716 = vpop.f32.mrb[0].mxu0
      %v717 = vadd.f32 %v677, %v716
      %v718 = vpop.f32.mrb[0].mxu0
      %719 = vmatprep.mubr.bf16.mxu0 0
      %720 = vmatmul.mubr.bf16.gmra.mrb[0].mxu0 %v644
      %v721 = vpop.f32.mrb[0].mxu0
      %v722 = vadd.f32 %v677, %v721
      %v723 = vpop.f32.mrb[0].mxu0
      %v724 = vpop.f32.mrb[0].mxu0
      %v725 = vadd.f32 %v677, %v724
      %v726 = vpop.f32.mrb[0].mxu0
      %727 = vmatprep.mubr.bf16.mxu0 0
      %728 = vmatmul.mubr.bf16.gmra.mrb[0].mxu0 %v645
      %v729 = vpop.f32.mrb[0].mxu0
      %v730 = vadd.f32 %v677, %v729
      %v731 = vpop.f32.mrb[0].mxu0
      %v732 = vpop.f32.mrb[0].mxu0
      %v733 = vadd.f32 %v677, %v732
      %v734 = vpop.f32.mrb[0].mxu0
      %735 = vmatprep.mubr.bf16.mxu0 0
      %736 = vmatmul.mubr.bf16.gmra.mrb[0].mxu0 %v646
      %v737 = vpop.f32.mrb[0].mxu0
      %v738 = vadd.f32 %v677, %v737
      %v739 = vpop.f32.mrb[0].mxu0
      %v740 = vpop.f32.mrb[0].mxu0
      %v741 = vadd.f32 %v677, %v740
      %v742 = vpop.f32.mrb[0].mxu0
      %743 = vmatprep.mubr.bf16.mxu0 0
      %744 = vmatmul.mubr.bf16.gmra.mrb[0].mxu0 %v647
      %v745 = vpop.f32.mrb[0].mxu0
      %v746 = vadd.f32 %v677, %v745
      %v747 = vpop.f32.mrb[0].mxu0
      %v748 = vpop.f32.mrb[0].mxu0
      %v749 = vadd.f32 %v677, %v748
      %v750 = vpop.f32.mrb[0].mxu0
      %751 = vmatprep.mubr.bf16.mxu0 0
      %752 = vmatmul.mubr.bf16.gmra.mrb[0].mxu0 %v648
      %v753 = vpop.f32.mrb[0].mxu0
      %v754 = vadd.f32 %v677, %v753
      %v755 = vpop.f32.mrb[0].mxu0
      %v756 = vpop.f32.mrb[0].mxu0
      %v757 = vadd.f32 %v677, %v756
      %v758 = vpop.f32.mrb[0].mxu0
      %759 = vmatprep.mubr.bf16.mxu0 0
      %760 = vmatmul.mubr.bf16.gmra.mrb[0].mxu0 %v649
      %v761 = vpop.f32.mrb[0].mxu0
      %v762 = vadd.f32 %v677, %v761
      %v763 = vpop.f32.mrb[0].mxu0
      %v764 = vpop.f32.mrb[0].mxu0
      %v765 = vadd.f32 %v677, %v764
      %v766 = vpop.f32.mrb[0].mxu0
      %767 = vmatprep.mubr.bf16.mxu0 0
      %768 = vmatmul.mubr.bf16.gmra.mrb[0].mxu0 %v650
      %v769 = vpop.f32.mrb[0].mxu0
      %v770 = vadd.f32 %v677, %v769
      %v771 = vpop.f32.mrb[0].mxu0
      %v772 = vpop.f32.mrb[0].mxu0
      %v773 = vadd.f32 %v677, %v772
      %v774 = vpop.f32.mrb[0].mxu0
      %775 = vmatprep.mubr.bf16.mxu0 0
      %776 = vmatmul.mubr.bf16.gmra.mrb[0].mxu0 %v651
      %v777 = vpop.f32.mrb[0].mxu0
      %v778 = vadd.f32 %v677, %v777
      %v779 = vpop.f32.mrb[0].mxu0
      %v780 = vpop.f32.mrb[0].mxu0
      %v781 = vadd.f32 %v677, %v780
      %v782 = vpop.f32.mrb[0].mxu0
      %783 = vmatprep.mubr.bf16.mxu0 0
      %784 = vmatmul.mubr.bf16.gmra.mrb[0].mxu0 %v652
      %v785 = vpop.f32.mrb[0].mxu0
      %v786 = vadd.f32 %v677, %v785
      %v787 = vpop.f32.mrb[0].mxu0
      %v788 = vpop.f32.mrb[0].mxu0
      %v789 = vadd.f32 %v677, %v788
      %v790 = vpop.f32.mrb[0].mxu0
      %791 = vmatprep.mubr.bf16.mxu0 0
      %792 = vmatmul.mubr.bf16.gmra.mrb[0].mxu0 %v653
      %v793 = vpop.f32.mrb[0].mxu0
      %v794 = vadd.f32 %v677, %v793
      %v795 = vpop.f32.mrb[0].mxu0
      %v796 = vpop.f32.mrb[0].mxu0
      %v797 = vadd.f32 %v677, %v796
      %v798 = vpop.f32.mrb[0].mxu0
      %799 = vmatprep.mubr.bf16.mxu0 0
      %800 = vmatmul.mubr.bf16.gmra.mrb[0].mxu0 %v654
      %v801 = vpop.f32.mrb[0].mxu0
      %v802 = vadd.f32 %v677, %v801
      %v803 = vpop.f32.mrb[0].mxu0
      %v804 = vpop.f32.mrb[0].mxu0
      %v805 = vadd.f32 %v677, %v804
      %v806 = vpop.f32.mrb[0].mxu0
      %807 = vmatprep.mubr.bf16.mxu0 0
      %808 = vmatmul.mubr.bf16.gmra.mrb[0].mxu0 %v655
      %v809 = vpop.f32.mrb[0].mxu0
      %v810 = vadd.f32 %v677, %v809
      %v811 = vpop.f32.mrb[0].mxu0
      %v812 = vpop.f32.mrb[0].mxu0
      %v813 = vadd.f32 %v677, %v812
      %v814 = vpop.f32.mrb[0].mxu0
      %815 = vmatprep.mubr.bf16.mxu0 0
      %816 = vmatmul.mubr.bf16.gmra.mrb[0].mxu0 %v656
      %v817 = vpop.f32.mrb[0].mxu0
      %v818 = vadd.f32 %v677, %v817
      %v819 = vpop.f32.mrb[0].mxu0
      %v820 = vpop.f32.mrb[0].mxu0
      %v821 = vadd.f32 %v677, %v820
      %v822 = vpop.f32.mrb[0].mxu0
      %823 = vmatprep.mubr.bf16.mxu0 0
      %824 = vmatmul.mubr.bf16.gmra.mrb[0].mxu0 %v657
      %v825 = vpop.f32.mrb[0].mxu0
      %v826 = vadd.f32 %v677, %v825
      %v827 = vpop.f32.mrb[0].mxu0
      %v828 = vpop.f32.mrb[0].mxu0
      %v829 = vadd.f32 %v677, %v828
      %v830 = vpop.f32.mrb[0].mxu0
      %831 = vmatprep.mubr.bf16.mxu0 0
      %832 = vmatmul.mubr.bf16.gmra.mrb[0].mxu0 %v658
      %v833 = vpop.f32.mrb[0].mxu0
      %v834 = vadd.f32 %v677, %v833
      %v835 = vpop.f32.mrb[0].mxu0
      %v836 = vpop.f32.mrb[0].mxu0
      %v837 = vadd.f32 %v677, %v836
      %v838 = vpop.f32.mrb[0].mxu0
      %839 = vmatprep.mubr.bf16.mxu0 0
      %840 = vmatmul.mubr.bf16.gmra.mrb[0].mxu0 %v659
      %v841 = vpop.f32.mrb[0].mxu0
      %v842 = vadd.f32 %v677, %v841
      %v843 = vpop.f32.mrb[0].mxu0
      %v844 = vpop.f32.mrb[0].mxu0
      %v845 = vadd.f32 %v677, %v844
      %v846 = vpop.f32.mrb[0].mxu0
      %847 = vmatprep.mubr.bf16.mxu0 0
      %848 = vmatmul.mubr.bf16.gmra.mrb[0].mxu0 %v660
      %v849 = vpop.f32.mrb[0].mxu0
      %v850 = vadd.f32 %v677, %v849
      %v851 = vpop.f32.mrb[0].mxu0
      %v852 = vpop.f32.mrb[0].mxu0
      %v853 = vadd.f32 %v677, %v852
      %v854 = vpop.f32.mrb[0].mxu0
      %855 = vmatprep.mubr.bf16.mxu0 0
      %856 = vmatmul.mubr.bf16.gmra.mrb[0].mxu0 %v661
      %v857 = vpop.f32.mrb[0].mxu0
      %v858 = vadd.f32 %v677, %v857
      %v859 = vpop.f32.mrb[0].mxu0
      %v860 = vpop.f32.mrb[0].mxu0
      %v861 = vadd.f32 %v677, %v860
      %v862 = vpop.f32.mrb[0].mxu0
      %863 = vmatprep.mubr.bf16.mxu0 0
      %864 = vmatmul.mubr.bf16.gmra.mrb[0].mxu0 %v662
      %v865 = vpop.f32.mrb[0].mxu0
      %v866 = vadd.f32 %v677, %v865
      %v867 = vpop.f32.mrb[0].mxu0
      %v868 = vpop.f32.mrb[0].mxu0
      %v869 = vadd.f32 %v677, %v868
      %v870 = vpop.f32.mrb[0].mxu0
      %871 = vmatprep.mubr.bf16.mxu0 0
      %872 = vmatmul.mubr.bf16.gmra.mrb[0].mxu0 %v663
      %v873 = vpop.f32.mrb[0].mxu0
      %v874 = vadd.f32 %v677, %v873
      %v875 = vpop.f32.mrb[0].mxu0
      %v876 = vpop.f32.mrb[0].mxu0
      %v877 = vadd.f32 %v677, %v876
      %v878 = vpop.f32.mrb[0].mxu0
      %879 = vdwg.mxu0
      %v880 = vmul.f32 %v714, 0.5
      %v881 = vmul.f32 %v717, 0.5
      %v882 = vmul.f32 %v722, 0.5
      %v883 = vmul.f32 %v725, 0.5
      %v884 = vmul.f32 %v730, 0.5
      %v885 = vmul.f32 %v733, 0.5
      %v886 = vmul.f32 %v738, 0.5
      %v887 = vmul.f32 %v741, 0.5
      %v888 = vmul.f32 %v746, 0.5
      %v889 = vmul.f32 %v749, 0.5
      %v890 = vmul.f32 %v754, 0.5
      %v891 = vmul.f32 %v757, 0.5
      %v892 = vmul.f32 %v762, 0.5
      %v893 = vmul.f32 %v765, 0.5
      %v894 = vmul.f32 %v770, 0.5
      %v895 = vmul.f32 %v773, 0.5
      %v896 = vmul.f32 %v778, 0.5
      %v897 = vmul.f32 %v781, 0.5
      %v898 = vmul.f32 %v786, 0.5
      %v899 = vmul.f32 %v789, 0.5
      %v900 = vmul.f32 %v794, 0.5
      %v901 = vmul.f32 %v797, 0.5
      %v902 = vmul.f32 %v802, 0.5
      %v903 = vmul.f32 %v805, 0.5
      %v904 = vmul.f32 %v810, 0.5
      %v905 = vmul.f32 %v813, 0.5
      %v906 = vmul.f32 %v818, 0.5
      %v907 = vmul.f32 %v821, 0.5
      %v908 = vmul.f32 %v826, 0.5
      %v909 = vmul.f32 %v829, 0.5
      %v910 = vmul.f32 %v834, 0.5
      %v911 = vmul.f32 %v837, 0.5
      %v912 = vmul.f32 %v842, 0.5
      %v913 = vmul.f32 %v845, 0.5
      %v914 = vmul.f32 %v850, 0.5
      %v915 = vmul.f32 %v853, 0.5
      %v916 = vmul.f32 %v858, 0.5
      %v917 = vmul.f32 %v861, 0.5
      %v918 = vmul.f32 %v866, 0.5
      %v919 = vmul.f32 %v869, 0.5
      %v920 = vmul.f32 %v874, 0.5
      %v921 = vmul.f32 %v877, 0.5
      %v922 = vmul.f32 %v714, 0.70710677
      %v923 = vmul.f32 %v717, 0.70710677
      %v924 = vmul.f32 %v722, 0.70710677
      %v925 = vmul.f32 %v725, 0.70710677
      %v926 = vmul.f32 %v730, 0.70710677
      %v927 = vmul.f32 %v733, 0.70710677
      %v928 = vmul.f32 %v738, 0.70710677
      %v929 = vmul.f32 %v741, 0.70710677
      %v930 = vmul.f32 %v746, 0.70710677
      %v931 = vmul.f32 %v749, 0.70710677
      %v932 = vmul.f32 %v754, 0.70710677
      %v933 = vmul.f32 %v757, 0.70710677
      %v934 = vmul.f32 %v762, 0.70710677
      %v935 = vmul.f32 %v765, 0.70710677
      %v936 = vmul.f32 %v770, 0.70710677
      %v937 = vmul.f32 %v773, 0.70710677
      %v938 = vmul.f32 %v778, 0.70710677
      %v939 = vmul.f32 %v781, 0.70710677
      %v940 = vmul.f32 %v786, 0.70710677
      %v941 = vmul.f32 %v789, 0.70710677
      %v942 = vmul.f32 %v794, 0.70710677
      %v943 = vmul.f32 %v797, 0.70710677
      %v944 = vmul.f32 %v802, 0.70710677
      %v945 = vmul.f32 %v805, 0.70710677
      %v946 = vmul.f32 %v810, 0.70710677
      %v947 = vmul.f32 %v813, 0.70710677
      %v948 = vmul.f32 %v818, 0.70710677
      %v949 = vmul.f32 %v821, 0.70710677
      %v950 = vmul.f32 %v826, 0.70710677
      %v951 = vmul.f32 %v829, 0.70710677
      %v952 = vmul.f32 %v834, 0.70710677
      %v953 = vmul.f32 %v837, 0.70710677
      %v954 = vmul.f32 %v842, 0.70710677
      %v955 = vmul.f32 %v845, 0.70710677
      %v956 = vmul.f32 %v850, 0.70710677
      %v957 = vmul.f32 %v853, 0.70710677
      %v958 = vmul.f32 %v858, 0.70710677
      %v959 = vmul.f32 %v861, 0.70710677
      %v960 = vmul.f32 %v866, 0.70710677
      %v961 = vmul.f32 %v869, 0.70710677
      %v962 = vmul.f32 %v874, 0.70710677
      %v963 = vmul.f32 %v877, 0.70710677
      %v964 = vmax.f32 %v922, -4.0
      %v965 = vmax.f32 %v923, -4.0
      %v966 = vmax.f32 %v924, -4.0
      %v967 = vmax.f32 %v925, -4.0
      %v968 = vmax.f32 %v926, -4.0
      %v969 = vmax.f32 %v927, -4.0
      %v970 = vmax.f32 %v928, -4.0
      %v971 = vmax.f32 %v929, -4.0
      %v972 = vmax.f32 %v930, -4.0
      %v973 = vmax.f32 %v931, -4.0
      %v974 = vmax.f32 %v932, -4.0
      %v975 = vmax.f32 %v933, -4.0
      %v976 = vmax.f32 %v934, -4.0
      %v977 = vmax.f32 %v935, -4.0
      %v978 = vmax.f32 %v936, -4.0
      %v979 = vmax.f32 %v937, -4.0
      %v980 = vmax.f32 %v938, -4.0
      %v981 = vmax.f32 %v939, -4.0
      %v982 = vmax.f32 %v940, -4.0
      %v983 = vmax.f32 %v941, -4.0
      %v984 = vmax.f32 %v942, -4.0
      %v985 = vmax.f32 %v943, -4.0
      %v986 = vmax.f32 %v944, -4.0
      %v987 = vmax.f32 %v945, -4.0
      %v988 = vmax.f32 %v946, -4.0
      %v989 = vmax.f32 %v947, -4.0
      %v990 = vmax.f32 %v948, -4.0
      %v991 = vmax.f32 %v949, -4.0
      %v992 = vmax.f32 %v950, -4.0
      %v993 = vmax.f32 %v951, -4.0
      %v994 = vmax.f32 %v952, -4.0
      %v995 = vmax.f32 %v953, -4.0
      %v996 = vmax.f32 %v954, -4.0
      %v997 = vmax.f32 %v955, -4.0
      %v998 = vmax.f32 %v956, -4.0
      %v999 = vmax.f32 %v957, -4.0
      %v1000 = vmax.f32 %v958, -4.0
      %v1001 = vmax.f32 %v959, -4.0
      %v1002 = vmax.f32 %v960, -4.0
      %v1003 = vmax.f32 %v961, -4.0
      %v1004 = vmax.f32 %v962, -4.0
      %v1005 = vmax.f32 %v963, -4.0
      %v1006 = vmin.f32 %v964, 4.0
      %v1007 = vmin.f32 %v965, 4.0
      %v1008 = vmin.f32 %v966, 4.0
      %v1009 = vmin.f32 %v967, 4.0
      %v1010 = vmin.f32 %v968, 4.0
      %v1011 = vmin.f32 %v969, 4.0
      %v1012 = vmin.f32 %v970, 4.0
      %v1013 = vmin.f32 %v971, 4.0
      %v1014 = vmin.f32 %v972, 4.0
      %v1015 = vmin.f32 %v973, 4.0
      %v1016 = vmin.f32 %v974, 4.0
      %v1017 = vmin.f32 %v975, 4.0
      %v1018 = vmin.f32 %v976, 4.0
      %v1019 = vmin.f32 %v977, 4.0
      %v1020 = vmin.f32 %v978, 4.0
      %v1021 = vmin.f32 %v979, 4.0
      %v1022 = vmin.f32 %v980, 4.0
      %v1023 = vmin.f32 %v981, 4.0
      %v1024 = vmin.f32 %v982, 4.0
      %v1025 = vmin.f32 %v983, 4.0
      %v1026 = vmin.f32 %v984, 4.0
      %v1027 = vmin.f32 %v985, 4.0
      %v1028 = vmin.f32 %v986, 4.0
      %v1029 = vmin.f32 %v987, 4.0
      %v1030 = vmin.f32 %v988, 4.0
      %v1031 = vmin.f32 %v989, 4.0
      %v1032 = vmin.f32 %v990, 4.0
      %v1033 = vmin.f32 %v991, 4.0
      %v1034 = vmin.f32 %v992, 4.0
      %v1035 = vmin.f32 %v993, 4.0
      %v1036 = vmin.f32 %v994, 4.0
      %v1037 = vmin.f32 %v995, 4.0
      %v1038 = vmin.f32 %v996, 4.0
      %v1039 = vmin.f32 %v997, 4.0
      %v1040 = vmin.f32 %v998, 4.0
      %v1041 = vmin.f32 %v999, 4.0
      %v1042 = vmin.f32 %v1000, 4.0
      %v1043 = vmin.f32 %v1001, 4.0
      %v1044 = vmin.f32 %v1002, 4.0
      %v1045 = vmin.f32 %v1003, 4.0
      %v1046 = vmin.f32 %v1004, 4.0
      %v1047 = vmin.f32 %v1005, 4.0
      %v1048 = vmul.f32 %v1006, %v1006
      %v1049 = vmul.f32 %v1007, %v1007
      %v1050 = vmul.f32 %v1008, %v1008
      %v1051 = vmul.f32 %v1009, %v1009
      %v1052 = vmul.f32 %v1010, %v1010
      %v1053 = vmul.f32 %v1011, %v1011
      %v1054 = vmul.f32 %v1012, %v1012
      %v1055 = vmul.f32 %v1013, %v1013
      %v1056 = vmul.f32 %v1014, %v1014
      %v1057 = vmul.f32 %v1015, %v1015
      %v1058 = vmul.f32 %v1016, %v1016
      %v1059 = vmul.f32 %v1017, %v1017
      %v1060 = vmul.f32 %v1018, %v1018
      %v1061 = vmul.f32 %v1019, %v1019
      %v1062 = vmul.f32 %v1020, %v1020
      %v1063 = vmul.f32 %v1021, %v1021
      %v1064 = vmul.f32 %v1022, %v1022
      %v1065 = vmul.f32 %v1023, %v1023
      %v1066 = vmul.f32 %v1024, %v1024
      %v1067 = vmul.f32 %v1025, %v1025
      %v1068 = vmul.f32 %v1026, %v1026
      %v1069 = vmul.f32 %v1027, %v1027
      %v1070 = vmul.f32 %v1028, %v1028
      %v1071 = vmul.f32 %v1029, %v1029
      %v1072 = vmul.f32 %v1030, %v1030
      %v1073 = vmul.f32 %v1031, %v1031
      %v1074 = vmul.f32 %v1032, %v1032
      %v1075 = vmul.f32 %v1033, %v1033
      %v1076 = vmul.f32 %v1034, %v1034
      %v1077 = vmul.f32 %v1035, %v1035
      %v1078 = vmul.f32 %v1036, %v1036
      %v1079 = vmul.f32 %v1037, %v1037
      %v1080 = vmul.f32 %v1038, %v1038
      %v1081 = vmul.f32 %v1039, %v1039
      %v1082 = vmul.f32 %v1040, %v1040
      %v1083 = vmul.f32 %v1041, %v1041
      %v1084 = vmul.f32 %v1042, %v1042
      %v1085 = vmul.f32 %v1043, %v1043
      %v1086 = vmul.f32 %v1044, %v1044
      %v1087 = vmul.f32 %v1045, %v1045
      %v1088 = vmul.f32 %v1046, %v1046
      %v1089 = vmul.f32 %v1047, %v1047
      %v1090 = vmul.f32 %v1048, 0.00022905065
      %v1091 = vmul.f32 %v1049, 0.00022905065
      %v1092 = vmul.f32 %v1050, 0.00022905065
      %v1093 = vmul.f32 %v1051, 0.00022905065
      %v1094 = vmul.f32 %v1052, 0.00022905065
      %v1095 = vmul.f32 %v1053, 0.00022905065
      %v1096 = vmul.f32 %v1054, 0.00022905065
      %v1097 = vmul.f32 %v1055, 0.00022905065
      %v1098 = vmul.f32 %v1056, 0.00022905065
      %v1099 = vmul.f32 %v1057, 0.00022905065
      %v1100 = vmul.f32 %v1058, 0.00022905065
      %v1101 = vmul.f32 %v1059, 0.00022905065
      %v1102 = vmul.f32 %v1060, 0.00022905065
      %v1103 = vmul.f32 %v1061, 0.00022905065
      %v1104 = vmul.f32 %v1062, 0.00022905065
      %v1105 = vmul.f32 %v1063, 0.00022905065
      %v1106 = vmul.f32 %v1064, 0.00022905065
      %v1107 = vmul.f32 %v1065, 0.00022905065
      %v1108 = vmul.f32 %v1066, 0.00022905065
      %v1109 = vmul.f32 %v1067, 0.00022905065
      %v1110 = vmul.f32 %v1068, 0.00022905065
      %v1111 = vmul.f32 %v1069, 0.00022905065
      %v1112 = vmul.f32 %v1070, 0.00022905065
      %v1113 = vmul.f32 %v1071, 0.00022905065
      %v1114 = vmul.f32 %v1072, 0.00022905065
      %v1115 = vmul.f32 %v1073, 0.00022905065
      %v1116 = vmul.f32 %v1074, 0.00022905065
      %v1117 = vmul.f32 %v1075, 0.00022905065
      %v1118 = vmul.f32 %v1076, 0.00022905065
      %v1119 = vmul.f32 %v1077, 0.00022905065
      %v1120 = vmul.f32 %v1078, 0.00022905065
      %v1121 = vmul.f32 %v1079, 0.00022905065
      %v1122 = vmul.f32 %v1080, 0.00022905065
      %v1123 = vmul.f32 %v1081, 0.00022905065
      %v1124 = vmul.f32 %v1082, 0.00022905065
      %v1125 = vmul.f32 %v1083, 0.00022905065
      %v1126 = vmul.f32 %v1084, 0.00022905065
      %v1127 = vmul.f32 %v1085, 0.00022905065
      %v1128 = vmul.f32 %v1086, 0.00022905065
      %v1129 = vmul.f32 %v1087, 0.00022905065
      %v1130 = vmul.f32 %v1088, 0.00022905065
      %v1131 = vmul.f32 %v1089, 0.00022905065
      %v1132 = vadd.f32 %v1090, 0.003408291
      %v1133 = vadd.f32 %v1091, 0.003408291
      %v1134 = vadd.f32 %v1092, 0.003408291
      %v1135 = vadd.f32 %v1093, 0.003408291
      %v1136 = vadd.f32 %v1094, 0.003408291
      %v1137 = vadd.f32 %v1095, 0.003408291
      %v1138 = vadd.f32 %v1096, 0.003408291
      %v1139 = vadd.f32 %v1097, 0.003408291
      %v1140 = vadd.f32 %v1098, 0.003408291
      %v1141 = vadd.f32 %v1099, 0.003408291
      %v1142 = vadd.f32 %v1100, 0.003408291
      %v1143 = vadd.f32 %v1101, 0.003408291
      %v1144 = vadd.f32 %v1102, 0.003408291
      %v1145 = vadd.f32 %v1103, 0.003408291
      %v1146 = vadd.f32 %v1104, 0.003408291
      %v1147 = vadd.f32 %v1105, 0.003408291
      %v1148 = vadd.f32 %v1106, 0.003408291
      %v1149 = vadd.f32 %v1107, 0.003408291
      %v1150 = vadd.f32 %v1108, 0.003408291
      %v1151 = vadd.f32 %v1109, 0.003408291
      %v1152 = vadd.f32 %v1110, 0.003408291
      %v1153 = vadd.f32 %v1111, 0.003408291
      %v1154 = vadd.f32 %v1112, 0.003408291
      %v1155 = vadd.f32 %v1113, 0.003408291
      %v1156 = vadd.f32 %v1114, 0.003408291
      %v1157 = vadd.f32 %v1115, 0.003408291
      %v1158 = vadd.f32 %v1116, 0.003408291
      %v1159 = vadd.f32 %v1117, 0.003408291
      %v1160 = vadd.f32 %v1118, 0.003408291
      %v1161 = vadd.f32 %v1119, 0.003408291
      %v1162 = vadd.f32 %v1120, 0.003408291
      %v1163 = vadd.f32 %v1121, 0.003408291
      %v1164 = vadd.f32 %v1122, 0.003408291
      %v1165 = vadd.f32 %v1123, 0.003408291
      %v1166 = vadd.f32 %v1124, 0.003408291
      %v1167 = vadd.f32 %v1125, 0.003408291
      %v1168 = vadd.f32 %v1126, 0.003408291
      %v1169 = vadd.f32 %v1127, 0.003408291
      %v1170 = vadd.f32 %v1128, 0.003408291
      %v1171 = vadd.f32 %v1129, 0.003408291
      %v1172 = vadd.f32 %v1130, 0.003408291
      %v1173 = vadd.f32 %v1131, 0.003408291
      %v1174 = vmul.f32 %v1132, %v1048
      %v1175 = vmul.f32 %v1133, %v1049
      %v1176 = vmul.f32 %v1134, %v1050
      %v1177 = vmul.f32 %v1135, %v1051
      %v1178 = vmul.f32 %v1136, %v1052
      %v1179 = vmul.f32 %v1137, %v1053
      %v1180 = vmul.f32 %v1138, %v1054
      %v1181 = vmul.f32 %v1139, %v1055
      %v1182 = vmul.f32 %v1140, %v1056
      %v1183 = vmul.f32 %v1141, %v1057
      %v1184 = vmul.f32 %v1142, %v1058
      %v1185 = vmul.f32 %v1143, %v1059
      %v1186 = vmul.f32 %v1144, %v1060
      %v1187 = vmul.f32 %v1145, %v1061
      %v1188 = vmul.f32 %v1146, %v1062
      %v1189 = vmul.f32 %v1147, %v1063
      %v1190 = vmul.f32 %v1148, %v1064
      %v1191 = vmul.f32 %v1149, %v1065
      %v1192 = vmul.f32 %v1150, %v1066
      %v1193 = vmul.f32 %v1151, %v1067
      %v1194 = vmul.f32 %v1152, %v1068
      %v1195 = vmul.f32 %v1153, %v1069
      %v1196 = vmul.f32 %v1154, %v1070
      %v1197 = vmul.f32 %v1155, %v1071
      %v1198 = vmul.f32 %v1156, %v1072
      %v1199 = vmul.f32 %v1157, %v1073
      %v1200 = vmul.f32 %v1158, %v1074
      %v1201 = vmul.f32 %v1159, %v1075
      %v1202 = vmul.f32 %v1160, %v1076
      %v1203 = vmul.f32 %v1161, %v1077
      %v1204 = vmul.f32 %v1162, %v1078
      %v1205 = vmul.f32 %v1163, %v1079
      %v1206 = vmul.f32 %v1164, %v1080
      %v1207 = vmul.f32 %v1165, %v1081
      %v1208 = vmul.f32 %v1166, %v1082
      %v1209 = vmul.f32 %v1167, %v1083
      %v1210 = vmul.f32 %v1168, %v1084
      %v1211 = vmul.f32 %v1169, %v1085
      %v1212 = vmul.f32 %v1170, %v1086
      %v1213 = vmul.f32 %v1171, %v1087
      %v1214 = vmul.f32 %v1172, %v1088
      %v1215 = vmul.f32 %v1173, %v1089
      %v1216 = vadd.f32 %v1174, 0.050955694
      %v1217 = vadd.f32 %v1175, 0.050955694
      %v1218 = vadd.f32 %v1176, 0.050955694
      %v1219 = vadd.f32 %v1177, 0.050955694
      %v1220 = vadd.f32 %v1178, 0.050955694
      %v1221 = vadd.f32 %v1179, 0.050955694
      %v1222 = vadd.f32 %v1180, 0.050955694
      %v1223 = vadd.f32 %v1181, 0.050955694
      %v1224 = vadd.f32 %v1182, 0.050955694
      %v1225 = vadd.f32 %v1183, 0.050955694
      %v1226 = vadd.f32 %v1184, 0.050955694
      %v1227 = vadd.f32 %v1185, 0.050955694
      %v1228 = vadd.f32 %v1186, 0.050955694
      %v1229 = vadd.f32 %v1187, 0.050955694
      %v1230 = vadd.f32 %v1188, 0.050955694
      %v1231 = vadd.f32 %v1189, 0.050955694
      %v1232 = vadd.f32 %v1190, 0.050955694
      %v1233 = vadd.f32 %v1191, 0.050955694
      %v1234 = vadd.f32 %v1192, 0.050955694
      %v1235 = vadd.f32 %v1193, 0.050955694
      %v1236 = vadd.f32 %v1194, 0.050955694
      %v1237 = vadd.f32 %v1195, 0.050955694
      %v1238 = vadd.f32 %v1196, 0.050955694
      %v1239 = vadd.f32 %v1197, 0.050955694
      %v1240 = vadd.f32 %v1198, 0.050955694
      %v1241 = vadd.f32 %v1199, 0.050955694
      %v1242 = vadd.f32 %v1200, 0.050955694
      %v1243 = vadd.f32 %v1201, 0.050955694
      %v1244 = vadd.f32 %v1202, 0.050955694
      %v1245 = vadd.f32 %v1203, 0.050955694
      %v1246 = vadd.f32 %v1204, 0.050955694
      %v1247 = vadd.f32 %v1205, 0.050955694
      %v1248 = vadd.f32 %v1206, 0.050955694
      %v1249 = vadd.f32 %v1207, 0.050955694
      %v1250 = vadd.f32 %v1208, 0.050955694
      %v1251 = vadd.f32 %v1209, 0.050955694
      %v1252 = vadd.f32 %v1210, 0.050955694
      %v1253 = vadd.f32 %v1211, 0.050955694
      %v1254 = vadd.f32 %v1212, 0.050955694
      %v1255 = vadd.f32 %v1213, 0.050955694
      %v1256 = vadd.f32 %v1214, 0.050955694
      %v1257 = vadd.f32 %v1215, 0.050955694
      %v1258 = vmul.f32 %v1216, %v1048
      %v1259 = vmul.f32 %v1217, %v1049
      %v1260 = vmul.f32 %v1218, %v1050
      %v1261 = vmul.f32 %v1219, %v1051
      %v1262 = vmul.f32 %v1220, %v1052
      %v1263 = vmul.f32 %v1221, %v1053
      %v1264 = vmul.f32 %v1222, %v1054
      %v1265 = vmul.f32 %v1223, %v1055
      %v1266 = vmul.f32 %v1224, %v1056
      %v1267 = vmul.f32 %v1225, %v1057
      %v1268 = vmul.f32 %v1226, %v1058
      %v1269 = vmul.f32 %v1227, %v1059
      %v1270 = vmul.f32 %v1228, %v1060
      %v1271 = vmul.f32 %v1229, %v1061
      %v1272 = vmul.f32 %v1230, %v1062
      %v1273 = vmul.f32 %v1231, %v1063
      %v1274 = vmul.f32 %v1232, %v1064
      %v1275 = vmul.f32 %v1233, %v1065
      %v1276 = vmul.f32 %v1234, %v1066
      %v1277 = vmul.f32 %v1235, %v1067
      %v1278 = vmul.f32 %v1236, %v1068
      %v1279 = vmul.f32 %v1237, %v1069
      %v1280 = vmul.f32 %v1238, %v1070
      %v1281 = vmul.f32 %v1239, %v1071
      %v1282 = vmul.f32 %v1240, %v1072
      %v1283 = vmul.f32 %v1241, %v1073
      %v1284 = vmul.f32 %v1242, %v1074
      %v1285 = vmul.f32 %v1243, %v1075
      %v1286 = vmul.f32 %v1244, %v1076
      %v1287 = vmul.f32 %v1245, %v1077
      %v1288 = vmul.f32 %v1246, %v1078
      %v1289 = vmul.f32 %v1247, %v1079
      %v1290 = vmul.f32 %v1248, %v1080
      %v1291 = vmul.f32 %v1249, %v1081
      %v1292 = vmul.f32 %v1250, %v1082
      %v1293 = vmul.f32 %v1251, %v1083
      %v1294 = vmul.f32 %v1252, %v1084
      %v1295 = vmul.f32 %v1253, %v1085
      %v1296 = vmul.f32 %v1254, %v1086
      %v1297 = vmul.f32 %v1255, %v1087
      %v1298 = vmul.f32 %v1256, %v1088
      %v1299 = vmul.f32 %v1257, %v1089
      %v1300 = vadd.f32 %v1258, 0.18520832
      %v1301 = vadd.f32 %v1259, 0.18520832
      %v1302 = vadd.f32 %v1260, 0.18520832
      %v1303 = vadd.f32 %v1261, 0.18520832
      %v1304 = vadd.f32 %v1262, 0.18520832
      %v1305 = vadd.f32 %v1263, 0.18520832
      %v1306 = vadd.f32 %v1264, 0.18520832
      %v1307 = vadd.f32 %v1265, 0.18520832
      %v1308 = vadd.f32 %v1266, 0.18520832
      %v1309 = vadd.f32 %v1267, 0.18520832
      %v1310 = vadd.f32 %v1268, 0.18520832
      %v1311 = vadd.f32 %v1269, 0.18520832
      %v1312 = vadd.f32 %v1270, 0.18520832
      %v1313 = vadd.f32 %v1271, 0.18520832
      %v1314 = vadd.f32 %v1272, 0.18520832
      %v1315 = vadd.f32 %v1273, 0.18520832
      %v1316 = vadd.f32 %v1274, 0.18520832
      %v1317 = vadd.f32 %v1275, 0.18520832
      %v1318 = vadd.f32 %v1276, 0.18520832
      %v1319 = vadd.f32 %v1277, 0.18520832
      %v1320 = vadd.f32 %v1278, 0.18520832
      %v1321 = vadd.f32 %v1279, 0.18520832
      %v1322 = vadd.f32 %v1280, 0.18520832
      %v1323 = vadd.f32 %v1281, 0.18520832
      %v1324 = vadd.f32 %v1282, 0.18520832
      %v1325 = vadd.f32 %v1283, 0.18520832
      %v1326 = vadd.f32 %v1284, 0.18520832
      %v1327 = vadd.f32 %v1285, 0.18520832
      %v1328 = vadd.f32 %v1286, 0.18520832
      %v1329 = vadd.f32 %v1287, 0.18520832
      %v1330 = vadd.f32 %v1288, 0.18520832
      %v1331 = vadd.f32 %v1289, 0.18520832
      %v1332 = vadd.f32 %v1290, 0.18520832
      %v1333 = vadd.f32 %v1291, 0.18520832
      %v1334 = vadd.f32 %v1292, 0.18520832
      %v1335 = vadd.f32 %v1293, 0.18520832
      %v1336 = vadd.f32 %v1294, 0.18520832
      %v1337 = vadd.f32 %v1295, 0.18520832
      %v1338 = vadd.f32 %v1296, 0.18520832
      %v1339 = vadd.f32 %v1297, 0.18520832
      %v1340 = vadd.f32 %v1298, 0.18520832
      %v1341 = vadd.f32 %v1299, 0.18520832
      %v1342 = vmul.f32 %v1300, %v1048
      %v1343 = vmul.f32 %v1301, %v1049
      %v1344 = vmul.f32 %v1302, %v1050
      %v1345 = vmul.f32 %v1303, %v1051
      %v1346 = vmul.f32 %v1304, %v1052
      %v1347 = vmul.f32 %v1305, %v1053
      %v1348 = vmul.f32 %v1306, %v1054
      %v1349 = vmul.f32 %v1307, %v1055
      %v1350 = vmul.f32 %v1308, %v1056
      %v1351 = vmul.f32 %v1309, %v1057
      %v1352 = vmul.f32 %v1310, %v1058
      %v1353 = vmul.f32 %v1311, %v1059
      %v1354 = vmul.f32 %v1312, %v1060
      %v1355 = vmul.f32 %v1313, %v1061
      %v1356 = vmul.f32 %v1314, %v1062
      %v1357 = vmul.f32 %v1315, %v1063
      %v1358 = vmul.f32 %v1316, %v1064
      %v1359 = vmul.f32 %v1317, %v1065
      %v1360 = vmul.f32 %v1318, %v1066
      %v1361 = vmul.f32 %v1319, %v1067
      %v1362 = vmul.f32 %v1320, %v1068
      %v1363 = vmul.f32 %v1321, %v1069
      %v1364 = vmul.f32 %v1322, %v1070
      %v1365 = vmul.f32 %v1323, %v1071
      %v1366 = vmul.f32 %v1324, %v1072
      %v1367 = vmul.f32 %v1325, %v1073
      %v1368 = vmul.f32 %v1326, %v1074
      %v1369 = vmul.f32 %v1327, %v1075
      %v1370 = vmul.f32 %v1328, %v1076
      %v1371 = vmul.f32 %v1329, %v1077
      %v1372 = vmul.f32 %v1330, %v1078
      %v1373 = vmul.f32 %v1331, %v1079
      %v1374 = vmul.f32 %v1332, %v1080
      %v1375 = vmul.f32 %v1333, %v1081
      %v1376 = vmul.f32 %v1334, %v1082
      %v1377 = vmul.f32 %v1335, %v1083
      %v1378 = vmul.f32 %v1336, %v1084
      %v1379 = vmul.f32 %v1337, %v1085
      %v1380 = vmul.f32 %v1338, %v1086
      %v1381 = vmul.f32 %v1339, %v1087
      %v1382 = vmul.f32 %v1340, %v1088
      %v1383 = vmul.f32 %v1341, %v1089
      %v1384 = vadd.f32 %v1342, 1.1283791
      %v1385 = vadd.f32 %v1343, 1.1283791
      %v1386 = vadd.f32 %v1344, 1.1283791
      %v1387 = vadd.f32 %v1345, 1.1283791
      %v1388 = vadd.f32 %v1346, 1.1283791
      %v1389 = vadd.f32 %v1347, 1.1283791
      %v1390 = vadd.f32 %v1348, 1.1283791
      %v1391 = vadd.f32 %v1349, 1.1283791
      %v1392 = vadd.f32 %v1350, 1.1283791
      %v1393 = vadd.f32 %v1351, 1.1283791
      %v1394 = vadd.f32 %v1352, 1.1283791
      %v1395 = vadd.f32 %v1353, 1.1283791
      %v1396 = vadd.f32 %v1354, 1.1283791
      %v1397 = vadd.f32 %v1355, 1.1283791
      %v1398 = vadd.f32 %v1356, 1.1283791
      %v1399 = vadd.f32 %v1357, 1.1283791
      %v1400 = vadd.f32 %v1358, 1.1283791
      %v1401 = vadd.f32 %v1359, 1.1283791
      %v1402 = vadd.f32 %v1360, 1.1283791
      %v1403 = vadd.f32 %v1361, 1.1283791
      %v1404 = vadd.f32 %v1362, 1.1283791
      %v1405 = vadd.f32 %v1363, 1.1283791
      %v1406 = vadd.f32 %v1364, 1.1283791
      %v1407 = vadd.f32 %v1365, 1.1283791
      %v1408 = vadd.f32 %v1366, 1.1283791
      %v1409 = vadd.f32 %v1367, 1.1283791
      %v1410 = vadd.f32 %v1368, 1.1283791
      %v1411 = vadd.f32 %v1369, 1.1283791
      %v1412 = vadd.f32 %v1370, 1.1283791
      %v1413 = vadd.f32 %v1371, 1.1283791
      %v1414 = vadd.f32 %v1372, 1.1283791
      %v1415 = vadd.f32 %v1373, 1.1283791
      %v1416 = vadd.f32 %v1374, 1.1283791
      %v1417 = vadd.f32 %v1375, 1.1283791
      %v1418 = vadd.f32 %v1376, 1.1283791
      %v1419 = vadd.f32 %v1377, 1.1283791
      %v1420 = vadd.f32 %v1378, 1.1283791
      %v1421 = vadd.f32 %v1379, 1.1283791
      %v1422 = vadd.f32 %v1380, 1.1283791
      %v1423 = vadd.f32 %v1381, 1.1283791
      %v1424 = vadd.f32 %v1382, 1.1283791
      %v1425 = vadd.f32 %v1383, 1.1283791
      %v1426 = vmul.f32 %v1048, -1.1791603e-07
      %v1427 = vmul.f32 %v1049, -1.1791603e-07
      %v1428 = vmul.f32 %v1050, -1.1791603e-07
      %v1429 = vmul.f32 %v1051, -1.1791603e-07
      %v1430 = vmul.f32 %v1052, -1.1791603e-07
      %v1431 = vmul.f32 %v1053, -1.1791603e-07
      %v1432 = vmul.f32 %v1054, -1.1791603e-07
      %v1433 = vmul.f32 %v1055, -1.1791603e-07
      %v1434 = vmul.f32 %v1056, -1.1791603e-07
      %v1435 = vmul.f32 %v1057, -1.1791603e-07
      %v1436 = vmul.f32 %v1058, -1.1791603e-07
      %v1437 = vmul.f32 %v1059, -1.1791603e-07
      %v1438 = vmul.f32 %v1060, -1.1791603e-07
      %v1439 = vmul.f32 %v1061, -1.1791603e-07
      %v1440 = vmul.f32 %v1062, -1.1791603e-07
      %v1441 = vmul.f32 %v1063, -1.1791603e-07
      %v1442 = vmul.f32 %v1064, -1.1791603e-07
      %v1443 = vmul.f32 %v1065, -1.1791603e-07
      %v1444 = vmul.f32 %v1066, -1.1791603e-07
      %v1445 = vmul.f32 %v1067, -1.1791603e-07
      %v1446 = vmul.f32 %v1068, -1.1791603e-07
      %v1447 = vmul.f32 %v1069, -1.1791603e-07
      %v1448 = vmul.f32 %v1070, -1.1791603e-07
      %v1449 = vmul.f32 %v1071, -1.1791603e-07
      %v1450 = vmul.f32 %v1072, -1.1791603e-07
      %v1451 = vmul.f32 %v1073, -1.1791603e-07
      %v1452 = vmul.f32 %v1074, -1.1791603e-07
      %v1453 = vmul.f32 %v1075, -1.1791603e-07
      %v1454 = vmul.f32 %v1076, -1.1791603e-07
      %v1455 = vmul.f32 %v1077, -1.1791603e-07
      %v1456 = vmul.f32 %v1078, -1.1791603e-07
      %v1457 = vmul.f32 %v1079, -1.1791603e-07
      %v1458 = vmul.f32 %v1080, -1.1791603e-07
      %v1459 = vmul.f32 %v1081, -1.1791603e-07
      %v1460 = vmul.f32 %v1082, -1.1791603e-07
      %v1461 = vmul.f32 %v1083, -1.1791603e-07
      %v1462 = vmul.f32 %v1084, -1.1791603e-07
      %v1463 = vmul.f32 %v1085, -1.1791603e-07
      %v1464 = vmul.f32 %v1086, -1.1791603e-07
      %v1465 = vmul.f32 %v1087, -1.1791603e-07
      %v1466 = vmul.f32 %v1088, -1.1791603e-07
      %v1467 = vmul.f32 %v1089, -1.1791603e-07
      %v1468 = vadd.f32 %v1426, 2.3547966e-05
      %v1469 = vadd.f32 %v1427, 2.3547966e-05
      %v1470 = vadd.f32 %v1428, 2.3547966e-05
      %v1471 = vadd.f32 %v1429, 2.3547966e-05
      %v1472 = vadd.f32 %v1430, 2.3547966e-05
      %v1473 = vadd.f32 %v1431, 2.3547966e-05
      %v1474 = vadd.f32 %v1432, 2.3547966e-05
      %v1475 = vadd.f32 %v1433, 2.3547966e-05
      %v1476 = vadd.f32 %v1434, 2.3547966e-05
      %v1477 = vadd.f32 %v1435, 2.3547966e-05
      %v1478 = vadd.f32 %v1436, 2.3547966e-05
      %v1479 = vadd.f32 %v1437, 2.3547966e-05
      %v1480 = vadd.f32 %v1438, 2.3547966e-05
      %v1481 = vadd.f32 %v1439, 2.3547966e-05
      %v1482 = vadd.f32 %v1440, 2.3547966e-05
      %v1483 = vadd.f32 %v1441, 2.3547966e-05
      %v1484 = vadd.f32 %v1442, 2.3547966e-05
      %v1485 = vadd.f32 %v1443, 2.3547966e-05
      %v1486 = vadd.f32 %v1444, 2.3547966e-05
      %v1487 = vadd.f32 %v1445, 2.3547966e-05
      %v1488 = vadd.f32 %v1446, 2.3547966e-05
      %v1489 = vadd.f32 %v1447, 2.3547966e-05
      %v1490 = vadd.f32 %v1448, 2.3547966e-05
      %v1491 = vadd.f32 %v1449, 2.3547966e-05
      %v1492 = vadd.f32 %v1450, 2.3547966e-05
      %v1493 = vadd.f32 %v1451, 2.3547966e-05
      %v1494 = vadd.f32 %v1452, 2.3547966e-05
      %v1495 = vadd.f32 %v1453, 2.3547966e-05
      %v1496 = vadd.f32 %v1454, 2.3547966e-05
      %v1497 = vadd.f32 %v1455, 2.3547966e-05
      %v1498 = vadd.f32 %v1456, 2.3547966e-05
      %v1499 = vadd.f32 %v1457, 2.3547966e-05
      %v1500 = vadd.f32 %v1458, 2.3547966e-05
      %v1501 = vadd.f32 %v1459, 2.3547966e-05
      %v1502 = vadd.f32 %v1460, 2.3547966e-05
      %v1503 = vadd.f32 %v1461, 2.3547966e-05
      %v1504 = vadd.f32 %v1462, 2.3547966e-05
      %v1505 = vadd.f32 %v1463, 2.3547966e-05
      %v1506 = vadd.f32 %v1464, 2.3547966e-05
      %v1507 = vadd.f32 %v1465, 2.3547966e-05
      %v1508 = vadd.f32 %v1466, 2.3547966e-05
      %v1509 = vadd.f32 %v1467, 2.3547966e-05
      %v1510 = vmul.f32 %v1468, %v1048
      %v1511 = vmul.f32 %v1469, %v1049
      %v1512 = vmul.f32 %v1470, %v1050
      %v1513 = vmul.f32 %v1471, %v1051
      %v1514 = vmul.f32 %v1472, %v1052
      %v1515 = vmul.f32 %v1473, %v1053
      %v1516 = vmul.f32 %v1474, %v1054
      %v1517 = vmul.f32 %v1475, %v1055
      %v1518 = vmul.f32 %v1476, %v1056
      %v1519 = vmul.f32 %v1477, %v1057
      %v1520 = vmul.f32 %v1478, %v1058
      %v1521 = vmul.f32 %v1479, %v1059
      %v1522 = vmul.f32 %v1480, %v1060
      %v1523 = vmul.f32 %v1481, %v1061
      %v1524 = vmul.f32 %v1482, %v1062
      %v1525 = vmul.f32 %v1483, %v1063
      %v1526 = vmul.f32 %v1484, %v1064
      %v1527 = vmul.f32 %v1485, %v1065
      %v1528 = vmul.f32 %v1486, %v1066
      %v1529 = vmul.f32 %v1487, %v1067
      %v1530 = vmul.f32 %v1488, %v1068
      %v1531 = vmul.f32 %v1489, %v1069
      %v1532 = vmul.f32 %v1490, %v1070
      %v1533 = vmul.f32 %v1491, %v1071
      %v1534 = vmul.f32 %v1492, %v1072
      %v1535 = vmul.f32 %v1493, %v1073
      %v1536 = vmul.f32 %v1494, %v1074
      %v1537 = vmul.f32 %v1495, %v1075
      %v1538 = vmul.f32 %v1496, %v1076
      %v1539 = vmul.f32 %v1497, %v1077
      %v1540 = vmul.f32 %v1498, %v1078
      %v1541 = vmul.f32 %v1499, %v1079
      %v1542 = vmul.f32 %v1500, %v1080
      %v1543 = vmul.f32 %v1501, %v1081
      %v1544 = vmul.f32 %v1502, %v1082
      %v1545 = vmul.f32 %v1503, %v1083
      %v1546 = vmul.f32 %v1504, %v1084
      %v1547 = vmul.f32 %v1505, %v1085
      %v1548 = vmul.f32 %v1506, %v1086
      %v1549 = vmul.f32 %v1507, %v1087
      %v1550 = vmul.f32 %v1508, %v1088
      %v1551 = vmul.f32 %v1509, %v1089
      %v1552 = vadd.f32 %v1510, 0.0010179626
      %v1553 = vadd.f32 %v1511, 0.0010179626
      %v1554 = vadd.f32 %v1512, 0.0010179626
      %v1555 = vadd.f32 %v1513, 0.0010179626
      %v1556 = vadd.f32 %v1514, 0.0010179626
      %v1557 = vadd.f32 %v1515, 0.0010179626
      %v1558 = vadd.f32 %v1516, 0.0010179626
      %v1559 = vadd.f32 %v1517, 0.0010179626
      %v1560 = vadd.f32 %v1518, 0.0010179626
      %v1561 = vadd.f32 %v1519, 0.0010179626
      %v1562 = vadd.f32 %v1520, 0.0010179626
      %v1563 = vadd.f32 %v1521, 0.0010179626
      %v1564 = vadd.f32 %v1522, 0.0010179626
      %v1565 = vadd.f32 %v1523, 0.0010179626
      %v1566 = vadd.f32 %v1524, 0.0010179626
      %v1567 = vadd.f32 %v1525, 0.0010179626
      %v1568 = vadd.f32 %v1526, 0.0010179626
      %v1569 = vadd.f32 %v1527, 0.0010179626
      %v1570 = vadd.f32 %v1528, 0.0010179626
      %v1571 = vadd.f32 %v1529, 0.0010179626
      %v1572 = vadd.f32 %v1530, 0.0010179626
      %v1573 = vadd.f32 %v1531, 0.0010179626
      %v1574 = vadd.f32 %v1532, 0.0010179626
      %v1575 = vadd.f32 %v1533, 0.0010179626
      %v1576 = vadd.f32 %v1534, 0.0010179626
      %v1577 = vadd.f32 %v1535, 0.0010179626
      %v1578 = vadd.f32 %v1536, 0.0010179626
      %v1579 = vadd.f32 %v1537, 0.0010179626
      %v1580 = vadd.f32 %v1538, 0.0010179626
      %v1581 = vadd.f32 %v1539, 0.0010179626
      %v1582 = vadd.f32 %v1540, 0.0010179626
      %v1583 = vadd.f32 %v1541, 0.0010179626
      %v1584 = vadd.f32 %v1542, 0.0010179626
      %v1585 = vadd.f32 %v1543, 0.0010179626
      %v1586 = vadd.f32 %v1544, 0.0010179626
      %v1587 = vadd.f32 %v1545, 0.0010179626
      %v1588 = vadd.f32 %v1546, 0.0010179626
      %v1589 = vadd.f32 %v1547, 0.0010179626
      %v1590 = vadd.f32 %v1548, 0.0010179626
      %v1591 = vadd.f32 %v1549, 0.0010179626
      %v1592 = vadd.f32 %v1550, 0.0010179626
      %v1593 = vadd.f32 %v1551, 0.0010179626
      %v1594 = vmul.f32 %v1552, %v1048
      %v1595 = vmul.f32 %v1553, %v1049
      %v1596 = vmul.f32 %v1554, %v1050
      %v1597 = vmul.f32 %v1555, %v1051
      %v1598 = vmul.f32 %v1556, %v1052
      %v1599 = vmul.f32 %v1557, %v1053
      %v1600 = vmul.f32 %v1558, %v1054
      %v1601 = vmul.f32 %v1559, %v1055
      %v1602 = vmul.f32 %v1560, %v1056
      %v1603 = vmul.f32 %v1561, %v1057
      %v1604 = vmul.f32 %v1562, %v1058
      %v1605 = vmul.f32 %v1563, %v1059
      %v1606 = vmul.f32 %v1564, %v1060
      %v1607 = vmul.f32 %v1565, %v1061
      %v1608 = vmul.f32 %v1566, %v1062
      %v1609 = vmul.f32 %v1567, %v1063
      %v1610 = vmul.f32 %v1568, %v1064
      %v1611 = vmul.f32 %v1569, %v1065
      %v1612 = vmul.f32 %v1570, %v1066
      %v1613 = vmul.f32 %v1571, %v1067
      %v1614 = vmul.f32 %v1572, %v1068
      %v1615 = vmul.f32 %v1573, %v1069
      %v1616 = vmul.f32 %v1574, %v1070
      %v1617 = vmul.f32 %v1575, %v1071
      %v1618 = vmul.f32 %v1576, %v1072
      %v1619 = vmul.f32 %v1577, %v1073
      %v1620 = vmul.f32 %v1578, %v1074
      %v1621 = vmul.f32 %v1579, %v1075
      %v1622 = vmul.f32 %v1580, %v1076
      %v1623 = vmul.f32 %v1581, %v1077
      %v1624 = vmul.f32 %v1582, %v1078
      %v1625 = vmul.f32 %v1583, %v1079
      %v1626 = vmul.f32 %v1584, %v1080
      %v1627 = vmul.f32 %v1585, %v1081
      %v1628 = vmul.f32 %v1586, %v1082
      %v1629 = vmul.f32 %v1587, %v1083
      %v1630 = vmul.f32 %v1588, %v1084
      %v1631 = vmul.f32 %v1589, %v1085
      %v1632 = vmul.f32 %v1590, %v1086
      %v1633 = vmul.f32 %v1591, %v1087
      %v1634 = vmul.f32 %v1592, %v1088
      %v1635 = vmul.f32 %v1593, %v1089
      %v1636 = vadd.f32 %v1594, 0.01407047
      %v1637 = vadd.f32 %v1595, 0.01407047
      %v1638 = vadd.f32 %v1596, 0.01407047
      %v1639 = vadd.f32 %v1597, 0.01407047
      %v1640 = vadd.f32 %v1598, 0.01407047
      %v1641 = vadd.f32 %v1599, 0.01407047
      %v1642 = vadd.f32 %v1600, 0.01407047
      %v1643 = vadd.f32 %v1601, 0.01407047
      %v1644 = vadd.f32 %v1602, 0.01407047
      %v1645 = vadd.f32 %v1603, 0.01407047
      %v1646 = vadd.f32 %v1604, 0.01407047
      %v1647 = vadd.f32 %v1605, 0.01407047
      %v1648 = vadd.f32 %v1606, 0.01407047
      %v1649 = vadd.f32 %v1607, 0.01407047
      %v1650 = vadd.f32 %v1608, 0.01407047
      %v1651 = vadd.f32 %v1609, 0.01407047
      %v1652 = vadd.f32 %v1610, 0.01407047
      %v1653 = vadd.f32 %v1611, 0.01407047
      %v1654 = vadd.f32 %v1612, 0.01407047
      %v1655 = vadd.f32 %v1613, 0.01407047
      %v1656 = vadd.f32 %v1614, 0.01407047
      %v1657 = vadd.f32 %v1615, 0.01407047
      %v1658 = vadd.f32 %v1616, 0.01407047
      %v1659 = vadd.f32 %v1617, 0.01407047
      %v1660 = vadd.f32 %v1618, 0.01407047
      %v1661 = vadd.f32 %v1619, 0.01407047
      %v1662 = vadd.f32 %v1620, 0.01407047
      %v1663 = vadd.f32 %v1621, 0.01407047
      %v1664 = vadd.f32 %v1622, 0.01407047
      %v1665 = vadd.f32 %v1623, 0.01407047
      %v1666 = vadd.f32 %v1624, 0.01407047
      %v1667 = vadd.f32 %v1625, 0.01407047
      %v1668 = vadd.f32 %v1626, 0.01407047
      %v1669 = vadd.f32 %v1627, 0.01407047
      %v1670 = vadd.f32 %v1628, 0.01407047
      %v1671 = vadd.f32 %v1629, 0.01407047
      %v1672 = vadd.f32 %v1630, 0.01407047
      %v1673 = vadd.f32 %v1631, 0.01407047
      %v1674 = vadd.f32 %v1632, 0.01407047
      %v1675 = vadd.f32 %v1633, 0.01407047
      %v1676 = vadd.f32 %v1634, 0.01407047
      %v1677 = vadd.f32 %v1635, 0.01407047
      %v1678 = vmul.f32 %v1636, %v1048
      %v1679 = vmul.f32 %v1637, %v1049
      %v1680 = vmul.f32 %v1638, %v1050
      %v1681 = vmul.f32 %v1639, %v1051
      %v1682 = vmul.f32 %v1640, %v1052
      %v1683 = vmul.f32 %v1641, %v1053
      %v1684 = vmul.f32 %v1642, %v1054
      %v1685 = vmul.f32 %v1643, %v1055
      %v1686 = vmul.f32 %v1644, %v1056
      %v1687 = vmul.f32 %v1645, %v1057
      %v1688 = vmul.f32 %v1646, %v1058
      %v1689 = vmul.f32 %v1647, %v1059
      %v1690 = vmul.f32 %v1648, %v1060
      %v1691 = vmul.f32 %v1649, %v1061
      %v1692 = vmul.f32 %v1650, %v1062
      %v1693 = vmul.f32 %v1651, %v1063
      %v1694 = vmul.f32 %v1652, %v1064
      %v1695 = vmul.f32 %v1653, %v1065
      %v1696 = vmul.f32 %v1654, %v1066
      %v1697 = vmul.f32 %v1655, %v1067
      %v1698 = vmul.f32 %v1656, %v1068
      %v1699 = vmul.f32 %v1657, %v1069
      %v1700 = vmul.f32 %v1658, %v1070
      %v1701 = vmul.f32 %v1659, %v1071
      %v1702 = vmul.f32 %v1660, %v1072
      %v1703 = vmul.f32 %v1661, %v1073
      %v1704 = vmul.f32 %v1662, %v1074
      %v1705 = vmul.f32 %v1663, %v1075
      %v1706 = vmul.f32 %v1664, %v1076
      %v1707 = vmul.f32 %v1665, %v1077
      %v1708 = vmul.f32 %v1666, %v1078
      %v1709 = vmul.f32 %v1667, %v1079
      %v1710 = vmul.f32 %v1668, %v1080
      %v1711 = vmul.f32 %v1669, %v1081
      %v1712 = vmul.f32 %v1670, %v1082
      %v1713 = vmul.f32 %v1671, %v1083
      %v1714 = vmul.f32 %v1672, %v1084
      %v1715 = vmul.f32 %v1673, %v1085
      %v1716 = vmul.f32 %v1674, %v1086
      %v1717 = vmul.f32 %v1675, %v1087
      %v1718 = vmul.f32 %v1676, %v1088
      %v1719 = vmul.f32 %v1677, %v1089
      %v1720 = vadd.f32 %v1678, 0.11098505
      %v1721 = vadd.f32 %v1679, 0.11098505
      %v1722 = vadd.f32 %v1680, 0.11098505
      %v1723 = vadd.f32 %v1681, 0.11098505
      %v1724 = vadd.f32 %v1682, 0.11098505
      %v1725 = vadd.f32 %v1683, 0.11098505
      %v1726 = vadd.f32 %v1684, 0.11098505
      %v1727 = vadd.f32 %v1685, 0.11098505
      %v1728 = vadd.f32 %v1686, 0.11098505
      %v1729 = vadd.f32 %v1687, 0.11098505
      %v1730 = vadd.f32 %v1688, 0.11098505
      %v1731 = vadd.f32 %v1689, 0.11098505
      %v1732 = vadd.f32 %v1690, 0.11098505
      %v1733 = vadd.f32 %v1691, 0.11098505
      %v1734 = vadd.f32 %v1692, 0.11098505
      %v1735 = vadd.f32 %v1693, 0.11098505
      %v1736 = vadd.f32 %v1694, 0.11098505
      %v1737 = vadd.f32 %v1695, 0.11098505
      %v1738 = vadd.f32 %v1696, 0.11098505
      %v1739 = vadd.f32 %v1697, 0.11098505
      %v1740 = vadd.f32 %v1698, 0.11098505
      %v1741 = vadd.f32 %v1699, 0.11098505
      %v1742 = vadd.f32 %v1700, 0.11098505
      %v1743 = vadd.f32 %v1701, 0.11098505
      %v1744 = vadd.f32 %v1702, 0.11098505
      %v1745 = vadd.f32 %v1703, 0.11098505
      %v1746 = vadd.f32 %v1704, 0.11098505
      %v1747 = vadd.f32 %v1705, 0.11098505
      %v1748 = vadd.f32 %v1706, 0.11098505
      %v1749 = vadd.f32 %v1707, 0.11098505
      %v1750 = vadd.f32 %v1708, 0.11098505
      %v1751 = vadd.f32 %v1709, 0.11098505
      %v1752 = vadd.f32 %v1710, 0.11098505
      %v1753 = vadd.f32 %v1711, 0.11098505
      %v1754 = vadd.f32 %v1712, 0.11098505
      %v1755 = vadd.f32 %v1713, 0.11098505
      %v1756 = vadd.f32 %v1714, 0.11098505
      %v1757 = vadd.f32 %v1715, 0.11098505
      %v1758 = vadd.f32 %v1716, 0.11098505
      %v1759 = vadd.f32 %v1717, 0.11098505
      %v1760 = vadd.f32 %v1718, 0.11098505
      %v1761 = vadd.f32 %v1719, 0.11098505
      %v1762 = vmul.f32 %v1720, %v1048
      %v1763 = vmul.f32 %v1721, %v1049
      %v1764 = vmul.f32 %v1722, %v1050
      %v1765 = vmul.f32 %v1723, %v1051
      %v1766 = vmul.f32 %v1724, %v1052
      %v1767 = vmul.f32 %v1725, %v1053
      %v1768 = vmul.f32 %v1726, %v1054
      %v1769 = vmul.f32 %v1727, %v1055
      %v1770 = vmul.f32 %v1728, %v1056
      %v1771 = vmul.f32 %v1729, %v1057
      %v1772 = vmul.f32 %v1730, %v1058
      %v1773 = vmul.f32 %v1731, %v1059
      %v1774 = vmul.f32 %v1732, %v1060
      %v1775 = vmul.f32 %v1733, %v1061
      %v1776 = vmul.f32 %v1734, %v1062
      %v1777 = vmul.f32 %v1735, %v1063
      %v1778 = vmul.f32 %v1736, %v1064
      %v1779 = vmul.f32 %v1737, %v1065
      %v1780 = vmul.f32 %v1738, %v1066
      %v1781 = vmul.f32 %v1739, %v1067
      %v1782 = vmul.f32 %v1740, %v1068
      %v1783 = vmul.f32 %v1741, %v1069
      %v1784 = vmul.f32 %v1742, %v1070
      %v1785 = vmul.f32 %v1743, %v1071
      %v1786 = vmul.f32 %v1744, %v1072
      %v1787 = vmul.f32 %v1745, %v1073
      %v1788 = vmul.f32 %v1746, %v1074
      %v1789 = vmul.f32 %v1747, %v1075
      %v1790 = vmul.f32 %v1748, %v1076
      %v1791 = vmul.f32 %v1749, %v1077
      %v1792 = vmul.f32 %v1750, %v1078
      %v1793 = vmul.f32 %v1751, %v1079
      %v1794 = vmul.f32 %v1752, %v1080
      %v1795 = vmul.f32 %v1753, %v1081
      %v1796 = vmul.f32 %v1754, %v1082
      %v1797 = vmul.f32 %v1755, %v1083
      %v1798 = vmul.f32 %v1756, %v1084
      %v1799 = vmul.f32 %v1757, %v1085
      %v1800 = vmul.f32 %v1758, %v1086
      %v1801 = vmul.f32 %v1759, %v1087
      %v1802 = vmul.f32 %v1760, %v1088
      %v1803 = vmul.f32 %v1761, %v1089
      %v1804 = vadd.f32 %v1762, 0.49746925
      %v1805 = vadd.f32 %v1763, 0.49746925
      %v1806 = vadd.f32 %v1764, 0.49746925
      %v1807 = vadd.f32 %v1765, 0.49746925
      %v1808 = vadd.f32 %v1766, 0.49746925
      %v1809 = vadd.f32 %v1767, 0.49746925
      %v1810 = vadd.f32 %v1768, 0.49746925
      %v1811 = vadd.f32 %v1769, 0.49746925
      %v1812 = vadd.f32 %v1770, 0.49746925
      %v1813 = vadd.f32 %v1771, 0.49746925
      %v1814 = vadd.f32 %v1772, 0.49746925
      %v1815 = vadd.f32 %v1773, 0.49746925
      %v1816 = vadd.f32 %v1774, 0.49746925
      %v1817 = vadd.f32 %v1775, 0.49746925
      %v1818 = vadd.f32 %v1776, 0.49746925
      %v1819 = vadd.f32 %v1777, 0.49746925
      %v1820 = vadd.f32 %v1778, 0.49746925
      %v1821 = vadd.f32 %v1779, 0.49746925
      %v1822 = vadd.f32 %v1780, 0.49746925
      %v1823 = vadd.f32 %v1781, 0.49746925
      %v1824 = vadd.f32 %v1782, 0.49746925
      %v1825 = vadd.f32 %v1783, 0.49746925
      %v1826 = vadd.f32 %v1784, 0.49746925
      %v1827 = vadd.f32 %v1785, 0.49746925
      %v1828 = vadd.f32 %v1786, 0.49746925
      %v1829 = vadd.f32 %v1787, 0.49746925
      %v1830 = vadd.f32 %v1788, 0.49746925
      %v1831 = vadd.f32 %v1789, 0.49746925
      %v1832 = vadd.f32 %v1790, 0.49746925
      %v1833 = vadd.f32 %v1791, 0.49746925
      %v1834 = vadd.f32 %v1792, 0.49746925
      %v1835 = vadd.f32 %v1793, 0.49746925
      %v1836 = vadd.f32 %v1794, 0.49746925
      %v1837 = vadd.f32 %v1795, 0.49746925
      %v1838 = vadd.f32 %v1796, 0.49746925
      %v1839 = vadd.f32 %v1797, 0.49746925
      %v1840 = vadd.f32 %v1798, 0.49746925
      %v1841 = vadd.f32 %v1799, 0.49746925
      %v1842 = vadd.f32 %v1800, 0.49746925
      %v1843 = vadd.f32 %v1801, 0.49746925
      %v1844 = vadd.f32 %v1802, 0.49746925
      %v1845 = vadd.f32 %v1803, 0.49746925
      %v1846 = vmul.f32 %v1804, %v1048
      %v1847 = vmul.f32 %v1805, %v1049
      %v1848 = vmul.f32 %v1806, %v1050
      %v1849 = vmul.f32 %v1807, %v1051
      %v1850 = vmul.f32 %v1808, %v1052
      %v1851 = vmul.f32 %v1809, %v1053
      %v1852 = vmul.f32 %v1810, %v1054
      %v1853 = vmul.f32 %v1811, %v1055
      %v1854 = vmul.f32 %v1812, %v1056
      %v1855 = vmul.f32 %v1813, %v1057
      %v1856 = vmul.f32 %v1814, %v1058
      %v1857 = vmul.f32 %v1815, %v1059
      %v1858 = vmul.f32 %v1816, %v1060
      %v1859 = vmul.f32 %v1817, %v1061
      %v1860 = vmul.f32 %v1818, %v1062
      %v1861 = vmul.f32 %v1819, %v1063
      %v1862 = vmul.f32 %v1820, %v1064
      %v1863 = vmul.f32 %v1821, %v1065
      %v1864 = vmul.f32 %v1822, %v1066
      %v1865 = vmul.f32 %v1823, %v1067
      %v1866 = vmul.f32 %v1824, %v1068
      %v1867 = vmul.f32 %v1825, %v1069
      %v1868 = vmul.f32 %v1826, %v1070
      %v1869 = vmul.f32 %v1827, %v1071
      %v1870 = vmul.f32 %v1828, %v1072
      %v1871 = vmul.f32 %v1829, %v1073
      %v1872 = vmul.f32 %v1830, %v1074
      %v1873 = vmul.f32 %v1831, %v1075
      %v1874 = vmul.f32 %v1832, %v1076
      %v1875 = vmul.f32 %v1833, %v1077
      %v1876 = vmul.f32 %v1834, %v1078
      %v1877 = vmul.f32 %v1835, %v1079
      %v1878 = vmul.f32 %v1836, %v1080
      %v1879 = vmul.f32 %v1837, %v1081
      %v1880 = vmul.f32 %v1838, %v1082
      %v1881 = vmul.f32 %v1839, %v1083
      %v1882 = vmul.f32 %v1840, %v1084
      %v1883 = vmul.f32 %v1841, %v1085
      %v1884 = vmul.f32 %v1842, %v1086
      %v1885 = vmul.f32 %v1843, %v1087
      %v1886 = vmul.f32 %v1844, %v1088
      %v1887 = vmul.f32 %v1845, %v1089
      %v1888 = vadd.f32 %v1846, 1.0
      %v1889 = vadd.f32 %v1847, 1.0
      %v1890 = vadd.f32 %v1848, 1.0
      %v1891 = vadd.f32 %v1849, 1.0
      %v1892 = vadd.f32 %v1850, 1.0
      %v1893 = vadd.f32 %v1851, 1.0
      %v1894 = vadd.f32 %v1852, 1.0
      %v1895 = vadd.f32 %v1853, 1.0
      %v1896 = vadd.f32 %v1854, 1.0
      %v1897 = vadd.f32 %v1855, 1.0
      %v1898 = vadd.f32 %v1856, 1.0
      %v1899 = vadd.f32 %v1857, 1.0
      %v1900 = vadd.f32 %v1858, 1.0
      %v1901 = vadd.f32 %v1859, 1.0
      %v1902 = vadd.f32 %v1860, 1.0
      %v1903 = vadd.f32 %v1861, 1.0
      %v1904 = vadd.f32 %v1862, 1.0
      %v1905 = vadd.f32 %v1863, 1.0
      %v1906 = vadd.f32 %v1864, 1.0
      %v1907 = vadd.f32 %v1865, 1.0
      %v1908 = vadd.f32 %v1866, 1.0
      %v1909 = vadd.f32 %v1867, 1.0
      %v1910 = vadd.f32 %v1868, 1.0
      %v1911 = vadd.f32 %v1869, 1.0
      %v1912 = vadd.f32 %v1870, 1.0
      %v1913 = vadd.f32 %v1871, 1.0
      %v1914 = vadd.f32 %v1872, 1.0
      %v1915 = vadd.f32 %v1873, 1.0
      %v1916 = vadd.f32 %v1874, 1.0
      %v1917 = vadd.f32 %v1875, 1.0
      %v1918 = vadd.f32 %v1876, 1.0
      %v1919 = vadd.f32 %v1877, 1.0
      %v1920 = vadd.f32 %v1878, 1.0
      %v1921 = vadd.f32 %v1879, 1.0
      %v1922 = vadd.f32 %v1880, 1.0
      %v1923 = vadd.f32 %v1881, 1.0
      %v1924 = vadd.f32 %v1882, 1.0
      %v1925 = vadd.f32 %v1883, 1.0
      %v1926 = vadd.f32 %v1884, 1.0
      %v1927 = vadd.f32 %v1885, 1.0
      %v1928 = vadd.f32 %v1886, 1.0
      %v1929 = vadd.f32 %v1887, 1.0
      %v1930 = vrcp.pop %v1888
      %v1931 = vrcp.pop %v1889
      %v1932 = vrcp.pop %v1890
      %v1933 = vrcp.pop %v1891
      %v1934 = vrcp.pop %v1892
      %v1935 = vrcp.pop %v1893
      %v1936 = vrcp.pop %v1894
      %v1937 = vrcp.pop %v1895
      %v1938 = vrcp.pop %v1896
      %v1939 = vrcp.pop %v1897
      %v1940 = vrcp.pop %v1898
      %v1941 = vrcp.pop %v1899
      %v1942 = vrcp.pop %v1900
      %v1943 = vrcp.pop %v1901
      %v1944 = vrcp.pop %v1902
      %v1945 = vrcp.pop %v1903
      %v1946 = vrcp.pop %v1904
      %v1947 = vrcp.pop %v1905
      %v1948 = vrcp.pop %v1906
      %v1949 = vrcp.pop %v1907
      %v1950 = vrcp.pop %v1908
      %v1951 = vrcp.pop %v1909
      %v1952 = vrcp.pop %v1910
      %v1953 = vrcp.pop %v1911
      %v1954 = vrcp.pop %v1912
      %v1955 = vrcp.pop %v1913
      %v1956 = vrcp.pop %v1914
      %v1957 = vrcp.pop %v1915
      %v1958 = vrcp.pop %v1916
      %v1959 = vrcp.pop %v1917
      %v1960 = vrcp.pop %v1918
      %v1961 = vrcp.pop %v1919
      %v1962 = vrcp.pop %v1920
      %v1963 = vrcp.pop %v1921
      %v1964 = vrcp.pop %v1922
      %v1965 = vrcp.pop %v1923
      %v1966 = vrcp.pop %v1924
      %v1967 = vrcp.pop %v1925
      %v1968 = vrcp.pop %v1926
      %v1969 = vrcp.pop %v1927
      %v1970 = vrcp.pop %v1928
      %v1971 = vrcp.pop %v1929
      %v1972 = vmul.f32 %v1888, %v1930
      %v1973 = vmul.f32 %v1889, %v1931
      %v1974 = vmul.f32 %v1890, %v1932
      %v1975 = vmul.f32 %v1891, %v1933
      %v1976 = vmul.f32 %v1892, %v1934
      %v1977 = vmul.f32 %v1893, %v1935
      %v1978 = vmul.f32 %v1894, %v1936
      %v1979 = vmul.f32 %v1895, %v1937
      %v1980 = vmul.f32 %v1896, %v1938
      %v1981 = vmul.f32 %v1897, %v1939
      %v1982 = vmul.f32 %v1898, %v1940
      %v1983 = vmul.f32 %v1899, %v1941
      %v1984 = vmul.f32 %v1900, %v1942
      %v1985 = vmul.f32 %v1901, %v1943
      %v1986 = vmul.f32 %v1902, %v1944
      %v1987 = vmul.f32 %v1903, %v1945
      %v1988 = vmul.f32 %v1904, %v1946
      %v1989 = vmul.f32 %v1905, %v1947
      %v1990 = vmul.f32 %v1906, %v1948
      %v1991 = vmul.f32 %v1907, %v1949
      %v1992 = vmul.f32 %v1908, %v1950
      %v1993 = vmul.f32 %v1909, %v1951
      %v1994 = vmul.f32 %v1910, %v1952
      %v1995 = vmul.f32 %v1911, %v1953
      %v1996 = vmul.f32 %v1912, %v1954
      %v1997 = vmul.f32 %v1913, %v1955
      %v1998 = vmul.f32 %v1914, %v1956
      %v1999 = vmul.f32 %v1915, %v1957
      %v2000 = vmul.f32 %v1916, %v1958
      %v2001 = vmul.f32 %v1917, %v1959
      %v2002 = vmul.f32 %v1918, %v1960
      %v2003 = vmul.f32 %v1919, %v1961
      %v2004 = vmul.f32 %v1920, %v1962
      %v2005 = vmul.f32 %v1921, %v1963
      %v2006 = vmul.f32 %v1922, %v1964
      %v2007 = vmul.f32 %v1923, %v1965
      %v2008 = vmul.f32 %v1924, %v1966
      %v2009 = vmul.f32 %v1925, %v1967
      %v2010 = vmul.f32 %v1926, %v1968
      %v2011 = vmul.f32 %v1927, %v1969
      %v2012 = vmul.f32 %v1928, %v1970
      %v2013 = vmul.f32 %v1929, %v1971
      %v2014 = vsub.f32 2.0, %v1972
      %v2015 = vsub.f32 2.0, %v1973
      %v2016 = vsub.f32 2.0, %v1974
      %v2017 = vsub.f32 2.0, %v1975
      %v2018 = vsub.f32 2.0, %v1976
      %v2019 = vsub.f32 2.0, %v1977
      %v2020 = vsub.f32 2.0, %v1978
      %v2021 = vsub.f32 2.0, %v1979
      %v2022 = vsub.f32 2.0, %v1980
      %v2023 = vsub.f32 2.0, %v1981
      %v2024 = vsub.f32 2.0, %v1982
      %v2025 = vsub.f32 2.0, %v1983
      %v2026 = vsub.f32 2.0, %v1984
      %v2027 = vsub.f32 2.0, %v1985
      %v2028 = vsub.f32 2.0, %v1986
      %v2029 = vsub.f32 2.0, %v1987
      %v2030 = vsub.f32 2.0, %v1988
      %v2031 = vsub.f32 2.0, %v1989
      %v2032 = vsub.f32 2.0, %v1990
      %v2033 = vsub.f32 2.0, %v1991
      %v2034 = vsub.f32 2.0, %v1992
      %v2035 = vsub.f32 2.0, %v1993
      %v2036 = vsub.f32 2.0, %v1994
      %v2037 = vsub.f32 2.0, %v1995
      %v2038 = vsub.f32 2.0, %v1996
      %v2039 = vsub.f32 2.0, %v1997
      %v2040 = vsub.f32 2.0, %v1998
      %v2041 = vsub.f32 2.0, %v1999
      %v2042 = vsub.f32 2.0, %v2000
      %v2043 = vsub.f32 2.0, %v2001
      %v2044 = vsub.f32 2.0, %v2002
      %v2045 = vsub.f32 2.0, %v2003
      %v2046 = vsub.f32 2.0, %v2004
      %v2047 = vsub.f32 2.0, %v2005
      %v2048 = vsub.f32 2.0, %v2006
      %v2049 = vsub.f32 2.0, %v2007
      %v2050 = vsub.f32 2.0, %v2008
      %v2051 = vsub.f32 2.0, %v2009
      %v2052 = vsub.f32 2.0, %v2010
      %v2053 = vsub.f32 2.0, %v2011
      %v2054 = vsub.f32 2.0, %v2012
      %v2055 = vsub.f32 2.0, %v2013
      %v2056 = vmul.f32 %v1930, %v2014
      %v2057 = vmul.f32 %v1931, %v2015
      %v2058 = vmul.f32 %v1932, %v2016
      %v2059 = vmul.f32 %v1933, %v2017
      %v2060 = vmul.f32 %v1934, %v2018
      %v2061 = vmul.f32 %v1935, %v2019
      %v2062 = vmul.f32 %v1936, %v2020
      %v2063 = vmul.f32 %v1937, %v2021
      %v2064 = vmul.f32 %v1938, %v2022
      %v2065 = vmul.f32 %v1939, %v2023
      %v2066 = vmul.f32 %v1940, %v2024
      %v2067 = vmul.f32 %v1941, %v2025
      %v2068 = vmul.f32 %v1942, %v2026
      %v2069 = vmul.f32 %v1943, %v2027
      %v2070 = vmul.f32 %v1944, %v2028
      %v2071 = vmul.f32 %v1945, %v2029
      %v2072 = vmul.f32 %v1946, %v2030
      %v2073 = vmul.f32 %v1947, %v2031
      %v2074 = vmul.f32 %v1948, %v2032
      %v2075 = vmul.f32 %v1949, %v2033
      %v2076 = vmul.f32 %v1950, %v2034
      %v2077 = vmul.f32 %v1951, %v2035
      %v2078 = vmul.f32 %v1952, %v2036
      %v2079 = vmul.f32 %v1953, %v2037
      %v2080 = vmul.f32 %v1954, %v2038
      %v2081 = vmul.f32 %v1955, %v2039
      %v2082 = vmul.f32 %v1956, %v2040
      %v2083 = vmul.f32 %v1957, %v2041
      %v2084 = vmul.f32 %v1958, %v2042
      %v2085 = vmul.f32 %v1959, %v2043
      %v2086 = vmul.f32 %v1960, %v2044
      %v2087 = vmul.f32 %v1961, %v2045
      %v2088 = vmul.f32 %v1962, %v2046
      %v2089 = vmul.f32 %v1963, %v2047
      %v2090 = vmul.f32 %v1964, %v2048
      %v2091 = vmul.f32 %v1965, %v2049
      %v2092 = vmul.f32 %v1966, %v2050
      %v2093 = vmul.f32 %v1967, %v2051
      %v2094 = vmul.f32 %v1968, %v2052
      %v2095 = vmul.f32 %v1969, %v2053
      %v2096 = vmul.f32 %v1970, %v2054
      %v2097 = vmul.f32 %v1971, %v2055
      %v2098 = vmul.f32 %v1006, %v1384
      %v2099 = vmul.f32 %v1007, %v1385
      %v2100 = vmul.f32 %v1008, %v1386
      %v2101 = vmul.f32 %v1009, %v1387
      %v2102 = vmul.f32 %v1010, %v1388
      %v2103 = vmul.f32 %v1011, %v1389
      %v2104 = vmul.f32 %v1012, %v1390
      %v2105 = vmul.f32 %v1013, %v1391
      %v2106 = vmul.f32 %v1014, %v1392
      %v2107 = vmul.f32 %v1015, %v1393
      %v2108 = vmul.f32 %v1016, %v1394
      %v2109 = vmul.f32 %v1017, %v1395
      %v2110 = vmul.f32 %v1018, %v1396
      %v2111 = vmul.f32 %v1019, %v1397
      %v2112 = vmul.f32 %v1020, %v1398
      %v2113 = vmul.f32 %v1021, %v1399
      %v2114 = vmul.f32 %v1022, %v1400
      %v2115 = vmul.f32 %v1023, %v1401
      %v2116 = vmul.f32 %v1024, %v1402
      %v2117 = vmul.f32 %v1025, %v1403
      %v2118 = vmul.f32 %v1026, %v1404
      %v2119 = vmul.f32 %v1027, %v1405
      %v2120 = vmul.f32 %v1028, %v1406
      %v2121 = vmul.f32 %v1029, %v1407
      %v2122 = vmul.f32 %v1030, %v1408
      %v2123 = vmul.f32 %v1031, %v1409
      %v2124 = vmul.f32 %v1032, %v1410
      %v2125 = vmul.f32 %v1033, %v1411
      %v2126 = vmul.f32 %v1034, %v1412
      %v2127 = vmul.f32 %v1035, %v1413
      %v2128 = vmul.f32 %v1036, %v1414
      %v2129 = vmul.f32 %v1037, %v1415
      %v2130 = vmul.f32 %v1038, %v1416
      %v2131 = vmul.f32 %v1039, %v1417
      %v2132 = vmul.f32 %v1040, %v1418
      %v2133 = vmul.f32 %v1041, %v1419
      %v2134 = vmul.f32 %v1042, %v1420
      %v2135 = vmul.f32 %v1043, %v1421
      %v2136 = vmul.f32 %v1044, %v1422
      %v2137 = vmul.f32 %v1045, %v1423
      %v2138 = vmul.f32 %v1046, %v1424
      %v2139 = vmul.f32 %v1047, %v1425
      %v2140 = vmul.f32 %v2098, %v2056
      %v2141 = vmul.f32 %v2099, %v2057
      %v2142 = vmul.f32 %v2100, %v2058
      %v2143 = vmul.f32 %v2101, %v2059
      %v2144 = vmul.f32 %v2102, %v2060
      %v2145 = vmul.f32 %v2103, %v2061
      %v2146 = vmul.f32 %v2104, %v2062
      %v2147 = vmul.f32 %v2105, %v2063
      %v2148 = vmul.f32 %v2106, %v2064
      %v2149 = vmul.f32 %v2107, %v2065
      %v2150 = vmul.f32 %v2108, %v2066
      %v2151 = vmul.f32 %v2109, %v2067
      %v2152 = vmul.f32 %v2110, %v2068
      %v2153 = vmul.f32 %v2111, %v2069
      %v2154 = vmul.f32 %v2112, %v2070
      %v2155 = vmul.f32 %v2113, %v2071
      %v2156 = vmul.f32 %v2114, %v2072
      %v2157 = vmul.f32 %v2115, %v2073
      %v2158 = vmul.f32 %v2116, %v2074
      %v2159 = vmul.f32 %v2117, %v2075
      %v2160 = vmul.f32 %v2118, %v2076
      %v2161 = vmul.f32 %v2119, %v2077
      %v2162 = vmul.f32 %v2120, %v2078
      %v2163 = vmul.f32 %v2121, %v2079
      %v2164 = vmul.f32 %v2122, %v2080
      %v2165 = vmul.f32 %v2123, %v2081
      %v2166 = vmul.f32 %v2124, %v2082
      %v2167 = vmul.f32 %v2125, %v2083
      %v2168 = vmul.f32 %v2126, %v2084
      %v2169 = vmul.f32 %v2127, %v2085
      %v2170 = vmul.f32 %v2128, %v2086
      %v2171 = vmul.f32 %v2129, %v2087
      %v2172 = vmul.f32 %v2130, %v2088
      %v2173 = vmul.f32 %v2131, %v2089
      %v2174 = vmul.f32 %v2132, %v2090
      %v2175 = vmul.f32 %v2133, %v2091
      %v2176 = vmul.f32 %v2134, %v2092
      %v2177 = vmul.f32 %v2135, %v2093
      %v2178 = vmul.f32 %v2136, %v2094
      %v2179 = vmul.f32 %v2137, %v2095
      %v2180 = vmul.f32 %v2138, %v2096
      %v2181 = vmul.f32 %v2139, %v2097
      %v2182 = vadd.f32 %v2140, 1.0
      %v2183 = vadd.f32 %v2141, 1.0
      %v2184 = vadd.f32 %v2142, 1.0
      %v2185 = vadd.f32 %v2143, 1.0
      %v2186 = vadd.f32 %v2144, 1.0
      %v2187 = vadd.f32 %v2145, 1.0
      %v2188 = vadd.f32 %v2146, 1.0
      %v2189 = vadd.f32 %v2147, 1.0
      %v2190 = vadd.f32 %v2148, 1.0
      %v2191 = vadd.f32 %v2149, 1.0
      %v2192 = vadd.f32 %v2150, 1.0
      %v2193 = vadd.f32 %v2151, 1.0
      %v2194 = vadd.f32 %v2152, 1.0
      %v2195 = vadd.f32 %v2153, 1.0
      %v2196 = vadd.f32 %v2154, 1.0
      %v2197 = vadd.f32 %v2155, 1.0
      %v2198 = vadd.f32 %v2156, 1.0
      %v2199 = vadd.f32 %v2157, 1.0
      %v2200 = vadd.f32 %v2158, 1.0
      %v2201 = vadd.f32 %v2159, 1.0
      %v2202 = vadd.f32 %v2160, 1.0
      %v2203 = vadd.f32 %v2161, 1.0
      %v2204 = vadd.f32 %v2162, 1.0
      %v2205 = vadd.f32 %v2163, 1.0
      %v2206 = vadd.f32 %v2164, 1.0
      %v2207 = vadd.f32 %v2165, 1.0
      %v2208 = vadd.f32 %v2166, 1.0
      %v2209 = vadd.f32 %v2167, 1.0
      %v2210 = vadd.f32 %v2168, 1.0
      %v2211 = vadd.f32 %v2169, 1.0
      %v2212 = vadd.f32 %v2170, 1.0
      %v2213 = vadd.f32 %v2171, 1.0
      %v2214 = vadd.f32 %v2172, 1.0
      %v2215 = vadd.f32 %v2173, 1.0
      %v2216 = vadd.f32 %v2174, 1.0
      %v2217 = vadd.f32 %v2175, 1.0
      %v2218 = vadd.f32 %v2176, 1.0
      %v2219 = vadd.f32 %v2177, 1.0
      %v2220 = vadd.f32 %v2178, 1.0
      %v2221 = vadd.f32 %v2179, 1.0
      %v2222 = vadd.f32 %v2180, 1.0
      %v2223 = vadd.f32 %v2181, 1.0
      %v2224 = vmul.f32 %v880, %v2182
      %v2225 = vmul.f32 %v881, %v2183
      %v2226 = vmul.f32 %v882, %v2184
      %v2227 = vmul.f32 %v883, %v2185
      %v2228 = vmul.f32 %v884, %v2186
      %v2229 = vmul.f32 %v885, %v2187
      %v2230 = vmul.f32 %v886, %v2188
      %v2231 = vmul.f32 %v887, %v2189
      %v2232 = vmul.f32 %v888, %v2190
      %v2233 = vmul.f32 %v889, %v2191
      %v2234 = vmul.f32 %v890, %v2192
      %v2235 = vmul.f32 %v891, %v2193
      %v2236 = vmul.f32 %v892, %v2194
      %v2237 = vmul.f32 %v893, %v2195
      %v2238 = vmul.f32 %v894, %v2196
      %v2239 = vmul.f32 %v895, %v2197
      %v2240 = vmul.f32 %v896, %v2198
      %v2241 = vmul.f32 %v897, %v2199
      %v2242 = vmul.f32 %v898, %v2200
      %v2243 = vmul.f32 %v899, %v2201
      %v2244 = vmul.f32 %v900, %v2202
      %v2245 = vmul.f32 %v901, %v2203
      %v2246 = vmul.f32 %v902, %v2204
      %v2247 = vmul.f32 %v903, %v2205
      %v2248 = vmul.f32 %v904, %v2206
      %v2249 = vmul.f32 %v905, %v2207
      %v2250 = vmul.f32 %v906, %v2208
      %v2251 = vmul.f32 %v907, %v2209
      %v2252 = vmul.f32 %v908, %v2210
      %v2253 = vmul.f32 %v909, %v2211
      %v2254 = vmul.f32 %v910, %v2212
      %v2255 = vmul.f32 %v911, %v2213
      %v2256 = vmul.f32 %v912, %v2214
      %v2257 = vmul.f32 %v913, %v2215
      %v2258 = vmul.f32 %v914, %v2216
      %v2259 = vmul.f32 %v915, %v2217
      %v2260 = vmul.f32 %v916, %v2218
      %v2261 = vmul.f32 %v917, %v2219
      %v2262 = vmul.f32 %v918, %v2220
      %v2263 = vmul.f32 %v919, %v2221
      %v2264 = vmul.f32 %v920, %v2222
      %v2265 = vmul.f32 %v921, %v2223
      %v2266 = vld [vmem:[#allocation3] sm:$0xff]
      %v2267 = vld [vmem:[#allocation3 + $0x8] sm:$0xff]
      %v2268 = vld [vmem:[#allocation3 + $0x10] sm:$0xff]
      %v2269 = vld [vmem:[#allocation3 + $0x18] sm:$0xff]
      %v2270 = vld [vmem:[#allocation3 + $0x20] sm:$0xff]
      %v2271 = vld [vmem:[#allocation3 + $0x28] sm:$0xff]
      %v2272 = vld [vmem:[#allocation3 + $0x30] sm:$0xff]
      %v2273 = vld [vmem:[#allocation3 + $0x38] sm:$0xff]
      %v2274 = vld [vmem:[#allocation3 + $0x40] sm:$0xff]
      %v2275 = vld [vmem:[#allocation3 + $0x48] sm:$0xff]
      %v2276 = vld [vmem:[#allocation3 + $0x50] sm:$0xff]
      %v2277 = vld [vmem:[#allocation3 + $0x58] sm:$0xff]
      %v2278 = vld [vmem:[#allocation3 + $0x60] sm:$0xff]
      %v2279 = vld [vmem:[#allocation3 + $0x68] sm:$0xff]
      %v2280 = vld [vmem:[#allocation3 + $0x70] sm:$0xff]
      %v2281 = vld [vmem:[#allocation3 + $0x78] sm:$0xff]
      %v2282 = vld [vmem:[#allocation3 + $0x80] sm:$0xff]
      %v2283 = vld [vmem:[#allocation3 + $0x88] sm:$0xff]
      %v2284 = vld [vmem:[#allocation3 + $0x90] sm:$0xff]
      %v2285 = vld [vmem:[#allocation3 + $0x98] sm:$0xff]
      %v2286 = vld [vmem:[#allocation3 + $0xa0] sm:$0xff]
      %v2287 = vld [vmem:[#allocation3 + $0xa8] sm:$0xff]
      %v2288 = vld [vmem:[#allocation3 + $0xb0] sm:$0xff]
      %v2289 = vld [vmem:[#allocation3 + $0xb8] sm:$0xff]
      %v2290 = vld [vmem:[#allocation3 + $0xc0] sm:$0xff]
      %v2291 = vld [vmem:[#allocation3 + $0xc8] sm:$0xff]
      %v2292 = vld [vmem:[#allocation3 + $0xd0] sm:$0xff]
      %v2293 = vld [vmem:[#allocation3 + $0xd8] sm:$0xff]
      %v2294 = vld [vmem:[#allocation3 + $0xe0] sm:$0xff]
      %v2295 = vld [vmem:[#allocation3 + $0xe8] sm:$0xff]
      %v2296 = vld [vmem:[#allocation3 + $0xf0] sm:$0xff]
      %v2297 = vld [vmem:[#allocation3 + $0xf8] sm:$0xff]
      %v2298 = vld [vmem:[#allocation3 + $0x100] sm:$0xff]
      %v2299 = vld [vmem:[#allocation3 + $0x108] sm:$0xff]
      %v2300 = vld [vmem:[#allocation3 + $0x110] sm:$0xff]
      %v2301 = vld [vmem:[#allocation3 + $0x118] sm:$0xff]
      %v2302 = vld [vmem:[#allocation3 + $0x120] sm:$0xff]
      %v2303 = vld [vmem:[#allocation3 + $0x128] sm:$0xff]
      %v2304 = vld [vmem:[#allocation3 + $0x130] sm:$0xff]
      %v2305 = vld [vmem:[#allocation3 + $0x138] sm:$0xff]
      %v2306 = vld [vmem:[#allocation3 + $0x140] sm:$0xff]
      %v2307 = vld [vmem:[#allocation3 + $0x148] sm:$0xff]
      %2309 = vset.pattern.permute.xlu0 0
      %2310 = vperm.xlu0 %2309, %v2266
      %v2311 = vpop.permute.xlu0 %2310
      %2314 = vset.pattern.permute.xlu0 0
      %2315 = vperm.xlu0 %2314, %v2267
      %v2316 = vpop.permute.xlu0 %2315
      %2319 = vset.pattern.permute.xlu0 0
      %2320 = vperm.xlu0 %2319, %v2268
      %v2321 = vpop.permute.xlu0 %2320
      %2324 = vset.pattern.permute.xlu0 0
      %2325 = vperm.xlu0 %2324, %v2269
      %v2326 = vpop.permute.xlu0 %2325
      %2329 = vset.pattern.permute.xlu0 0
      %2330 = vperm.xlu0 %2329, %v2270
      %v2331 = vpop.permute.xlu0 %2330
      %2334 = vset.pattern.permute.xlu0 0
      %2335 = vperm.xlu0 %2334, %v2271
      %v2336 = vpop.permute.xlu0 %2335
      %2339 = vset.pattern.permute.xlu0 0
      %2340 = vperm.xlu0 %2339, %v2272
      %v2341 = vpop.permute.xlu0 %2340
      %2344 = vset.pattern.permute.xlu0 0
      %2345 = vperm.xlu0 %2344, %v2273
      %v2346 = vpop.permute.xlu0 %2345
      %2349 = vset.pattern.permute.xlu0 0
      %2350 = vperm.xlu0 %2349, %v2274
      %v2351 = vpop.permute.xlu0 %2350
      %2354 = vset.pattern.permute.xlu0 0
      %2355 = vperm.xlu0 %2354, %v2275
      %v2356 = vpop.permute.xlu0 %2355
      %2359 = vset.pattern.permute.xlu0 0
      %2360 = vperm.xlu0 %2359, %v2276
      %v2361 = vpop.permute.xlu0 %2360
      %2364 = vset.pattern.permute.xlu0 0
      %2365 = vperm.xlu0 %2364, %v2277
      %v2366 = vpop.permute.xlu0 %2365
      %2369 = vset.pattern.permute.xlu0 0
      %2370 = vperm.xlu0 %2369, %v2278
      %v2371 = vpop.permute.xlu0 %2370
      %2374 = vset.pattern.permute.xlu0 0
      %2375 = vperm.xlu0 %2374, %v2279
      %v2376 = vpop.permute.xlu0 %2375
      %2379 = vset.pattern.permute.xlu0 0
      %2380 = vperm.xlu0 %2379, %v2280
      %v2381 = vpop.permute.xlu0 %2380
      %2384 = vset.pattern.permute.xlu0 0
      %2385 = vperm.xlu0 %2384, %v2281
      %v2386 = vpop.permute.xlu0 %2385
      %2389 = vset.pattern.permute.xlu0 0
      %2390 = vperm.xlu0 %2389, %v2282
      %v2391 = vpop.permute.xlu0 %2390
      %2394 = vset.pattern.permute.xlu0 0
      %2395 = vperm.xlu0 %2394, %v2283
      %v2396 = vpop.permute.xlu0 %2395
      %2399 = vset.pattern.permute.xlu0 0
      %2400 = vperm.xlu0 %2399, %v2284
      %v2401 = vpop.permute.xlu0 %2400
      %2404 = vset.pattern.permute.xlu0 0
      %2405 = vperm.xlu0 %2404, %v2285
      %v2406 = vpop.permute.xlu0 %2405
      %2409 = vset.pattern.permute.xlu0 0
      %2410 = vperm.xlu0 %2409, %v2286
      %v2411 = vpop.permute.xlu0 %2410
      %2414 = vset.pattern.permute.xlu0 0
      %2415 = vperm.xlu0 %2414, %v2287
      %v2416 = vpop.permute.xlu0 %2415
      %2419 = vset.pattern.permute.xlu0 0
      %2420 = vperm.xlu0 %2419, %v2288
      %v2421 = vpop.permute.xlu0 %2420
      %2424 = vset.pattern.permute.xlu0 0
      %2425 = vperm.xlu0 %2424, %v2289
      %v2426 = vpop.permute.xlu0 %2425
      %2429 = vset.pattern.permute.xlu0 0
      %2430 = vperm.xlu0 %2429, %v2290
      %v2431 = vpop.permute.xlu0 %2430
      %2434 = vset.pattern.permute.xlu0 0
      %2435 = vperm.xlu0 %2434, %v2291
      %v2436 = vpop.permute.xlu0 %2435
      %2439 = vset.pattern.permute.xlu0 0
      %2440 = vperm.xlu0 %2439, %v2292
      %v2441 = vpop.permute.xlu0 %2440
      %2444 = vset.pattern.permute.xlu0 0
      %2445 = vperm.xlu0 %2444, %v2293
      %v2446 = vpop.permute.xlu0 %2445
      %2449 = vset.pattern.permute.xlu0 0
      %2450 = vperm.xlu0 %2449, %v2294
      %v2451 = vpop.permute.xlu0 %2450
      %2454 = vset.pattern.permute.xlu0 0
      %2455 = vperm.xlu0 %2454, %v2295
      %v2456 = vpop.permute.xlu0 %2455
      %2459 = vset.pattern.permute.xlu0 0
      %2460 = vperm.xlu0 %2459, %v2296
      %v2461 = vpop.permute.xlu0 %2460
      %2464 = vset.pattern.permute.xlu0 0
      %2465 = vperm.xlu0 %2464, %v2297
      %v2466 = vpop.permute.xlu0 %2465
      %2469 = vset.pattern.permute.xlu0 0
      %2470 = vperm.xlu0 %2469, %v2298
      %v2471 = vpop.permute.xlu0 %2470
      %2474 = vset.pattern.permute.xlu0 0
      %2475 = vperm.xlu0 %2474, %v2299
      %v2476 = vpop.permute.xlu0 %2475
      %2479 = vset.pattern.permute.xlu0 0
      %2480 = vperm.xlu0 %2479, %v2300
      %v2481 = vpop.permute.xlu0 %2480
      %2484 = vset.pattern.permute.xlu0 0
      %2485 = vperm.xlu0 %2484, %v2301
      %v2486 = vpop.permute.xlu0 %2485
      %2489 = vset.pattern.permute.xlu0 0
      %2490 = vperm.xlu0 %2489, %v2302
      %v2491 = vpop.permute.xlu0 %2490
      %2494 = vset.pattern.permute.xlu0 0
      %2495 = vperm.xlu0 %2494, %v2303
      %v2496 = vpop.permute.xlu0 %2495
      %2499 = vset.pattern.permute.xlu0 0
      %2500 = vperm.xlu0 %2499, %v2304
      %v2501 = vpop.permute.xlu0 %2500
      %2504 = vset.pattern.permute.xlu0 0
      %2505 = vperm.xlu0 %2504, %v2305
      %v2506 = vpop.permute.xlu0 %2505
      %2509 = vset.pattern.permute.xlu0 0
      %2510 = vperm.xlu0 %2509, %v2306
      %v2511 = vpop.permute.xlu0 %2510
      %2514 = vset.pattern.permute.xlu0 0
      %2515 = vperm.xlu0 %2514, %v2307
      %v2516 = vpop.permute.xlu0 %2515
      %v2518 = vmul.f32 %v2224, %v2311
      %v2519 = vmul.f32 %v2225, %v2316
      %v2520 = vmul.f32 %v2226, %v2321
      %v2521 = vmul.f32 %v2227, %v2326
      %v2522 = vmul.f32 %v2228, %v2331
      %v2523 = vmul.f32 %v2229, %v2336
      %v2524 = vmul.f32 %v2230, %v2341
      %v2525 = vmul.f32 %v2231, %v2346
      %v2526 = vmul.f32 %v2232, %v2351
      %v2527 = vmul.f32 %v2233, %v2356
      %v2528 = vmul.f32 %v2234, %v2361
      %v2529 = vmul.f32 %v2235, %v2366
      %v2530 = vmul.f32 %v2236, %v2371
      %v2531 = vmul.f32 %v2237, %v2376
      %v2532 = vmul.f32 %v2238, %v2381
      %v2533 = vmul.f32 %v2239, %v2386
      %v2534 = vmul.f32 %v2240, %v2391
      %v2535 = vmul.f32 %v2241, %v2396
      %v2536 = vmul.f32 %v2242, %v2401
      %v2537 = vmul.f32 %v2243, %v2406
      %v2538 = vmul.f32 %v2244, %v2411
      %v2539 = vmul.f32 %v2245, %v2416
      %v2540 = vmul.f32 %v2246, %v2421
      %v2541 = vmul.f32 %v2247, %v2426
      %v2542 = vmul.f32 %v2248, %v2431
      %v2543 = vmul.f32 %v2249, %v2436
      %v2544 = vmul.f32 %v2250, %v2441
      %v2545 = vmul.f32 %v2251, %v2446
      %v2546 = vmul.f32 %v2252, %v2451
      %v2547 = vmul.f32 %v2253, %v2456
      %v2548 = vmul.f32 %v2254, %v2461
      %v2549 = vmul.f32 %v2255, %v2466
      %v2550 = vmul.f32 %v2256, %v2471
      %v2551 = vmul.f32 %v2257, %v2476
      %v2552 = vmul.f32 %v2258, %v2481
      %v2553 = vmul.f32 %v2259, %v2486
      %v2554 = vmul.f32 %v2260, %v2491
      %v2555 = vmul.f32 %v2261, %v2496
      %v2556 = vmul.f32 %v2262, %v2501
      %v2557 = vmul.f32 %v2263, %v2506
      %v2558 = vmul.f32 %v2264, %v2511
      %v2559 = vmul.f32 %v2265, %v2516
      %2560 = vst [vmem:[#allocation4] sm:$0xff] %v2518
      %2561 = vst [vmem:[#allocation4 + $0x8] sm:$0xff] %v2519
      %2562 = vst [vmem:[#allocation4 + $0x10] sm:$0xff] %v2520
      %2563 = vst [vmem:[#allocation4 + $0x18] sm:$0xff] %v2521
      %2564 = vst [vmem:[#allocation4 + $0x20] sm:$0xff] %v2522
      %2565 = vst [vmem:[#allocation4 + $0x28] sm:$0xff] %v2523
      %2566 = vst [vmem:[#allocation4 + $0x30] sm:$0xff] %v2524
      %2567 = vst [vmem:[#allocation4 + $0x38] sm:$0xff] %v2525
      %2568 = vst [vmem:[#allocation4 + $0x40] sm:$0xff] %v2526
      %2569 = vst [vmem:[#allocation4 + $0x48] sm:$0xff] %v2527
      %2570 = vst [vmem:[#allocation4 + $0x50] sm:$0xff] %v2528
      %2571 = vst [vmem:[#allocation4 + $0x58] sm:$0xff] %v2529
      %2572 = vst [vmem:[#allocation4 + $0x60] sm:$0xff] %v2530
      %2573 = vst [vmem:[#allocation4 + $0x68] sm:$0xff] %v2531
      %2574 = vst [vmem:[#allocation4 + $0x70] sm:$0xff] %v2532
      %2575 = vst [vmem:[#allocation4 + $0x78] sm:$0xff] %v2533
      %2576 = vst [vmem:[#allocation4 + $0x80] sm:$0xff] %v2534
      %2577 = vst [vmem:[#allocation4 + $0x88] sm:$0xff] %v2535
      %2578 = vst [vmem:[#allocation4 + $0x90] sm:$0xff] %v2536
      %2579 = vst [vmem:[#allocation4 + $0x98] sm:$0xff] %v2537
      %2580 = vst [vmem:[#allocation4 + $0xa0] sm:$0xff] %v2538
      %2581 = vst [vmem:[#allocation4 + $0xa8] sm:$0xff] %v2539
      %2582 = vst [vmem:[#allocation4 + $0xb0] sm:$0xff] %v2540
      %2583 = vst [vmem:[#allocation4 + $0xb8] sm:$0xff] %v2541
      %2584 = vst [vmem:[#allocation4 + $0xc0] sm:$0xff] %v2542
      %2585 = vst [vmem:[#allocation4 + $0xc8] sm:$0xff] %v2543
      %2586 = vst [vmem:[#allocation4 + $0xd0] sm:$0xff] %v2544
      %2587 = vst [vmem:[#allocation4 + $0xd8] sm:$0xff] %v2545
      %2588 = vst [vmem:[#allocation4 + $0xe0] sm:$0xff] %v2546
      %2589 = vst [vmem:[#allocation4 + $0xe8] sm:$0xff] %v2547
      %2590 = vst [vmem:[#allocation4 + $0xf0] sm:$0xff] %v2548
      %2591 = vst [vmem:[#allocation4 + $0xf8] sm:$0xff] %v2549
      %2592 = vst [vmem:[#allocation4 + $0x100] sm:$0xff] %v2550
      %2593 = vst [vmem:[#allocation4 + $0x108] sm:$0xff] %v2551
      %2594 = vst [vmem:[#allocation4 + $0x110] sm:$0xff] %v2552
      %2595 = vst [vmem:[#allocation4 + $0x118] sm:$0xff] %v2553
      %2596 = vst [vmem:[#allocation4 + $0x120] sm:$0xff] %v2554
      %2597 = vst [vmem:[#allocation4 + $0x128] sm:$0xff] %v2555
      %2598 = vst [vmem:[#allocation4 + $0x130] sm:$0xff] %v2556
      %2599 = vst [vmem:[#allocation4 + $0x138] sm:$0xff] %v2557
      %2600 = vst [vmem:[#allocation4 + $0x140] sm:$0xff] %v2558
      %2601 = vst [vmem:[#allocation4 + $0x148] sm:$0xff] %v2559
      %v2602 = vld [vmem:[#allocation4 + $0x2] sm:$0xff]
      %v2603 = vld [vmem:[#allocation4 + $0xa] sm:$0xff]
      %v2604 = vld [vmem:[#allocation4 + $0x12] sm:$0xff]
      %v2605 = vld [vmem:[#allocation4 + $0x1a] sm:$0xff]
      %v2606 = vld [vmem:[#allocation4 + $0x22] sm:$0xff]
      %v2607 = vld [vmem:[#allocation4 + $0x2a] sm:$0xff]
      %v2608 = vld [vmem:[#allocation4 + $0x32] sm:$0xff]
      %v2609 = vld [vmem:[#allocation4 + $0x3a] sm:$0xff]
      %v2610 = vld [vmem:[#allocation4 + $0x42] sm:$0xff]
      %v2611 = vld [vmem:[#allocation4 + $0x4a] sm:$0xff]
      %v2612 = vld [vmem:[#allocation4 + $0x52] sm:$0xff]
      %v2613 = vld [vmem:[#allocation4 + $0x5a] sm:$0xff]
      %v2614 = vld [vmem:[#allocation4 + $0x62] sm:$0xff]
      %v2615 = vld [vmem:[#allocation4 + $0x6a] sm:$0xff]
      %v2616 = vld [vmem:[#allocation4 + $0x72] sm:$0xff]
      %v2617 = vld [vmem:[#allocation4 + $0x7a] sm:$0xff]
      %v2618 = vld [vmem:[#allocation4 + $0x82] sm:$0xff]
      %v2619 = vld [vmem:[#allocation4 + $0x8a] sm:$0xff]
      %v2620 = vld [vmem:[#allocation4 + $0x92] sm:$0xff]
      %v2621 = vld [vmem:[#allocation4 + $0x9a] sm:$0xff]
      %v2622 = vld [vmem:[#allocation4 + $0xa2] sm:$0xff]
      %v2623 = vld [vmem:[#allocation4 + $0xaa] sm:$0xff]
      %v2624 = vld [vmem:[#allocation4 + $0xb2] sm:$0xff]
      %v2625 = vld [vmem:[#allocation4 + $0xba] sm:$0xff]
      %v2626 = vld [vmem:[#allocation4 + $0xc2] sm:$0xff]
      %v2627 = vld [vmem:[#allocation4 + $0xca] sm:$0xff]
      %v2628 = vld [vmem:[#allocation4 + $0xd2] sm:$0xff]
      %v2629 = vld [vmem:[#allocation4 + $0xda] sm:$0xff]
      %v2630 = vld [vmem:[#allocation4 + $0xe2] sm:$0xff]
      %v2631 = vld [vmem:[#allocation4 + $0xea] sm:$0xff]
      %v2632 = vld [vmem:[#allocation4 + $0xf2] sm:$0xff]
      %v2633 = vld [vmem:[#allocation4 + $0xfa] sm:$0xff]
      %v2634 = vld [vmem:[#allocation4 + $0x102] sm:$0xff]
      %v2635 = vld [vmem:[#allocation4 + $0x10a] sm:$0xff]
      %v2636 = vld [vmem:[#allocation4 + $0x112] sm:$0xff]
      %v2637 = vld [vmem:[#allocation4 + $0x11a] sm:$0xff]
      %v2638 = vld [vmem:[#allocation4 + $0x122] sm:$0xff]
      %v2639 = vld [vmem:[#allocation4 + $0x3] sm:$0xff]
      %v2640 = vld [vmem:[#allocation4 + $0xb] sm:$0xff]
      %v2641 = vld [vmem:[#allocation4 + $0x13] sm:$0xff]
      %v2642 = vld [vmem:[#allocation4 + $0x1b] sm:$0xff]
      %v2643 = vld [vmem:[#allocation4 + $0x23] sm:$0xff]
      %v2644 = vld [vmem:[#allocation4 + $0x2b] sm:$0xff]
      %v2645 = vld [vmem:[#allocation4 + $0x33] sm:$0xff]
      %v2646 = vld [vmem:[#allocation4 + $0x3b] sm:$0xff]
      %v2647 = vld [vmem:[#allocation4 + $0x43] sm:$0xff]
      %v2648 = vld [vmem:[#allocation4 + $0x4b] sm:$0xff]
      %v2649 = vld [vmem:[#allocation4 + $0x53] sm:$0xff]
      %v2650 = vld [vmem:[#allocation4 + $0x5b] sm:$0xff]
      %v2651 = vld [vmem:[#allocation4 + $0x63] sm:$0xff]
      %v2652 = vld [vmem:[#allocation4 + $0x6b] sm:$0xff]
      %v2653 = vld [vmem:[#allocation4 + $0x73] sm:$0xff]
      %v2654 = vld [vmem:[#allocation4 + $0x7b] sm:$0xff]
      %v2655 = vld [vmem:[#allocation4 + $0x83] sm:$0xff]
      %v2656 = vld [vmem:[#allocation4 + $0x8b] sm:$0xff]
      %v2657 = vld [vmem:[#allocation4 + $0x93] sm:$0xff]
      %v2658 = vld [vmem:[#allocation4 + $0x9b] sm:$0xff]
      %v2659 = vld [vmem:[#allocation4 + $0xa3] sm:$0xff]
      %v2660 = vld [vmem:[#allocation4 + $0xab] sm:$0xff]
      %v2661 = vld [vmem:[#allocation4 + $0xb3] sm:$0xff]
      %v2662 = vld [vmem:[#allocation4 + $0xbb] sm:$0xff]
      %v2663 = vld [vmem:[#allocation4 + $0xc3] sm:$0xff]
      %v2664 = vld [vmem:[#allocation4 + $0xcb] sm:$0xff]
      %v2665 = vld [vmem:[#allocation4 + $0xd3] sm:$0xff]
      %v2666 = vld [vmem:[#allocation4 + $0xdb] sm:$0xff]
      %v2667 = vld [vmem:[#allocation4 + $0xe3] sm:$0xff]
      %v2668 = vld [vmem:[#allocation4 + $0xeb] sm:$0xff]
      %v2669 = vld [vmem:[#allocation4 + $0xf3] sm:$0xff]
      %v2670 = vld [vmem:[#allocation4 + $0xfb] sm:$0xff]
      %v2671 = vld [vmem:[#allocation4 + $0x103] sm:$0xff]
      %v2672 = vld [vmem:[#allocation4 + $0x10b] sm:$0xff]
      %v2673 = vld [vmem:[#allocation4 + $0x113] sm:$0xff]
      %v2674 = vld [vmem:[#allocation4 + $0x11b] sm:$0xff]
      %v2675 = vld [vmem:[#allocation4 + $0x123] sm:$0xff]
      %2676 = vrot.lane.b32.xlu0 %v2639, 8
      %v2677 = vpop.permute.xlu0 %2676
      %2678 = vrot.lane.b32.xlu0 %v2640, 8
      %v2679 = vpop.permute.xlu0 %2678
      %2680 = vrot.lane.b32.xlu0 %v2641, 8
      %v2681 = vpop.permute.xlu0 %2680
      %2682 = vrot.lane.b32.xlu0 %v2642, 8
      %v2683 = vpop.permute.xlu0 %2682
      %2684 = vrot.lane.b32.xlu0 %v2643, 8
      %v2685 = vpop.permute.xlu0 %2684
      %2686 = vrot.lane.b32.xlu0 %v2644, 8
      %v2687 = vpop.permute.xlu0 %2686
      %2688 = vrot.lane.b32.xlu0 %v2645, 8
      %v2689 = vpop.permute.xlu0 %2688
      %2690 = vrot.lane.b32.xlu0 %v2646, 8
      %v2691 = vpop.permute.xlu0 %2690
      %2692 = vrot.lane.b32.xlu0 %v2647, 8
      %v2693 = vpop.permute.xlu0 %2692
      %2694 = vrot.lane.b32.xlu0 %v2648, 8
      %v2695 = vpop.permute.xlu0 %2694
      %2696 = vrot.lane.b32.xlu0 %v2649, 8
      %v2697 = vpop.permute.xlu0 %2696
      %2698 = vrot.lane.b32.xlu0 %v2650, 8
      %v2699 = vpop.permute.xlu0 %2698
      %2700 = vrot.lane.b32.xlu0 %v2651, 8
      %v2701 = vpop.permute.xlu0 %2700
      %2702 = vrot.lane.b32.xlu0 %v2652, 8
      %v2703 = vpop.permute.xlu0 %2702
      %2704 = vrot.lane.b32.xlu0 %v2653, 8
      %v2705 = vpop.permute.xlu0 %2704
      %2706 = vrot.lane.b32.xlu0 %v2654, 8
      %v2707 = vpop.permute.xlu0 %2706
      %2708 = vrot.lane.b32.xlu0 %v2655, 8
      %v2709 = vpop.permute.xlu0 %2708
      %2710 = vrot.lane.b32.xlu0 %v2656, 8
      %v2711 = vpop.permute.xlu0 %2710
      %2712 = vrot.lane.b32.xlu0 %v2657, 8
      %v2713 = vpop.permute.xlu0 %2712
      %2714 = vrot.lane.b32.xlu0 %v2658, 8
      %v2715 = vpop.permute.xlu0 %2714
      %2716 = vrot.lane.b32.xlu0 %v2659, 8
      %v2717 = vpop.permute.xlu0 %2716
      %2718 = vrot.lane.b32.xlu0 %v2660, 8
      %v2719 = vpop.permute.xlu0 %2718
      %2720 = vrot.lane.b32.xlu0 %v2661, 8
      %v2721 = vpop.permute.xlu0 %2720
      %2722 = vrot.lane.b32.xlu0 %v2662, 8
      %v2723 = vpop.permute.xlu0 %2722
      %2724 = vrot.lane.b32.xlu0 %v2663, 8
      %v2725 = vpop.permute.xlu0 %2724
      %2726 = vrot.lane.b32.xlu0 %v2664, 8
      %v2727 = vpop.permute.xlu0 %2726
      %2728 = vrot.lane.b32.xlu0 %v2665, 8
      %v2729 = vpop.permute.xlu0 %2728
      %2730 = vrot.lane.b32.xlu0 %v2666, 8
      %v2731 = vpop.permute.xlu0 %2730
      %2732 = vrot.lane.b32.xlu0 %v2667, 8
      %v2733 = vpop.permute.xlu0 %2732
      %2734 = vrot.lane.b32.xlu0 %v2668, 8
      %v2735 = vpop.permute.xlu0 %2734
      %2736 = vrot.lane.b32.xlu0 %v2669, 8
      %v2737 = vpop.permute.xlu0 %2736
      %2738 = vrot.lane.b32.xlu0 %v2670, 8
      %v2739 = vpop.permute.xlu0 %2738
      %2740 = vrot.lane.b32.xlu0 %v2671, 8
      %v2741 = vpop.permute.xlu0 %2740
      %2742 = vrot.lane.b32.xlu0 %v2672, 8
      %v2743 = vpop.permute.xlu0 %2742
      %2744 = vrot.lane.b32.xlu0 %v2673, 8
      %v2745 = vpop.permute.xlu0 %2744
      %2746 = vrot.lane.b32.xlu0 %v2674, 8
      %v2747 = vpop.permute.xlu0 %2746
      %2748 = vrot.lane.b32.xlu0 %v2675, 8
      %v2749 = vpop.permute.xlu0 %2748
      %v2750 = vadd.f32 %v2602, %v2677
      %v2751 = vadd.f32 %v2603, %v2679
      %v2752 = vadd.f32 %v2604, %v2681
      %v2753 = vadd.f32 %v2605, %v2683
      %v2754 = vadd.f32 %v2606, %v2685
      %v2755 = vadd.f32 %v2607, %v2687
      %v2756 = vadd.f32 %v2608, %v2689
      %v2757 = vadd.f32 %v2609, %v2691
      %v2758 = vadd.f32 %v2610, %v2693
      %v2759 = vadd.f32 %v2611, %v2695
      %v2760 = vadd.f32 %v2612, %v2697
      %v2761 = vadd.f32 %v2613, %v2699
      %v2762 = vadd.f32 %v2614, %v2701
      %v2763 = vadd.f32 %v2615, %v2703
      %v2764 = vadd.f32 %v2616, %v2705
      %v2765 = vadd.f32 %v2617, %v2707
      %v2766 = vadd.f32 %v2618, %v2709
      %v2767 = vadd.f32 %v2619, %v2711
      %v2768 = vadd.f32 %v2620, %v2713
      %v2769 = vadd.f32 %v2621, %v2715
      %v2770 = vadd.f32 %v2622, %v2717
      %v2771 = vadd.f32 %v2623, %v2719
      %v2772 = vadd.f32 %v2624, %v2721
      %v2773 = vadd.f32 %v2625, %v2723
      %v2774 = vadd.f32 %v2626, %v2725
      %v2775 = vadd.f32 %v2627, %v2727
      %v2776 = vadd.f32 %v2628, %v2729
      %v2777 = vadd.f32 %v2629, %v2731
      %v2778 = vadd.f32 %v2630, %v2733
      %v2779 = vadd.f32 %v2631, %v2735
      %v2780 = vadd.f32 %v2632, %v2737
      %v2781 = vadd.f32 %v2633, %v2739
      %v2782 = vadd.f32 %v2634, %v2741
      %v2783 = vadd.f32 %v2635, %v2743
      %v2784 = vadd.f32 %v2636, %v2745
      %v2785 = vadd.f32 %v2637, %v2747
      %v2786 = vadd.f32 %v2638, %v2749
      %v2787 = vld [vmem:[#allocation4 + $0x4] sm:$0xff]
      %v2788 = vld [vmem:[#allocation4 + $0xc] sm:$0xff]
      %v2789 = vld [vmem:[#allocation4 + $0x14] sm:$0xff]
      %v2790 = vld [vmem:[#allocation4 + $0x1c] sm:$0xff]
      %v2791 = vld [vmem:[#allocation4 + $0x24] sm:$0xff]
      %v2792 = vld [vmem:[#allocation4 + $0x2c] sm:$0xff]
      %v2793 = vld [vmem:[#allocation4 + $0x34] sm:$0xff]
      %v2794 = vld [vmem:[#allocation4 + $0x3c] sm:$0xff]
      %v2795 = vld [vmem:[#allocation4 + $0x44] sm:$0xff]
      %v2796 = vld [vmem:[#allocation4 + $0x4c] sm:$0xff]
      %v2797 = vld [vmem:[#allocation4 + $0x54] sm:$0xff]
      %v2798 = vld [vmem:[#allocation4 + $0x5c] sm:$0xff]
      %v2799 = vld [vmem:[#allocation4 + $0x64] sm:$0xff]
      %v2800 = vld [vmem:[#allocation4 + $0x6c] sm:$0xff]
      %v2801 = vld [vmem:[#allocation4 + $0x74] sm:$0xff]
      %v2802 = vld [vmem:[#allocation4 + $0x7c] sm:$0xff]
      %v2803 = vld [vmem:[#allocation4 + $0x84] sm:$0xff]
      %v2804 = vld [vmem:[#allocation4 + $0x8c] sm:$0xff]
      %v2805 = vld [vmem:[#allocation4 + $0x94] sm:$0xff]
      %v2806 = vld [vmem:[#allocation4 + $0x9c] sm:$0xff]
      %v2807 = vld [vmem:[#allocation4 + $0xa4] sm:$0xff]
      %v2808 = vld [vmem:[#allocation4 + $0xac] sm:$0xff]
      %v2809 = vld [vmem:[#allocation4 + $0xb4] sm:$0xff]
      %v2810 = vld [vmem:[#allocation4 + $0xbc] sm:$0xff]
      %v2811 = vld [vmem:[#allocation4 + $0xc4] sm:$0xff]
      %v2812 = vld [vmem:[#allocation4 + $0xcc] sm:$0xff]
      %v2813 = vld [vmem:[#allocation4 + $0xd4] sm:$0xff]
      %v2814 = vld [vmem:[#allocation4 + $0xdc] sm:$0xff]
      %v2815 = vld [vmem:[#allocation4 + $0xe4] sm:$0xff]
      %v2816 = vld [vmem:[#allocation4 + $0xec] sm:$0xff]
      %v2817 = vld [vmem:[#allocation4 + $0xf4] sm:$0xff]
      %v2818 = vld [vmem:[#allocation4 + $0xfc] sm:$0xff]
      %v2819 = vld [vmem:[#allocation4 + $0x104] sm:$0xff]
      %v2820 = vld [vmem:[#allocation4 + $0x10c] sm:$0xff]
      %v2821 = vld [vmem:[#allocation4 + $0x114] sm:$0xff]
      %v2822 = vld [vmem:[#allocation4 + $0x11c] sm:$0xff]
      %v2823 = vld [vmem:[#allocation4 + $0x124] sm:$0xff]
      %2824 = vrot.lane.b32.xlu0 %v2787, 16
      %v2825 = vpop.permute.xlu0 %2824
      %2826 = vrot.lane.b32.xlu0 %v2788, 16
      %v2827 = vpop.permute.xlu0 %2826
      %2828 = vrot.lane.b32.xlu0 %v2789, 16
      %v2829 = vpop.permute.xlu0 %2828
      %2830 = vrot.lane.b32.xlu0 %v2790, 16
      %v2831 = vpop.permute.xlu0 %2830
      %2832 = vrot.lane.b32.xlu0 %v2791, 16
      %v2833 = vpop.permute.xlu0 %2832
      %2834 = vrot.lane.b32.xlu0 %v2792, 16
      %v2835 = vpop.permute.xlu0 %2834
      %2836 = vrot.lane.b32.xlu0 %v2793, 16
      %v2837 = vpop.permute.xlu0 %2836
      %2838 = vrot.lane.b32.xlu0 %v2794, 16
      %v2839 = vpop.permute.xlu0 %2838
      %2840 = vrot.lane.b32.xlu0 %v2795, 16
      %v2841 = vpop.permute.xlu0 %2840
      %2842 = vrot.lane.b32.xlu0 %v2796, 16
      %v2843 = vpop.permute.xlu0 %2842
      %2844 = vrot.lane.b32.xlu0 %v2797, 16
      %v2845 = vpop.permute.xlu0 %2844
      %2846 = vrot.lane.b32.xlu0 %v2798, 16
      %v2847 = vpop.permute.xlu0 %2846
      %2848 = vrot.lane.b32.xlu0 %v2799, 16
      %v2849 = vpop.permute.xlu0 %2848
      %2850 = vrot.lane.b32.xlu0 %v2800, 16
      %v2851 = vpop.permute.xlu0 %2850
      %2852 = vrot.lane.b32.xlu0 %v2801, 16
      %v2853 = vpop.permute.xlu0 %2852
      %2854 = vrot.lane.b32.xlu0 %v2802, 16
      %v2855 = vpop.permute.xlu0 %2854
      %2856 = vrot.lane.b32.xlu0 %v2803, 16
      %v2857 = vpop.permute.xlu0 %2856
      %2858 = vrot.lane.b32.xlu0 %v2804, 16
      %v2859 = vpop.permute.xlu0 %2858
      %2860 = vrot.lane.b32.xlu0 %v2805, 16
      %v2861 = vpop.permute.xlu0 %2860
      %2862 = vrot.lane.b32.xlu0 %v2806, 16
      %v2863 = vpop.permute.xlu0 %2862
      %2864 = vrot.lane.b32.xlu0 %v2807, 16
      %v2865 = vpop.permute.xlu0 %2864
      %2866 = vrot.lane.b32.xlu0 %v2808, 16
      %v2867 = vpop.permute.xlu0 %2866
      %2868 = vrot.lane.b32.xlu0 %v2809, 16
      %v2869 = vpop.permute.xlu0 %2868
      %2870 = vrot.lane.b32.xlu0 %v2810, 16
      %v2871 = vpop.permute.xlu0 %2870
      %2872 = vrot.lane.b32.xlu0 %v2811, 16
      %v2873 = vpop.permute.xlu0 %2872
      %2874 = vrot.lane.b32.xlu0 %v2812, 16
      %v2875 = vpop.permute.xlu0 %2874
      %2876 = vrot.lane.b32.xlu0 %v2813, 16
      %v2877 = vpop.permute.xlu0 %2876
      %2878 = vrot.lane.b32.xlu0 %v2814, 16
      %v2879 = vpop.permute.xlu0 %2878
      %2880 = vrot.lane.b32.xlu0 %v2815, 16
      %v2881 = vpop.permute.xlu0 %2880
      %2882 = vrot.lane.b32.xlu0 %v2816, 16
      %v2883 = vpop.permute.xlu0 %2882
      %2884 = vrot.lane.b32.xlu0 %v2817, 16
      %v2885 = vpop.permute.xlu0 %2884
      %2886 = vrot.lane.b32.xlu0 %v2818, 16
      %v2887 = vpop.permute.xlu0 %2886
      %2888 = vrot.lane.b32.xlu0 %v2819, 16
      %v2889 = vpop.permute.xlu0 %2888
      %2890 = vrot.lane.b32.xlu0 %v2820, 16
      %v2891 = vpop.permute.xlu0 %2890
      %2892 = vrot.lane.b32.xlu0 %v2821, 16
      %v2893 = vpop.permute.xlu0 %2892
      %2894 = vrot.lane.b32.xlu0 %v2822, 16
      %v2895 = vpop.permute.xlu0 %2894
      %2896 = vrot.lane.b32.xlu0 %v2823, 16
      %v2897 = vpop.permute.xlu0 %2896
      %v2898 = vadd.f32 %v2750, %v2825
      %v2899 = vadd.f32 %v2751, %v2827
      %v2900 = vadd.f32 %v2752, %v2829
      %v2901 = vadd.f32 %v2753, %v2831
      %v2902 = vadd.f32 %v2754, %v2833
      %v2903 = vadd.f32 %v2755, %v2835
      %v2904 = vadd.f32 %v2756, %v2837
      %v2905 = vadd.f32 %v2757, %v2839
      %v2906 = vadd.f32 %v2758, %v2841
      %v2907 = vadd.f32 %v2759, %v2843
      %v2908 = vadd.f32 %v2760, %v2845
      %v2909 = vadd.f32 %v2761, %v2847
      %v2910 = vadd.f32 %v2762, %v2849
      %v2911 = vadd.f32 %v2763, %v2851
      %v2912 = vadd.f32 %v2764, %v2853
      %v2913 = vadd.f32 %v2765, %v2855
      %v2914 = vadd.f32 %v2766, %v2857
      %v2915 = vadd.f32 %v2767, %v2859
      %v2916 = vadd.f32 %v2768, %v2861
      %v2917 = vadd.f32 %v2769, %v2863
      %v2918 = vadd.f32 %v2770, %v2865
      %v2919 = vadd.f32 %v2771, %v2867
      %v2920 = vadd.f32 %v2772, %v2869
      %v2921 = vadd.f32 %v2773, %v2871
      %v2922 = vadd.f32 %v2774, %v2873
      %v2923 = vadd.f32 %v2775, %v2875
      %v2924 = vadd.f32 %v2776, %v2877
      %v2925 = vadd.f32 %v2777, %v2879
      %v2926 = vadd.f32 %v2778, %v2881
      %v2927 = vadd.f32 %v2779, %v2883
      %v2928 = vadd.f32 %v2780, %v2885
      %v2929 = vadd.f32 %v2781, %v2887
      %v2930 = vadd.f32 %v2782, %v2889
      %v2931 = vadd.f32 %v2783, %v2891
      %v2932 = vadd.f32 %v2784, %v2893
      %v2933 = vadd.f32 %v2785, %v2895
      %v2934 = vadd.f32 %v2786, %v2897
      %v2935 = vld [vmem:[#allocation4 + $0x12c] sm:$0xff]
      %v2936 = vld [vmem:[#allocation4 + $0x134] sm:$0xff]
      %2937 = vrot.lane.b32.xlu0 %v2789, 24
      %v2938 = vpop.permute.xlu0 %2937
      %2939 = vrot.lane.b32.xlu0 %v2790, 24
      %v2940 = vpop.permute.xlu0 %2939
      %2941 = vrot.lane.b32.xlu0 %v2791, 24
      %v2942 = vpop.permute.xlu0 %2941
      %2943 = vrot.lane.b32.xlu0 %v2792, 24
      %v2944 = vpop.permute.xlu0 %2943
      %2945 = vrot.lane.b32.xlu0 %v2793, 24
      %v2946 = vpop.permute.xlu0 %2945
      %2947 = vrot.lane.b32.xlu0 %v2794, 24
      %v2948 = vpop.permute.xlu0 %2947
      %2949 = vrot.lane.b32.xlu0 %v2795, 24
      %v2950 = vpop.permute.xlu0 %2949
      %2951 = vrot.lane.b32.xlu0 %v2796, 24
      %v2952 = vpop.permute.xlu0 %2951
      %2953 = vrot.lane.b32.xlu0 %v2797, 24
      %v2954 = vpop.permute.xlu0 %2953
      %2955 = vrot.lane.b32.xlu0 %v2798, 24
      %v2956 = vpop.permute.xlu0 %2955
      %2957 = vrot.lane.b32.xlu0 %v2799, 24
      %v2958 = vpop.permute.xlu0 %2957
      %2959 = vrot.lane.b32.xlu0 %v2800, 24
      %v2960 = vpop.permute.xlu0 %2959
      %2961 = vrot.lane.b32.xlu0 %v2801, 24
      %v2962 = vpop.permute.xlu0 %2961
      %2963 = vrot.lane.b32.xlu0 %v2802, 24
      %v2964 = vpop.permute.xlu0 %2963
      %2965 = vrot.lane.b32.xlu0 %v2803, 24
      %v2966 = vpop.permute.xlu0 %2965
      %2967 = vrot.lane.b32.xlu0 %v2804, 24
      %v2968 = vpop.permute.xlu0 %2967
      %2969 = vrot.lane.b32.xlu0 %v2805, 24
      %v2970 = vpop.permute.xlu0 %2969
      %2971 = vrot.lane.b32.xlu0 %v2806, 24
      %v2972 = vpop.permute.xlu0 %2971
      %2973 = vrot.lane.b32.xlu0 %v2807, 24
      %v2974 = vpop.permute.xlu0 %2973
      %2975 = vrot.lane.b32.xlu0 %v2808, 24
      %v2976 = vpop.permute.xlu0 %2975
      %2977 = vrot.lane.b32.xlu0 %v2809, 24
      %v2978 = vpop.permute.xlu0 %2977
      %2979 = vrot.lane.b32.xlu0 %v2810, 24
      %v2980 = vpop.permute.xlu0 %2979
      %2981 = vrot.lane.b32.xlu0 %v2811, 24
      %v2982 = vpop.permute.xlu0 %2981
      %2983 = vrot.lane.b32.xlu0 %v2812, 24
      %v2984 = vpop.permute.xlu0 %2983
      %2985 = vrot.lane.b32.xlu0 %v2813, 24
      %v2986 = vpop.permute.xlu0 %2985
      %2987 = vrot.lane.b32.xlu0 %v2814, 24
      %v2988 = vpop.permute.xlu0 %2987
      %2989 = vrot.lane.b32.xlu0 %v2815, 24
      %v2990 = vpop.permute.xlu0 %2989
      %2991 = vrot.lane.b32.xlu0 %v2816, 24
      %v2992 = vpop.permute.xlu0 %2991
      %2993 = vrot.lane.b32.xlu0 %v2817, 24
      %v2994 = vpop.permute.xlu0 %2993
      %2995 = vrot.lane.b32.xlu0 %v2818, 24
      %v2996 = vpop.permute.xlu0 %2995
      %2997 = vrot.lane.b32.xlu0 %v2819, 24
      %v2998 = vpop.permute.xlu0 %2997
      %2999 = vrot.lane.b32.xlu0 %v2820, 24
      %v3000 = vpop.permute.xlu0 %2999
      %3001 = vrot.lane.b32.xlu0 %v2821, 24
      %v3002 = vpop.permute.xlu0 %3001
      %3003 = vrot.lane.b32.xlu0 %v2822, 24
      %v3004 = vpop.permute.xlu0 %3003
      %3005 = vrot.lane.b32.xlu0 %v2823, 24
      %v3006 = vpop.permute.xlu0 %3005
      %3007 = vrot.lane.b32.xlu0 %v2935, 24
      %v3008 = vpop.permute.xlu0 %3007
      %3009 = vrot.lane.b32.xlu0 %v2936, 24
      %v3010 = vpop.permute.xlu0 %3009
      %v3011 = vadd.f32 %v2898, %v2938
      %v3012 = vadd.f32 %v2899, %v2940
      %v3013 = vadd.f32 %v2900, %v2942
      %v3014 = vadd.f32 %v2901, %v2944
      %v3015 = vadd.f32 %v2902, %v2946
      %v3016 = vadd.f32 %v2903, %v2948
      %v3017 = vadd.f32 %v2904, %v2950
      %v3018 = vadd.f32 %v2905, %v2952
      %v3019 = vadd.f32 %v2906, %v2954
      %v3020 = vadd.f32 %v2907, %v2956
      %v3021 = vadd.f32 %v2908, %v2958
      %v3022 = vadd.f32 %v2909, %v2960
      %v3023 = vadd.f32 %v2910, %v2962
      %v3024 = vadd.f32 %v2911, %v2964
      %v3025 = vadd.f32 %v2912, %v2966
      %v3026 = vadd.f32 %v2913, %v2968
      %v3027 = vadd.f32 %v2914, %v2970
      %v3028 = vadd.f32 %v2915, %v2972
      %v3029 = vadd.f32 %v2916, %v2974
      %v3030 = vadd.f32 %v2917, %v2976
      %v3031 = vadd.f32 %v2918, %v2978
      %v3032 = vadd.f32 %v2919, %v2980
      %v3033 = vadd.f32 %v2920, %v2982
      %v3034 = vadd.f32 %v2921, %v2984
      %v3035 = vadd.f32 %v2922, %v2986
      %v3036 = vadd.f32 %v2923, %v2988
      %v3037 = vadd.f32 %v2924, %v2990
      %v3038 = vadd.f32 %v2925, %v2992
      %v3039 = vadd.f32 %v2926, %v2994
      %v3040 = vadd.f32 %v2927, %v2996
      %v3041 = vadd.f32 %v2928, %v2998
      %v3042 = vadd.f32 %v2929, %v3000
      %v3043 = vadd.f32 %v2930, %v3002
      %v3044 = vadd.f32 %v2931, %v3004
      %v3045 = vadd.f32 %v2932, %v3006
      %v3046 = vadd.f32 %v2933, %v3008
      %v3047 = vadd.f32 %v2934, %v3010
      %v3048 = vld [vmem:[#allocation4 + $0x15] sm:$0xff]
      %v3049 = vld [vmem:[#allocation4 + $0x1d] sm:$0xff]
      %v3050 = vld [vmem:[#allocation4 + $0x25] sm:$0xff]
      %v3051 = vld [vmem:[#allocation4 + $0x2d] sm:$0xff]
      %v3052 = vld [vmem:[#allocation4 + $0x35] sm:$0xff]
      %v3053 = vld [vmem:[#allocation4 + $0x3d] sm:$0xff]
      %v3054 = vld [vmem:[#allocation4 + $0x45] sm:$0xff]
      %v3055 = vld [vmem:[#allocation4 + $0x4d] sm:$0xff]
      %v3056 = vld [vmem:[#allocation4 + $0x55] sm:$0xff]
      %v3057 = vld [vmem:[#allocation4 + $0x5d] sm:$0xff]
      %v3058 = vld [vmem:[#allocation4 + $0x65] sm:$0xff]
      %v3059 = vld [vmem:[#allocation4 + $0x6d] sm:$0xff]
      %v3060 = vld [vmem:[#allocation4 + $0x75] sm:$0xff]
      %v3061 = vld [vmem:[#allocation4 + $0x7d] sm:$0xff]
      %v3062 = vld [vmem:[#allocation4 + $0x85] sm:$0xff]
      %v3063 = vld [vmem:[#allocation4 + $0x8d] sm:$0xff]
      %v3064 = vld [vmem:[#allocation4 + $0x95] sm:$0xff]
      %v3065 = vld [vmem:[#allocation4 + $0x9d] sm:$0xff]
      %v3066 = vld [vmem:[#allocation4 + $0xa5] sm:$0xff]
      %v3067 = vld [vmem:[#allocation4 + $0xad] sm:$0xff]
      %v3068 = vld [vmem:[#allocation4 + $0xb5] sm:$0xff]
      %v3069 = vld [vmem:[#allocation4 + $0xbd] sm:$0xff]
      %v3070 = vld [vmem:[#allocation4 + $0xc5] sm:$0xff]
      %v3071 = vld [vmem:[#allocation4 + $0xcd] sm:$0xff]
      %v3072 = vld [vmem:[#allocation4 + $0xd5] sm:$0xff]
      %v3073 = vld [vmem:[#allocation4 + $0xdd] sm:$0xff]
      %v3074 = vld [vmem:[#allocation4 + $0xe5] sm:$0xff]
      %v3075 = vld [vmem:[#allocation4 + $0xed] sm:$0xff]
      %v3076 = vld [vmem:[#allocation4 + $0xf5] sm:$0xff]
      %v3077 = vld [vmem:[#allocation4 + $0xfd] sm:$0xff]
      %v3078 = vld [vmem:[#allocation4 + $0x105] sm:$0xff]
      %v3079 = vld [vmem:[#allocation4 + $0x10d] sm:$0xff]
      %v3080 = vld [vmem:[#allocation4 + $0x115] sm:$0xff]
      %v3081 = vld [vmem:[#allocation4 + $0x11d] sm:$0xff]
      %v3082 = vld [vmem:[#allocation4 + $0x125] sm:$0xff]
      %v3083 = vld [vmem:[#allocation4 + $0x12d] sm:$0xff]
      %v3084 = vld [vmem:[#allocation4 + $0x135] sm:$0xff]
      %3085 = vrot.lane.b32.xlu0 %v3048, 32
      %v3086 = vpop.permute.xlu0 %3085
      %3087 = vrot.lane.b32.xlu0 %v3049, 32
      %v3088 = vpop.permute.xlu0 %3087
      %3089 = vrot.lane.b32.xlu0 %v3050, 32
      %v3090 = vpop.permute.xlu0 %3089
      %3091 = vrot.lane.b32.xlu0 %v3051, 32
      %v3092 = vpop.permute.xlu0 %3091
      %3093 = vrot.lane.b32.xlu0 %v3052, 32
      %v3094 = vpop.permute.xlu0 %3093
      %3095 = vrot.lane.b32.xlu0 %v3053, 32
      %v3096 = vpop.permute.xlu0 %3095
      %3097 = vrot.lane.b32.xlu0 %v3054, 32
      %v3098 = vpop.permute.xlu0 %3097
      %3099 = vrot.lane.b32.xlu0 %v3055, 32
      %v3100 = vpop.permute.xlu0 %3099
      %3101 = vrot.lane.b32.xlu0 %v3056, 32
      %v3102 = vpop.permute.xlu0 %3101
      %3103 = vrot.lane.b32.xlu0 %v3057, 32
      %v3104 = vpop.permute.xlu0 %3103
      %3105 = vrot.lane.b32.xlu0 %v3058, 32
      %v3106 = vpop.permute.xlu0 %3105
      %3107 = vrot.lane.b32.xlu0 %v3059, 32
      %v3108 = vpop.permute.xlu0 %3107
      %3109 = vrot.lane.b32.xlu0 %v3060, 32
      %v3110 = vpop.permute.xlu0 %3109
      %3111 = vrot.lane.b32.xlu0 %v3061, 32
      %v3112 = vpop.permute.xlu0 %3111
      %3113 = vrot.lane.b32.xlu0 %v3062, 32
      %v3114 = vpop.permute.xlu0 %3113
      %3115 = vrot.lane.b32.xlu0 %v3063, 32
      %v3116 = vpop.permute.xlu0 %3115
      %3117 = vrot.lane.b32.xlu0 %v3064, 32
      %v3118 = vpop.permute.xlu0 %3117
      %3119 = vrot.lane.b32.xlu0 %v3065, 32
      %v3120 = vpop.permute.xlu0 %3119
      %3121 = vrot.lane.b32.xlu0 %v3066, 32
      %v3122 = vpop.permute.xlu0 %3121
      %3123 = vrot.lane.b32.xlu0 %v3067, 32
      %v3124 = vpop.permute.xlu0 %3123
      %3125 = vrot.lane.b32.xlu0 %v3068, 32
      %v3126 = vpop.permute.xlu0 %3125
      %3127 = vrot.lane.b32.xlu0 %v3069, 32
      %v3128 = vpop.permute.xlu0 %3127
      %3129 = vrot.lane.b32.xlu0 %v3070, 32
      %v3130 = vpop.permute.xlu0 %3129
      %3131 = vrot.lane.b32.xlu0 %v3071, 32
      %v3132 = vpop.permute.xlu0 %3131
      %3133 = vrot.lane.b32.xlu0 %v3072, 32
      %v3134 = vpop.permute.xlu0 %3133
      %3135 = vrot.lane.b32.xlu0 %v3073, 32
      %v3136 = vpop.permute.xlu0 %3135
      %3137 = vrot.lane.b32.xlu0 %v3074, 32
      %v3138 = vpop.permute.xlu0 %3137
      %3139 = vrot.lane.b32.xlu0 %v3075, 32
      %v3140 = vpop.permute.xlu0 %3139
      %3141 = vrot.lane.b32.xlu0 %v3076, 32
      %v3142 = vpop.permute.xlu0 %3141
      %3143 = vrot.lane.b32.xlu0 %v3077, 32
      %v3144 = vpop.permute.xlu0 %3143
      %3145 = vrot.lane.b32.xlu0 %v3078, 32
      %v3146 = vpop.permute.xlu0 %3145
      %3147 = vrot.lane.b32.xlu0 %v3079, 32
      %v3148 = vpop.permute.xlu0 %3147
      %3149 = vrot.lane.b32.xlu0 %v3080, 32
      %v3150 = vpop.permute.xlu0 %3149
      %3151 = vrot.lane.b32.xlu0 %v3081, 32
      %v3152 = vpop.permute.xlu0 %3151
      %3153 = vrot.lane.b32.xlu0 %v3082, 32
      %v3154 = vpop.permute.xlu0 %3153
      %3155 = vrot.lane.b32.xlu0 %v3083, 32
      %v3156 = vpop.permute.xlu0 %3155
      %3157 = vrot.lane.b32.xlu0 %v3084, 32
      %v3158 = vpop.permute.xlu0 %3157
      %v3159 = vadd.f32 %v3011, %v3086
      %v3160 = vadd.f32 %v3012, %v3088
      %v3161 = vadd.f32 %v3013, %v3090
      %v3162 = vadd.f32 %v3014, %v3092
      %v3163 = vadd.f32 %v3015, %v3094
      %v3164 = vadd.f32 %v3016, %v3096
      %v3165 = vadd.f32 %v3017, %v3098
      %v3166 = vadd.f32 %v3018, %v3100
      %v3167 = vadd.f32 %v3019, %v3102
      %v3168 = vadd.f32 %v3020, %v3104
      %v3169 = vadd.f32 %v3021, %v3106
      %v3170 = vadd.f32 %v3022, %v3108
      %v3171 = vadd.f32 %v3023, %v3110
      %v3172 = vadd.f32 %v3024, %v3112
      %v3173 = vadd.f32 %v3025, %v3114
      %v3174 = vadd.f32 %v3026, %v3116
      %v3175 = vadd.f32 %v3027, %v3118
      %v3176 = vadd.f32 %v3028, %v3120
      %v3177 = vadd.f32 %v3029, %v3122
      %v3178 = vadd.f32 %v3030, %v3124
      %v3179 = vadd.f32 %v3031, %v3126
      %v3180 = vadd.f32 %v3032, %v3128
      %v3181 = vadd.f32 %v3033, %v3130
      %v3182 = vadd.f32 %v3034, %v3132
      %v3183 = vadd.f32 %v3035, %v3134
      %v3184 = vadd.f32 %v3036, %v3136
      %v3185 = vadd.f32 %v3037, %v3138
      %v3186 = vadd.f32 %v3038, %v3140
      %v3187 = vadd.f32 %v3039, %v3142
      %v3188 = vadd.f32 %v3040, %v3144
      %v3189 = vadd.f32 %v3041, %v3146
      %v3190 = vadd.f32 %v3042, %v3148
      %v3191 = vadd.f32 %v3043, %v3150
      %v3192 = vadd.f32 %v3044, %v3152
      %v3193 = vadd.f32 %v3045, %v3154
      %v3194 = vadd.f32 %v3046, %v3156
      %v3195 = vadd.f32 %v3047, %v3158
      %v3196 = vld [vmem:[#allocation4 + $0x16] sm:$0xff]
      %v3197 = vld [vmem:[#allocation4 + $0x1e] sm:$0xff]
      %v3198 = vld [vmem:[#allocation4 + $0x26] sm:$0xff]
      %v3199 = vld [vmem:[#allocation4 + $0x2e] sm:$0xff]
      %v3200 = vld [vmem:[#allocation4 + $0x36] sm:$0xff]
      %v3201 = vld [vmem:[#allocation4 + $0x3e] sm:$0xff]
      %v3202 = vld [vmem:[#allocation4 + $0x46] sm:$0xff]
      %v3203 = vld [vmem:[#allocation4 + $0x4e] sm:$0xff]
      %v3204 = vld [vmem:[#allocation4 + $0x56] sm:$0xff]
      %v3205 = vld [vmem:[#allocation4 + $0x5e] sm:$0xff]
      %v3206 = vld [vmem:[#allocation4 + $0x66] sm:$0xff]
      %v3207 = vld [vmem:[#allocation4 + $0x6e] sm:$0xff]
      %v3208 = vld [vmem:[#allocation4 + $0x76] sm:$0xff]
      %v3209 = vld [vmem:[#allocation4 + $0x7e] sm:$0xff]
      %v3210 = vld [vmem:[#allocation4 + $0x86] sm:$0xff]
      %v3211 = vld [vmem:[#allocation4 + $0x8e] sm:$0xff]
      %v3212 = vld [vmem:[#allocation4 + $0x96] sm:$0xff]
      %v3213 = vld [vmem:[#allocation4 + $0x9e] sm:$0xff]
      %v3214 = vld [vmem:[#allocation4 + $0xa6] sm:$0xff]
      %v3215 = vld [vmem:[#allocation4 + $0xae] sm:$0xff]
      %v3216 = vld [vmem:[#allocation4 + $0xb6] sm:$0xff]
      %v3217 = vld [vmem:[#allocation4 + $0xbe] sm:$0xff]
      %v3218 = vld [vmem:[#allocation4 + $0xc6] sm:$0xff]
      %v3219 = vld [vmem:[#allocation4 + $0xce] sm:$0xff]
      %v3220 = vld [vmem:[#allocation4 + $0xd6] sm:$0xff]
      %v3221 = vld [vmem:[#allocation4 + $0xde] sm:$0xff]
      %v3222 = vld [vmem:[#allocation4 + $0xe6] sm:$0xff]
      %v3223 = vld [vmem:[#allocation4 + $0xee] sm:$0xff]
      %v3224 = vld [vmem:[#allocation4 + $0xf6] sm:$0xff]
      %v3225 = vld [vmem:[#allocation4 + $0xfe] sm:$0xff]
      %v3226 = vld [vmem:[#allocation4 + $0x106] sm:$0xff]
      %v3227 = vld [vmem:[#allocation4 + $0x10e] sm:$0xff]
      %v3228 = vld [vmem:[#allocation4 + $0x116] sm:$0xff]
      %v3229 = vld [vmem:[#allocation4 + $0x11e] sm:$0xff]
      %v3230 = vld [vmem:[#allocation4 + $0x126] sm:$0xff]
      %v3231 = vld [vmem:[#allocation4 + $0x12e] sm:$0xff]
      %v3232 = vld [vmem:[#allocation4 + $0x136] sm:$0xff]
      %3233 = vrot.lane.b32.xlu0 %v3196, 40
      %v3234 = vpop.permute.xlu0 %3233
      %3235 = vrot.lane.b32.xlu0 %v3197, 40
      %v3236 = vpop.permute.xlu0 %3235
      %3237 = vrot.lane.b32.xlu0 %v3198, 40
      %v3238 = vpop.permute.xlu0 %3237
      %3239 = vrot.lane.b32.xlu0 %v3199, 40
      %v3240 = vpop.permute.xlu0 %3239
      %3241 = vrot.lane.b32.xlu0 %v3200, 40
      %v3242 = vpop.permute.xlu0 %3241
      %3243 = vrot.lane.b32.xlu0 %v3201, 40
      %v3244 = vpop.permute.xlu0 %3243
      %3245 = vrot.lane.b32.xlu0 %v3202, 40
      %v3246 = vpop.permute.xlu0 %3245
      %3247 = vrot.lane.b32.xlu0 %v3203, 40
      %v3248 = vpop.permute.xlu0 %3247
      %3249 = vrot.lane.b32.xlu0 %v3204, 40
      %v3250 = vpop.permute.xlu0 %3249
      %3251 = vrot.lane.b32.xlu0 %v3205, 40
      %v3252 = vpop.permute.xlu0 %3251
      %3253 = vrot.lane.b32.xlu0 %v3206, 40
      %v3254 = vpop.permute.xlu0 %3253
      %3255 = vrot.lane.b32.xlu0 %v3207, 40
      %v3256 = vpop.permute.xlu0 %3255
      %3257 = vrot.lane.b32.xlu0 %v3208, 40
      %v3258 = vpop.permute.xlu0 %3257
      %3259 = vrot.lane.b32.xlu0 %v3209, 40
      %v3260 = vpop.permute.xlu0 %3259
      %3261 = vrot.lane.b32.xlu0 %v3210, 40
      %v3262 = vpop.permute.xlu0 %3261
      %3263 = vrot.lane.b32.xlu0 %v3211, 40
      %v3264 = vpop.permute.xlu0 %3263
      %3265 = vrot.lane.b32.xlu0 %v3212, 40
      %v3266 = vpop.permute.xlu0 %3265
      %3267 = vrot.lane.b32.xlu0 %v3213, 40
      %v3268 = vpop.permute.xlu0 %3267
      %3269 = vrot.lane.b32.xlu0 %v3214, 40
      %v3270 = vpop.permute.xlu0 %3269
      %3271 = vrot.lane.b32.xlu0 %v3215, 40
      %v3272 = vpop.permute.xlu0 %3271
      %3273 = vrot.lane.b32.xlu0 %v3216, 40
      %v3274 = vpop.permute.xlu0 %3273
      %3275 = vrot.lane.b32.xlu0 %v3217, 40
      %v3276 = vpop.permute.xlu0 %3275
      %3277 = vrot.lane.b32.xlu0 %v3218, 40
      %v3278 = vpop.permute.xlu0 %3277
      %3279 = vrot.lane.b32.xlu0 %v3219, 40
      %v3280 = vpop.permute.xlu0 %3279
      %3281 = vrot.lane.b32.xlu0 %v3220, 40
      %v3282 = vpop.permute.xlu0 %3281
      %3283 = vrot.lane.b32.xlu0 %v3221, 40
      %v3284 = vpop.permute.xlu0 %3283
      %3285 = vrot.lane.b32.xlu0 %v3222, 40
      %v3286 = vpop.permute.xlu0 %3285
      %3287 = vrot.lane.b32.xlu0 %v3223, 40
      %v3288 = vpop.permute.xlu0 %3287
      %3289 = vrot.lane.b32.xlu0 %v3224, 40
      %v3290 = vpop.permute.xlu0 %3289
      %3291 = vrot.lane.b32.xlu0 %v3225, 40
      %v3292 = vpop.permute.xlu0 %3291
      %3293 = vrot.lane.b32.xlu0 %v3226, 40
      %v3294 = vpop.permute.xlu0 %3293
      %3295 = vrot.lane.b32.xlu0 %v3227, 40
      %v3296 = vpop.permute.xlu0 %3295
      %3297 = vrot.lane.b32.xlu0 %v3228, 40
      %v3298 = vpop.permute.xlu0 %3297
      %3299 = vrot.lane.b32.xlu0 %v3229, 40
      %v3300 = vpop.permute.xlu0 %3299
      %3301 = vrot.lane.b32.xlu0 %v3230, 40
      %v3302 = vpop.permute.xlu0 %3301
      %3303 = vrot.lane.b32.xlu0 %v3231, 40
      %v3304 = vpop.permute.xlu0 %3303
      %3305 = vrot.lane.b32.xlu0 %v3232, 40
      %v3306 = vpop.permute.xlu0 %3305
      %v3307 = vadd.f32 %v3159, %v3234
      %v3308 = vadd.f32 %v3160, %v3236
      %v3309 = vadd.f32 %v3161, %v3238
      %v3310 = vadd.f32 %v3162, %v3240
      %v3311 = vadd.f32 %v3163, %v3242
      %v3312 = vadd.f32 %v3164, %v3244
      %v3313 = vadd.f32 %v3165, %v3246
      %v3314 = vadd.f32 %v3166, %v3248
      %v3315 = vadd.f32 %v3167, %v3250
      %v3316 = vadd.f32 %v3168, %v3252
      %v3317 = vadd.f32 %v3169, %v3254
      %v3318 = vadd.f32 %v3170, %v3256
      %v3319 = vadd.f32 %v3171, %v3258
      %v3320 = vadd.f32 %v3172, %v3260
      %v3321 = vadd.f32 %v3173, %v3262
      %v3322 = vadd.f32 %v3174, %v3264
      %v3323 = vadd.f32 %v3175, %v3266
      %v3324 = vadd.f32 %v3176, %v3268
      %v3325 = vadd.f32 %v3177, %v3270
      %v3326 = vadd.f32 %v3178, %v3272
      %v3327 = vadd.f32 %v3179, %v3274
      %v3328 = vadd.f32 %v3180, %v3276
      %v3329 = vadd.f32 %v3181, %v3278
      %v3330 = vadd.f32 %v3182, %v3280
      %v3331 = vadd.f32 %v3183, %v3282
      %v3332 = vadd.f32 %v3184, %v3284
      %v3333 = vadd.f32 %v3185, %v3286
      %v3334 = vadd.f32 %v3186, %v3288
      %v3335 = vadd.f32 %v3187, %v3290
      %v3336 = vadd.f32 %v3188, %v3292
      %v3337 = vadd.f32 %v3189, %v3294
      %v3338 = vadd.f32 %v3190, %v3296
      %v3339 = vadd.f32 %v3191, %v3298
      %v3340 = vadd.f32 %v3192, %v3300
      %v3341 = vadd.f32 %v3193, %v3302
      %v3342 = vadd.f32 %v3194, %v3304
      %v3343 = vadd.f32 %v3195, %v3306
      %v3344 = vld [vmem:[#allocation4 + $0x13e] sm:$0xff]
      %v3345 = vld [vmem:[#allocation4 + $0x146] sm:$0xff]
      %3346 = vrot.lane.b32.xlu0 %v3198, 48
      %v3347 = vpop.permute.xlu0 %3346
      %3348 = vrot.lane.b32.xlu0 %v3199, 48
      %v3349 = vpop.permute.xlu0 %3348
      %3350 = vrot.lane.b32.xlu0 %v3200, 48
      %v3351 = vpop.permute.xlu0 %3350
      %3352 = vrot.lane.b32.xlu0 %v3201, 48
      %v3353 = vpop.permute.xlu0 %3352
      %3354 = vrot.lane.b32.xlu0 %v3202, 48
      %v3355 = vpop.permute.xlu0 %3354
      %3356 = vrot.lane.b32.xlu0 %v3203, 48
      %v3357 = vpop.permute.xlu0 %3356
      %3358 = vrot.lane.b32.xlu0 %v3204, 48
      %v3359 = vpop.permute.xlu0 %3358
      %3360 = vrot.lane.b32.xlu0 %v3205, 48
      %v3361 = vpop.permute.xlu0 %3360
      %3362 = vrot.lane.b32.xlu0 %v3206, 48
      %v3363 = vpop.permute.xlu0 %3362
      %3364 = vrot.lane.b32.xlu0 %v3207, 48
      %v3365 = vpop.permute.xlu0 %3364
      %3366 = vrot.lane.b32.xlu0 %v3208, 48
      %v3367 = vpop.permute.xlu0 %3366
      %3368 = vrot.lane.b32.xlu0 %v3209, 48
      %v3369 = vpop.permute.xlu0 %3368
      %3370 = vrot.lane.b32.xlu0 %v3210, 48
      %v3371 = vpop.permute.xlu0 %3370
      %3372 = vrot.lane.b32.xlu0 %v3211, 48
      %v3373 = vpop.permute.xlu0 %3372
      %3374 = vrot.lane.b32.xlu0 %v3212, 48
      %v3375 = vpop.permute.xlu0 %3374
      %3376 = vrot.lane.b32.xlu0 %v3213, 48
      %v3377 = vpop.permute.xlu0 %3376
      %3378 = vrot.lane.b32.xlu0 %v3214, 48
      %v3379 = vpop.permute.xlu0 %3378
      %3380 = vrot.lane.b32.xlu0 %v3215, 48
      %v3381 = vpop.permute.xlu0 %3380
      %3382 = vrot.lane.b32.xlu0 %v3216, 48
      %v3383 = vpop.permute.xlu0 %3382
      %3384 = vrot.lane.b32.xlu0 %v3217, 48
      %v3385 = vpop.permute.xlu0 %3384
      %3386 = vrot.lane.b32.xlu0 %v3218, 48
      %v3387 = vpop.permute.xlu0 %3386
      %3388 = vrot.lane.b32.xlu0 %v3219, 48
      %v3389 = vpop.permute.xlu0 %3388
      %3390 = vrot.lane.b32.xlu0 %v3220, 48
      %v3391 = vpop.permute.xlu0 %3390
      %3392 = vrot.lane.b32.xlu0 %v3221, 48
      %v3393 = vpop.permute.xlu0 %3392
      %3394 = vrot.lane.b32.xlu0 %v3222, 48
      %v3395 = vpop.permute.xlu0 %3394
      %3396 = vrot.lane.b32.xlu0 %v3223, 48
      %v3397 = vpop.permute.xlu0 %3396
      %3398 = vrot.lane.b32.xlu0 %v3224, 48
      %v3399 = vpop.permute.xlu0 %3398
      %3400 = vrot.lane.b32.xlu0 %v3225, 48
      %v3401 = vpop.permute.xlu0 %3400
      %3402 = vrot.lane.b32.xlu0 %v3226, 48
      %v3403 = vpop.permute.xlu0 %3402
      %3404 = vrot.lane.b32.xlu0 %v3227, 48
      %v3405 = vpop.permute.xlu0 %3404
      %3406 = vrot.lane.b32.xlu0 %v3228, 48
      %v3407 = vpop.permute.xlu0 %3406
      %3408 = vrot.lane.b32.xlu0 %v3229, 48
      %v3409 = vpop.permute.xlu0 %3408
      %3410 = vrot.lane.b32.xlu0 %v3230, 48
      %v3411 = vpop.permute.xlu0 %3410
      %3412 = vrot.lane.b32.xlu0 %v3231, 48
      %v3413 = vpop.permute.xlu0 %3412
      %3414 = vrot.lane.b32.xlu0 %v3232, 48
      %v3415 = vpop.permute.xlu0 %3414
      %3416 = vrot.lane.b32.xlu0 %v3344, 48
      %v3417 = vpop.permute.xlu0 %3416
      %3418 = vrot.lane.b32.xlu0 %v3345, 48
      %v3419 = vpop.permute.xlu0 %3418
      %v3420 = vadd.f32 %v3307, %v3347
      %v3421 = vadd.f32 %v3308, %v3349
      %v3422 = vadd.f32 %v3309, %v3351
      %v3423 = vadd.f32 %v3310, %v3353
      %v3424 = vadd.f32 %v3311, %v3355
      %v3425 = vadd.f32 %v3312, %v3357
      %v3426 = vadd.f32 %v3313, %v3359
      %v3427 = vadd.f32 %v3314, %v3361
      %v3428 = vadd.f32 %v3315, %v3363
      %v3429 = vadd.f32 %v3316, %v3365
      %v3430 = vadd.f32 %v3317, %v3367
      %v3431 = vadd.f32 %v3318, %v3369
      %v3432 = vadd.f32 %v3319, %v3371
      %v3433 = vadd.f32 %v3320, %v3373
      %v3434 = vadd.f32 %v3321, %v3375
      %v3435 = vadd.f32 %v3322, %v3377
      %v3436 = vadd.f32 %v3323, %v3379
      %v3437 = vadd.f32 %v3324, %v3381
      %v3438 = vadd.f32 %v3325, %v3383
      %v3439 = vadd.f32 %v3326, %v3385
      %v3440 = vadd.f32 %v3327, %v3387
      %v3441 = vadd.f32 %v3328, %v3389
      %v3442 = vadd.f32 %v3329, %v3391
      %v3443 = vadd.f32 %v3330, %v3393
      %v3444 = vadd.f32 %v3331, %v3395
      %v3445 = vadd.f32 %v3332, %v3397
      %v3446 = vadd.f32 %v3333, %v3399
      %v3447 = vadd.f32 %v3334, %v3401
      %v3448 = vadd.f32 %v3335, %v3403
      %v3449 = vadd.f32 %v3336, %v3405
      %v3450 = vadd.f32 %v3337, %v3407
      %v3451 = vadd.f32 %v3338, %v3409
      %v3452 = vadd.f32 %v3339, %v3411
      %v3453 = vadd.f32 %v3340, %v3413
      %v3454 = vadd.f32 %v3341, %v3415
      %v3455 = vadd.f32 %v3342, %v3417
      %v3456 = vadd.f32 %v3343, %v3419
      %v3457 = vld [vmem:[#allocation4 + $0x27] sm:$0xff]
      %v3458 = vld [vmem:[#allocation4 + $0x2f] sm:$0xff]
      %v3459 = vld [vmem:[#allocation4 + $0x37] sm:$0xff]
      %v3460 = vld [vmem:[#allocation4 + $0x3f] sm:$0xff]
      %v3461 = vld [vmem:[#allocation4 + $0x47] sm:$0xff]
      %v3462 = vld [vmem:[#allocation4 + $0x4f] sm:$0xff]
      %v3463 = vld [vmem:[#allocation4 + $0x57] sm:$0xff]
      %v3464 = vld [vmem:[#allocation4 + $0x5f] sm:$0xff]
      %v3465 = vld [vmem:[#allocation4 + $0x67] sm:$0xff]
      %v3466 = vld [vmem:[#allocation4 + $0x6f] sm:$0xff]
      %v3467 = vld [vmem:[#allocation4 + $0x77] sm:$0xff]
      %v3468 = vld [vmem:[#allocation4 + $0x7f] sm:$0xff]
      %v3469 = vld [vmem:[#allocation4 + $0x87] sm:$0xff]
      %v3470 = vld [vmem:[#allocation4 + $0x8f] sm:$0xff]
      %v3471 = vld [vmem:[#allocation4 + $0x97] sm:$0xff]
      %v3472 = vld [vmem:[#allocation4 + $0x9f] sm:$0xff]
      %v3473 = vld [vmem:[#allocation4 + $0xa7] sm:$0xff]
      %v3474 = vld [vmem:[#allocation4 + $0xaf] sm:$0xff]
      %v3475 = vld [vmem:[#allocation4 + $0xb7] sm:$0xff]
      %v3476 = vld [vmem:[#allocation4 + $0xbf] sm:$0xff]
      %v3477 = vld [vmem:[#allocation4 + $0xc7] sm:$0xff]
      %v3478 = vld [vmem:[#allocation4 + $0xcf] sm:$0xff]
      %v3479 = vld [vmem:[#allocation4 + $0xd7] sm:$0xff]
      %v3480 = vld [vmem:[#allocation4 + $0xdf] sm:$0xff]
      %v3481 = vld [vmem:[#allocation4 + $0xe7] sm:$0xff]
      %v3482 = vld [vmem:[#allocation4 + $0xef] sm:$0xff]
      %v3483 = vld [vmem:[#allocation4 + $0xf7] sm:$0xff]
      %v3484 = vld [vmem:[#allocation4 + $0xff] sm:$0xff]
      %v3485 = vld [vmem:[#allocation4 + $0x107] sm:$0xff]
      %v3486 = vld [vmem:[#allocation4 + $0x10f] sm:$0xff]
      %v3487 = vld [vmem:[#allocation4 + $0x117] sm:$0xff]
      %v3488 = vld [vmem:[#allocation4 + $0x11f] sm:$0xff]
      %v3489 = vld [vmem:[#allocation4 + $0x127] sm:$0xff]
      %v3490 = vld [vmem:[#allocation4 + $0x12f] sm:$0xff]
      %v3491 = vld [vmem:[#allocation4 + $0x137] sm:$0xff]
      %v3492 = vld [vmem:[#allocation4 + $0x13f] sm:$0xff]
      %v3493 = vld [vmem:[#allocation4 + $0x147] sm:$0xff]
      %3494 = vrot.lane.b32.xlu0 %v3457, 56
      %v3495 = vpop.permute.xlu0 %3494
      %3496 = vrot.lane.b32.xlu0 %v3458, 56
      %v3497 = vpop.permute.xlu0 %3496
      %3498 = vrot.lane.b32.xlu0 %v3459, 56
      %v3499 = vpop.permute.xlu0 %3498
      %3500 = vrot.lane.b32.xlu0 %v3460, 56
      %v3501 = vpop.permute.xlu0 %3500
      %3502 = vrot.lane.b32.xlu0 %v3461, 56
      %v3503 = vpop.permute.xlu0 %3502
      %3504 = vrot.lane.b32.xlu0 %v3462, 56
      %v3505 = vpop.permute.xlu0 %3504
      %3506 = vrot.lane.b32.xlu0 %v3463, 56
      %v3507 = vpop.permute.xlu0 %3506
      %3508 = vrot.lane.b32.xlu0 %v3464, 56
      %v3509 = vpop.permute.xlu0 %3508
      %3510 = vrot.lane.b32.xlu0 %v3465, 56
      %v3511 = vpop.permute.xlu0 %3510
      %3512 = vrot.lane.b32.xlu0 %v3466, 56
      %v3513 = vpop.permute.xlu0 %3512
      %3514 = vrot.lane.b32.xlu0 %v3467, 56
      %v3515 = vpop.permute.xlu0 %3514
      %3516 = vrot.lane.b32.xlu0 %v3468, 56
      %v3517 = vpop.permute.xlu0 %3516
      %3518 = vrot.lane.b32.xlu0 %v3469, 56
      %v3519 = vpop.permute.xlu0 %3518
      %3520 = vrot.lane.b32.xlu0 %v3470, 56
      %v3521 = vpop.permute.xlu0 %3520
      %3522 = vrot.lane.b32.xlu0 %v3471, 56
      %v3523 = vpop.permute.xlu0 %3522
      %3524 = vrot.lane.b32.xlu0 %v3472, 56
      %v3525 = vpop.permute.xlu0 %3524
      %3526 = vrot.lane.b32.xlu0 %v3473, 56
      %v3527 = vpop.permute.xlu0 %3526
      %3528 = vrot.lane.b32.xlu0 %v3474, 56
      %v3529 = vpop.permute.xlu0 %3528
      %3530 = vrot.lane.b32.xlu0 %v3475, 56
      %v3531 = vpop.permute.xlu0 %3530
      %3532 = vrot.lane.b32.xlu0 %v3476, 56
      %v3533 = vpop.permute.xlu0 %3532
      %3534 = vrot.lane.b32.xlu0 %v3477, 56
      %v3535 = vpop.permute.xlu0 %3534
      %3536 = vrot.lane.b32.xlu0 %v3478, 56
      %v3537 = vpop.permute.xlu0 %3536
      %3538 = vrot.lane.b32.xlu0 %v3479, 56
      %v3539 = vpop.permute.xlu0 %3538
      %3540 = vrot.lane.b32.xlu0 %v3480, 56
      %v3541 = vpop.permute.xlu0 %3540
      %3542 = vrot.lane.b32.xlu0 %v3481, 56
      %v3543 = vpop.permute.xlu0 %3542
      %3544 = vrot.lane.b32.xlu0 %v3482, 56
      %v3545 = vpop.permute.xlu0 %3544
      %3546 = vrot.lane.b32.xlu0 %v3483, 56
      %v3547 = vpop.permute.xlu0 %3546
      %3548 = vrot.lane.b32.xlu0 %v3484, 56
      %v3549 = vpop.permute.xlu0 %3548
      %3550 = vrot.lane.b32.xlu0 %v3485, 56
      %v3551 = vpop.permute.xlu0 %3550
      %3552 = vrot.lane.b32.xlu0 %v3486, 56
      %v3553 = vpop.permute.xlu0 %3552
      %3554 = vrot.lane.b32.xlu0 %v3487, 56
      %v3555 = vpop.permute.xlu0 %3554
      %3556 = vrot.lane.b32.xlu0 %v3488, 56
      %v3557 = vpop.permute.xlu0 %3556
      %3558 = vrot.lane.b32.xlu0 %v3489, 56
      %v3559 = vpop.permute.xlu0 %3558
      %3560 = vrot.lane.b32.xlu0 %v3490, 56
      %v3561 = vpop.permute.xlu0 %3560
      %3562 = vrot.lane.b32.xlu0 %v3491, 56
      %v3563 = vpop.permute.xlu0 %3562
      %3564 = vrot.lane.b32.xlu0 %v3492, 56
      %v3565 = vpop.permute.xlu0 %3564
      %3566 = vrot.lane.b32.xlu0 %v3493, 56
      %v3567 = vpop.permute.xlu0 %3566
      %v3568 = vadd.f32 %v3420, %v3495
      %v3569 = vadd.f32 %v3421, %v3497
      %v3570 = vadd.f32 %v3422, %v3499
      %v3571 = vadd.f32 %v3423, %v3501
      %v3572 = vadd.f32 %v3424, %v3503
      %v3573 = vadd.f32 %v3425, %v3505
      %v3574 = vadd.f32 %v3426, %v3507
      %v3575 = vadd.f32 %v3427, %v3509
      %v3576 = vadd.f32 %v3428, %v3511
      %v3577 = vadd.f32 %v3429, %v3513
      %v3578 = vadd.f32 %v3430, %v3515
      %v3579 = vadd.f32 %v3431, %v3517
      %v3580 = vadd.f32 %v3432, %v3519
      %v3581 = vadd.f32 %v3433, %v3521
      %v3582 = vadd.f32 %v3434, %v3523
      %v3583 = vadd.f32 %v3435, %v3525
      %v3584 = vadd.f32 %v3436, %v3527
      %v3585 = vadd.f32 %v3437, %v3529
      %v3586 = vadd.f32 %v3438, %v3531
      %v3587 = vadd.f32 %v3439, %v3533
      %v3588 = vadd.f32 %v3440, %v3535
      %v3589 = vadd.f32 %v3441, %v3537
      %v3590 = vadd.f32 %v3442, %v3539
      %v3591 = vadd.f32 %v3443, %v3541
      %v3592 = vadd.f32 %v3444, %v3543
      %v3593 = vadd.f32 %v3445, %v3545
      %v3594 = vadd.f32 %v3446, %v3547
      %v3595 = vadd.f32 %v3447, %v3549
      %v3596 = vadd.f32 %v3448, %v3551
      %v3597 = vadd.f32 %v3449, %v3553
      %v3598 = vadd.f32 %v3450, %v3555
      %v3599 = vadd.f32 %v3451, %v3557
      %v3600 = vadd.f32 %v3452, %v3559
      %v3601 = vadd.f32 %v3453, %v3561
      %v3602 = vadd.f32 %v3454, %v3563
      %v3603 = vadd.f32 %v3455, %v3565
      %v3604 = vadd.f32 %v3456, %v3567
      %v3605 = vld [vmem:[#allocation4 + $0x28] sm:$0xff]
      %v3606 = vld [vmem:[#allocation4 + $0x30] sm:$0xff]
      %v3607 = vld [vmem:[#allocation4 + $0x38] sm:$0xff]
      %v3608 = vld [vmem:[#allocation4 + $0x40] sm:$0xff]
      %v3609 = vld [vmem:[#allocation4 + $0x48] sm:$0xff]
      %v3610 = vld [vmem:[#allocation4 + $0x50] sm:$0xff]
      %v3611 = vld [vmem:[#allocation4 + $0x58] sm:$0xff]
      %v3612 = vld [vmem:[#allocation4 + $0x60] sm:$0xff]
      %v3613 = vld [vmem:[#allocation4 + $0x68] sm:$0xff]
      %v3614 = vld [vmem:[#allocation4 + $0x70] sm:$0xff]
      %v3615 = vld [vmem:[#allocation4 + $0x78] sm:$0xff]
      %v3616 = vld [vmem:[#allocation4 + $0x80] sm:$0xff]
      %v3617 = vld [vmem:[#allocation4 + $0x88] sm:$0xff]
      %v3618 = vld [vmem:[#allocation4 + $0x90] sm:$0xff]
      %v3619 = vld [vmem:[#allocation4 + $0x98] sm:$0xff]
      %v3620 = vld [vmem:[#allocation4 + $0xa0] sm:$0xff]
      %v3621 = vld [vmem:[#allocation4 + $0xa8] sm:$0xff]
      %v3622 = vld [vmem:[#allocation4 + $0xb0] sm:$0xff]
      %v3623 = vld [vmem:[#allocation4 + $0xb8] sm:$0xff]
      %v3624 = vld [vmem:[#allocation4 + $0xc0] sm:$0xff]
      %v3625 = vld [vmem:[#allocation4 + $0xc8] sm:$0xff]
      %v3626 = vld [vmem:[#allocation4 + $0xd0] sm:$0xff]
      %v3627 = vld [vmem:[#allocation4 + $0xd8] sm:$0xff]
      %v3628 = vld [vmem:[#allocation4 + $0xe0] sm:$0xff]
      %v3629 = vld [vmem:[#allocation4 + $0xe8] sm:$0xff]
      %v3630 = vld [vmem:[#allocation4 + $0xf0] sm:$0xff]
      %v3631 = vld [vmem:[#allocation4 + $0xf8] sm:$0xff]
      %v3632 = vld [vmem:[#allocation4 + $0x100] sm:$0xff]
      %v3633 = vld [vmem:[#allocation4 + $0x108] sm:$0xff]
      %v3634 = vld [vmem:[#allocation4 + $0x110] sm:$0xff]
      %v3635 = vld [vmem:[#allocation4 + $0x118] sm:$0xff]
      %v3636 = vld [vmem:[#allocation4 + $0x120] sm:$0xff]
      %v3637 = vld [vmem:[#allocation4 + $0x128] sm:$0xff]
      %v3638 = vld [vmem:[#allocation4 + $0x130] sm:$0xff]
      %v3639 = vld [vmem:[#allocation4 + $0x138] sm:$0xff]
      %v3640 = vld [vmem:[#allocation4 + $0x140] sm:$0xff]
      %v3641 = vld [vmem:[#allocation4 + $0x148] sm:$0xff]
      %3642 = vrot.lane.b32.xlu0 %v3605, 64
      %v3643 = vpop.permute.xlu0 %3642
      %3644 = vrot.lane.b32.xlu0 %v3606, 64
      %v3645 = vpop.permute.xlu0 %3644
      %3646 = vrot.lane.b32.xlu0 %v3607, 64
      %v3647 = vpop.permute.xlu0 %3646
      %3648 = vrot.lane.b32.xlu0 %v3608, 64
      %v3649 = vpop.permute.xlu0 %3648
      %3650 = vrot.lane.b32.xlu0 %v3609, 64
      %v3651 = vpop.permute.xlu0 %3650
      %3652 = vrot.lane.b32.xlu0 %v3610, 64
      %v3653 = vpop.permute.xlu0 %3652
      %3654 = vrot.lane.b32.xlu0 %v3611, 64
      %v3655 = vpop.permute.xlu0 %3654
      %3656 = vrot.lane.b32.xlu0 %v3612, 64
      %v3657 = vpop.permute.xlu0 %3656
      %3658 = vrot.lane.b32.xlu0 %v3613, 64
      %v3659 = vpop.permute.xlu0 %3658
      %3660 = vrot.lane.b32.xlu0 %v3614, 64
      %v3661 = vpop.permute.xlu0 %3660
      %3662 = vrot.lane.b32.xlu0 %v3615, 64
      %v3663 = vpop.permute.xlu0 %3662
      %3664 = vrot.lane.b32.xlu0 %v3616, 64
      %v3665 = vpop.permute.xlu0 %3664
      %3666 = vrot.lane.b32.xlu0 %v3617, 64
      %v3667 = vpop.permute.xlu0 %3666
      %3668 = vrot.lane.b32.xlu0 %v3618, 64
      %v3669 = vpop.permute.xlu0 %3668
      %3670 = vrot.lane.b32.xlu0 %v3619, 64
      %v3671 = vpop.permute.xlu0 %3670
      %3672 = vrot.lane.b32.xlu0 %v3620, 64
      %v3673 = vpop.permute.xlu0 %3672
      %3674 = vrot.lane.b32.xlu0 %v3621, 64
      %v3675 = vpop.permute.xlu0 %3674
      %3676 = vrot.lane.b32.xlu0 %v3622, 64
      %v3677 = vpop.permute.xlu0 %3676
      %3678 = vrot.lane.b32.xlu0 %v3623, 64
      %v3679 = vpop.permute.xlu0 %3678
      %3680 = vrot.lane.b32.xlu0 %v3624, 64
      %v3681 = vpop.permute.xlu0 %3680
      %3682 = vrot.lane.b32.xlu0 %v3625, 64
      %v3683 = vpop.permute.xlu0 %3682
      %3684 = vrot.lane.b32.xlu0 %v3626, 64
      %v3685 = vpop.permute.xlu0 %3684
      %3686 = vrot.lane.b32.xlu0 %v3627, 64
      %v3687 = vpop.permute.xlu0 %3686
      %3688 = vrot.lane.b32.xlu0 %v3628, 64
      %v3689 = vpop.permute.xlu0 %3688
      %3690 = vrot.lane.b32.xlu0 %v3629, 64
      %v3691 = vpop.permute.xlu0 %3690
      %3692 = vrot.lane.b32.xlu0 %v3630, 64
      %v3693 = vpop.permute.xlu0 %3692
      %3694 = vrot.lane.b32.xlu0 %v3631, 64
      %v3695 = vpop.permute.xlu0 %3694
      %3696 = vrot.lane.b32.xlu0 %v3632, 64
      %v3697 = vpop.permute.xlu0 %3696
      %3698 = vrot.lane.b32.xlu0 %v3633, 64
      %v3699 = vpop.permute.xlu0 %3698
      %3700 = vrot.lane.b32.xlu0 %v3634, 64
      %v3701 = vpop.permute.xlu0 %3700
      %3702 = vrot.lane.b32.xlu0 %v3635, 64
      %v3703 = vpop.permute.xlu0 %3702
      %3704 = vrot.lane.b32.xlu0 %v3636, 64
      %v3705 = vpop.permute.xlu0 %3704
      %3706 = vrot.lane.b32.xlu0 %v3637, 64
      %v3707 = vpop.permute.xlu0 %3706
      %3708 = vrot.lane.b32.xlu0 %v3638, 64
      %v3709 = vpop.permute.xlu0 %3708
      %3710 = vrot.lane.b32.xlu0 %v3639, 64
      %v3711 = vpop.permute.xlu0 %3710
      %3712 = vrot.lane.b32.xlu0 %v3640, 64
      %v3713 = vpop.permute.xlu0 %3712
      %3714 = vrot.lane.b32.xlu0 %v3641, 64
      %v3715 = vpop.permute.xlu0 %3714
      %v3716 = vadd.f32 %v3568, %v3643
      %v3717 = vadd.f32 %v3569, %v3645
      %v3718 = vadd.f32 %v3570, %v3647
      %v3719 = vadd.f32 %v3571, %v3649
      %v3720 = vadd.f32 %v3572, %v3651
      %v3721 = vadd.f32 %v3573, %v3653
      %v3722 = vadd.f32 %v3574, %v3655
      %v3723 = vadd.f32 %v3575, %v3657
      %v3724 = vadd.f32 %v3576, %v3659
      %v3725 = vadd.f32 %v3577, %v3661
      %v3726 = vadd.f32 %v3578, %v3663
      %v3727 = vadd.f32 %v3579, %v3665
      %v3728 = vadd.f32 %v3580, %v3667
      %v3729 = vadd.f32 %v3581, %v3669
      %v3730 = vadd.f32 %v3582, %v3671
      %v3731 = vadd.f32 %v3583, %v3673
      %v3732 = vadd.f32 %v3584, %v3675
      %v3733 = vadd.f32 %v3585, %v3677
      %v3734 = vadd.f32 %v3586, %v3679
      %v3735 = vadd.f32 %v3587, %v3681
      %v3736 = vadd.f32 %v3588, %v3683
      %v3737 = vadd.f32 %v3589, %v3685
      %v3738 = vadd.f32 %v3590, %v3687
      %v3739 = vadd.f32 %v3591, %v3689
      %v3740 = vadd.f32 %v3592, %v3691
      %v3741 = vadd.f32 %v3593, %v3693
      %v3742 = vadd.f32 %v3594, %v3695
      %v3743 = vadd.f32 %v3595, %v3697
      %v3744 = vadd.f32 %v3596, %v3699
      %v3745 = vadd.f32 %v3597, %v3701
      %v3746 = vadd.f32 %v3598, %v3703
      %v3747 = vadd.f32 %v3599, %v3705
      %v3748 = vadd.f32 %v3600, %v3707
      %v3749 = vadd.f32 %v3601, %v3709
      %v3750 = vadd.f32 %v3602, %v3711
      %v3751 = vadd.f32 %v3603, %v3713
      %v3752 = vadd.f32 %v3604, %v3715
      %v3753 = vld [vmem:[%s4] sm:$0xff]
      %v3754 = vld [vmem:[%s4 + $0x8] sm:$0xff]
      %v3755 = vld [vmem:[%s4 + $0x10] sm:$0xff]
      %v3756 = vld [vmem:[%s4 + $0x18] sm:$0xff]
      %v3757 = vld [vmem:[%s4 + $0x20] sm:$0xff]
      %v3758 = vld [vmem:[%s4 + $0x28] sm:$0xff]
      %v3759 = vld [vmem:[%s4 + $0x30] sm:$0xff]
      %v3760 = vld [vmem:[%s4 + $0x38] sm:$0xff]
      %v3761 = vld [vmem:[%s4 + $0x40] sm:$0xff]
      %v3762 = vld [vmem:[%s4 + $0x48] sm:$0xff]
      %v3763 = vld [vmem:[%s4 + $0x50] sm:$0xff]
      %v3764 = vld [vmem:[%s4 + $0x58] sm:$0xff]
      %v3765 = vld [vmem:[%s4 + $0x60] sm:$0xff]
      %v3766 = vld [vmem:[%s4 + $0x68] sm:$0xff]
      %v3767 = vld [vmem:[%s4 + $0x70] sm:$0xff]
      %v3768 = vld [vmem:[%s4 + $0x78] sm:$0xff]
      %v3769 = vpack.c.bf16 %v3717, %v3716
      %v3770 = vpack.c.bf16 %v3719, %v3718
      %v3771 = vpack.c.bf16 %v3721, %v3720
      %v3772 = vpack.c.bf16 %v3723, %v3722
      %v3773 = vpack.c.bf16 %v3725, %v3724
      %v3774 = vpack.c.bf16 %v3727, %v3726
      %v3775 = vpack.c.bf16 %v3729, %v3728
      %v3776 = vpack.c.bf16 %v3731, %v3730
      %v3777 = vpack.c.bf16 %v3733, %v3732
      %v3778 = vpack.c.bf16 %v3735, %v3734
      %v3779 = vpack.c.bf16 %v3737, %v3736
      %v3780 = vpack.c.bf16 %v3739, %v3738
      %v3781 = vpack.c.bf16 %v3741, %v3740
      %v3782 = vpack.c.bf16 %v3743, %v3742
      %v3783 = vpack.c.bf16 %v3745, %v3744
      %v3784 = vpack.c.bf16 %v3747, %v3746
      %v3785 = vpack.c.bf16 %v3749, %v3748
      %v3786 = vpack.c.bf16 %v3751, %v3750
      %v3787 = vpack.c.bf16 %v3752, %v3752
      %v3788 = vpack.c.bf16 %v3754, %v3753
      %v3789 = vpack.c.bf16 %v3756, %v3755
      %v3790 = vpack.c.bf16 %v3758, %v3757
      %v3791 = vpack.c.bf16 %v3760, %v3759
      %v3792 = vpack.c.bf16 %v3762, %v3761
      %v3793 = vpack.c.bf16 %v3764, %v3763
      %v3794 = vpack.c.bf16 %v3766, %v3765
      %v3795 = vpack.c.bf16 %v3768, %v3767
      %v3796 = vld [vmem:[%s5] sm:$0x1]
      %v3798 = vlaneseq
      %v3799 = vshrl.u32 %v3798, 7
      %v3800 = vsub.s32 0, %v3799
      %v3801 = vrot.slane %v3796, %v3800
      %3803 = vmatprep.subr.bf16.mxu0 0
      %3804 = vmatpush1.bf16.msra.mxu0 %v3788
      %3805 = vmatprep.subr.bf16.mxu0 0
      %3806 = vmatpush1.bf16.msra.mxu0 %v3789
      %3807 = vmatprep.subr.bf16.mxu0 0
      %3808 = vmatpush1.bf16.msra.mxu0 %v3790
      %3809 = vmatprep.subr.bf16.mxu0 0
      %3810 = vmatpush1.bf16.msra.mxu0 %v3791
      %3811 = vmatprep.subr.bf16.mxu0 0
      %3812 = vmatpush1.bf16.msra.mxu0 %v3792
      %3813 = vmatprep.subr.bf16.mxu0 0
      %3814 = vmatpush1.bf16.msra.mxu0 %v3793
      %3815 = vmatprep.subr.bf16.mxu0 0
      %3816 = vmatpush1.bf16.msra.mxu0 %v3794
      %3817 = vmatprep.subr.bf16.mxu0 0
      %3818 = vmatpush1.bf16.msra.mxu0 %v3795
      %3819 = vmatprep.subr.bf16.mxu0 0
      %3820 = vmatpush1.bf16.msra.mxu0 0
      %3821 = vmatprep.subr.bf16.mxu0 0
      %3822 = vmatpush1.bf16.msra.mxu0 0
      %3823 = vmatprep.subr.bf16.mxu0 0
      %3824 = vmatpush1.bf16.msra.mxu0 0
      %3825 = vmatprep.subr.bf16.mxu0 0
      %3826 = vmatpush1.bf16.msra.mxu0 0
      %3827 = vmatprep.subr.bf16.mxu0 0
      %3828 = vmatpush1.bf16.msra.mxu0 0
      %3829 = vmatprep.subr.bf16.mxu0 0
      %3830 = vmatpush1.bf16.msra.mxu0 0
      %3831 = vmatprep.subr.bf16.mxu0 0
      %3832 = vmatpush1.bf16.msra.mxu0 0
      %3833 = vmatprep.subr.bf16.mxu0 0
      %3834 = vmatpush1.bf16.msra.mxu0 0
      %3835 = vmatprep.mubr.bf16.mxu0 0
      %3836 = vmatmul.mubr.bf16.gmra.mrb[0].mxu0 %v3769
      %v3837 = vpop.f32.mrb[0].mxu0
      %v3838 = vadd.f32 %v3801, %v3837
      %v3839 = vpop.f32.mrb[0].mxu0
      %v3840 = vpop.f32.mrb[0].mxu0
      %v3841 = vadd.f32 %v3801, %v3840
      %v3842 = vpop.f32.mrb[0].mxu0
      %3843 = vmatprep.mubr.bf16.mxu0 0
      %3844 = vmatmul.mubr.bf16.gmra.mrb[0].mxu0 %v3770
      %v3845 = vpop.f32.mrb[0].mxu0
      %v3846 = vadd.f32 %v3801, %v3845
      %v3847 = vpop.f32.mrb[0].mxu0
      %v3848 = vpop.f32.mrb[0].mxu0
      %v3849 = vadd.f32 %v3801, %v3848
      %v3850 = vpop.f32.mrb[0].mxu0
      %3851 = vmatprep.mubr.bf16.mxu0 0
      %3852 = vmatmul.mubr.bf16.gmra.mrb[0].mxu0 %v3771
      %v3853 = vpop.f32.mrb[0].mxu0
      %v3854 = vadd.f32 %v3801, %v3853
      %v3855 = vpop.f32.mrb[0].mxu0
      %v3856 = vpop.f32.mrb[0].mxu0
      %v3857 = vadd.f32 %v3801, %v3856
      %v3858 = vpop.f32.mrb[0].mxu0
      %3859 = vmatprep.mubr.bf16.mxu0 0
      %3860 = vmatmul.mubr.bf16.gmra.mrb[0].mxu0 %v3772
      %v3861 = vpop.f32.mrb[0].mxu0
      %v3862 = vadd.f32 %v3801, %v3861
      %v3863 = vpop.f32.mrb[0].mxu0
      %v3864 = vpop.f32.mrb[0].mxu0
      %v3865 = vadd.f32 %v3801, %v3864
      %v3866 = vpop.f32.mrb[0].mxu0
      %3867 = vmatprep.mubr.bf16.mxu0 0
      %3868 = vmatmul.mubr.bf16.gmra.mrb[0].mxu0 %v3773
      %v3869 = vpop.f32.mrb[0].mxu0
      %v3870 = vadd.f32 %v3801, %v3869
      %v3871 = vpop.f32.mrb[0].mxu0
      %v3872 = vpop.f32.mrb[0].mxu0
      %v3873 = vadd.f32 %v3801, %v3872
      %v3874 = vpop.f32.mrb[0].mxu0
      %3875 = vmatprep.mubr.bf16.mxu0 0
      %3876 = vmatmul.mubr.bf16.gmra.mrb[0].mxu0 %v3774
      %v3877 = vpop.f32.mrb[0].mxu0
      %v3878 = vadd.f32 %v3801, %v3877
      %v3879 = vpop.f32.mrb[0].mxu0
      %v3880 = vpop.f32.mrb[0].mxu0
      %v3881 = vadd.f32 %v3801, %v3880
      %v3882 = vpop.f32.mrb[0].mxu0
      %3883 = vmatprep.mubr.bf16.mxu0 0
      %3884 = vmatmul.mubr.bf16.gmra.mrb[0].mxu0 %v3775
      %v3885 = vpop.f32.mrb[0].mxu0
      %v3886 = vadd.f32 %v3801, %v3885
      %v3887 = vpop.f32.mrb[0].mxu0
      %v3888 = vpop.f32.mrb[0].mxu0
      %v3889 = vadd.f32 %v3801, %v3888
      %v3890 = vpop.f32.mrb[0].mxu0
      %3891 = vmatprep.mubr.bf16.mxu0 0
      %3892 = vmatmul.mubr.bf16.gmra.mrb[0].mxu0 %v3776
      %v3893 = vpop.f32.mrb[0].mxu0
      %v3894 = vadd.f32 %v3801, %v3893
      %v3895 = vpop.f32.mrb[0].mxu0
      %v3896 = vpop.f32.mrb[0].mxu0
      %v3897 = vadd.f32 %v3801, %v3896
      %v3898 = vpop.f32.mrb[0].mxu0
      %3899 = vmatprep.mubr.bf16.mxu0 0
      %3900 = vmatmul.mubr.bf16.gmra.mrb[0].mxu0 %v3777
      %v3901 = vpop.f32.mrb[0].mxu0
      %v3902 = vadd.f32 %v3801, %v3901
      %v3903 = vpop.f32.mrb[0].mxu0
      %v3904 = vpop.f32.mrb[0].mxu0
      %v3905 = vadd.f32 %v3801, %v3904
      %v3906 = vpop.f32.mrb[0].mxu0
      %3907 = vmatprep.mubr.bf16.mxu0 0
      %3908 = vmatmul.mubr.bf16.gmra.mrb[0].mxu0 %v3778
      %v3909 = vpop.f32.mrb[0].mxu0
      %v3910 = vadd.f32 %v3801, %v3909
      %v3911 = vpop.f32.mrb[0].mxu0
      %v3912 = vpop.f32.mrb[0].mxu0
      %v3913 = vadd.f32 %v3801, %v3912
      %v3914 = vpop.f32.mrb[0].mxu0
      %3915 = vmatprep.mubr.bf16.mxu0 0
      %3916 = vmatmul.mubr.bf16.gmra.mrb[0].mxu0 %v3779
      %v3917 = vpop.f32.mrb[0].mxu0
      %v3918 = vadd.f32 %v3801, %v3917
      %v3919 = vpop.f32.mrb[0].mxu0
      %v3920 = vpop.f32.mrb[0].mxu0
      %v3921 = vadd.f32 %v3801, %v3920
      %v3922 = vpop.f32.mrb[0].mxu0
      %3923 = vmatprep.mubr.bf16.mxu0 0
      %3924 = vmatmul.mubr.bf16.gmra.mrb[0].mxu0 %v3780
      %v3925 = vpop.f32.mrb[0].mxu0
      %v3926 = vadd.f32 %v3801, %v3925
      %v3927 = vpop.f32.mrb[0].mxu0
      %v3928 = vpop.f32.mrb[0].mxu0
      %v3929 = vadd.f32 %v3801, %v3928
      %v3930 = vpop.f32.mrb[0].mxu0
      %3931 = vmatprep.mubr.bf16.mxu0 0
      %3932 = vmatmul.mubr.bf16.gmra.mrb[0].mxu0 %v3781
      %v3933 = vpop.f32.mrb[0].mxu0
      %v3934 = vadd.f32 %v3801, %v3933
      %v3935 = vpop.f32.mrb[0].mxu0
      %v3936 = vpop.f32.mrb[0].mxu0
      %v3937 = vadd.f32 %v3801, %v3936
      %v3938 = vpop.f32.mrb[0].mxu0
      %3939 = vmatprep.mubr.bf16.mxu0 0
      %3940 = vmatmul.mubr.bf16.gmra.mrb[0].mxu0 %v3782
      %v3941 = vpop.f32.mrb[0].mxu0
      %v3942 = vadd.f32 %v3801, %v3941
      %v3943 = vpop.f32.mrb[0].mxu0
      %v3944 = vpop.f32.mrb[0].mxu0
      %v3945 = vadd.f32 %v3801, %v3944
      %v3946 = vpop.f32.mrb[0].mxu0
      %3947 = vmatprep.mubr.bf16.mxu0 0
      %3948 = vmatmul.mubr.bf16.gmra.mrb[0].mxu0 %v3783
      %v3949 = vpop.f32.mrb[0].mxu0
      %v3950 = vadd.f32 %v3801, %v3949
      %v3951 = vpop.f32.mrb[0].mxu0
      %v3952 = vpop.f32.mrb[0].mxu0
      %v3953 = vadd.f32 %v3801, %v3952
      %v3954 = vpop.f32.mrb[0].mxu0
      %3955 = vmatprep.mubr.bf16.mxu0 0
      %3956 = vmatmul.mubr.bf16.gmra.mrb[0].mxu0 %v3784
      %v3957 = vpop.f32.mrb[0].mxu0
      %v3958 = vadd.f32 %v3801, %v3957
      %v3959 = vpop.f32.mrb[0].mxu0
      %v3960 = vpop.f32.mrb[0].mxu0
      %v3961 = vadd.f32 %v3801, %v3960
      %v3962 = vpop.f32.mrb[0].mxu0
      %3963 = vmatprep.mubr.bf16.mxu0 0
      %3964 = vmatmul.mubr.bf16.gmra.mrb[0].mxu0 %v3785
      %v3965 = vpop.f32.mrb[0].mxu0
      %v3966 = vadd.f32 %v3801, %v3965
      %v3967 = vpop.f32.mrb[0].mxu0
      %v3968 = vpop.f32.mrb[0].mxu0
      %v3969 = vadd.f32 %v3801, %v3968
      %v3970 = vpop.f32.mrb[0].mxu0
      %3971 = vmatprep.mubr.bf16.mxu0 0
      %3972 = vmatmul.mubr.bf16.gmra.mrb[0].mxu0 %v3786
      %v3973 = vpop.f32.mrb[0].mxu0
      %v3974 = vadd.f32 %v3801, %v3973
      %v3975 = vpop.f32.mrb[0].mxu0
      %v3976 = vpop.f32.mrb[0].mxu0
      %v3977 = vadd.f32 %v3801, %v3976
      %v3978 = vpop.f32.mrb[0].mxu0
      %3979 = vmatprep.mubr.bf16.mxu0 0
      %3980 = vmatmul.mubr.bf16.gmra.mrb[0].mxu0 %v3787
      %v3981 = vpop.f32.mrb[0].mxu0
      %v3982 = vadd.f32 %v3801, %v3981
      %v3983 = vpop.f32.mrb[0].mxu0
      %v3984 = vpop.f32.mrb[0].mxu0
      %v3985 = vpop.f32.mrb[0].mxu0
      %3986 = vdwg.mxu0
      %v3987 = vmul.f32 %v3838, 0.5
      %v3988 = vmul.f32 %v3841, 0.5
      %v3989 = vmul.f32 %v3846, 0.5
      %v3990 = vmul.f32 %v3849, 0.5
      %v3991 = vmul.f32 %v3854, 0.5
      %v3992 = vmul.f32 %v3857, 0.5
      %v3993 = vmul.f32 %v3862, 0.5
      %v3994 = vmul.f32 %v3865, 0.5
      %v3995 = vmul.f32 %v3870, 0.5
      %v3996 = vmul.f32 %v3873, 0.5
      %v3997 = vmul.f32 %v3878, 0.5
      %v3998 = vmul.f32 %v3881, 0.5
      %v3999 = vmul.f32 %v3886, 0.5
      %v4000 = vmul.f32 %v3889, 0.5
      %v4001 = vmul.f32 %v3894, 0.5
      %v4002 = vmul.f32 %v3897, 0.5
      %v4003 = vmul.f32 %v3902, 0.5
      %v4004 = vmul.f32 %v3905, 0.5
      %v4005 = vmul.f32 %v3910, 0.5
      %v4006 = vmul.f32 %v3913, 0.5
      %v4007 = vmul.f32 %v3918, 0.5
      %v4008 = vmul.f32 %v3921, 0.5
      %v4009 = vmul.f32 %v3926, 0.5
      %v4010 = vmul.f32 %v3929, 0.5
      %v4011 = vmul.f32 %v3934, 0.5
      %v4012 = vmul.f32 %v3937, 0.5
      %v4013 = vmul.f32 %v3942, 0.5
      %v4014 = vmul.f32 %v3945, 0.5
      %v4015 = vmul.f32 %v3950, 0.5
      %v4016 = vmul.f32 %v3953, 0.5
      %v4017 = vmul.f32 %v3958, 0.5
      %v4018 = vmul.f32 %v3961, 0.5
      %v4019 = vmul.f32 %v3966, 0.5
      %v4020 = vmul.f32 %v3969, 0.5
      %v4021 = vmul.f32 %v3974, 0.5
      %v4022 = vmul.f32 %v3977, 0.5
      %v4023 = vmul.f32 %v3982, 0.5
      %v4024 = vmul.f32 %v3838, 0.70710677
      %v4025 = vmul.f32 %v3841, 0.70710677
      %v4026 = vmul.f32 %v3846, 0.70710677
      %v4027 = vmul.f32 %v3849, 0.70710677
      %v4028 = vmul.f32 %v3854, 0.70710677
      %v4029 = vmul.f32 %v3857, 0.70710677
      %v4030 = vmul.f32 %v3862, 0.70710677
      %v4031 = vmul.f32 %v3865, 0.70710677
      %v4032 = vmul.f32 %v3870, 0.70710677
      %v4033 = vmul.f32 %v3873, 0.70710677
      %v4034 = vmul.f32 %v3878, 0.70710677
      %v4035 = vmul.f32 %v3881, 0.70710677
      %v4036 = vmul.f32 %v3886, 0.70710677
      %v4037 = vmul.f32 %v3889, 0.70710677
      %v4038 = vmul.f32 %v3894, 0.70710677
      %v4039 = vmul.f32 %v3897, 0.70710677
      %v4040 = vmul.f32 %v3902, 0.70710677
      %v4041 = vmul.f32 %v3905, 0.70710677
      %v4042 = vmul.f32 %v3910, 0.70710677
      %v4043 = vmul.f32 %v3913, 0.70710677
      %v4044 = vmul.f32 %v3918, 0.70710677
      %v4045 = vmul.f32 %v3921, 0.70710677
      %v4046 = vmul.f32 %v3926, 0.70710677
      %v4047 = vmul.f32 %v3929, 0.70710677
      %v4048 = vmul.f32 %v3934, 0.70710677
      %v4049 = vmul.f32 %v3937, 0.70710677
      %v4050 = vmul.f32 %v3942, 0.70710677
      %v4051 = vmul.f32 %v3945, 0.70710677
      %v4052 = vmul.f32 %v3950, 0.70710677
      %v4053 = vmul.f32 %v3953, 0.70710677
      %v4054 = vmul.f32 %v3958, 0.70710677
      %v4055 = vmul.f32 %v3961, 0.70710677
      %v4056 = vmul.f32 %v3966, 0.70710677
      %v4057 = vmul.f32 %v3969, 0.70710677
      %v4058 = vmul.f32 %v3974, 0.70710677
      %v4059 = vmul.f32 %v3977, 0.70710677
      %v4060 = vmul.f32 %v3982, 0.70710677
      %v4061 = vmax.f32 %v4024, -4.0
      %v4062 = vmax.f32 %v4025, -4.0
      %v4063 = vmax.f32 %v4026, -4.0
      %v4064 = vmax.f32 %v4027, -4.0
      %v4065 = vmax.f32 %v4028, -4.0
      %v4066 = vmax.f32 %v4029, -4.0
      %v4067 = vmax.f32 %v4030, -4.0
      %v4068 = vmax.f32 %v4031, -4.0
      %v4069 = vmax.f32 %v4032, -4.0
      %v4070 = vmax.f32 %v4033, -4.0
      %v4071 = vmax.f32 %v4034, -4.0
      %v4072 = vmax.f32 %v4035, -4.0
      %v4073 = vmax.f32 %v4036, -4.0
      %v4074 = vmax.f32 %v4037, -4.0
      %v4075 = vmax.f32 %v4038, -4.0
      %v4076 = vmax.f32 %v4039, -4.0
      %v4077 = vmax.f32 %v4040, -4.0
      %v4078 = vmax.f32 %v4041, -4.0
      %v4079 = vmax.f32 %v4042, -4.0
      %v4080 = vmax.f32 %v4043, -4.0
      %v4081 = vmax.f32 %v4044, -4.0
      %v4082 = vmax.f32 %v4045, -4.0
      %v4083 = vmax.f32 %v4046, -4.0
      %v4084 = vmax.f32 %v4047, -4.0
      %v4085 = vmax.f32 %v4048, -4.0
      %v4086 = vmax.f32 %v4049, -4.0
      %v4087 = vmax.f32 %v4050, -4.0
      %v4088 = vmax.f32 %v4051, -4.0
      %v4089 = vmax.f32 %v4052, -4.0
      %v4090 = vmax.f32 %v4053, -4.0
      %v4091 = vmax.f32 %v4054, -4.0
      %v4092 = vmax.f32 %v4055, -4.0
      %v4093 = vmax.f32 %v4056, -4.0
      %v4094 = vmax.f32 %v4057, -4.0
      %v4095 = vmax.f32 %v4058, -4.0
      %v4096 = vmax.f32 %v4059, -4.0
      %v4097 = vmax.f32 %v4060, -4.0
      %v4098 = vmin.f32 %v4061, 4.0
      %v4099 = vmin.f32 %v4062, 4.0
      %v4100 = vmin.f32 %v4063, 4.0
      %v4101 = vmin.f32 %v4064, 4.0
      %v4102 = vmin.f32 %v4065, 4.0
      %v4103 = vmin.f32 %v4066, 4.0
      %v4104 = vmin.f32 %v4067, 4.0
      %v4105 = vmin.f32 %v4068, 4.0
      %v4106 = vmin.f32 %v4069, 4.0
      %v4107 = vmin.f32 %v4070, 4.0
      %v4108 = vmin.f32 %v4071, 4.0
      %v4109 = vmin.f32 %v4072, 4.0
      %v4110 = vmin.f32 %v4073, 4.0
      %v4111 = vmin.f32 %v4074, 4.0
      %v4112 = vmin.f32 %v4075, 4.0
      %v4113 = vmin.f32 %v4076, 4.0
      %v4114 = vmin.f32 %v4077, 4.0
      %v4115 = vmin.f32 %v4078, 4.0
      %v4116 = vmin.f32 %v4079, 4.0
      %v4117 = vmin.f32 %v4080, 4.0
      %v4118 = vmin.f32 %v4081, 4.0
      %v4119 = vmin.f32 %v4082, 4.0
      %v4120 = vmin.f32 %v4083, 4.0
      %v4121 = vmin.f32 %v4084, 4.0
      %v4122 = vmin.f32 %v4085, 4.0
      %v4123 = vmin.f32 %v4086, 4.0
      %v4124 = vmin.f32 %v4087, 4.0
      %v4125 = vmin.f32 %v4088, 4.0
      %v4126 = vmin.f32 %v4089, 4.0
      %v4127 = vmin.f32 %v4090, 4.0
      %v4128 = vmin.f32 %v4091, 4.0
      %v4129 = vmin.f32 %v4092, 4.0
      %v4130 = vmin.f32 %v4093, 4.0
      %v4131 = vmin.f32 %v4094, 4.0
      %v4132 = vmin.f32 %v4095, 4.0
      %v4133 = vmin.f32 %v4096, 4.0
      %v4134 = vmin.f32 %v4097, 4.0
      %v4135 = vmul.f32 %v4098, %v4098
      %v4136 = vmul.f32 %v4099, %v4099
      %v4137 = vmul.f32 %v4100, %v4100
      %v4138 = vmul.f32 %v4101, %v4101
      %v4139 = vmul.f32 %v4102, %v4102
      %v4140 = vmul.f32 %v4103, %v4103
      %v4141 = vmul.f32 %v4104, %v4104
      %v4142 = vmul.f32 %v4105, %v4105
      %v4143 = vmul.f32 %v4106, %v4106
      %v4144 = vmul.f32 %v4107, %v4107
      %v4145 = vmul.f32 %v4108, %v4108
      %v4146 = vmul.f32 %v4109, %v4109
      %v4147 = vmul.f32 %v4110, %v4110
      %v4148 = vmul.f32 %v4111, %v4111
      %v4149 = vmul.f32 %v4112, %v4112
      %v4150 = vmul.f32 %v4113, %v4113
      %v4151 = vmul.f32 %v4114, %v4114
      %v4152 = vmul.f32 %v4115, %v4115
      %v4153 = vmul.f32 %v4116, %v4116
      %v4154 = vmul.f32 %v4117, %v4117
      %v4155 = vmul.f32 %v4118, %v4118
      %v4156 = vmul.f32 %v4119, %v4119
      %v4157 = vmul.f32 %v4120, %v4120
      %v4158 = vmul.f32 %v4121, %v4121
      %v4159 = vmul.f32 %v4122, %v4122
      %v4160 = vmul.f32 %v4123, %v4123
      %v4161 = vmul.f32 %v4124, %v4124
      %v4162 = vmul.f32 %v4125, %v4125
      %v4163 = vmul.f32 %v4126, %v4126
      %v4164 = vmul.f32 %v4127, %v4127
      %v4165 = vmul.f32 %v4128, %v4128
      %v4166 = vmul.f32 %v4129, %v4129
      %v4167 = vmul.f32 %v4130, %v4130
      %v4168 = vmul.f32 %v4131, %v4131
      %v4169 = vmul.f32 %v4132, %v4132
      %v4170 = vmul.f32 %v4133, %v4133
      %v4171 = vmul.f32 %v4134, %v4134
      %v4172 = vmul.f32 %v4135, 0.00022905065
      %v4173 = vmul.f32 %v4136, 0.00022905065
      %v4174 = vmul.f32 %v4137, 0.00022905065
      %v4175 = vmul.f32 %v4138, 0.00022905065
      %v4176 = vmul.f32 %v4139, 0.00022905065
      %v4177 = vmul.f32 %v4140, 0.00022905065
      %v4178 = vmul.f32 %v4141, 0.00022905065
      %v4179 = vmul.f32 %v4142, 0.00022905065
      %v4180 = vmul.f32 %v4143, 0.00022905065
      %v4181 = vmul.f32 %v4144, 0.00022905065
      %v4182 = vmul.f32 %v4145, 0.00022905065
      %v4183 = vmul.f32 %v4146, 0.00022905065
      %v4184 = vmul.f32 %v4147, 0.00022905065
      %v4185 = vmul.f32 %v4148, 0.00022905065
      %v4186 = vmul.f32 %v4149, 0.00022905065
      %v4187 = vmul.f32 %v4150, 0.00022905065
      %v4188 = vmul.f32 %v4151, 0.00022905065
      %v4189 = vmul.f32 %v4152, 0.00022905065
      %v4190 = vmul.f32 %v4153, 0.00022905065
      %v4191 = vmul.f32 %v4154, 0.00022905065
      %v4192 = vmul.f32 %v4155, 0.00022905065
      %v4193 = vmul.f32 %v4156, 0.00022905065
      %v4194 = vmul.f32 %v4157, 0.00022905065
      %v4195 = vmul.f32 %v4158, 0.00022905065
      %v4196 = vmul.f32 %v4159, 0.00022905065
      %v4197 = vmul.f32 %v4160, 0.00022905065
      %v4198 = vmul.f32 %v4161, 0.00022905065
      %v4199 = vmul.f32 %v4162, 0.00022905065
      %v4200 = vmul.f32 %v4163, 0.00022905065
      %v4201 = vmul.f32 %v4164, 0.00022905065
      %v4202 = vmul.f32 %v4165, 0.00022905065
      %v4203 = vmul.f32 %v4166, 0.00022905065
      %v4204 = vmul.f32 %v4167, 0.00022905065
      %v4205 = vmul.f32 %v4168, 0.00022905065
      %v4206 = vmul.f32 %v4169, 0.00022905065
      %v4207 = vmul.f32 %v4170, 0.00022905065
      %v4208 = vmul.f32 %v4171, 0.00022905065
      %v4209 = vadd.f32 %v4172, 0.003408291
      %v4210 = vadd.f32 %v4173, 0.003408291
      %v4211 = vadd.f32 %v4174, 0.003408291
      %v4212 = vadd.f32 %v4175, 0.003408291
      %v4213 = vadd.f32 %v4176, 0.003408291
      %v4214 = vadd.f32 %v4177, 0.003408291
      %v4215 = vadd.f32 %v4178, 0.003408291
      %v4216 = vadd.f32 %v4179, 0.003408291
      %v4217 = vadd.f32 %v4180, 0.003408291
      %v4218 = vadd.f32 %v4181, 0.003408291
      %v4219 = vadd.f32 %v4182, 0.003408291
      %v4220 = vadd.f32 %v4183, 0.003408291
      %v4221 = vadd.f32 %v4184, 0.003408291
      %v4222 = vadd.f32 %v4185, 0.003408291
      %v4223 = vadd.f32 %v4186, 0.003408291
      %v4224 = vadd.f32 %v4187, 0.003408291
      %v4225 = vadd.f32 %v4188, 0.003408291
      %v4226 = vadd.f32 %v4189, 0.003408291
      %v4227 = vadd.f32 %v4190, 0.003408291
      %v4228 = vadd.f32 %v4191, 0.003408291
      %v4229 = vadd.f32 %v4192, 0.003408291
      %v4230 = vadd.f32 %v4193, 0.003408291
      %v4231 = vadd.f32 %v4194, 0.003408291
      %v4232 = vadd.f32 %v4195, 0.003408291
      %v4233 = vadd.f32 %v4196, 0.003408291
      %v4234 = vadd.f32 %v4197, 0.003408291
      %v4235 = vadd.f32 %v4198, 0.003408291
      %v4236 = vadd.f32 %v4199, 0.003408291
      %v4237 = vadd.f32 %v4200, 0.003408291
      %v4238 = vadd.f32 %v4201, 0.003408291
      %v4239 = vadd.f32 %v4202, 0.003408291
      %v4240 = vadd.f32 %v4203, 0.003408291
      %v4241 = vadd.f32 %v4204, 0.003408291
      %v4242 = vadd.f32 %v4205, 0.003408291
      %v4243 = vadd.f32 %v4206, 0.003408291
      %v4244 = vadd.f32 %v4207, 0.003408291
      %v4245 = vadd.f32 %v4208, 0.003408291
      %v4246 = vmul.f32 %v4209, %v4135
      %v4247 = vmul.f32 %v4210, %v4136
      %v4248 = vmul.f32 %v4211, %v4137
      %v4249 = vmul.f32 %v4212, %v4138
      %v4250 = vmul.f32 %v4213, %v4139
      %v4251 = vmul.f32 %v4214, %v4140
      %v4252 = vmul.f32 %v4215, %v4141
      %v4253 = vmul.f32 %v4216, %v4142
      %v4254 = vmul.f32 %v4217, %v4143
      %v4255 = vmul.f32 %v4218, %v4144
      %v4256 = vmul.f32 %v4219, %v4145
      %v4257 = vmul.f32 %v4220, %v4146
      %v4258 = vmul.f32 %v4221, %v4147
      %v4259 = vmul.f32 %v4222, %v4148
      %v4260 = vmul.f32 %v4223, %v4149
      %v4261 = vmul.f32 %v4224, %v4150
      %v4262 = vmul.f32 %v4225, %v4151
      %v4263 = vmul.f32 %v4226, %v4152
      %v4264 = vmul.f32 %v4227, %v4153
      %v4265 = vmul.f32 %v4228, %v4154
      %v4266 = vmul.f32 %v4229, %v4155
      %v4267 = vmul.f32 %v4230, %v4156
      %v4268 = vmul.f32 %v4231, %v4157
      %v4269 = vmul.f32 %v4232, %v4158
      %v4270 = vmul.f32 %v4233, %v4159
      %v4271 = vmul.f32 %v4234, %v4160
      %v4272 = vmul.f32 %v4235, %v4161
      %v4273 = vmul.f32 %v4236, %v4162
      %v4274 = vmul.f32 %v4237, %v4163
      %v4275 = vmul.f32 %v4238, %v4164
      %v4276 = vmul.f32 %v4239, %v4165
      %v4277 = vmul.f32 %v4240, %v4166
      %v4278 = vmul.f32 %v4241, %v4167
      %v4279 = vmul.f32 %v4242, %v4168
      %v4280 = vmul.f32 %v4243, %v4169
      %v4281 = vmul.f32 %v4244, %v4170
      %v4282 = vmul.f32 %v4245, %v4171
      %v4283 = vadd.f32 %v4246, 0.050955694
      %v4284 = vadd.f32 %v4247, 0.050955694
      %v4285 = vadd.f32 %v4248, 0.050955694
      %v4286 = vadd.f32 %v4249, 0.050955694
      %v4287 = vadd.f32 %v4250, 0.050955694
      %v4288 = vadd.f32 %v4251, 0.050955694
      %v4289 = vadd.f32 %v4252, 0.050955694
      %v4290 = vadd.f32 %v4253, 0.050955694
      %v4291 = vadd.f32 %v4254, 0.050955694
      %v4292 = vadd.f32 %v4255, 0.050955694
      %v4293 = vadd.f32 %v4256, 0.050955694
      %v4294 = vadd.f32 %v4257, 0.050955694
      %v4295 = vadd.f32 %v4258, 0.050955694
      %v4296 = vadd.f32 %v4259, 0.050955694
      %v4297 = vadd.f32 %v4260, 0.050955694
      %v4298 = vadd.f32 %v4261, 0.050955694
      %v4299 = vadd.f32 %v4262, 0.050955694
      %v4300 = vadd.f32 %v4263, 0.050955694
      %v4301 = vadd.f32 %v4264, 0.050955694
      %v4302 = vadd.f32 %v4265, 0.050955694
      %v4303 = vadd.f32 %v4266, 0.050955694
      %v4304 = vadd.f32 %v4267, 0.050955694
      %v4305 = vadd.f32 %v4268, 0.050955694
      %v4306 = vadd.f32 %v4269, 0.050955694
      %v4307 = vadd.f32 %v4270, 0.050955694
      %v4308 = vadd.f32 %v4271, 0.050955694
      %v4309 = vadd.f32 %v4272, 0.050955694
      %v4310 = vadd.f32 %v4273, 0.050955694
      %v4311 = vadd.f32 %v4274, 0.050955694
      %v4312 = vadd.f32 %v4275, 0.050955694
      %v4313 = vadd.f32 %v4276, 0.050955694
      %v4314 = vadd.f32 %v4277, 0.050955694
      %v4315 = vadd.f32 %v4278, 0.050955694
      %v4316 = vadd.f32 %v4279, 0.050955694
      %v4317 = vadd.f32 %v4280, 0.050955694
      %v4318 = vadd.f32 %v4281, 0.050955694
      %v4319 = vadd.f32 %v4282, 0.050955694
      %v4320 = vmul.f32 %v4283, %v4135
      %v4321 = vmul.f32 %v4284, %v4136
      %v4322 = vmul.f32 %v4285, %v4137
      %v4323 = vmul.f32 %v4286, %v4138
      %v4324 = vmul.f32 %v4287, %v4139
      %v4325 = vmul.f32 %v4288, %v4140
      %v4326 = vmul.f32 %v4289, %v4141
      %v4327 = vmul.f32 %v4290, %v4142
      %v4328 = vmul.f32 %v4291, %v4143
      %v4329 = vmul.f32 %v4292, %v4144
      %v4330 = vmul.f32 %v4293, %v4145
      %v4331 = vmul.f32 %v4294, %v4146
      %v4332 = vmul.f32 %v4295, %v4147
      %v4333 = vmul.f32 %v4296, %v4148
      %v4334 = vmul.f32 %v4297, %v4149
      %v4335 = vmul.f32 %v4298, %v4150
      %v4336 = vmul.f32 %v4299, %v4151
      %v4337 = vmul.f32 %v4300, %v4152
      %v4338 = vmul.f32 %v4301, %v4153
      %v4339 = vmul.f32 %v4302, %v4154
      %v4340 = vmul.f32 %v4303, %v4155
      %v4341 = vmul.f32 %v4304, %v4156
      %v4342 = vmul.f32 %v4305, %v4157
      %v4343 = vmul.f32 %v4306, %v4158
      %v4344 = vmul.f32 %v4307, %v4159
      %v4345 = vmul.f32 %v4308, %v4160
      %v4346 = vmul.f32 %v4309, %v4161
      %v4347 = vmul.f32 %v4310, %v4162
      %v4348 = vmul.f32 %v4311, %v4163
      %v4349 = vmul.f32 %v4312, %v4164
      %v4350 = vmul.f32 %v4313, %v4165
      %v4351 = vmul.f32 %v4314, %v4166
      %v4352 = vmul.f32 %v4315, %v4167
      %v4353 = vmul.f32 %v4316, %v4168
      %v4354 = vmul.f32 %v4317, %v4169
      %v4355 = vmul.f32 %v4318, %v4170
      %v4356 = vmul.f32 %v4319, %v4171
      %v4357 = vadd.f32 %v4320, 0.18520832
      %v4358 = vadd.f32 %v4321, 0.18520832
      %v4359 = vadd.f32 %v4322, 0.18520832
      %v4360 = vadd.f32 %v4323, 0.18520832
      %v4361 = vadd.f32 %v4324, 0.18520832
      %v4362 = vadd.f32 %v4325, 0.18520832
      %v4363 = vadd.f32 %v4326, 0.18520832
      %v4364 = vadd.f32 %v4327, 0.18520832
      %v4365 = vadd.f32 %v4328, 0.18520832
      %v4366 = vadd.f32 %v4329, 0.18520832
      %v4367 = vadd.f32 %v4330, 0.18520832
      %v4368 = vadd.f32 %v4331, 0.18520832
      %v4369 = vadd.f32 %v4332, 0.18520832
      %v4370 = vadd.f32 %v4333, 0.18520832
      %v4371 = vadd.f32 %v4334, 0.18520832
      %v4372 = vadd.f32 %v4335, 0.18520832
      %v4373 = vadd.f32 %v4336, 0.18520832
      %v4374 = vadd.f32 %v4337, 0.18520832
      %v4375 = vadd.f32 %v4338, 0.18520832
      %v4376 = vadd.f32 %v4339, 0.18520832
      %v4377 = vadd.f32 %v4340, 0.18520832
      %v4378 = vadd.f32 %v4341, 0.18520832
      %v4379 = vadd.f32 %v4342, 0.18520832
      %v4380 = vadd.f32 %v4343, 0.18520832
      %v4381 = vadd.f32 %v4344, 0.18520832
      %v4382 = vadd.f32 %v4345, 0.18520832
      %v4383 = vadd.f32 %v4346, 0.18520832
      %v4384 = vadd.f32 %v4347, 0.18520832
      %v4385 = vadd.f32 %v4348, 0.18520832
      %v4386 = vadd.f32 %v4349, 0.18520832
      %v4387 = vadd.f32 %v4350, 0.18520832
      %v4388 = vadd.f32 %v4351, 0.18520832
      %v4389 = vadd.f32 %v4352, 0.18520832
      %v4390 = vadd.f32 %v4353, 0.18520832
      %v4391 = vadd.f32 %v4354, 0.18520832
      %v4392 = vadd.f32 %v4355, 0.18520832
      %v4393 = vadd.f32 %v4356, 0.18520832
      %v4394 = vmul.f32 %v4357, %v4135
      %v4395 = vmul.f32 %v4358, %v4136
      %v4396 = vmul.f32 %v4359, %v4137
      %v4397 = vmul.f32 %v4360, %v4138
      %v4398 = vmul.f32 %v4361, %v4139
      %v4399 = vmul.f32 %v4362, %v4140
      %v4400 = vmul.f32 %v4363, %v4141
      %v4401 = vmul.f32 %v4364, %v4142
      %v4402 = vmul.f32 %v4365, %v4143
      %v4403 = vmul.f32 %v4366, %v4144
      %v4404 = vmul.f32 %v4367, %v4145
      %v4405 = vmul.f32 %v4368, %v4146
      %v4406 = vmul.f32 %v4369, %v4147
      %v4407 = vmul.f32 %v4370, %v4148
      %v4408 = vmul.f32 %v4371, %v4149
      %v4409 = vmul.f32 %v4372, %v4150
      %v4410 = vmul.f32 %v4373, %v4151
      %v4411 = vmul.f32 %v4374, %v4152
      %v4412 = vmul.f32 %v4375, %v4153
      %v4413 = vmul.f32 %v4376, %v4154
      %v4414 = vmul.f32 %v4377, %v4155
      %v4415 = vmul.f32 %v4378, %v4156
      %v4416 = vmul.f32 %v4379, %v4157
      %v4417 = vmul.f32 %v4380, %v4158
      %v4418 = vmul.f32 %v4381, %v4159
      %v4419 = vmul.f32 %v4382, %v4160
      %v4420 = vmul.f32 %v4383, %v4161
      %v4421 = vmul.f32 %v4384, %v4162
      %v4422 = vmul.f32 %v4385, %v4163
      %v4423 = vmul.f32 %v4386, %v4164
      %v4424 = vmul.f32 %v4387, %v4165
      %v4425 = vmul.f32 %v4388, %v4166
      %v4426 = vmul.f32 %v4389, %v4167
      %v4427 = vmul.f32 %v4390, %v4168
      %v4428 = vmul.f32 %v4391, %v4169
      %v4429 = vmul.f32 %v4392, %v4170
      %v4430 = vmul.f32 %v4393, %v4171
      %v4431 = vadd.f32 %v4394, 1.1283791
      %v4432 = vadd.f32 %v4395, 1.1283791
      %v4433 = vadd.f32 %v4396, 1.1283791
      %v4434 = vadd.f32 %v4397, 1.1283791
      %v4435 = vadd.f32 %v4398, 1.1283791
      %v4436 = vadd.f32 %v4399, 1.1283791
      %v4437 = vadd.f32 %v4400, 1.1283791
      %v4438 = vadd.f32 %v4401, 1.1283791
      %v4439 = vadd.f32 %v4402, 1.1283791
      %v4440 = vadd.f32 %v4403, 1.1283791
      %v4441 = vadd.f32 %v4404, 1.1283791
      %v4442 = vadd.f32 %v4405, 1.1283791
      %v4443 = vadd.f32 %v4406, 1.1283791
      %v4444 = vadd.f32 %v4407, 1.1283791
      %v4445 = vadd.f32 %v4408, 1.1283791
      %v4446 = vadd.f32 %v4409, 1.1283791
      %v4447 = vadd.f32 %v4410, 1.1283791
      %v4448 = vadd.f32 %v4411, 1.1283791
      %v4449 = vadd.f32 %v4412, 1.1283791
      %v4450 = vadd.f32 %v4413, 1.1283791
      %v4451 = vadd.f32 %v4414, 1.1283791
      %v4452 = vadd.f32 %v4415, 1.1283791
      %v4453 = vadd.f32 %v4416, 1.1283791
      %v4454 = vadd.f32 %v4417, 1.1283791
      %v4455 = vadd.f32 %v4418, 1.1283791
      %v4456 = vadd.f32 %v4419, 1.1283791
      %v4457 = vadd.f32 %v4420, 1.1283791
      %v4458 = vadd.f32 %v4421, 1.1283791
      %v4459 = vadd.f32 %v4422, 1.1283791
      %v4460 = vadd.f32 %v4423, 1.1283791
      %v4461 = vadd.f32 %v4424, 1.1283791
      %v4462 = vadd.f32 %v4425, 1.1283791
      %v4463 = vadd.f32 %v4426, 1.1283791
      %v4464 = vadd.f32 %v4427, 1.1283791
      %v4465 = vadd.f32 %v4428, 1.1283791
      %v4466 = vadd.f32 %v4429, 1.1283791
      %v4467 = vadd.f32 %v4430, 1.1283791
      %v4468 = vmul.f32 %v4135, -1.1791603e-07
      %v4469 = vmul.f32 %v4136, -1.1791603e-07
      %v4470 = vmul.f32 %v4137, -1.1791603e-07
      %v4471 = vmul.f32 %v4138, -1.1791603e-07
      %v4472 = vmul.f32 %v4139, -1.1791603e-07
      %v4473 = vmul.f32 %v4140, -1.1791603e-07
      %v4474 = vmul.f32 %v4141, -1.1791603e-07
      %v4475 = vmul.f32 %v4142, -1.1791603e-07
      %v4476 = vmul.f32 %v4143, -1.1791603e-07
      %v4477 = vmul.f32 %v4144, -1.1791603e-07
      %v4478 = vmul.f32 %v4145, -1.1791603e-07
      %v4479 = vmul.f32 %v4146, -1.1791603e-07
      %v4480 = vmul.f32 %v4147, -1.1791603e-07
      %v4481 = vmul.f32 %v4148, -1.1791603e-07
      %v4482 = vmul.f32 %v4149, -1.1791603e-07
      %v4483 = vmul.f32 %v4150, -1.1791603e-07
      %v4484 = vmul.f32 %v4151, -1.1791603e-07
      %v4485 = vmul.f32 %v4152, -1.1791603e-07
      %v4486 = vmul.f32 %v4153, -1.1791603e-07
      %v4487 = vmul.f32 %v4154, -1.1791603e-07
      %v4488 = vmul.f32 %v4155, -1.1791603e-07
      %v4489 = vmul.f32 %v4156, -1.1791603e-07
      %v4490 = vmul.f32 %v4157, -1.1791603e-07
      %v4491 = vmul.f32 %v4158, -1.1791603e-07
      %v4492 = vmul.f32 %v4159, -1.1791603e-07
      %v4493 = vmul.f32 %v4160, -1.1791603e-07
      %v4494 = vmul.f32 %v4161, -1.1791603e-07
      %v4495 = vmul.f32 %v4162, -1.1791603e-07
      %v4496 = vmul.f32 %v4163, -1.1791603e-07
      %v4497 = vmul.f32 %v4164, -1.1791603e-07
      %v4498 = vmul.f32 %v4165, -1.1791603e-07
      %v4499 = vmul.f32 %v4166, -1.1791603e-07
      %v4500 = vmul.f32 %v4167, -1.1791603e-07
      %v4501 = vmul.f32 %v4168, -1.1791603e-07
      %v4502 = vmul.f32 %v4169, -1.1791603e-07
      %v4503 = vmul.f32 %v4170, -1.1791603e-07
      %v4504 = vmul.f32 %v4171, -1.1791603e-07
      %v4505 = vadd.f32 %v4468, 2.3547966e-05
      %v4506 = vadd.f32 %v4469, 2.3547966e-05
      %v4507 = vadd.f32 %v4470, 2.3547966e-05
      %v4508 = vadd.f32 %v4471, 2.3547966e-05
      %v4509 = vadd.f32 %v4472, 2.3547966e-05
      %v4510 = vadd.f32 %v4473, 2.3547966e-05
      %v4511 = vadd.f32 %v4474, 2.3547966e-05
      %v4512 = vadd.f32 %v4475, 2.3547966e-05
      %v4513 = vadd.f32 %v4476, 2.3547966e-05
      %v4514 = vadd.f32 %v4477, 2.3547966e-05
      %v4515 = vadd.f32 %v4478, 2.3547966e-05
      %v4516 = vadd.f32 %v4479, 2.3547966e-05
      %v4517 = vadd.f32 %v4480, 2.3547966e-05
      %v4518 = vadd.f32 %v4481, 2.3547966e-05
      %v4519 = vadd.f32 %v4482, 2.3547966e-05
      %v4520 = vadd.f32 %v4483, 2.3547966e-05
      %v4521 = vadd.f32 %v4484, 2.3547966e-05
      %v4522 = vadd.f32 %v4485, 2.3547966e-05
      %v4523 = vadd.f32 %v4486, 2.3547966e-05
      %v4524 = vadd.f32 %v4487, 2.3547966e-05
      %v4525 = vadd.f32 %v4488, 2.3547966e-05
      %v4526 = vadd.f32 %v4489, 2.3547966e-05
      %v4527 = vadd.f32 %v4490, 2.3547966e-05
      %v4528 = vadd.f32 %v4491, 2.3547966e-05
      %v4529 = vadd.f32 %v4492, 2.3547966e-05
      %v4530 = vadd.f32 %v4493, 2.3547966e-05
      %v4531 = vadd.f32 %v4494, 2.3547966e-05
      %v4532 = vadd.f32 %v4495, 2.3547966e-05
      %v4533 = vadd.f32 %v4496, 2.3547966e-05
      %v4534 = vadd.f32 %v4497, 2.3547966e-05
      %v4535 = vadd.f32 %v4498, 2.3547966e-05
      %v4536 = vadd.f32 %v4499, 2.3547966e-05
      %v4537 = vadd.f32 %v4500, 2.3547966e-05
      %v4538 = vadd.f32 %v4501, 2.3547966e-05
      %v4539 = vadd.f32 %v4502, 2.3547966e-05
      %v4540 = vadd.f32 %v4503, 2.3547966e-05
      %v4541 = vadd.f32 %v4504, 2.3547966e-05
      %v4542 = vmul.f32 %v4505, %v4135
      %v4543 = vmul.f32 %v4506, %v4136
      %v4544 = vmul.f32 %v4507, %v4137
      %v4545 = vmul.f32 %v4508, %v4138
      %v4546 = vmul.f32 %v4509, %v4139
      %v4547 = vmul.f32 %v4510, %v4140
      %v4548 = vmul.f32 %v4511, %v4141
      %v4549 = vmul.f32 %v4512, %v4142
      %v4550 = vmul.f32 %v4513, %v4143
      %v4551 = vmul.f32 %v4514, %v4144
      %v4552 = vmul.f32 %v4515, %v4145
      %v4553 = vmul.f32 %v4516, %v4146
      %v4554 = vmul.f32 %v4517, %v4147
      %v4555 = vmul.f32 %v4518, %v4148
      %v4556 = vmul.f32 %v4519, %v4149
      %v4557 = vmul.f32 %v4520, %v4150
      %v4558 = vmul.f32 %v4521, %v4151
      %v4559 = vmul.f32 %v4522, %v4152
      %v4560 = vmul.f32 %v4523, %v4153
      %v4561 = vmul.f32 %v4524, %v4154
      %v4562 = vmul.f32 %v4525, %v4155
      %v4563 = vmul.f32 %v4526, %v4156
      %v4564 = vmul.f32 %v4527, %v4157
      %v4565 = vmul.f32 %v4528, %v4158
      %v4566 = vmul.f32 %v4529, %v4159
      %v4567 = vmul.f32 %v4530, %v4160
      %v4568 = vmul.f32 %v4531, %v4161
      %v4569 = vmul.f32 %v4532, %v4162
      %v4570 = vmul.f32 %v4533, %v4163
      %v4571 = vmul.f32 %v4534, %v4164
      %v4572 = vmul.f32 %v4535, %v4165
      %v4573 = vmul.f32 %v4536, %v4166
      %v4574 = vmul.f32 %v4537, %v4167
      %v4575 = vmul.f32 %v4538, %v4168
      %v4576 = vmul.f32 %v4539, %v4169
      %v4577 = vmul.f32 %v4540, %v4170
      %v4578 = vmul.f32 %v4541, %v4171
      %v4579 = vadd.f32 %v4542, 0.0010179626
      %v4580 = vadd.f32 %v4543, 0.0010179626
      %v4581 = vadd.f32 %v4544, 0.0010179626
      %v4582 = vadd.f32 %v4545, 0.0010179626
      %v4583 = vadd.f32 %v4546, 0.0010179626
      %v4584 = vadd.f32 %v4547, 0.0010179626
      %v4585 = vadd.f32 %v4548, 0.0010179626
      %v4586 = vadd.f32 %v4549, 0.0010179626
      %v4587 = vadd.f32 %v4550, 0.0010179626
      %v4588 = vadd.f32 %v4551, 0.0010179626
      %v4589 = vadd.f32 %v4552, 0.0010179626
      %v4590 = vadd.f32 %v4553, 0.0010179626
      %v4591 = vadd.f32 %v4554, 0.0010179626
      %v4592 = vadd.f32 %v4555, 0.0010179626
      %v4593 = vadd.f32 %v4556, 0.0010179626
      %v4594 = vadd.f32 %v4557, 0.0010179626
      %v4595 = vadd.f32 %v4558, 0.0010179626
      %v4596 = vadd.f32 %v4559, 0.0010179626
      %v4597 = vadd.f32 %v4560, 0.0010179626
      %v4598 = vadd.f32 %v4561, 0.0010179626
      %v4599 = vadd.f32 %v4562, 0.0010179626
      %v4600 = vadd.f32 %v4563, 0.0010179626
      %v4601 = vadd.f32 %v4564, 0.0010179626
      %v4602 = vadd.f32 %v4565, 0.0010179626
      %v4603 = vadd.f32 %v4566, 0.0010179626
      %v4604 = vadd.f32 %v4567, 0.0010179626
      %v4605 = vadd.f32 %v4568, 0.0010179626
      %v4606 = vadd.f32 %v4569, 0.0010179626
      %v4607 = vadd.f32 %v4570, 0.0010179626
      %v4608 = vadd.f32 %v4571, 0.0010179626
      %v4609 = vadd.f32 %v4572, 0.0010179626
      %v4610 = vadd.f32 %v4573, 0.0010179626
      %v4611 = vadd.f32 %v4574, 0.0010179626
      %v4612 = vadd.f32 %v4575, 0.0010179626
      %v4613 = vadd.f32 %v4576, 0.0010179626
      %v4614 = vadd.f32 %v4577, 0.0010179626
      %v4615 = vadd.f32 %v4578, 0.0010179626
      %v4616 = vmul.f32 %v4579, %v4135
      %v4617 = vmul.f32 %v4580, %v4136
      %v4618 = vmul.f32 %v4581, %v4137
      %v4619 = vmul.f32 %v4582, %v4138
      %v4620 = vmul.f32 %v4583, %v4139
      %v4621 = vmul.f32 %v4584, %v4140
      %v4622 = vmul.f32 %v4585, %v4141
      %v4623 = vmul.f32 %v4586, %v4142
      %v4624 = vmul.f32 %v4587, %v4143
      %v4625 = vmul.f32 %v4588, %v4144
      %v4626 = vmul.f32 %v4589, %v4145
      %v4627 = vmul.f32 %v4590, %v4146
      %v4628 = vmul.f32 %v4591, %v4147
      %v4629 = vmul.f32 %v4592, %v4148
      %v4630 = vmul.f32 %v4593, %v4149
      %v4631 = vmul.f32 %v4594, %v4150
      %v4632 = vmul.f32 %v4595, %v4151
      %v4633 = vmul.f32 %v4596, %v4152
      %v4634 = vmul.f32 %v4597, %v4153
      %v4635 = vmul.f32 %v4598, %v4154
      %v4636 = vmul.f32 %v4599, %v4155
      %v4637 = vmul.f32 %v4600, %v4156
      %v4638 = vmul.f32 %v4601, %v4157
      %v4639 = vmul.f32 %v4602, %v4158
      %v4640 = vmul.f32 %v4603, %v4159
      %v4641 = vmul.f32 %v4604, %v4160
      %v4642 = vmul.f32 %v4605, %v4161
      %v4643 = vmul.f32 %v4606, %v4162
      %v4644 = vmul.f32 %v4607, %v4163
      %v4645 = vmul.f32 %v4608, %v4164
      %v4646 = vmul.f32 %v4609, %v4165
      %v4647 = vmul.f32 %v4610, %v4166
      %v4648 = vmul.f32 %v4611, %v4167
      %v4649 = vmul.f32 %v4612, %v4168
      %v4650 = vmul.f32 %v4613, %v4169
      %v4651 = vmul.f32 %v4614, %v4170
      %v4652 = vmul.f32 %v4615, %v4171
      %v4653 = vadd.f32 %v4616, 0.01407047
      %v4654 = vadd.f32 %v4617, 0.01407047
      %v4655 = vadd.f32 %v4618, 0.01407047
      %v4656 = vadd.f32 %v4619, 0.01407047
      %v4657 = vadd.f32 %v4620, 0.01407047
      %v4658 = vadd.f32 %v4621, 0.01407047
      %v4659 = vadd.f32 %v4622, 0.01407047
      %v4660 = vadd.f32 %v4623, 0.01407047
      %v4661 = vadd.f32 %v4624, 0.01407047
      %v4662 = vadd.f32 %v4625, 0.01407047
      %v4663 = vadd.f32 %v4626, 0.01407047
      %v4664 = vadd.f32 %v4627, 0.01407047
      %v4665 = vadd.f32 %v4628, 0.01407047
      %v4666 = vadd.f32 %v4629, 0.01407047
      %v4667 = vadd.f32 %v4630, 0.01407047
      %v4668 = vadd.f32 %v4631, 0.01407047
      %v4669 = vadd.f32 %v4632, 0.01407047
      %v4670 = vadd.f32 %v4633, 0.01407047
      %v4671 = vadd.f32 %v4634, 0.01407047
      %v4672 = vadd.f32 %v4635, 0.01407047
      %v4673 = vadd.f32 %v4636, 0.01407047
      %v4674 = vadd.f32 %v4637, 0.01407047
      %v4675 = vadd.f32 %v4638, 0.01407047
      %v4676 = vadd.f32 %v4639, 0.01407047
      %v4677 = vadd.f32 %v4640, 0.01407047
      %v4678 = vadd.f32 %v4641, 0.01407047
      %v4679 = vadd.f32 %v4642, 0.01407047
      %v4680 = vadd.f32 %v4643, 0.01407047
      %v4681 = vadd.f32 %v4644, 0.01407047
      %v4682 = vadd.f32 %v4645, 0.01407047
      %v4683 = vadd.f32 %v4646, 0.01407047
      %v4684 = vadd.f32 %v4647, 0.01407047
      %v4685 = vadd.f32 %v4648, 0.01407047
      %v4686 = vadd.f32 %v4649, 0.01407047
      %v4687 = vadd.f32 %v4650, 0.01407047
      %v4688 = vadd.f32 %v4651, 0.01407047
      %v4689 = vadd.f32 %v4652, 0.01407047
      %v4690 = vmul.f32 %v4653, %v4135
      %v4691 = vmul.f32 %v4654, %v4136
      %v4692 = vmul.f32 %v4655, %v4137
      %v4693 = vmul.f32 %v4656, %v4138
      %v4694 = vmul.f32 %v4657, %v4139
      %v4695 = vmul.f32 %v4658, %v4140
      %v4696 = vmul.f32 %v4659, %v4141
      %v4697 = vmul.f32 %v4660, %v4142
      %v4698 = vmul.f32 %v4661, %v4143
      %v4699 = vmul.f32 %v4662, %v4144
      %v4700 = vmul.f32 %v4663, %v4145
      %v4701 = vmul.f32 %v4664, %v4146
      %v4702 = vmul.f32 %v4665, %v4147
      %v4703 = vmul.f32 %v4666, %v4148
      %v4704 = vmul.f32 %v4667, %v4149
      %v4705 = vmul.f32 %v4668, %v4150
      %v4706 = vmul.f32 %v4669, %v4151
      %v4707 = vmul.f32 %v4670, %v4152
      %v4708 = vmul.f32 %v4671, %v4153
      %v4709 = vmul.f32 %v4672, %v4154
      %v4710 = vmul.f32 %v4673, %v4155
      %v4711 = vmul.f32 %v4674, %v4156
      %v4712 = vmul.f32 %v4675, %v4157
      %v4713 = vmul.f32 %v4676, %v4158
      %v4714 = vmul.f32 %v4677, %v4159
      %v4715 = vmul.f32 %v4678, %v4160
      %v4716 = vmul.f32 %v4679, %v4161
      %v4717 = vmul.f32 %v4680, %v4162
      %v4718 = vmul.f32 %v4681, %v4163
      %v4719 = vmul.f32 %v4682, %v4164
      %v4720 = vmul.f32 %v4683, %v4165
      %v4721 = vmul.f32 %v4684, %v4166
      %v4722 = vmul.f32 %v4685, %v4167
      %v4723 = vmul.f32 %v4686, %v4168
      %v4724 = vmul.f32 %v4687, %v4169
      %v4725 = vmul.f32 %v4688, %v4170
      %v4726 = vmul.f32 %v4689, %v4171
      %v4727 = vadd.f32 %v4690, 0.11098505
      %v4728 = vadd.f32 %v4691, 0.11098505
      %v4729 = vadd.f32 %v4692, 0.11098505
      %v4730 = vadd.f32 %v4693, 0.11098505
      %v4731 = vadd.f32 %v4694, 0.11098505
      %v4732 = vadd.f32 %v4695, 0.11098505
      %v4733 = vadd.f32 %v4696, 0.11098505
      %v4734 = vadd.f32 %v4697, 0.11098505
      %v4735 = vadd.f32 %v4698, 0.11098505
      %v4736 = vadd.f32 %v4699, 0.11098505
      %v4737 = vadd.f32 %v4700, 0.11098505
      %v4738 = vadd.f32 %v4701, 0.11098505
      %v4739 = vadd.f32 %v4702, 0.11098505
      %v4740 = vadd.f32 %v4703, 0.11098505
      %v4741 = vadd.f32 %v4704, 0.11098505
      %v4742 = vadd.f32 %v4705, 0.11098505
      %v4743 = vadd.f32 %v4706, 0.11098505
      %v4744 = vadd.f32 %v4707, 0.11098505
      %v4745 = vadd.f32 %v4708, 0.11098505
      %v4746 = vadd.f32 %v4709, 0.11098505
      %v4747 = vadd.f32 %v4710, 0.11098505
      %v4748 = vadd.f32 %v4711, 0.11098505
      %v4749 = vadd.f32 %v4712, 0.11098505
      %v4750 = vadd.f32 %v4713, 0.11098505
      %v4751 = vadd.f32 %v4714, 0.11098505
      %v4752 = vadd.f32 %v4715, 0.11098505
      %v4753 = vadd.f32 %v4716, 0.11098505
      %v4754 = vadd.f32 %v4717, 0.11098505
      %v4755 = vadd.f32 %v4718, 0.11098505
      %v4756 = vadd.f32 %v4719, 0.11098505
      %v4757 = vadd.f32 %v4720, 0.11098505
      %v4758 = vadd.f32 %v4721, 0.11098505
      %v4759 = vadd.f32 %v4722, 0.11098505
      %v4760 = vadd.f32 %v4723, 0.11098505
      %v4761 = vadd.f32 %v4724, 0.11098505
      %v4762 = vadd.f32 %v4725, 0.11098505
      %v4763 = vadd.f32 %v4726, 0.11098505
      %v4764 = vmul.f32 %v4727, %v4135
      %v4765 = vmul.f32 %v4728, %v4136
      %v4766 = vmul.f32 %v4729, %v4137
      %v4767 = vmul.f32 %v4730, %v4138
      %v4768 = vmul.f32 %v4731, %v4139
      %v4769 = vmul.f32 %v4732, %v4140
      %v4770 = vmul.f32 %v4733, %v4141
      %v4771 = vmul.f32 %v4734, %v4142
      %v4772 = vmul.f32 %v4735, %v4143
      %v4773 = vmul.f32 %v4736, %v4144
      %v4774 = vmul.f32 %v4737, %v4145
      %v4775 = vmul.f32 %v4738, %v4146
      %v4776 = vmul.f32 %v4739, %v4147
      %v4777 = vmul.f32 %v4740, %v4148
      %v4778 = vmul.f32 %v4741, %v4149
      %v4779 = vmul.f32 %v4742, %v4150
      %v4780 = vmul.f32 %v4743, %v4151
      %v4781 = vmul.f32 %v4744, %v4152
      %v4782 = vmul.f32 %v4745, %v4153
      %v4783 = vmul.f32 %v4746, %v4154
      %v4784 = vmul.f32 %v4747, %v4155
      %v4785 = vmul.f32 %v4748, %v4156
      %v4786 = vmul.f32 %v4749, %v4157
      %v4787 = vmul.f32 %v4750, %v4158
      %v4788 = vmul.f32 %v4751, %v4159
      %v4789 = vmul.f32 %v4752, %v4160
      %v4790 = vmul.f32 %v4753, %v4161
      %v4791 = vmul.f32 %v4754, %v4162
      %v4792 = vmul.f32 %v4755, %v4163
      %v4793 = vmul.f32 %v4756, %v4164
      %v4794 = vmul.f32 %v4757, %v4165
      %v4795 = vmul.f32 %v4758, %v4166
      %v4796 = vmul.f32 %v4759, %v4167
      %v4797 = vmul.f32 %v4760, %v4168
      %v4798 = vmul.f32 %v4761, %v4169
      %v4799 = vmul.f32 %v4762, %v4170
      %v4800 = vmul.f32 %v4763, %v4171
      %v4801 = vadd.f32 %v4764, 0.49746925
      %v4802 = vadd.f32 %v4765, 0.49746925
      %v4803 = vadd.f32 %v4766, 0.49746925
      %v4804 = vadd.f32 %v4767, 0.49746925
      %v4805 = vadd.f32 %v4768, 0.49746925
      %v4806 = vadd.f32 %v4769, 0.49746925
      %v4807 = vadd.f32 %v4770, 0.49746925
      %v4808 = vadd.f32 %v4771, 0.49746925
      %v4809 = vadd.f32 %v4772, 0.49746925
      %v4810 = vadd.f32 %v4773, 0.49746925
      %v4811 = vadd.f32 %v4774, 0.49746925
      %v4812 = vadd.f32 %v4775, 0.49746925
      %v4813 = vadd.f32 %v4776, 0.49746925
      %v4814 = vadd.f32 %v4777, 0.49746925
      %v4815 = vadd.f32 %v4778, 0.49746925
      %v4816 = vadd.f32 %v4779, 0.49746925
      %v4817 = vadd.f32 %v4780, 0.49746925
      %v4818 = vadd.f32 %v4781, 0.49746925
      %v4819 = vadd.f32 %v4782, 0.49746925
      %v4820 = vadd.f32 %v4783, 0.49746925
      %v4821 = vadd.f32 %v4784, 0.49746925
      %v4822 = vadd.f32 %v4785, 0.49746925
      %v4823 = vadd.f32 %v4786, 0.49746925
      %v4824 = vadd.f32 %v4787, 0.49746925
      %v4825 = vadd.f32 %v4788, 0.49746925
      %v4826 = vadd.f32 %v4789, 0.49746925
      %v4827 = vadd.f32 %v4790, 0.49746925
      %v4828 = vadd.f32 %v4791, 0.49746925
      %v4829 = vadd.f32 %v4792, 0.49746925
      %v4830 = vadd.f32 %v4793, 0.49746925
      %v4831 = vadd.f32 %v4794, 0.49746925
      %v4832 = vadd.f32 %v4795, 0.49746925
      %v4833 = vadd.f32 %v4796, 0.49746925
      %v4834 = vadd.f32 %v4797, 0.49746925
      %v4835 = vadd.f32 %v4798, 0.49746925
      %v4836 = vadd.f32 %v4799, 0.49746925
      %v4837 = vadd.f32 %v4800, 0.49746925
      %v4838 = vmul.f32 %v4801, %v4135
      %v4839 = vmul.f32 %v4802, %v4136
      %v4840 = vmul.f32 %v4803, %v4137
      %v4841 = vmul.f32 %v4804, %v4138
      %v4842 = vmul.f32 %v4805, %v4139
      %v4843 = vmul.f32 %v4806, %v4140
      %v4844 = vmul.f32 %v4807, %v4141
      %v4845 = vmul.f32 %v4808, %v4142
      %v4846 = vmul.f32 %v4809, %v4143
      %v4847 = vmul.f32 %v4810, %v4144
      %v4848 = vmul.f32 %v4811, %v4145
      %v4849 = vmul.f32 %v4812, %v4146
      %v4850 = vmul.f32 %v4813, %v4147
      %v4851 = vmul.f32 %v4814, %v4148
      %v4852 = vmul.f32 %v4815, %v4149
      %v4853 = vmul.f32 %v4816, %v4150
      %v4854 = vmul.f32 %v4817, %v4151
      %v4855 = vmul.f32 %v4818, %v4152
      %v4856 = vmul.f32 %v4819, %v4153
      %v4857 = vmul.f32 %v4820, %v4154
      %v4858 = vmul.f32 %v4821, %v4155
      %v4859 = vmul.f32 %v4822, %v4156
      %v4860 = vmul.f32 %v4823, %v4157
      %v4861 = vmul.f32 %v4824, %v4158
      %v4862 = vmul.f32 %v4825, %v4159
      %v4863 = vmul.f32 %v4826, %v4160
      %v4864 = vmul.f32 %v4827, %v4161
      %v4865 = vmul.f32 %v4828, %v4162
      %v4866 = vmul.f32 %v4829, %v4163
      %v4867 = vmul.f32 %v4830, %v4164
      %v4868 = vmul.f32 %v4831, %v4165
      %v4869 = vmul.f32 %v4832, %v4166
      %v4870 = vmul.f32 %v4833, %v4167
      %v4871 = vmul.f32 %v4834, %v4168
      %v4872 = vmul.f32 %v4835, %v4169
      %v4873 = vmul.f32 %v4836, %v4170
      %v4874 = vmul.f32 %v4837, %v4171
      %v4875 = vadd.f32 %v4838, 1.0
      %v4876 = vadd.f32 %v4839, 1.0
      %v4877 = vadd.f32 %v4840, 1.0
      %v4878 = vadd.f32 %v4841, 1.0
      %v4879 = vadd.f32 %v4842, 1.0
      %v4880 = vadd.f32 %v4843, 1.0
      %v4881 = vadd.f32 %v4844, 1.0
      %v4882 = vadd.f32 %v4845, 1.0
      %v4883 = vadd.f32 %v4846, 1.0
      %v4884 = vadd.f32 %v4847, 1.0
      %v4885 = vadd.f32 %v4848, 1.0
      %v4886 = vadd.f32 %v4849, 1.0
      %v4887 = vadd.f32 %v4850, 1.0
      %v4888 = vadd.f32 %v4851, 1.0
      %v4889 = vadd.f32 %v4852, 1.0
      %v4890 = vadd.f32 %v4853, 1.0
      %v4891 = vadd.f32 %v4854, 1.0
      %v4892 = vadd.f32 %v4855, 1.0
      %v4893 = vadd.f32 %v4856, 1.0
      %v4894 = vadd.f32 %v4857, 1.0
      %v4895 = vadd.f32 %v4858, 1.0
      %v4896 = vadd.f32 %v4859, 1.0
      %v4897 = vadd.f32 %v4860, 1.0
      %v4898 = vadd.f32 %v4861, 1.0
      %v4899 = vadd.f32 %v4862, 1.0
      %v4900 = vadd.f32 %v4863, 1.0
      %v4901 = vadd.f32 %v4864, 1.0
      %v4902 = vadd.f32 %v4865, 1.0
      %v4903 = vadd.f32 %v4866, 1.0
      %v4904 = vadd.f32 %v4867, 1.0
      %v4905 = vadd.f32 %v4868, 1.0
      %v4906 = vadd.f32 %v4869, 1.0
      %v4907 = vadd.f32 %v4870, 1.0
      %v4908 = vadd.f32 %v4871, 1.0
      %v4909 = vadd.f32 %v4872, 1.0
      %v4910 = vadd.f32 %v4873, 1.0
      %v4911 = vadd.f32 %v4874, 1.0
      %v4912 = vrcp.pop %v4875
      %v4913 = vrcp.pop %v4876
      %v4914 = vrcp.pop %v4877
      %v4915 = vrcp.pop %v4878
      %v4916 = vrcp.pop %v4879
      %v4917 = vrcp.pop %v4880
      %v4918 = vrcp.pop %v4881
      %v4919 = vrcp.pop %v4882
      %v4920 = vrcp.pop %v4883
      %v4921 = vrcp.pop %v4884
      %v4922 = vrcp.pop %v4885
      %v4923 = vrcp.pop %v4886
      %v4924 = vrcp.pop %v4887
      %v4925 = vrcp.pop %v4888
      %v4926 = vrcp.pop %v4889
      %v4927 = vrcp.pop %v4890
      %v4928 = vrcp.pop %v4891
      %v4929 = vrcp.pop %v4892
      %v4930 = vrcp.pop %v4893
      %v4931 = vrcp.pop %v4894
      %v4932 = vrcp.pop %v4895
      %v4933 = vrcp.pop %v4896
      %v4934 = vrcp.pop %v4897
      %v4935 = vrcp.pop %v4898
      %v4936 = vrcp.pop %v4899
      %v4937 = vrcp.pop %v4900
      %v4938 = vrcp.pop %v4901
      %v4939 = vrcp.pop %v4902
      %v4940 = vrcp.pop %v4903
      %v4941 = vrcp.pop %v4904
      %v4942 = vrcp.pop %v4905
      %v4943 = vrcp.pop %v4906
      %v4944 = vrcp.pop %v4907
      %v4945 = vrcp.pop %v4908
      %v4946 = vrcp.pop %v4909
      %v4947 = vrcp.pop %v4910
      %v4948 = vrcp.pop %v4911
      %v4949 = vmul.f32 %v4875, %v4912
      %v4950 = vmul.f32 %v4876, %v4913
      %v4951 = vmul.f32 %v4877, %v4914
      %v4952 = vmul.f32 %v4878, %v4915
      %v4953 = vmul.f32 %v4879, %v4916
      %v4954 = vmul.f32 %v4880, %v4917
      %v4955 = vmul.f32 %v4881, %v4918
      %v4956 = vmul.f32 %v4882, %v4919
      %v4957 = vmul.f32 %v4883, %v4920
      %v4958 = vmul.f32 %v4884, %v4921
      %v4959 = vmul.f32 %v4885, %v4922
      %v4960 = vmul.f32 %v4886, %v4923
      %v4961 = vmul.f32 %v4887, %v4924
      %v4962 = vmul.f32 %v4888, %v4925
      %v4963 = vmul.f32 %v4889, %v4926
      %v4964 = vmul.f32 %v4890, %v4927
      %v4965 = vmul.f32 %v4891, %v4928
      %v4966 = vmul.f32 %v4892, %v4929
      %v4967 = vmul.f32 %v4893, %v4930
      %v4968 = vmul.f32 %v4894, %v4931
      %v4969 = vmul.f32 %v4895, %v4932
      %v4970 = vmul.f32 %v4896, %v4933
      %v4971 = vmul.f32 %v4897, %v4934
      %v4972 = vmul.f32 %v4898, %v4935
      %v4973 = vmul.f32 %v4899, %v4936
      %v4974 = vmul.f32 %v4900, %v4937
      %v4975 = vmul.f32 %v4901, %v4938
      %v4976 = vmul.f32 %v4902, %v4939
      %v4977 = vmul.f32 %v4903, %v4940
      %v4978 = vmul.f32 %v4904, %v4941
      %v4979 = vmul.f32 %v4905, %v4942
      %v4980 = vmul.f32 %v4906, %v4943
      %v4981 = vmul.f32 %v4907, %v4944
      %v4982 = vmul.f32 %v4908, %v4945
      %v4983 = vmul.f32 %v4909, %v4946
      %v4984 = vmul.f32 %v4910, %v4947
      %v4985 = vmul.f32 %v4911, %v4948
      %v4986 = vsub.f32 2.0, %v4949
      %v4987 = vsub.f32 2.0, %v4950
      %v4988 = vsub.f32 2.0, %v4951
      %v4989 = vsub.f32 2.0, %v4952
      %v4990 = vsub.f32 2.0, %v4953
      %v4991 = vsub.f32 2.0, %v4954
      %v4992 = vsub.f32 2.0, %v4955
      %v4993 = vsub.f32 2.0, %v4956
      %v4994 = vsub.f32 2.0, %v4957
      %v4995 = vsub.f32 2.0, %v4958
      %v4996 = vsub.f32 2.0, %v4959
      %v4997 = vsub.f32 2.0, %v4960
      %v4998 = vsub.f32 2.0, %v4961
      %v4999 = vsub.f32 2.0, %v4962
      %v5000 = vsub.f32 2.0, %v4963
      %v5001 = vsub.f32 2.0, %v4964
      %v5002 = vsub.f32 2.0, %v4965
      %v5003 = vsub.f32 2.0, %v4966
      %v5004 = vsub.f32 2.0, %v4967
      %v5005 = vsub.f32 2.0, %v4968
      %v5006 = vsub.f32 2.0, %v4969
      %v5007 = vsub.f32 2.0, %v4970
      %v5008 = vsub.f32 2.0, %v4971
      %v5009 = vsub.f32 2.0, %v4972
      %v5010 = vsub.f32 2.0, %v4973
      %v5011 = vsub.f32 2.0, %v4974
      %v5012 = vsub.f32 2.0, %v4975
      %v5013 = vsub.f32 2.0, %v4976
      %v5014 = vsub.f32 2.0, %v4977
      %v5015 = vsub.f32 2.0, %v4978
      %v5016 = vsub.f32 2.0, %v4979
      %v5017 = vsub.f32 2.0, %v4980
      %v5018 = vsub.f32 2.0, %v4981
      %v5019 = vsub.f32 2.0, %v4982
      %v5020 = vsub.f32 2.0, %v4983
      %v5021 = vsub.f32 2.0, %v4984
      %v5022 = vsub.f32 2.0, %v4985
      %v5023 = vmul.f32 %v4912, %v4986
      %v5024 = vmul.f32 %v4913, %v4987
      %v5025 = vmul.f32 %v4914, %v4988
      %v5026 = vmul.f32 %v4915, %v4989
      %v5027 = vmul.f32 %v4916, %v4990
      %v5028 = vmul.f32 %v4917, %v4991
      %v5029 = vmul.f32 %v4918, %v4992
      %v5030 = vmul.f32 %v4919, %v4993
      %v5031 = vmul.f32 %v4920, %v4994
      %v5032 = vmul.f32 %v4921, %v4995
      %v5033 = vmul.f32 %v4922, %v4996
      %v5034 = vmul.f32 %v4923, %v4997
      %v5035 = vmul.f32 %v4924, %v4998
      %v5036 = vmul.f32 %v4925, %v4999
      %v5037 = vmul.f32 %v4926, %v5000
      %v5038 = vmul.f32 %v4927, %v5001
      %v5039 = vmul.f32 %v4928, %v5002
      %v5040 = vmul.f32 %v4929, %v5003
      %v5041 = vmul.f32 %v4930, %v5004
      %v5042 = vmul.f32 %v4931, %v5005
      %v5043 = vmul.f32 %v4932, %v5006
      %v5044 = vmul.f32 %v4933, %v5007
      %v5045 = vmul.f32 %v4934, %v5008
      %v5046 = vmul.f32 %v4935, %v5009
      %v5047 = vmul.f32 %v4936, %v5010
      %v5048 = vmul.f32 %v4937, %v5011
      %v5049 = vmul.f32 %v4938, %v5012
      %v5050 = vmul.f32 %v4939, %v5013
      %v5051 = vmul.f32 %v4940, %v5014
      %v5052 = vmul.f32 %v4941, %v5015
      %v5053 = vmul.f32 %v4942, %v5016
      %v5054 = vmul.f32 %v4943, %v5017
      %v5055 = vmul.f32 %v4944, %v5018
      %v5056 = vmul.f32 %v4945, %v5019
      %v5057 = vmul.f32 %v4946, %v5020
      %v5058 = vmul.f32 %v4947, %v5021
      %v5059 = vmul.f32 %v4948, %v5022
      %v5060 = vmul.f32 %v4098, %v4431
      %v5061 = vmul.f32 %v4099, %v4432
      %v5062 = vmul.f32 %v4100, %v4433
      %v5063 = vmul.f32 %v4101, %v4434
      %v5064 = vmul.f32 %v4102, %v4435
      %v5065 = vmul.f32 %v4103, %v4436
      %v5066 = vmul.f32 %v4104, %v4437
      %v5067 = vmul.f32 %v4105, %v4438
      %v5068 = vmul.f32 %v4106, %v4439
      %v5069 = vmul.f32 %v4107, %v4440
      %v5070 = vmul.f32 %v4108, %v4441
      %v5071 = vmul.f32 %v4109, %v4442
      %v5072 = vmul.f32 %v4110, %v4443
      %v5073 = vmul.f32 %v4111, %v4444
      %v5074 = vmul.f32 %v4112, %v4445
      %v5075 = vmul.f32 %v4113, %v4446
      %v5076 = vmul.f32 %v4114, %v4447
      %v5077 = vmul.f32 %v4115, %v4448
      %v5078 = vmul.f32 %v4116, %v4449
      %v5079 = vmul.f32 %v4117, %v4450
      %v5080 = vmul.f32 %v4118, %v4451
      %v5081 = vmul.f32 %v4119, %v4452
      %v5082 = vmul.f32 %v4120, %v4453
      %v5083 = vmul.f32 %v4121, %v4454
      %v5084 = vmul.f32 %v4122, %v4455
      %v5085 = vmul.f32 %v4123, %v4456
      %v5086 = vmul.f32 %v4124, %v4457
      %v5087 = vmul.f32 %v4125, %v4458
      %v5088 = vmul.f32 %v4126, %v4459
      %v5089 = vmul.f32 %v4127, %v4460
      %v5090 = vmul.f32 %v4128, %v4461
      %v5091 = vmul.f32 %v4129, %v4462
      %v5092 = vmul.f32 %v4130, %v4463
      %v5093 = vmul.f32 %v4131, %v4464
      %v5094 = vmul.f32 %v4132, %v4465
      %v5095 = vmul.f32 %v4133, %v4466
      %v5096 = vmul.f32 %v4134, %v4467
      %v5097 = vmul.f32 %v5060, %v5023
      %v5098 = vmul.f32 %v5061, %v5024
      %v5099 = vmul.f32 %v5062, %v5025
      %v5100 = vmul.f32 %v5063, %v5026
      %v5101 = vmul.f32 %v5064, %v5027
      %v5102 = vmul.f32 %v5065, %v5028
      %v5103 = vmul.f32 %v5066, %v5029
      %v5104 = vmul.f32 %v5067, %v5030
      %v5105 = vmul.f32 %v5068, %v5031
      %v5106 = vmul.f32 %v5069, %v5032
      %v5107 = vmul.f32 %v5070, %v5033
      %v5108 = vmul.f32 %v5071, %v5034
      %v5109 = vmul.f32 %v5072, %v5035
      %v5110 = vmul.f32 %v5073, %v5036
      %v5111 = vmul.f32 %v5074, %v5037
      %v5112 = vmul.f32 %v5075, %v5038
      %v5113 = vmul.f32 %v5076, %v5039
      %v5114 = vmul.f32 %v5077, %v5040
      %v5115 = vmul.f32 %v5078, %v5041
      %v5116 = vmul.f32 %v5079, %v5042
      %v5117 = vmul.f32 %v5080, %v5043
      %v5118 = vmul.f32 %v5081, %v5044
      %v5119 = vmul.f32 %v5082, %v5045
      %v5120 = vmul.f32 %v5083, %v5046
      %v5121 = vmul.f32 %v5084, %v5047
      %v5122 = vmul.f32 %v5085, %v5048
      %v5123 = vmul.f32 %v5086, %v5049
      %v5124 = vmul.f32 %v5087, %v5050
      %v5125 = vmul.f32 %v5088, %v5051
      %v5126 = vmul.f32 %v5089, %v5052
      %v5127 = vmul.f32 %v5090, %v5053
      %v5128 = vmul.f32 %v5091, %v5054
      %v5129 = vmul.f32 %v5092, %v5055
      %v5130 = vmul.f32 %v5093, %v5056
      %v5131 = vmul.f32 %v5094, %v5057
      %v5132 = vmul.f32 %v5095, %v5058
      %v5133 = vmul.f32 %v5096, %v5059
      %v5134 = vadd.f32 %v5097, 1.0
      %v5135 = vadd.f32 %v5098, 1.0
      %v5136 = vadd.f32 %v5099, 1.0
      %v5137 = vadd.f32 %v5100, 1.0
      %v5138 = vadd.f32 %v5101, 1.0
      %v5139 = vadd.f32 %v5102, 1.0
      %v5140 = vadd.f32 %v5103, 1.0
      %v5141 = vadd.f32 %v5104, 1.0
      %v5142 = vadd.f32 %v5105, 1.0
      %v5143 = vadd.f32 %v5106, 1.0
      %v5144 = vadd.f32 %v5107, 1.0
      %v5145 = vadd.f32 %v5108, 1.0
      %v5146 = vadd.f32 %v5109, 1.0
      %v5147 = vadd.f32 %v5110, 1.0
      %v5148 = vadd.f32 %v5111, 1.0
      %v5149 = vadd.f32 %v5112, 1.0
      %v5150 = vadd.f32 %v5113, 1.0
      %v5151 = vadd.f32 %v5114, 1.0
      %v5152 = vadd.f32 %v5115, 1.0
      %v5153 = vadd.f32 %v5116, 1.0
      %v5154 = vadd.f32 %v5117, 1.0
      %v5155 = vadd.f32 %v5118, 1.0
      %v5156 = vadd.f32 %v5119, 1.0
      %v5157 = vadd.f32 %v5120, 1.0
      %v5158 = vadd.f32 %v5121, 1.0
      %v5159 = vadd.f32 %v5122, 1.0
      %v5160 = vadd.f32 %v5123, 1.0
      %v5161 = vadd.f32 %v5124, 1.0
      %v5162 = vadd.f32 %v5125, 1.0
      %v5163 = vadd.f32 %v5126, 1.0
      %v5164 = vadd.f32 %v5127, 1.0
      %v5165 = vadd.f32 %v5128, 1.0
      %v5166 = vadd.f32 %v5129, 1.0
      %v5167 = vadd.f32 %v5130, 1.0
      %v5168 = vadd.f32 %v5131, 1.0
      %v5169 = vadd.f32 %v5132, 1.0
      %v5170 = vadd.f32 %v5133, 1.0
      %v5171 = vmul.f32 %v3987, %v5134
      %v5172 = vmul.f32 %v3988, %v5135
      %v5173 = vmul.f32 %v3989, %v5136
      %v5174 = vmul.f32 %v3990, %v5137
      %v5175 = vmul.f32 %v3991, %v5138
      %v5176 = vmul.f32 %v3992, %v5139
      %v5177 = vmul.f32 %v3993, %v5140
      %v5178 = vmul.f32 %v3994, %v5141
      %v5179 = vmul.f32 %v3995, %v5142
      %v5180 = vmul.f32 %v3996, %v5143
      %v5181 = vmul.f32 %v3997, %v5144
      %v5182 = vmul.f32 %v3998, %v5145
      %v5183 = vmul.f32 %v3999, %v5146
      %v5184 = vmul.f32 %v4000, %v5147
      %v5185 = vmul.f32 %v4001, %v5148
      %v5186 = vmul.f32 %v4002, %v5149
      %v5187 = vmul.f32 %v4003, %v5150
      %v5188 = vmul.f32 %v4004, %v5151
      %v5189 = vmul.f32 %v4005, %v5152
      %v5190 = vmul.f32 %v4006, %v5153
      %v5191 = vmul.f32 %v4007, %v5154
      %v5192 = vmul.f32 %v4008, %v5155
      %v5193 = vmul.f32 %v4009, %v5156
      %v5194 = vmul.f32 %v4010, %v5157
      %v5195 = vmul.f32 %v4011, %v5158
      %v5196 = vmul.f32 %v4012, %v5159
      %v5197 = vmul.f32 %v4013, %v5160
      %v5198 = vmul.f32 %v4014, %v5161
      %v5199 = vmul.f32 %v4015, %v5162
      %v5200 = vmul.f32 %v4016, %v5163
      %v5201 = vmul.f32 %v4017, %v5164
      %v5202 = vmul.f32 %v4018, %v5165
      %v5203 = vmul.f32 %v4019, %v5166
      %v5204 = vmul.f32 %v4020, %v5167
      %v5205 = vmul.f32 %v4021, %v5168
      %v5206 = vmul.f32 %v4022, %v5169
      %v5207 = vmul.f32 %v4023, %v5170
      %v5208 = vld [vmem:[#allocation3 + $0x15] sm:$0xff]
      %v5209 = vld [vmem:[#allocation3 + $0x1d] sm:$0xff]
      %v5210 = vld [vmem:[#allocation3 + $0x25] sm:$0xff]
      %v5211 = vld [vmem:[#allocation3 + $0x2d] sm:$0xff]
      %v5212 = vld [vmem:[#allocation3 + $0x35] sm:$0xff]
      %v5213 = vld [vmem:[#allocation3 + $0x3d] sm:$0xff]
      %v5214 = vld [vmem:[#allocation3 + $0x45] sm:$0xff]
      %v5215 = vld [vmem:[#allocation3 + $0x4d] sm:$0xff]
      %v5216 = vld [vmem:[#allocation3 + $0x55] sm:$0xff]
      %v5217 = vld [vmem:[#allocation3 + $0x5d] sm:$0xff]
      %v5218 = vld [vmem:[#allocation3 + $0x65] sm:$0xff]
      %v5219 = vld [vmem:[#allocation3 + $0x6d] sm:$0xff]
      %v5220 = vld [vmem:[#allocation3 + $0x75] sm:$0xff]
      %v5221 = vld [vmem:[#allocation3 + $0x7d] sm:$0xff]
      %v5222 = vld [vmem:[#allocation3 + $0x85] sm:$0xff]
      %v5223 = vld [vmem:[#allocation3 + $0x8d] sm:$0xff]
      %v5224 = vld [vmem:[#allocation3 + $0x95] sm:$0xff]
      %v5225 = vld [vmem:[#allocation3 + $0x9d] sm:$0xff]
      %v5226 = vld [vmem:[#allocation3 + $0xa5] sm:$0xff]
      %v5227 = vld [vmem:[#allocation3 + $0xad] sm:$0xff]
      %v5228 = vld [vmem:[#allocation3 + $0xb5] sm:$0xff]
      %v5229 = vld [vmem:[#allocation3 + $0xbd] sm:$0xff]
      %v5230 = vld [vmem:[#allocation3 + $0xc5] sm:$0xff]
      %v5231 = vld [vmem:[#allocation3 + $0xcd] sm:$0xff]
      %v5232 = vld [vmem:[#allocation3 + $0xd5] sm:$0xff]
      %v5233 = vld [vmem:[#allocation3 + $0xdd] sm:$0xff]
      %v5234 = vld [vmem:[#allocation3 + $0xe5] sm:$0xff]
      %v5235 = vld [vmem:[#allocation3 + $0xed] sm:$0xff]
      %v5236 = vld [vmem:[#allocation3 + $0xf5] sm:$0xff]
      %v5237 = vld [vmem:[#allocation3 + $0xfd] sm:$0xff]
      %v5238 = vld [vmem:[#allocation3 + $0x105] sm:$0xff]
      %v5239 = vld [vmem:[#allocation3 + $0x10d] sm:$0xff]
      %v5240 = vld [vmem:[#allocation3 + $0x115] sm:$0xff]
      %v5241 = vld [vmem:[#allocation3 + $0x11d] sm:$0xff]
      %v5242 = vld [vmem:[#allocation3 + $0x125] sm:$0xff]
      %v5243 = vld [vmem:[#allocation3 + $0x12d] sm:$0xff]
      %v5244 = vld [vmem:[#allocation3 + $0x135] sm:$0xff]
      %5246 = vset.pattern.permute.xlu0 0
      %5247 = vperm.xlu0 %5246, %v5208
      %v5248 = vpop.permute.xlu0 %5247
      %5251 = vset.pattern.permute.xlu0 0
      %5252 = vperm.xlu0 %5251, %v5209
      %v5253 = vpop.permute.xlu0 %5252
      %5256 = vset.pattern.permute.xlu0 0
      %5257 = vperm.xlu0 %5256, %v5210
      %v5258 = vpop.permute.xlu0 %5257
      %5261 = vset.pattern.permute.xlu0 0
      %5262 = vperm.xlu0 %5261, %v5211
      %v5263 = vpop.permute.xlu0 %5262
      %5266 = vset.pattern.permute.xlu0 0
      %5267 = vperm.xlu0 %5266, %v5212
      %v5268 = vpop.permute.xlu0 %5267
      %5271 = vset.pattern.permute.xlu0 0
      %5272 = vperm.xlu0 %5271, %v5213
      %v5273 = vpop.permute.xlu0 %5272
      %5276 = vset.pattern.permute.xlu0 0
      %5277 = vperm.xlu0 %5276, %v5214
      %v5278 = vpop.permute.xlu0 %5277
      %5281 = vset.pattern.permute.xlu0 0
      %5282 = vperm.xlu0 %5281, %v5215
      %v5283 = vpop.permute.xlu0 %5282
      %5286 = vset.pattern.permute.xlu0 0
      %5287 = vperm.xlu0 %5286, %v5216
      %v5288 = vpop.permute.xlu0 %5287
      %5291 = vset.pattern.permute.xlu0 0
      %5292 = vperm.xlu0 %5291, %v5217
      %v5293 = vpop.permute.xlu0 %5292
      %5296 = vset.pattern.permute.xlu0 0
      %5297 = vperm.xlu0 %5296, %v5218
      %v5298 = vpop.permute.xlu0 %5297
      %5301 = vset.pattern.permute.xlu0 0
      %5302 = vperm.xlu0 %5301, %v5219
      %v5303 = vpop.permute.xlu0 %5302
      %5306 = vset.pattern.permute.xlu0 0
      %5307 = vperm.xlu0 %5306, %v5220
      %v5308 = vpop.permute.xlu0 %5307
      %5311 = vset.pattern.permute.xlu0 0
      %5312 = vperm.xlu0 %5311, %v5221
      %v5313 = vpop.permute.xlu0 %5312
      %5316 = vset.pattern.permute.xlu0 0
      %5317 = vperm.xlu0 %5316, %v5222
      %v5318 = vpop.permute.xlu0 %5317
      %5321 = vset.pattern.permute.xlu0 0
      %5322 = vperm.xlu0 %5321, %v5223
      %v5323 = vpop.permute.xlu0 %5322
      %5326 = vset.pattern.permute.xlu0 0
      %5327 = vperm.xlu0 %5326, %v5224
      %v5328 = vpop.permute.xlu0 %5327
      %5331 = vset.pattern.permute.xlu0 0
      %5332 = vperm.xlu0 %5331, %v5225
      %v5333 = vpop.permute.xlu0 %5332
      %5336 = vset.pattern.permute.xlu0 0
      %5337 = vperm.xlu0 %5336, %v5226
      %v5338 = vpop.permute.xlu0 %5337
      %5341 = vset.pattern.permute.xlu0 0
      %5342 = vperm.xlu0 %5341, %v5227
      %v5343 = vpop.permute.xlu0 %5342
      %5346 = vset.pattern.permute.xlu0 0
      %5347 = vperm.xlu0 %5346, %v5228
      %v5348 = vpop.permute.xlu0 %5347
      %5351 = vset.pattern.permute.xlu0 0
      %5352 = vperm.xlu0 %5351, %v5229
      %v5353 = vpop.permute.xlu0 %5352
      %5356 = vset.pattern.permute.xlu0 0
      %5357 = vperm.xlu0 %5356, %v5230
      %v5358 = vpop.permute.xlu0 %5357
      %5361 = vset.pattern.permute.xlu0 0
      %5362 = vperm.xlu0 %5361, %v5231
      %v5363 = vpop.permute.xlu0 %5362
      %5366 = vset.pattern.permute.xlu0 0
      %5367 = vperm.xlu0 %5366, %v5232
      %v5368 = vpop.permute.xlu0 %5367
      %5371 = vset.pattern.permute.xlu0 0
      %5372 = vperm.xlu0 %5371, %v5233
      %v5373 = vpop.permute.xlu0 %5372
      %5376 = vset.pattern.permute.xlu0 0
      %5377 = vperm.xlu0 %5376, %v5234
      %v5378 = vpop.permute.xlu0 %5377
      %5381 = vset.pattern.permute.xlu0 0
      %5382 = vperm.xlu0 %5381, %v5235
      %v5383 = vpop.permute.xlu0 %5382
      %5386 = vset.pattern.permute.xlu0 0
      %5387 = vperm.xlu0 %5386, %v5236
      %v5388 = vpop.permute.xlu0 %5387
      %5391 = vset.pattern.permute.xlu0 0
      %5392 = vperm.xlu0 %5391, %v5237
      %v5393 = vpop.permute.xlu0 %5392
      %5396 = vset.pattern.permute.xlu0 0
      %5397 = vperm.xlu0 %5396, %v5238
      %v5398 = vpop.permute.xlu0 %5397
      %5401 = vset.pattern.permute.xlu0 0
      %5402 = vperm.xlu0 %5401, %v5239
      %v5403 = vpop.permute.xlu0 %5402
      %5406 = vset.pattern.permute.xlu0 0
      %5407 = vperm.xlu0 %5406, %v5240
      %v5408 = vpop.permute.xlu0 %5407
      %5411 = vset.pattern.permute.xlu0 0
      %5412 = vperm.xlu0 %5411, %v5241
      %v5413 = vpop.permute.xlu0 %5412
      %5416 = vset.pattern.permute.xlu0 0
      %5417 = vperm.xlu0 %5416, %v5242
      %v5418 = vpop.permute.xlu0 %5417
      %5421 = vset.pattern.permute.xlu0 0
      %5422 = vperm.xlu0 %5421, %v5243
      %v5423 = vpop.permute.xlu0 %5422
      %5426 = vset.pattern.permute.xlu0 0
      %5427 = vperm.xlu0 %5426, %v5244
      %v5428 = vpop.permute.xlu0 %5427
      %v5430 = vmul.f32 %v5171, %v5248
      %v5431 = vmul.f32 %v5172, %v5253
      %v5432 = vmul.f32 %v5173, %v5258
      %v5433 = vmul.f32 %v5174, %v5263
      %v5434 = vmul.f32 %v5175, %v5268
      %v5435 = vmul.f32 %v5176, %v5273
      %v5436 = vmul.f32 %v5177, %v5278
      %v5437 = vmul.f32 %v5178, %v5283
      %v5438 = vmul.f32 %v5179, %v5288
      %v5439 = vmul.f32 %v5180, %v5293
      %v5440 = vmul.f32 %v5181, %v5298
      %v5441 = vmul.f32 %v5182, %v5303
      %v5442 = vmul.f32 %v5183, %v5308
      %v5443 = vmul.f32 %v5184, %v5313
      %v5444 = vmul.f32 %v5185, %v5318
      %v5445 = vmul.f32 %v5186, %v5323
      %v5446 = vmul.f32 %v5187, %v5328
      %v5447 = vmul.f32 %v5188, %v5333
      %v5448 = vmul.f32 %v5189, %v5338
      %v5449 = vmul.f32 %v5190, %v5343
      %v5450 = vmul.f32 %v5191, %v5348
      %v5451 = vmul.f32 %v5192, %v5353
      %v5452 = vmul.f32 %v5193, %v5358
      %v5453 = vmul.f32 %v5194, %v5363
      %v5454 = vmul.f32 %v5195, %v5368
      %v5455 = vmul.f32 %v5196, %v5373
      %v5456 = vmul.f32 %v5197, %v5378
      %v5457 = vmul.f32 %v5198, %v5383
      %v5458 = vmul.f32 %v5199, %v5388
      %v5459 = vmul.f32 %v5200, %v5393
      %v5460 = vmul.f32 %v5201, %v5398
      %v5461 = vmul.f32 %v5202, %v5403
      %v5462 = vmul.f32 %v5203, %v5408
      %v5463 = vmul.f32 %v5204, %v5413
      %v5464 = vmul.f32 %v5205, %v5418
      %v5465 = vmul.f32 %v5206, %v5423
      %v5466 = vmul.f32 %v5207, %v5428
      %5467 = vst [vmem:[#allocation5 + $0x15] sm:$0xff] %v5430
      %5468 = vst [vmem:[#allocation5 + $0x1d] sm:$0xff] %v5431
      %5469 = vst [vmem:[#allocation5 + $0x25] sm:$0xff] %v5432
      %5470 = vst [vmem:[#allocation5 + $0x2d] sm:$0xff] %v5433
      %5471 = vst [vmem:[#allocation5 + $0x35] sm:$0xff] %v5434
      %5472 = vst [vmem:[#allocation5 + $0x3d] sm:$0xff] %v5435
      %5473 = vst [vmem:[#allocation5 + $0x45] sm:$0xff] %v5436
      %5474 = vst [vmem:[#allocation5 + $0x4d] sm:$0xff] %v5437
      %5475 = vst [vmem:[#allocation5 + $0x55] sm:$0xff] %v5438
      %5476 = vst [vmem:[#allocation5 + $0x5d] sm:$0xff] %v5439
      %5477 = vst [vmem:[#allocation5 + $0x65] sm:$0xff] %v5440
      %5478 = vst [vmem:[#allocation5 + $0x6d] sm:$0xff] %v5441
      %5479 = vst [vmem:[#allocation5 + $0x75] sm:$0xff] %v5442
      %5480 = vst [vmem:[#allocation5 + $0x7d] sm:$0xff] %v5443
      %5481 = vst [vmem:[#allocation5 + $0x85] sm:$0xff] %v5444
      %5482 = vst [vmem:[#allocation5 + $0x8d] sm:$0xff] %v5445
      %5483 = vst [vmem:[#allocation5 + $0x95] sm:$0xff] %v5446
      %5484 = vst [vmem:[#allocation5 + $0x9d] sm:$0xff] %v5447
      %5485 = vst [vmem:[#allocation5 + $0xa5] sm:$0xff] %v5448
      %5486 = vst [vmem:[#allocation5 + $0xad] sm:$0xff] %v5449
      %5487 = vst [vmem:[#allocation5 + $0xb5] sm:$0xff] %v5450
      %5488 = vst [vmem:[#allocation5 + $0xbd] sm:$0xff] %v5451
      %5489 = vst [vmem:[#allocation5 + $0xc5] sm:$0xff] %v5452
      %5490 = vst [vmem:[#allocation5 + $0xcd] sm:$0xff] %v5453
      %5491 = vst [vmem:[#allocation5 + $0xd5] sm:$0xff] %v5454
      %5492 = vst [vmem:[#allocation5 + $0xdd] sm:$0xff] %v5455
      %5493 = vst [vmem:[#allocation5 + $0xe5] sm:$0xff] %v5456
      %5494 = vst [vmem:[#allocation5 + $0xed] sm:$0xff] %v5457
      %5495 = vst [vmem:[#allocation5 + $0xf5] sm:$0xff] %v5458
      %5496 = vst [vmem:[#allocation5 + $0xfd] sm:$0xff] %v5459
      %5497 = vst [vmem:[#allocation5 + $0x105] sm:$0xff] %v5460
      %5498 = vst [vmem:[#allocation5 + $0x10d] sm:$0xff] %v5461
      %5499 = vst [vmem:[#allocation5 + $0x115] sm:$0xff] %v5462
      %5500 = vst [vmem:[#allocation5 + $0x11d] sm:$0xff] %v5463
      %5501 = vst [vmem:[#allocation5 + $0x125] sm:$0xff] %v5464
      %5502 = vst [vmem:[#allocation5 + $0x12d] sm:$0xff] %v5465
      %5503 = vst [vmem:[#allocation5 + $0x135] sm:$0xff] %v5466
      %v5504 = vld [vmem:[#allocation5 + $0x15] sm:$0xff]
      %v5505 = vld [vmem:[#allocation5 + $0x1d] sm:$0xff]
      %v5506 = vld [vmem:[#allocation5 + $0x25] sm:$0xff]
      %v5507 = vld [vmem:[#allocation5 + $0x2d] sm:$0xff]
      %v5508 = vld [vmem:[#allocation5 + $0x35] sm:$0xff]
      %v5509 = vld [vmem:[#allocation5 + $0x3d] sm:$0xff]
      %v5510 = vld [vmem:[#allocation5 + $0x45] sm:$0xff]
      %v5511 = vld [vmem:[#allocation5 + $0x4d] sm:$0xff]
      %v5512 = vld [vmem:[#allocation5 + $0x55] sm:$0xff]
      %v5513 = vld [vmem:[#allocation5 + $0x5d] sm:$0xff]
      %v5514 = vld [vmem:[#allocation5 + $0x65] sm:$0xff]
      %v5515 = vld [vmem:[#allocation5 + $0x6d] sm:$0xff]
      %v5516 = vld [vmem:[#allocation5 + $0x75] sm:$0xff]
      %v5517 = vld [vmem:[#allocation5 + $0x7d] sm:$0xff]
      %v5518 = vld [vmem:[#allocation5 + $0x85] sm:$0xff]
      %v5519 = vld [vmem:[#allocation5 + $0x8d] sm:$0xff]
      %v5520 = vld [vmem:[#allocation5 + $0x95] sm:$0xff]
      %v5521 = vld [vmem:[#allocation5 + $0x9d] sm:$0xff]
      %v5522 = vld [vmem:[#allocation5 + $0xa5] sm:$0xff]
      %v5523 = vld [vmem:[#allocation5 + $0xad] sm:$0xff]
      %v5524 = vld [vmem:[#allocation5 + $0xb5] sm:$0xff]
      %v5525 = vld [vmem:[#allocation5 + $0xbd] sm:$0xff]
      %v5526 = vld [vmem:[#allocation5 + $0xc5] sm:$0xff]
      %v5527 = vld [vmem:[#allocation5 + $0xcd] sm:$0xff]
      %v5528 = vld [vmem:[#allocation5 + $0xd5] sm:$0xff]
      %v5529 = vld [vmem:[#allocation5 + $0xdd] sm:$0xff]
      %v5530 = vld [vmem:[#allocation5 + $0xe5] sm:$0xff]
      %v5531 = vld [vmem:[#allocation5 + $0xed] sm:$0xff]
      %v5532 = vld [vmem:[#allocation5 + $0xf5] sm:$0xff]
      %v5533 = vld [vmem:[#allocation5 + $0xfd] sm:$0xff]
      %v5534 = vld [vmem:[#allocation5 + $0x105] sm:$0xff]
      %v5535 = vld [vmem:[#allocation5 + $0x10d] sm:$0xff]
      %v5536 = vld [vmem:[#allocation5 + $0x16] sm:$0xff]
      %v5537 = vld [vmem:[#allocation5 + $0x1e] sm:$0xff]
      %v5538 = vld [vmem:[#allocation5 + $0x26] sm:$0xff]
      %v5539 = vld [vmem:[#allocation5 + $0x2e] sm:$0xff]
      %v5540 = vld [vmem:[#allocation5 + $0x36] sm:$0xff]
      %v5541 = vld [vmem:[#allocation5 + $0x3e] sm:$0xff]
      %v5542 = vld [vmem:[#allocation5 + $0x46] sm:$0xff]
      %v5543 = vld [vmem:[#allocation5 + $0x4e] sm:$0xff]
      %v5544 = vld [vmem:[#allocation5 + $0x56] sm:$0xff]
      %v5545 = vld [vmem:[#allocation5 + $0x5e] sm:$0xff]
      %v5546 = vld [vmem:[#allocation5 + $0x66] sm:$0xff]
      %v5547 = vld [vmem:[#allocation5 + $0x6e] sm:$0xff]
      %v5548 = vld [vmem:[#allocation5 + $0x76] sm:$0xff]
      %v5549 = vld [vmem:[#allocation5 + $0x7e] sm:$0xff]
      %v5550 = vld [vmem:[#allocation5 + $0x86] sm:$0xff]
      %v5551 = vld [vmem:[#allocation5 + $0x8e] sm:$0xff]
      %v5552 = vld [vmem:[#allocation5 + $0x96] sm:$0xff]
      %v5553 = vld [vmem:[#allocation5 + $0x9e] sm:$0xff]
      %v5554 = vld [vmem:[#allocation5 + $0xa6] sm:$0xff]
      %v5555 = vld [vmem:[#allocation5 + $0xae] sm:$0xff]
      %v5556 = vld [vmem:[#allocation5 + $0xb6] sm:$0xff]
      %v5557 = vld [vmem:[#allocation5 + $0xbe] sm:$0xff]
      %v5558 = vld [vmem:[#allocation5 + $0xc6] sm:$0xff]
      %v5559 = vld [vmem:[#allocation5 + $0xce] sm:$0xff]
      %v5560 = vld [vmem:[#allocation5 + $0xd6] sm:$0xff]
      %v5561 = vld [vmem:[#allocation5 + $0xde] sm:$0xff]
      %v5562 = vld [vmem:[#allocation5 + $0xe6] sm:$0xff]
      %v5563 = vld [vmem:[#allocation5 + $0xee] sm:$0xff]
      %v5564 = vld [vmem:[#allocation5 + $0xf6] sm:$0xff]
      %v5565 = vld [vmem:[#allocation5 + $0xfe] sm:$0xff]
      %v5566 = vld [vmem:[#allocation5 + $0x106] sm:$0xff]
      %v5567 = vld [vmem:[#allocation5 + $0x10e] sm:$0xff]
      %5568 = vrot.lane.b32.xlu0 %v5536, 8
      %v5569 = vpop.permute.xlu0 %5568
      %5570 = vrot.lane.b32.xlu0 %v5537, 8
      %v5571 = vpop.permute.xlu0 %5570
      %5572 = vrot.lane.b32.xlu0 %v5538, 8
      %v5573 = vpop.permute.xlu0 %5572
      %5574 = vrot.lane.b32.xlu0 %v5539, 8
      %v5575 = vpop.permute.xlu0 %5574
      %5576 = vrot.lane.b32.xlu0 %v5540, 8
      %v5577 = vpop.permute.xlu0 %5576
      %5578 = vrot.lane.b32.xlu0 %v5541, 8
      %v5579 = vpop.permute.xlu0 %5578
      %5580 = vrot.lane.b32.xlu0 %v5542, 8
      %v5581 = vpop.permute.xlu0 %5580
      %5582 = vrot.lane.b32.xlu0 %v5543, 8
      %v5583 = vpop.permute.xlu0 %5582
      %5584 = vrot.lane.b32.xlu0 %v5544, 8
      %v5585 = vpop.permute.xlu0 %5584
      %5586 = vrot.lane.b32.xlu0 %v5545, 8
      %v5587 = vpop.permute.xlu0 %5586
      %5588 = vrot.lane.b32.xlu0 %v5546, 8
      %v5589 = vpop.permute.xlu0 %5588
      %5590 = vrot.lane.b32.xlu0 %v5547, 8
      %v5591 = vpop.permute.xlu0 %5590
      %5592 = vrot.lane.b32.xlu0 %v5548, 8
      %v5593 = vpop.permute.xlu0 %5592
      %5594 = vrot.lane.b32.xlu0 %v5549, 8
      %v5595 = vpop.permute.xlu0 %5594
      %5596 = vrot.lane.b32.xlu0 %v5550, 8
      %v5597 = vpop.permute.xlu0 %5596
      %5598 = vrot.lane.b32.xlu0 %v5551, 8
      %v5599 = vpop.permute.xlu0 %5598
      %5600 = vrot.lane.b32.xlu0 %v5552, 8
      %v5601 = vpop.permute.xlu0 %5600
      %5602 = vrot.lane.b32.xlu0 %v5553, 8
      %v5603 = vpop.permute.xlu0 %5602
      %5604 = vrot.lane.b32.xlu0 %v5554, 8
      %v5605 = vpop.permute.xlu0 %5604
      %5606 = vrot.lane.b32.xlu0 %v5555, 8
      %v5607 = vpop.permute.xlu0 %5606
      %5608 = vrot.lane.b32.xlu0 %v5556, 8
      %v5609 = vpop.permute.xlu0 %5608
      %5610 = vrot.lane.b32.xlu0 %v5557, 8
      %v5611 = vpop.permute.xlu0 %5610
      %5612 = vrot.lane.b32.xlu0 %v5558, 8
      %v5613 = vpop.permute.xlu0 %5612
      %5614 = vrot.lane.b32.xlu0 %v5559, 8
      %v5615 = vpop.permute.xlu0 %5614
      %5616 = vrot.lane.b32.xlu0 %v5560, 8
      %v5617 = vpop.permute.xlu0 %5616
      %5618 = vrot.lane.b32.xlu0 %v5561, 8
      %v5619 = vpop.permute.xlu0 %5618
      %5620 = vrot.lane.b32.xlu0 %v5562, 8
      %v5621 = vpop.permute.xlu0 %5620
      %5622 = vrot.lane.b32.xlu0 %v5563, 8
      %v5623 = vpop.permute.xlu0 %5622
      %5624 = vrot.lane.b32.xlu0 %v5564, 8
      %v5625 = vpop.permute.xlu0 %5624
      %5626 = vrot.lane.b32.xlu0 %v5565, 8
      %v5627 = vpop.permute.xlu0 %5626
      %5628 = vrot.lane.b32.xlu0 %v5566, 8
      %v5629 = vpop.permute.xlu0 %5628
      %5630 = vrot.lane.b32.xlu0 %v5567, 8
      %v5631 = vpop.permute.xlu0 %5630
      %v5632 = vadd.f32 %v5504, %v5569
      %v5633 = vadd.f32 %v5505, %v5571
      %v5634 = vadd.f32 %v5506, %v5573
      %v5635 = vadd.f32 %v5507, %v5575
      %v5636 = vadd.f32 %v5508, %v5577
      %v5637 = vadd.f32 %v5509, %v5579
      %v5638 = vadd.f32 %v5510, %v5581
      %v5639 = vadd.f32 %v5511, %v5583
      %v5640 = vadd.f32 %v5512, %v5585
      %v5641 = vadd.f32 %v5513, %v5587
      %v5642 = vadd.f32 %v5514, %v5589
      %v5643 = vadd.f32 %v5515, %v5591
      %v5644 = vadd.f32 %v5516, %v5593
      %v5645 = vadd.f32 %v5517, %v5595
      %v5646 = vadd.f32 %v5518, %v5597
      %v5647 = vadd.f32 %v5519, %v5599
      %v5648 = vadd.f32 %v5520, %v5601
      %v5649 = vadd.f32 %v5521, %v5603
      %v5650 = vadd.f32 %v5522, %v5605
      %v5651 = vadd.f32 %v5523, %v5607
      %v5652 = vadd.f32 %v5524, %v5609
      %v5653 = vadd.f32 %v5525, %v5611
      %v5654 = vadd.f32 %v5526, %v5613
      %v5655 = vadd.f32 %v5527, %v5615
      %v5656 = vadd.f32 %v5528, %v5617
      %v5657 = vadd.f32 %v5529, %v5619
      %v5658 = vadd.f32 %v5530, %v5621
      %v5659 = vadd.f32 %v5531, %v5623
      %v5660 = vadd.f32 %v5532, %v5625
      %v5661 = vadd.f32 %v5533, %v5627
      %v5662 = vadd.f32 %v5534, %v5629
      %v5663 = vadd.f32 %v5535, %v5631
      %v5664 = vld [vmem:[#allocation5 + $0x17] sm:$0xff]
      %v5665 = vld [vmem:[#allocation5 + $0x1f] sm:$0xff]
      %v5666 = vld [vmem:[#allocation5 + $0x27] sm:$0xff]
      %v5667 = vld [vmem:[#allocation5 + $0x2f] sm:$0xff]
      %v5668 = vld [vmem:[#allocation5 + $0x37] sm:$0xff]
      %v5669 = vld [vmem:[#allocation5 + $0x3f] sm:$0xff]
      %v5670 = vld [vmem:[#allocation5 + $0x47] sm:$0xff]
      %v5671 = vld [vmem:[#allocation5 + $0x4f] sm:$0xff]
      %v5672 = vld [vmem:[#allocation5 + $0x57] sm:$0xff]
      %v5673 = vld [vmem:[#allocation5 + $0x5f] sm:$0xff]
      %v5674 = vld [vmem:[#allocation5 + $0x67] sm:$0xff]
      %v5675 = vld [vmem:[#allocation5 + $0x6f] sm:$0xff]
      %v5676 = vld [vmem:[#allocation5 + $0x77] sm:$0xff]
      %v5677 = vld [vmem:[#allocation5 + $0x7f] sm:$0xff]
      %v5678 = vld [vmem:[#allocation5 + $0x87] sm:$0xff]
      %v5679 = vld [vmem:[#allocation5 + $0x8f] sm:$0xff]
      %v5680 = vld [vmem:[#allocation5 + $0x97] sm:$0xff]
      %v5681 = vld [vmem:[#allocation5 + $0x9f] sm:$0xff]
      %v5682 = vld [vmem:[#allocation5 + $0xa7] sm:$0xff]
      %v5683 = vld [vmem:[#allocation5 + $0xaf] sm:$0xff]
      %v5684 = vld [vmem:[#allocation5 + $0xb7] sm:$0xff]
      %v5685 = vld [vmem:[#allocation5 + $0xbf] sm:$0xff]
      %v5686 = vld [vmem:[#allocation5 + $0xc7] sm:$0xff]
      %v5687 = vld [vmem:[#allocation5 + $0xcf] sm:$0xff]
      %v5688 = vld [vmem:[#allocation5 + $0xd7] sm:$0xff]
      %v5689 = vld [vmem:[#allocation5 + $0xdf] sm:$0xff]
      %v5690 = vld [vmem:[#allocation5 + $0xe7] sm:$0xff]
      %v5691 = vld [vmem:[#allocation5 + $0xef] sm:$0xff]
      %v5692 = vld [vmem:[#allocation5 + $0xf7] sm:$0xff]
      %v5693 = vld [vmem:[#allocation5 + $0xff] sm:$0xff]
      %v5694 = vld [vmem:[#allocation5 + $0x107] sm:$0xff]
      %v5695 = vld [vmem:[#allocation5 + $0x10f] sm:$0xff]
      %5696 = vrot.lane.b32.xlu0 %v5664, 16
      %v5697 = vpop.permute.xlu0 %5696
      %5698 = vrot.lane.b32.xlu0 %v5665, 16
      %v5699 = vpop.permute.xlu0 %5698
      %5700 = vrot.lane.b32.xlu0 %v5666, 16
      %v5701 = vpop.permute.xlu0 %5700
      %5702 = vrot.lane.b32.xlu0 %v5667, 16
      %v5703 = vpop.permute.xlu0 %5702
      %5704 = vrot.lane.b32.xlu0 %v5668, 16
      %v5705 = vpop.permute.xlu0 %5704
      %5706 = vrot.lane.b32.xlu0 %v5669, 16
      %v5707 = vpop.permute.xlu0 %5706
      %5708 = vrot.lane.b32.xlu0 %v5670, 16
      %v5709 = vpop.permute.xlu0 %5708
      %5710 = vrot.lane.b32.xlu0 %v5671, 16
      %v5711 = vpop.permute.xlu0 %5710
      %5712 = vrot.lane.b32.xlu0 %v5672, 16
      %v5713 = vpop.permute.xlu0 %5712
      %5714 = vrot.lane.b32.xlu0 %v5673, 16
      %v5715 = vpop.permute.xlu0 %5714
      %5716 = vrot.lane.b32.xlu0 %v5674, 16
      %v5717 = vpop.permute.xlu0 %5716
      %5718 = vrot.lane.b32.xlu0 %v5675, 16
      %v5719 = vpop.permute.xlu0 %5718
      %5720 = vrot.lane.b32.xlu0 %v5676, 16
      %v5721 = vpop.permute.xlu0 %5720
      %5722 = vrot.lane.b32.xlu0 %v5677, 16
      %v5723 = vpop.permute.xlu0 %5722
      %5724 = vrot.lane.b32.xlu0 %v5678, 16
      %v5725 = vpop.permute.xlu0 %5724
      %5726 = vrot.lane.b32.xlu0 %v5679, 16
      %v5727 = vpop.permute.xlu0 %5726
      %5728 = vrot.lane.b32.xlu0 %v5680, 16
      %v5729 = vpop.permute.xlu0 %5728
      %5730 = vrot.lane.b32.xlu0 %v5681, 16
      %v5731 = vpop.permute.xlu0 %5730
      %5732 = vrot.lane.b32.xlu0 %v5682, 16
      %v5733 = vpop.permute.xlu0 %5732
      %5734 = vrot.lane.b32.xlu0 %v5683, 16
      %v5735 = vpop.permute.xlu0 %5734
      %5736 = vrot.lane.b32.xlu0 %v5684, 16
      %v5737 = vpop.permute.xlu0 %5736
      %5738 = vrot.lane.b32.xlu0 %v5685, 16
      %v5739 = vpop.permute.xlu0 %5738
      %5740 = vrot.lane.b32.xlu0 %v5686, 16
      %v5741 = vpop.permute.xlu0 %5740
      %5742 = vrot.lane.b32.xlu0 %v5687, 16
      %v5743 = vpop.permute.xlu0 %5742
      %5744 = vrot.lane.b32.xlu0 %v5688, 16
      %v5745 = vpop.permute.xlu0 %5744
      %5746 = vrot.lane.b32.xlu0 %v5689, 16
      %v5747 = vpop.permute.xlu0 %5746
      %5748 = vrot.lane.b32.xlu0 %v5690, 16
      %v5749 = vpop.permute.xlu0 %5748
      %5750 = vrot.lane.b32.xlu0 %v5691, 16
      %v5751 = vpop.permute.xlu0 %5750
      %5752 = vrot.lane.b32.xlu0 %v5692, 16
      %v5753 = vpop.permute.xlu0 %5752
      %5754 = vrot.lane.b32.xlu0 %v5693, 16
      %v5755 = vpop.permute.xlu0 %5754
      %5756 = vrot.lane.b32.xlu0 %v5694, 16
      %v5757 = vpop.permute.xlu0 %5756
      %5758 = vrot.lane.b32.xlu0 %v5695, 16
      %v5759 = vpop.permute.xlu0 %5758
      %v5760 = vadd.f32 %v5632, %v5697
      %v5761 = vadd.f32 %v5633, %v5699
      %v5762 = vadd.f32 %v5634, %v5701
      %v5763 = vadd.f32 %v5635, %v5703
      %v5764 = vadd.f32 %v5636, %v5705
      %v5765 = vadd.f32 %v5637, %v5707
      %v5766 = vadd.f32 %v5638, %v5709
      %v5767 = vadd.f32 %v5639, %v5711
      %v5768 = vadd.f32 %v5640, %v5713
      %v5769 = vadd.f32 %v5641, %v5715
      %v5770 = vadd.f32 %v5642, %v5717
      %v5771 = vadd.f32 %v5643, %v5719
      %v5772 = vadd.f32 %v5644, %v5721
      %v5773 = vadd.f32 %v5645, %v5723
      %v5774 = vadd.f32 %v5646, %v5725
      %v5775 = vadd.f32 %v5647, %v5727
      %v5776 = vadd.f32 %v5648, %v5729
      %v5777 = vadd.f32 %v5649, %v5731
      %v5778 = vadd.f32 %v5650, %v5733
      %v5779 = vadd.f32 %v5651, %v5735
      %v5780 = vadd.f32 %v5652, %v5737
      %v5781 = vadd.f32 %v5653, %v5739
      %v5782 = vadd.f32 %v5654, %v5741
      %v5783 = vadd.f32 %v5655, %v5743
      %v5784 = vadd.f32 %v5656, %v5745
      %v5785 = vadd.f32 %v5657, %v5747
      %v5786 = vadd.f32 %v5658, %v5749
      %v5787 = vadd.f32 %v5659, %v5751
      %v5788 = vadd.f32 %v5660, %v5753
      %v5789 = vadd.f32 %v5661, %v5755
      %v5790 = vadd.f32 %v5662, %v5757
      %v5791 = vadd.f32 %v5663, %v5759
      %v5792 = vld [vmem:[#allocation5 + $0x117] sm:$0xff]
      %v5793 = vld [vmem:[#allocation5 + $0x11f] sm:$0xff]
      %5794 = vrot.lane.b32.xlu0 %v5666, 24
      %v5795 = vpop.permute.xlu0 %5794
      %5796 = vrot.lane.b32.xlu0 %v5667, 24
      %v5797 = vpop.permute.xlu0 %5796
      %5798 = vrot.lane.b32.xlu0 %v5668, 24
      %v5799 = vpop.permute.xlu0 %5798
      %5800 = vrot.lane.b32.xlu0 %v5669, 24
      %v5801 = vpop.permute.xlu0 %5800
      %5802 = vrot.lane.b32.xlu0 %v5670, 24
      %v5803 = vpop.permute.xlu0 %5802
      %5804 = vrot.lane.b32.xlu0 %v5671, 24
      %v5805 = vpop.permute.xlu0 %5804
      %5806 = vrot.lane.b32.xlu0 %v5672, 24
      %v5807 = vpop.permute.xlu0 %5806
      %5808 = vrot.lane.b32.xlu0 %v5673, 24
      %v5809 = vpop.permute.xlu0 %5808
      %5810 = vrot.lane.b32.xlu0 %v5674, 24
      %v5811 = vpop.permute.xlu0 %5810
      %5812 = vrot.lane.b32.xlu0 %v5675, 24
      %v5813 = vpop.permute.xlu0 %5812
      %5814 = vrot.lane.b32.xlu0 %v5676, 24
      %v5815 = vpop.permute.xlu0 %5814
      %5816 = vrot.lane.b32.xlu0 %v5677, 24
      %v5817 = vpop.permute.xlu0 %5816
      %5818 = vrot.lane.b32.xlu0 %v5678, 24
      %v5819 = vpop.permute.xlu0 %5818
      %5820 = vrot.lane.b32.xlu0 %v5679, 24
      %v5821 = vpop.permute.xlu0 %5820
      %5822 = vrot.lane.b32.xlu0 %v5680, 24
      %v5823 = vpop.permute.xlu0 %5822
      %5824 = vrot.lane.b32.xlu0 %v5681, 24
      %v5825 = vpop.permute.xlu0 %5824
      %5826 = vrot.lane.b32.xlu0 %v5682, 24
      %v5827 = vpop.permute.xlu0 %5826
      %5828 = vrot.lane.b32.xlu0 %v5683, 24
      %v5829 = vpop.permute.xlu0 %5828
      %5830 = vrot.lane.b32.xlu0 %v5684, 24
      %v5831 = vpop.permute.xlu0 %5830
      %5832 = vrot.lane.b32.xlu0 %v5685, 24
      %v5833 = vpop.permute.xlu0 %5832
      %5834 = vrot.lane.b32.xlu0 %v5686, 24
      %v5835 = vpop.permute.xlu0 %5834
      %5836 = vrot.lane.b32.xlu0 %v5687, 24
      %v5837 = vpop.permute.xlu0 %5836
      %5838 = vrot.lane.b32.xlu0 %v5688, 24
      %v5839 = vpop.permute.xlu0 %5838
      %5840 = vrot.lane.b32.xlu0 %v5689, 24
      %v5841 = vpop.permute.xlu0 %5840
      %5842 = vrot.lane.b32.xlu0 %v5690, 24
      %v5843 = vpop.permute.xlu0 %5842
      %5844 = vrot.lane.b32.xlu0 %v5691, 24
      %v5845 = vpop.permute.xlu0 %5844
      %5846 = vrot.lane.b32.xlu0 %v5692, 24
      %v5847 = vpop.permute.xlu0 %5846
      %5848 = vrot.lane.b32.xlu0 %v5693, 24
      %v5849 = vpop.permute.xlu0 %5848
      %5850 = vrot.lane.b32.xlu0 %v5694, 24
      %v5851 = vpop.permute.xlu0 %5850
      %5852 = vrot.lane.b32.xlu0 %v5695, 24
      %v5853 = vpop.permute.xlu0 %5852
      %5854 = vrot.lane.b32.xlu0 %v5792, 24
      %v5855 = vpop.permute.xlu0 %5854
      %5856 = vrot.lane.b32.xlu0 %v5793, 24
      %v5857 = vpop.permute.xlu0 %5856
      %v5858 = vadd.f32 %v5760, %v5795
      %v5859 = vadd.f32 %v5761, %v5797
      %v5860 = vadd.f32 %v5762, %v5799
      %v5861 = vadd.f32 %v5763, %v5801
      %v5862 = vadd.f32 %v5764, %v5803
      %v5863 = vadd.f32 %v5765, %v5805
      %v5864 = vadd.f32 %v5766, %v5807
      %v5865 = vadd.f32 %v5767, %v5809
      %v5866 = vadd.f32 %v5768, %v5811
      %v5867 = vadd.f32 %v5769, %v5813
      %v5868 = vadd.f32 %v5770, %v5815
      %v5869 = vadd.f32 %v5771, %v5817
      %v5870 = vadd.f32 %v5772, %v5819
      %v5871 = vadd.f32 %v5773, %v5821
      %v5872 = vadd.f32 %v5774, %v5823
      %v5873 = vadd.f32 %v5775, %v5825
      %v5874 = vadd.f32 %v5776, %v5827
      %v5875 = vadd.f32 %v5777, %v5829
      %v5876 = vadd.f32 %v5778, %v5831
      %v5877 = vadd.f32 %v5779, %v5833
      %v5878 = vadd.f32 %v5780, %v5835
      %v5879 = vadd.f32 %v5781, %v5837
      %v5880 = vadd.f32 %v5782, %v5839
      %v5881 = vadd.f32 %v5783, %v5841
      %v5882 = vadd.f32 %v5784, %v5843
      %v5883 = vadd.f32 %v5785, %v5845
      %v5884 = vadd.f32 %v5786, %v5847
      %v5885 = vadd.f32 %v5787, %v5849
      %v5886 = vadd.f32 %v5788, %v5851
      %v5887 = vadd.f32 %v5789, %v5853
      %v5888 = vadd.f32 %v5790, %v5855
      %v5889 = vadd.f32 %v5791, %v5857
      %v5890 = vld [vmem:[#allocation5 + $0x28] sm:$0xff]
      %v5891 = vld [vmem:[#allocation5 + $0x30] sm:$0xff]
      %v5892 = vld [vmem:[#allocation5 + $0x38] sm:$0xff]
      %v5893 = vld [vmem:[#allocation5 + $0x40] sm:$0xff]
      %v5894 = vld [vmem:[#allocation5 + $0x48] sm:$0xff]
      %v5895 = vld [vmem:[#allocation5 + $0x50] sm:$0xff]
      %v5896 = vld [vmem:[#allocation5 + $0x58] sm:$0xff]
      %v5897 = vld [vmem:[#allocation5 + $0x60] sm:$0xff]
      %v5898 = vld [vmem:[#allocation5 + $0x68] sm:$0xff]
      %v5899 = vld [vmem:[#allocation5 + $0x70] sm:$0xff]
      %v5900 = vld [vmem:[#allocation5 + $0x78] sm:$0xff]
      %v5901 = vld [vmem:[#allocation5 + $0x80] sm:$0xff]
      %v5902 = vld [vmem:[#allocation5 + $0x88] sm:$0xff]
      %v5903 = vld [vmem:[#allocation5 + $0x90] sm:$0xff]
      %v5904 = vld [vmem:[#allocation5 + $0x98] sm:$0xff]
      %v5905 = vld [vmem:[#allocation5 + $0xa0] sm:$0xff]
      %v5906 = vld [vmem:[#allocation5 + $0xa8] sm:$0xff]
      %v5907 = vld [vmem:[#allocation5 + $0xb0] sm:$0xff]
      %v5908 = vld [vmem:[#allocation5 + $0xb8] sm:$0xff]
      %v5909 = vld [vmem:[#allocation5 + $0xc0] sm:$0xff]
      %v5910 = vld [vmem:[#allocation5 + $0xc8] sm:$0xff]
      %v5911 = vld [vmem:[#allocation5 + $0xd0] sm:$0xff]
      %v5912 = vld [vmem:[#allocation5 + $0xd8] sm:$0xff]
      %v5913 = vld [vmem:[#allocation5 + $0xe0] sm:$0xff]
      %v5914 = vld [vmem:[#allocation5 + $0xe8] sm:$0xff]
      %v5915 = vld [vmem:[#allocation5 + $0xf0] sm:$0xff]
      %v5916 = vld [vmem:[#allocation5 + $0xf8] sm:$0xff]
      %v5917 = vld [vmem:[#allocation5 + $0x100] sm:$0xff]
      %v5918 = vld [vmem:[#allocation5 + $0x108] sm:$0xff]
      %v5919 = vld [vmem:[#allocation5 + $0x110] sm:$0xff]
      %v5920 = vld [vmem:[#allocation5 + $0x118] sm:$0xff]
      %v5921 = vld [vmem:[#allocation5 + $0x120] sm:$0xff]
      %5922 = vrot.lane.b32.xlu0 %v5890, 32
      %v5923 = vpop.permute.xlu0 %5922
      %5924 = vrot.lane.b32.xlu0 %v5891, 32
      %v5925 = vpop.permute.xlu0 %5924
      %5926 = vrot.lane.b32.xlu0 %v5892, 32
      %v5927 = vpop.permute.xlu0 %5926
      %5928 = vrot.lane.b32.xlu0 %v5893, 32
      %v5929 = vpop.permute.xlu0 %5928
      %5930 = vrot.lane.b32.xlu0 %v5894, 32
      %v5931 = vpop.permute.xlu0 %5930
      %5932 = vrot.lane.b32.xlu0 %v5895, 32
      %v5933 = vpop.permute.xlu0 %5932
      %5934 = vrot.lane.b32.xlu0 %v5896, 32
      %v5935 = vpop.permute.xlu0 %5934
      %5936 = vrot.lane.b32.xlu0 %v5897, 32
      %v5937 = vpop.permute.xlu0 %5936
      %5938 = vrot.lane.b32.xlu0 %v5898, 32
      %v5939 = vpop.permute.xlu0 %5938
      %5940 = vrot.lane.b32.xlu0 %v5899, 32
      %v5941 = vpop.permute.xlu0 %5940
      %5942 = vrot.lane.b32.xlu0 %v5900, 32
      %v5943 = vpop.permute.xlu0 %5942
      %5944 = vrot.lane.b32.xlu0 %v5901, 32
      %v5945 = vpop.permute.xlu0 %5944
      %5946 = vrot.lane.b32.xlu0 %v5902, 32
      %v5947 = vpop.permute.xlu0 %5946
      %5948 = vrot.lane.b32.xlu0 %v5903, 32
      %v5949 = vpop.permute.xlu0 %5948
      %5950 = vrot.lane.b32.xlu0 %v5904, 32
      %v5951 = vpop.permute.xlu0 %5950
      %5952 = vrot.lane.b32.xlu0 %v5905, 32
      %v5953 = vpop.permute.xlu0 %5952
      %5954 = vrot.lane.b32.xlu0 %v5906, 32
      %v5955 = vpop.permute.xlu0 %5954
      %5956 = vrot.lane.b32.xlu0 %v5907, 32
      %v5957 = vpop.permute.xlu0 %5956
      %5958 = vrot.lane.b32.xlu0 %v5908, 32
      %v5959 = vpop.permute.xlu0 %5958
      %5960 = vrot.lane.b32.xlu0 %v5909, 32
      %v5961 = vpop.permute.xlu0 %5960
      %5962 = vrot.lane.b32.xlu0 %v5910, 32
      %v5963 = vpop.permute.xlu0 %5962
      %5964 = vrot.lane.b32.xlu0 %v5911, 32
      %v5965 = vpop.permute.xlu0 %5964
      %5966 = vrot.lane.b32.xlu0 %v5912, 32
      %v5967 = vpop.permute.xlu0 %5966
      %5968 = vrot.lane.b32.xlu0 %v5913, 32
      %v5969 = vpop.permute.xlu0 %5968
      %5970 = vrot.lane.b32.xlu0 %v5914, 32
      %v5971 = vpop.permute.xlu0 %5970
      %5972 = vrot.lane.b32.xlu0 %v5915, 32
      %v5973 = vpop.permute.xlu0 %5972
      %5974 = vrot.lane.b32.xlu0 %v5916, 32
      %v5975 = vpop.permute.xlu0 %5974
      %5976 = vrot.lane.b32.xlu0 %v5917, 32
      %v5977 = vpop.permute.xlu0 %5976
      %5978 = vrot.lane.b32.xlu0 %v5918, 32
      %v5979 = vpop.permute.xlu0 %5978
      %5980 = vrot.lane.b32.xlu0 %v5919, 32
      %v5981 = vpop.permute.xlu0 %5980
      %5982 = vrot.lane.b32.xlu0 %v5920, 32
      %v5983 = vpop.permute.xlu0 %5982
      %5984 = vrot.lane.b32.xlu0 %v5921, 32
      %v5985 = vpop.permute.xlu0 %5984
      %v5986 = vadd.f32 %v5858, %v5923
      %v5987 = vadd.f32 %v5859, %v5925
      %v5988 = vadd.f32 %v5860, %v5927
      %v5989 = vadd.f32 %v5861, %v5929
      %v5990 = vadd.f32 %v5862, %v5931
      %v5991 = vadd.f32 %v5863, %v5933
      %v5992 = vadd.f32 %v5864, %v5935
      %v5993 = vadd.f32 %v5865, %v5937
      %v5994 = vadd.f32 %v5866, %v5939
      %v5995 = vadd.f32 %v5867, %v5941
      %v5996 = vadd.f32 %v5868, %v5943
      %v5997 = vadd.f32 %v5869, %v5945
      %v5998 = vadd.f32 %v5870, %v5947
      %v5999 = vadd.f32 %v5871, %v5949
      %v6000 = vadd.f32 %v5872, %v5951
      %v6001 = vadd.f32 %v5873, %v5953
      %v6002 = vadd.f32 %v5874, %v5955
      %v6003 = vadd.f32 %v5875, %v5957
      %v6004 = vadd.f32 %v5876, %v5959
      %v6005 = vadd.f32 %v5877, %v5961
      %v6006 = vadd.f32 %v5878, %v5963
      %v6007 = vadd.f32 %v5879, %v5965
      %v6008 = vadd.f32 %v5880, %v5967
      %v6009 = vadd.f32 %v5881, %v5969
      %v6010 = vadd.f32 %v5882, %v5971
      %v6011 = vadd.f32 %v5883, %v5973
      %v6012 = vadd.f32 %v5884, %v5975
      %v6013 = vadd.f32 %v5885, %v5977
      %v6014 = vadd.f32 %v5886, %v5979
      %v6015 = vadd.f32 %v5887, %v5981
      %v6016 = vadd.f32 %v5888, %v5983
      %v6017 = vadd.f32 %v5889, %v5985
      %v6018 = vld [vmem:[#allocation5 + $0x29] sm:$0xff]
      %v6019 = vld [vmem:[#allocation5 + $0x31] sm:$0xff]
      %v6020 = vld [vmem:[#allocation5 + $0x39] sm:$0xff]
      %v6021 = vld [vmem:[#allocation5 + $0x41] sm:$0xff]
      %v6022 = vld [vmem:[#allocation5 + $0x49] sm:$0xff]
      %v6023 = vld [vmem:[#allocation5 + $0x51] sm:$0xff]
      %v6024 = vld [vmem:[#allocation5 + $0x59] sm:$0xff]
      %v6025 = vld [vmem:[#allocation5 + $0x61] sm:$0xff]
      %v6026 = vld [vmem:[#allocation5 + $0x69] sm:$0xff]
      %v6027 = vld [vmem:[#allocation5 + $0x71] sm:$0xff]
      %v6028 = vld [vmem:[#allocation5 + $0x79] sm:$0xff]
      %v6029 = vld [vmem:[#allocation5 + $0x81] sm:$0xff]
      %v6030 = vld [vmem:[#allocation5 + $0x89] sm:$0xff]
      %v6031 = vld [vmem:[#allocation5 + $0x91] sm:$0xff]
      %v6032 = vld [vmem:[#allocation5 + $0x99] sm:$0xff]
      %v6033 = vld [vmem:[#allocation5 + $0xa1] sm:$0xff]
      %v6034 = vld [vmem:[#allocation5 + $0xa9] sm:$0xff]
      %v6035 = vld [vmem:[#allocation5 + $0xb1] sm:$0xff]
      %v6036 = vld [vmem:[#allocation5 + $0xb9] sm:$0xff]
      %v6037 = vld [vmem:[#allocation5 + $0xc1] sm:$0xff]
      %v6038 = vld [vmem:[#allocation5 + $0xc9] sm:$0xff]
      %v6039 = vld [vmem:[#allocation5 + $0xd1] sm:$0xff]
      %v6040 = vld [vmem:[#allocation5 + $0xd9] sm:$0xff]
      %v6041 = vld [vmem:[#allocation5 + $0xe1] sm:$0xff]
      %v6042 = vld [vmem:[#allocation5 + $0xe9] sm:$0xff]
      %v6043 = vld [vmem:[#allocation5 + $0xf1] sm:$0xff]
      %v6044 = vld [vmem:[#allocation5 + $0xf9] sm:$0xff]
      %v6045 = vld [vmem:[#allocation5 + $0x101] sm:$0xff]
      %v6046 = vld [vmem:[#allocation5 + $0x109] sm:$0xff]
      %v6047 = vld [vmem:[#allocation5 + $0x111] sm:$0xff]
      %v6048 = vld [vmem:[#allocation5 + $0x119] sm:$0xff]
      %v6049 = vld [vmem:[#allocation5 + $0x121] sm:$0xff]
      %6050 = vrot.lane.b32.xlu0 %v6018, 40
      %v6051 = vpop.permute.xlu0 %6050
      %6052 = vrot.lane.b32.xlu0 %v6019, 40
      %v6053 = vpop.permute.xlu0 %6052
      %6054 = vrot.lane.b32.xlu0 %v6020, 40
      %v6055 = vpop.permute.xlu0 %6054
      %6056 = vrot.lane.b32.xlu0 %v6021, 40
      %v6057 = vpop.permute.xlu0 %6056
      %6058 = vrot.lane.b32.xlu0 %v6022, 40
      %v6059 = vpop.permute.xlu0 %6058
      %6060 = vrot.lane.b32.xlu0 %v6023, 40
      %v6061 = vpop.permute.xlu0 %6060
      %6062 = vrot.lane.b32.xlu0 %v6024, 40
      %v6063 = vpop.permute.xlu0 %6062
      %6064 = vrot.lane.b32.xlu0 %v6025, 40
      %v6065 = vpop.permute.xlu0 %6064
      %6066 = vrot.lane.b32.xlu0 %v6026, 40
      %v6067 = vpop.permute.xlu0 %6066
      %6068 = vrot.lane.b32.xlu0 %v6027, 40
      %v6069 = vpop.permute.xlu0 %6068
      %6070 = vrot.lane.b32.xlu0 %v6028, 40
      %v6071 = vpop.permute.xlu0 %6070
      %6072 = vrot.lane.b32.xlu0 %v6029, 40
      %v6073 = vpop.permute.xlu0 %6072
      %6074 = vrot.lane.b32.xlu0 %v6030, 40
      %v6075 = vpop.permute.xlu0 %6074
      %6076 = vrot.lane.b32.xlu0 %v6031, 40
      %v6077 = vpop.permute.xlu0 %6076
      %6078 = vrot.lane.b32.xlu0 %v6032, 40
      %v6079 = vpop.permute.xlu0 %6078
      %6080 = vrot.lane.b32.xlu0 %v6033, 40
      %v6081 = vpop.permute.xlu0 %6080
      %6082 = vrot.lane.b32.xlu0 %v6034, 40
      %v6083 = vpop.permute.xlu0 %6082
      %6084 = vrot.lane.b32.xlu0 %v6035, 40
      %v6085 = vpop.permute.xlu0 %6084
      %6086 = vrot.lane.b32.xlu0 %v6036, 40
      %v6087 = vpop.permute.xlu0 %6086
      %6088 = vrot.lane.b32.xlu0 %v6037, 40
      %v6089 = vpop.permute.xlu0 %6088
      %6090 = vrot.lane.b32.xlu0 %v6038, 40
      %v6091 = vpop.permute.xlu0 %6090
      %6092 = vrot.lane.b32.xlu0 %v6039, 40
      %v6093 = vpop.permute.xlu0 %6092
      %6094 = vrot.lane.b32.xlu0 %v6040, 40
      %v6095 = vpop.permute.xlu0 %6094
      %6096 = vrot.lane.b32.xlu0 %v6041, 40
      %v6097 = vpop.permute.xlu0 %6096
      %6098 = vrot.lane.b32.xlu0 %v6042, 40
      %v6099 = vpop.permute.xlu0 %6098
      %6100 = vrot.lane.b32.xlu0 %v6043, 40
      %v6101 = vpop.permute.xlu0 %6100
      %6102 = vrot.lane.b32.xlu0 %v6044, 40
      %v6103 = vpop.permute.xlu0 %6102
      %6104 = vrot.lane.b32.xlu0 %v6045, 40
      %v6105 = vpop.permute.xlu0 %6104
      %6106 = vrot.lane.b32.xlu0 %v6046, 40
      %v6107 = vpop.permute.xlu0 %6106
      %6108 = vrot.lane.b32.xlu0 %v6047, 40
      %v6109 = vpop.permute.xlu0 %6108
      %6110 = vrot.lane.b32.xlu0 %v6048, 40
      %v6111 = vpop.permute.xlu0 %6110
      %6112 = vrot.lane.b32.xlu0 %v6049, 40
      %v6113 = vpop.permute.xlu0 %6112
      %v6114 = vadd.f32 %v5986, %v6051
      %v6115 = vadd.f32 %v5987, %v6053
      %v6116 = vadd.f32 %v5988, %v6055
      %v6117 = vadd.f32 %v5989, %v6057
      %v6118 = vadd.f32 %v5990, %v6059
      %v6119 = vadd.f32 %v5991, %v6061
      %v6120 = vadd.f32 %v5992, %v6063
      %v6121 = vadd.f32 %v5993, %v6065
      %v6122 = vadd.f32 %v5994, %v6067
      %v6123 = vadd.f32 %v5995, %v6069
      %v6124 = vadd.f32 %v5996, %v6071
      %v6125 = vadd.f32 %v5997, %v6073
      %v6126 = vadd.f32 %v5998, %v6075
      %v6127 = vadd.f32 %v5999, %v6077
      %v6128 = vadd.f32 %v6000, %v6079
      %v6129 = vadd.f32 %v6001, %v6081
      %v6130 = vadd.f32 %v6002, %v6083
      %v6131 = vadd.f32 %v6003, %v6085
      %v6132 = vadd.f32 %v6004, %v6087
      %v6133 = vadd.f32 %v6005, %v6089
      %v6134 = vadd.f32 %v6006, %v6091
      %v6135 = vadd.f32 %v6007, %v6093
      %v6136 = vadd.f32 %v6008, %v6095
      %v6137 = vadd.f32 %v6009, %v6097
      %v6138 = vadd.f32 %v6010, %v6099
      %v6139 = vadd.f32 %v6011, %v6101
      %v6140 = vadd.f32 %v6012, %v6103
      %v6141 = vadd.f32 %v6013, %v6105
      %v6142 = vadd.f32 %v6014, %v6107
      %v6143 = vadd.f32 %v6015, %v6109
      %v6144 = vadd.f32 %v6016, %v6111
      %v6145 = vadd.f32 %v6017, %v6113
      %v6146 = vld [vmem:[#allocation5 + $0x129] sm:$0xff]
      %v6147 = vld [vmem:[#allocation5 + $0x131] sm:$0xff]
      %6148 = vrot.lane.b32.xlu0 %v6020, 48
      %v6149 = vpop.permute.xlu0 %6148
      %6150 = vrot.lane.b32.xlu0 %v6021, 48
      %v6151 = vpop.permute.xlu0 %6150
      %6152 = vrot.lane.b32.xlu0 %v6022, 48
      %v6153 = vpop.permute.xlu0 %6152
      %6154 = vrot.lane.b32.xlu0 %v6023, 48
      %v6155 = vpop.permute.xlu0 %6154
      %6156 = vrot.lane.b32.xlu0 %v6024, 48
      %v6157 = vpop.permute.xlu0 %6156
      %6158 = vrot.lane.b32.xlu0 %v6025, 48
      %v6159 = vpop.permute.xlu0 %6158
      %6160 = vrot.lane.b32.xlu0 %v6026, 48
      %v6161 = vpop.permute.xlu0 %6160
      %6162 = vrot.lane.b32.xlu0 %v6027, 48
      %v6163 = vpop.permute.xlu0 %6162
      %6164 = vrot.lane.b32.xlu0 %v6028, 48
      %v6165 = vpop.permute.xlu0 %6164
      %6166 = vrot.lane.b32.xlu0 %v6029, 48
      %v6167 = vpop.permute.xlu0 %6166
      %6168 = vrot.lane.b32.xlu0 %v6030, 48
      %v6169 = vpop.permute.xlu0 %6168
      %6170 = vrot.lane.b32.xlu0 %v6031, 48
      %v6171 = vpop.permute.xlu0 %6170
      %6172 = vrot.lane.b32.xlu0 %v6032, 48
      %v6173 = vpop.permute.xlu0 %6172
      %6174 = vrot.lane.b32.xlu0 %v6033, 48
      %v6175 = vpop.permute.xlu0 %6174
      %6176 = vrot.lane.b32.xlu0 %v6034, 48
      %v6177 = vpop.permute.xlu0 %6176
      %6178 = vrot.lane.b32.xlu0 %v6035, 48
      %v6179 = vpop.permute.xlu0 %6178
      %6180 = vrot.lane.b32.xlu0 %v6036, 48
      %v6181 = vpop.permute.xlu0 %6180
      %6182 = vrot.lane.b32.xlu0 %v6037, 48
      %v6183 = vpop.permute.xlu0 %6182
      %6184 = vrot.lane.b32.xlu0 %v6038, 48
      %v6185 = vpop.permute.xlu0 %6184
      %6186 = vrot.lane.b32.xlu0 %v6039, 48
      %v6187 = vpop.permute.xlu0 %6186
      %6188 = vrot.lane.b32.xlu0 %v6040, 48
      %v6189 = vpop.permute.xlu0 %6188
      %6190 = vrot.lane.b32.xlu0 %v6041, 48
      %v6191 = vpop.permute.xlu0 %6190
      %6192 = vrot.lane.b32.xlu0 %v6042, 48
      %v6193 = vpop.permute.xlu0 %6192
      %6194 = vrot.lane.b32.xlu0 %v6043, 48
      %v6195 = vpop.permute.xlu0 %6194
      %6196 = vrot.lane.b32.xlu0 %v6044, 48
      %v6197 = vpop.permute.xlu0 %6196
      %6198 = vrot.lane.b32.xlu0 %v6045, 48
      %v6199 = vpop.permute.xlu0 %6198
      %6200 = vrot.lane.b32.xlu0 %v6046, 48
      %v6201 = vpop.permute.xlu0 %6200
      %6202 = vrot.lane.b32.xlu0 %v6047, 48
      %v6203 = vpop.permute.xlu0 %6202
      %6204 = vrot.lane.b32.xlu0 %v6048, 48
      %v6205 = vpop.permute.xlu0 %6204
      %6206 = vrot.lane.b32.xlu0 %v6049, 48
      %v6207 = vpop.permute.xlu0 %6206
      %6208 = vrot.lane.b32.xlu0 %v6146, 48
      %v6209 = vpop.permute.xlu0 %6208
      %6210 = vrot.lane.b32.xlu0 %v6147, 48
      %v6211 = vpop.permute.xlu0 %6210
      %v6212 = vadd.f32 %v6114, %v6149
      %v6213 = vadd.f32 %v6115, %v6151
      %v6214 = vadd.f32 %v6116, %v6153
      %v6215 = vadd.f32 %v6117, %v6155
      %v6216 = vadd.f32 %v6118, %v6157
      %v6217 = vadd.f32 %v6119, %v6159
      %v6218 = vadd.f32 %v6120, %v6161
      %v6219 = vadd.f32 %v6121, %v6163
      %v6220 = vadd.f32 %v6122, %v6165
      %v6221 = vadd.f32 %v6123, %v6167
      %v6222 = vadd.f32 %v6124, %v6169
      %v6223 = vadd.f32 %v6125, %v6171
      %v6224 = vadd.f32 %v6126, %v6173
      %v6225 = vadd.f32 %v6127, %v6175
      %v6226 = vadd.f32 %v6128, %v6177
      %v6227 = vadd.f32 %v6129, %v6179
      %v6228 = vadd.f32 %v6130, %v6181
      %v6229 = vadd.f32 %v6131, %v6183
      %v6230 = vadd.f32 %v6132, %v6185
      %v6231 = vadd.f32 %v6133, %v6187
      %v6232 = vadd.f32 %v6134, %v6189
      %v6233 = vadd.f32 %v6135, %v6191
      %v6234 = vadd.f32 %v6136, %v6193
      %v6235 = vadd.f32 %v6137, %v6195
      %v6236 = vadd.f32 %v6138, %v6197
      %v6237 = vadd.f32 %v6139, %v6199
      %v6238 = vadd.f32 %v6140, %v6201
      %v6239 = vadd.f32 %v6141, %v6203
      %v6240 = vadd.f32 %v6142, %v6205
      %v6241 = vadd.f32 %v6143, %v6207
      %v6242 = vadd.f32 %v6144, %v6209
      %v6243 = vadd.f32 %v6145, %v6211
      %v6244 = vld [vmem:[#allocation5 + $0x3a] sm:$0xff]
      %v6245 = vld [vmem:[#allocation5 + $0x42] sm:$0xff]
      %v6246 = vld [vmem:[#allocation5 + $0x4a] sm:$0xff]
      %v6247 = vld [vmem:[#allocation5 + $0x52] sm:$0xff]
      %v6248 = vld [vmem:[#allocation5 + $0x5a] sm:$0xff]
      %v6249 = vld [vmem:[#allocation5 + $0x62] sm:$0xff]
      %v6250 = vld [vmem:[#allocation5 + $0x6a] sm:$0xff]
      %v6251 = vld [vmem:[#allocation5 + $0x72] sm:$0xff]
      %v6252 = vld [vmem:[#allocation5 + $0x7a] sm:$0xff]
      %v6253 = vld [vmem:[#allocation5 + $0x82] sm:$0xff]
      %v6254 = vld [vmem:[#allocation5 + $0x8a] sm:$0xff]
      %v6255 = vld [vmem:[#allocation5 + $0x92] sm:$0xff]
      %v6256 = vld [vmem:[#allocation5 + $0x9a] sm:$0xff]
      %v6257 = vld [vmem:[#allocation5 + $0xa2] sm:$0xff]
      %v6258 = vld [vmem:[#allocation5 + $0xaa] sm:$0xff]
      %v6259 = vld [vmem:[#allocation5 + $0xb2] sm:$0xff]
      %v6260 = vld [vmem:[#allocation5 + $0xba] sm:$0xff]
      %v6261 = vld [vmem:[#allocation5 + $0xc2] sm:$0xff]
      %v6262 = vld [vmem:[#allocation5 + $0xca] sm:$0xff]
      %v6263 = vld [vmem:[#allocation5 + $0xd2] sm:$0xff]
      %v6264 = vld [vmem:[#allocation5 + $0xda] sm:$0xff]
      %v6265 = vld [vmem:[#allocation5 + $0xe2] sm:$0xff]
      %v6266 = vld [vmem:[#allocation5 + $0xea] sm:$0xff]
      %v6267 = vld [vmem:[#allocation5 + $0xf2] sm:$0xff]
      %v6268 = vld [vmem:[#allocation5 + $0xfa] sm:$0xff]
      %v6269 = vld [vmem:[#allocation5 + $0x102] sm:$0xff]
      %v6270 = vld [vmem:[#allocation5 + $0x10a] sm:$0xff]
      %v6271 = vld [vmem:[#allocation5 + $0x112] sm:$0xff]
      %v6272 = vld [vmem:[#allocation5 + $0x11a] sm:$0xff]
      %v6273 = vld [vmem:[#allocation5 + $0x122] sm:$0xff]
      %v6274 = vld [vmem:[#allocation5 + $0x12a] sm:$0xff]
      %v6275 = vld [vmem:[#allocation5 + $0x132] sm:$0xff]
      %6276 = vrot.lane.b32.xlu0 %v6244, 56
      %v6277 = vpop.permute.xlu0 %6276
      %6278 = vrot.lane.b32.xlu0 %v6245, 56
      %v6279 = vpop.permute.xlu0 %6278
      %6280 = vrot.lane.b32.xlu0 %v6246, 56
      %v6281 = vpop.permute.xlu0 %6280
      %6282 = vrot.lane.b32.xlu0 %v6247, 56
      %v6283 = vpop.permute.xlu0 %6282
      %6284 = vrot.lane.b32.xlu0 %v6248, 56
      %v6285 = vpop.permute.xlu0 %6284
      %6286 = vrot.lane.b32.xlu0 %v6249, 56
      %v6287 = vpop.permute.xlu0 %6286
      %6288 = vrot.lane.b32.xlu0 %v6250, 56
      %v6289 = vpop.permute.xlu0 %6288
      %6290 = vrot.lane.b32.xlu0 %v6251, 56
      %v6291 = vpop.permute.xlu0 %6290
      %6292 = vrot.lane.b32.xlu0 %v6252, 56
      %v6293 = vpop.permute.xlu0 %6292
      %6294 = vrot.lane.b32.xlu0 %v6253, 56
      %v6295 = vpop.permute.xlu0 %6294
      %6296 = vrot.lane.b32.xlu0 %v6254, 56
      %v6297 = vpop.permute.xlu0 %6296
      %6298 = vrot.lane.b32.xlu0 %v6255, 56
      %v6299 = vpop.permute.xlu0 %6298
      %6300 = vrot.lane.b32.xlu0 %v6256, 56
      %v6301 = vpop.permute.xlu0 %6300
      %6302 = vrot.lane.b32.xlu0 %v6257, 56
      %v6303 = vpop.permute.xlu0 %6302
      %6304 = vrot.lane.b32.xlu0 %v6258, 56
      %v6305 = vpop.permute.xlu0 %6304
      %6306 = vrot.lane.b32.xlu0 %v6259, 56
      %v6307 = vpop.permute.xlu0 %6306
      %6308 = vrot.lane.b32.xlu0 %v6260, 56
      %v6309 = vpop.permute.xlu0 %6308
      %6310 = vrot.lane.b32.xlu0 %v6261, 56
      %v6311 = vpop.permute.xlu0 %6310
      %6312 = vrot.lane.b32.xlu0 %v6262, 56
      %v6313 = vpop.permute.xlu0 %6312
      %6314 = vrot.lane.b32.xlu0 %v6263, 56
      %v6315 = vpop.permute.xlu0 %6314
      %6316 = vrot.lane.b32.xlu0 %v6264, 56
      %v6317 = vpop.permute.xlu0 %6316
      %6318 = vrot.lane.b32.xlu0 %v6265, 56
      %v6319 = vpop.permute.xlu0 %6318
      %6320 = vrot.lane.b32.xlu0 %v6266, 56
      %v6321 = vpop.permute.xlu0 %6320
      %6322 = vrot.lane.b32.xlu0 %v6267, 56
      %v6323 = vpop.permute.xlu0 %6322
      %6324 = vrot.lane.b32.xlu0 %v6268, 56
      %v6325 = vpop.permute.xlu0 %6324
      %6326 = vrot.lane.b32.xlu0 %v6269, 56
      %v6327 = vpop.permute.xlu0 %6326
      %6328 = vrot.lane.b32.xlu0 %v6270, 56
      %v6329 = vpop.permute.xlu0 %6328
      %6330 = vrot.lane.b32.xlu0 %v6271, 56
      %v6331 = vpop.permute.xlu0 %6330
      %6332 = vrot.lane.b32.xlu0 %v6272, 56
      %v6333 = vpop.permute.xlu0 %6332
      %6334 = vrot.lane.b32.xlu0 %v6273, 56
      %v6335 = vpop.permute.xlu0 %6334
      %6336 = vrot.lane.b32.xlu0 %v6274, 56
      %v6337 = vpop.permute.xlu0 %6336
      %6338 = vrot.lane.b32.xlu0 %v6275, 56
      %v6339 = vpop.permute.xlu0 %6338
      %v6340 = vadd.f32 %v6212, %v6277
      %v6341 = vadd.f32 %v6213, %v6279
      %v6342 = vadd.f32 %v6214, %v6281
      %v6343 = vadd.f32 %v6215, %v6283
      %v6344 = vadd.f32 %v6216, %v6285
      %v6345 = vadd.f32 %v6217, %v6287
      %v6346 = vadd.f32 %v6218, %v6289
      %v6347 = vadd.f32 %v6219, %v6291
      %v6348 = vadd.f32 %v6220, %v6293
      %v6349 = vadd.f32 %v6221, %v6295
      %v6350 = vadd.f32 %v6222, %v6297
      %v6351 = vadd.f32 %v6223, %v6299
      %v6352 = vadd.f32 %v6224, %v6301
      %v6353 = vadd.f32 %v6225, %v6303
      %v6354 = vadd.f32 %v6226, %v6305
      %v6355 = vadd.f32 %v6227, %v6307
      %v6356 = vadd.f32 %v6228, %v6309
      %v6357 = vadd.f32 %v6229, %v6311
      %v6358 = vadd.f32 %v6230, %v6313
      %v6359 = vadd.f32 %v6231, %v6315
      %v6360 = vadd.f32 %v6232, %v6317
      %v6361 = vadd.f32 %v6233, %v6319
      %v6362 = vadd.f32 %v6234, %v6321
      %v6363 = vadd.f32 %v6235, %v6323
      %v6364 = vadd.f32 %v6236, %v6325
      %v6365 = vadd.f32 %v6237, %v6327
      %v6366 = vadd.f32 %v6238, %v6329
      %v6367 = vadd.f32 %v6239, %v6331
      %v6368 = vadd.f32 %v6240, %v6333
      %v6369 = vadd.f32 %v6241, %v6335
      %v6370 = vadd.f32 %v6242, %v6337
      %v6371 = vadd.f32 %v6243, %v6339
      %v6372 = vld [vmem:[#allocation5 + $0x3b] sm:$0xff]
      %v6373 = vld [vmem:[#allocation5 + $0x43] sm:$0xff]
      %v6374 = vld [vmem:[#allocation5 + $0x4b] sm:$0xff]
      %v6375 = vld [vmem:[#allocation5 + $0x53] sm:$0xff]
      %v6376 = vld [vmem:[#allocation5 + $0x5b] sm:$0xff]
      %v6377 = vld [vmem:[#allocation5 + $0x63] sm:$0xff]
      %v6378 = vld [vmem:[#allocation5 + $0x6b] sm:$0xff]
      %v6379 = vld [vmem:[#allocation5 + $0x73] sm:$0xff]
      %v6380 = vld [vmem:[#allocation5 + $0x7b] sm:$0xff]
      %v6381 = vld [vmem:[#allocation5 + $0x83] sm:$0xff]
      %v6382 = vld [vmem:[#allocation5 + $0x8b] sm:$0xff]
      %v6383 = vld [vmem:[#allocation5 + $0x93] sm:$0xff]
      %v6384 = vld [vmem:[#allocation5 + $0x9b] sm:$0xff]
      %v6385 = vld [vmem:[#allocation5 + $0xa3] sm:$0xff]
      %v6386 = vld [vmem:[#allocation5 + $0xab] sm:$0xff]
      %v6387 = vld [vmem:[#allocation5 + $0xb3] sm:$0xff]
      %v6388 = vld [vmem:[#allocation5 + $0xbb] sm:$0xff]
      %v6389 = vld [vmem:[#allocation5 + $0xc3] sm:$0xff]
      %v6390 = vld [vmem:[#allocation5 + $0xcb] sm:$0xff]
      %v6391 = vld [vmem:[#allocation5 + $0xd3] sm:$0xff]
      %v6392 = vld [vmem:[#allocation5 + $0xdb] sm:$0xff]
      %v6393 = vld [vmem:[#allocation5 + $0xe3] sm:$0xff]
      %v6394 = vld [vmem:[#allocation5 + $0xeb] sm:$0xff]
      %v6395 = vld [vmem:[#allocation5 + $0xf3] sm:$0xff]
      %v6396 = vld [vmem:[#allocation5 + $0xfb] sm:$0xff]
      %v6397 = vld [vmem:[#allocation5 + $0x103] sm:$0xff]
      %v6398 = vld [vmem:[#allocation5 + $0x10b] sm:$0xff]
      %v6399 = vld [vmem:[#allocation5 + $0x113] sm:$0xff]
      %v6400 = vld [vmem:[#allocation5 + $0x11b] sm:$0xff]
      %v6401 = vld [vmem:[#allocation5 + $0x123] sm:$0xff]
      %v6402 = vld [vmem:[#allocation5 + $0x12b] sm:$0xff]
      %v6403 = vld [vmem:[#allocation5 + $0x133] sm:$0xff]
      %6404 = vrot.lane.b32.xlu0 %v6372, 64
      %v6405 = vpop.permute.xlu0 %6404
      %6406 = vrot.lane.b32.xlu0 %v6373, 64
      %v6407 = vpop.permute.xlu0 %6406
      %6408 = vrot.lane.b32.xlu0 %v6374, 64
      %v6409 = vpop.permute.xlu0 %6408
      %6410 = vrot.lane.b32.xlu0 %v6375, 64
      %v6411 = vpop.permute.xlu0 %6410
      %6412 = vrot.lane.b32.xlu0 %v6376, 64
      %v6413 = vpop.permute.xlu0 %6412
      %6414 = vrot.lane.b32.xlu0 %v6377, 64
      %v6415 = vpop.permute.xlu0 %6414
      %6416 = vrot.lane.b32.xlu0 %v6378, 64
      %v6417 = vpop.permute.xlu0 %6416
      %6418 = vrot.lane.b32.xlu0 %v6379, 64
      %v6419 = vpop.permute.xlu0 %6418
      %6420 = vrot.lane.b32.xlu0 %v6380, 64
      %v6421 = vpop.permute.xlu0 %6420
      %6422 = vrot.lane.b32.xlu0 %v6381, 64
      %v6423 = vpop.permute.xlu0 %6422
      %6424 = vrot.lane.b32.xlu0 %v6382, 64
      %v6425 = vpop.permute.xlu0 %6424
      %6426 = vrot.lane.b32.xlu0 %v6383, 64
      %v6427 = vpop.permute.xlu0 %6426
      %6428 = vrot.lane.b32.xlu0 %v6384, 64
      %v6429 = vpop.permute.xlu0 %6428
      %6430 = vrot.lane.b32.xlu0 %v6385, 64
      %v6431 = vpop.permute.xlu0 %6430
      %6432 = vrot.lane.b32.xlu0 %v6386, 64
      %v6433 = vpop.permute.xlu0 %6432
      %6434 = vrot.lane.b32.xlu0 %v6387, 64
      %v6435 = vpop.permute.xlu0 %6434
      %6436 = vrot.lane.b32.xlu0 %v6388, 64
      %v6437 = vpop.permute.xlu0 %6436
      %6438 = vrot.lane.b32.xlu0 %v6389, 64
      %v6439 = vpop.permute.xlu0 %6438
      %6440 = vrot.lane.b32.xlu0 %v6390, 64
      %v6441 = vpop.permute.xlu0 %6440
      %6442 = vrot.lane.b32.xlu0 %v6391, 64
      %v6443 = vpop.permute.xlu0 %6442
      %6444 = vrot.lane.b32.xlu0 %v6392, 64
      %v6445 = vpop.permute.xlu0 %6444
      %6446 = vrot.lane.b32.xlu0 %v6393, 64
      %v6447 = vpop.permute.xlu0 %6446
      %6448 = vrot.lane.b32.xlu0 %v6394, 64
      %v6449 = vpop.permute.xlu0 %6448
      %6450 = vrot.lane.b32.xlu0 %v6395, 64
      %v6451 = vpop.permute.xlu0 %6450
      %6452 = vrot.lane.b32.xlu0 %v6396, 64
      %v6453 = vpop.permute.xlu0 %6452
      %6454 = vrot.lane.b32.xlu0 %v6397, 64
      %v6455 = vpop.permute.xlu0 %6454
      %6456 = vrot.lane.b32.xlu0 %v6398, 64
      %v6457 = vpop.permute.xlu0 %6456
      %6458 = vrot.lane.b32.xlu0 %v6399, 64
      %v6459 = vpop.permute.xlu0 %6458
      %6460 = vrot.lane.b32.xlu0 %v6400, 64
      %v6461 = vpop.permute.xlu0 %6460
      %6462 = vrot.lane.b32.xlu0 %v6401, 64
      %v6463 = vpop.permute.xlu0 %6462
      %6464 = vrot.lane.b32.xlu0 %v6402, 64
      %v6465 = vpop.permute.xlu0 %6464
      %6466 = vrot.lane.b32.xlu0 %v6403, 64
      %v6467 = vpop.permute.xlu0 %6466
      %v6468 = vadd.f32 %v6340, %v6405
      %v6469 = vadd.f32 %v6341, %v6407
      %v6470 = vadd.f32 %v6342, %v6409
      %v6471 = vadd.f32 %v6343, %v6411
      %v6472 = vadd.f32 %v6344, %v6413
      %v6473 = vadd.f32 %v6345, %v6415
      %v6474 = vadd.f32 %v6346, %v6417
      %v6475 = vadd.f32 %v6347, %v6419
      %v6476 = vadd.f32 %v6348, %v6421
      %v6477 = vadd.f32 %v6349, %v6423
      %v6478 = vadd.f32 %v6350, %v6425
      %v6479 = vadd.f32 %v6351, %v6427
      %v6480 = vadd.f32 %v6352, %v6429
      %v6481 = vadd.f32 %v6353, %v6431
      %v6482 = vadd.f32 %v6354, %v6433
      %v6483 = vadd.f32 %v6355, %v6435
      %v6484 = vadd.f32 %v6356, %v6437
      %v6485 = vadd.f32 %v6357, %v6439
      %v6486 = vadd.f32 %v6358, %v6441
      %v6487 = vadd.f32 %v6359, %v6443
      %v6488 = vadd.f32 %v6360, %v6445
      %v6489 = vadd.f32 %v6361, %v6447
      %v6490 = vadd.f32 %v6362, %v6449
      %v6491 = vadd.f32 %v6363, %v6451
      %v6492 = vadd.f32 %v6364, %v6453
      %v6493 = vadd.f32 %v6365, %v6455
      %v6494 = vadd.f32 %v6366, %v6457
      %v6495 = vadd.f32 %v6367, %v6459
      %v6496 = vadd.f32 %v6368, %v6461
      %v6497 = vadd.f32 %v6369, %v6463
      %v6498 = vadd.f32 %v6370, %v6465
      %v6499 = vadd.f32 %v6371, %v6467
      %v6500 = vld [vmem:[%s6] sm:$0xff]
      %v6501 = vld [vmem:[%s6 + $0x8] sm:$0xff]
      %v6502 = vld [vmem:[%s6 + $0x10] sm:$0xff]
      %v6503 = vld [vmem:[%s6 + $0x18] sm:$0xff]
      %v6504 = vld [vmem:[%s6 + $0x20] sm:$0xff]
      %v6505 = vld [vmem:[%s6 + $0x28] sm:$0xff]
      %v6506 = vld [vmem:[%s6 + $0x30] sm:$0xff]
      %v6507 = vld [vmem:[%s6 + $0x38] sm:$0xff]
      %v6508 = vld [vmem:[%s6 + $0x40] sm:$0xff]
      %v6509 = vld [vmem:[%s6 + $0x48] sm:$0xff]
      %v6510 = vld [vmem:[%s6 + $0x50] sm:$0xff]
      %v6511 = vld [vmem:[%s6 + $0x58] sm:$0xff]
      %v6512 = vld [vmem:[%s6 + $0x60] sm:$0xff]
      %v6513 = vld [vmem:[%s6 + $0x68] sm:$0xff]
      %v6514 = vld [vmem:[%s6 + $0x70] sm:$0xff]
      %v6515 = vld [vmem:[%s6 + $0x78] sm:$0xff]
      %v6516 = vpack.c.bf16 %v6469, %v6468
      %v6517 = vpack.c.bf16 %v6471, %v6470
      %v6518 = vpack.c.bf16 %v6473, %v6472
      %v6519 = vpack.c.bf16 %v6475, %v6474
      %v6520 = vpack.c.bf16 %v6477, %v6476
      %v6521 = vpack.c.bf16 %v6479, %v6478
      %v6522 = vpack.c.bf16 %v6481, %v6480
      %v6523 = vpack.c.bf16 %v6483, %v6482
      %v6524 = vpack.c.bf16 %v6485, %v6484
      %v6525 = vpack.c.bf16 %v6487, %v6486
      %v6526 = vpack.c.bf16 %v6489, %v6488
      %v6527 = vpack.c.bf16 %v6491, %v6490
      %v6528 = vpack.c.bf16 %v6493, %v6492
      %v6529 = vpack.c.bf16 %v6495, %v6494
      %v6530 = vpack.c.bf16 %v6497, %v6496
      %v6531 = vpack.c.bf16 %v6499, %v6498
      %v6532 = vpack.c.bf16 %v6501, %v6500
      %v6533 = vpack.c.bf16 %v6503, %v6502
      %v6534 = vpack.c.bf16 %v6505, %v6504
      %v6535 = vpack.c.bf16 %v6507, %v6506
      %v6536 = vpack.c.bf16 %v6509, %v6508
      %v6537 = vpack.c.bf16 %v6511, %v6510
      %v6538 = vpack.c.bf16 %v6513, %v6512
      %v6539 = vpack.c.bf16 %v6515, %v6514
      %v6540 = vld [vmem:[%s7] sm:$0x1]
      %v6542 = vlaneseq
      %v6543 = vshrl.u32 %v6542, 7
      %v6544 = vsub.s32 0, %v6543
      %v6545 = vrot.slane %v6540, %v6544
      %6547 = vmatprep.subr.bf16.mxu0 0
      %6548 = vmatpush1.bf16.msra.mxu0 %v6532
      %6549 = vmatprep.subr.bf16.mxu0 0
      %6550 = vmatpush1.bf16.msra.mxu0 %v6533
      %6551 = vmatprep.subr.bf16.mxu0 0
      %6552 = vmatpush1.bf16.msra.mxu0 %v6534
      %6553 = vmatprep.subr.bf16.mxu0 0
      %6554 = vmatpush1.bf16.msra.mxu0 %v6535
      %6555 = vmatprep.subr.bf16.mxu0 0
      %6556 = vmatpush1.bf16.msra.mxu0 %v6536
      %6557 = vmatprep.subr.bf16.mxu0 0
      %6558 = vmatpush1.bf16.msra.mxu0 %v6537
      %6559 = vmatprep.subr.bf16.mxu0 0
      %6560 = vmatpush1.bf16.msra.mxu0 %v6538
      %6561 = vmatprep.subr.bf16.mxu0 0
      %6562 = vmatpush1.bf16.msra.mxu0 %v6539
      %6563 = vmatprep.subr.bf16.mxu0 0
      %6564 = vmatpush1.bf16.msra.mxu0 0
      %6565 = vmatprep.subr.bf16.mxu0 0
      %6566 = vmatpush1.bf16.msra.mxu0 0
      %6567 = vmatprep.subr.bf16.mxu0 0
      %6568 = vmatpush1.bf16.msra.mxu0 0
      %6569 = vmatprep.subr.bf16.mxu0 0
      %6570 = vmatpush1.bf16.msra.mxu0 0
      %6571 = vmatprep.subr.bf16.mxu0 0
      %6572 = vmatpush1.bf16.msra.mxu0 0
      %6573 = vmatprep.subr.bf16.mxu0 0
      %6574 = vmatpush1.bf16.msra.mxu0 0
      %6575 = vmatprep.subr.bf16.mxu0 0
      %6576 = vmatpush1.bf16.msra.mxu0 0
      %6577 = vmatprep.subr.bf16.mxu0 0
      %6578 = vmatpush1.bf16.msra.mxu0 0
      %6579 = vmatprep.mubr.bf16.mxu0 0
      %6580 = vmatmul.mubr.bf16.gmra.mrb[0].mxu0 %v6516
      %v6581 = vpop.f32.mrb[0].mxu0
      %v6582 = vadd.f32 %v6545, %v6581
      %v6583 = vpop.f32.mrb[0].mxu0
      %v6584 = vpop.f32.mrb[0].mxu0
      %v6585 = vadd.f32 %v6545, %v6584
      %v6586 = vpop.f32.mrb[0].mxu0
      %6587 = vmatprep.mubr.bf16.mxu0 0
      %6588 = vmatmul.mubr.bf16.gmra.mrb[0].mxu0 %v6517
      %v6589 = vpop.f32.mrb[0].mxu0
      %v6590 = vadd.f32 %v6545, %v6589
      %v6591 = vpop.f32.mrb[0].mxu0
      %v6592 = vpop.f32.mrb[0].mxu0
      %v6593 = vadd.f32 %v6545, %v6592
      %v6594 = vpop.f32.mrb[0].mxu0
      %6595 = vmatprep.mubr.bf16.mxu0 0
      %6596 = vmatmul.mubr.bf16.gmra.mrb[0].mxu0 %v6518
      %v6597 = vpop.f32.mrb[0].mxu0
      %v6598 = vadd.f32 %v6545, %v6597
      %v6599 = vpop.f32.mrb[0].mxu0
      %v6600 = vpop.f32.mrb[0].mxu0
      %v6601 = vadd.f32 %v6545, %v6600
      %v6602 = vpop.f32.mrb[0].mxu0
      %6603 = vmatprep.mubr.bf16.mxu0 0
      %6604 = vmatmul.mubr.bf16.gmra.mrb[0].mxu0 %v6519
      %v6605 = vpop.f32.mrb[0].mxu0
      %v6606 = vadd.f32 %v6545, %v6605
      %v6607 = vpop.f32.mrb[0].mxu0
      %v6608 = vpop.f32.mrb[0].mxu0
      %v6609 = vadd.f32 %v6545, %v6608
      %v6610 = vpop.f32.mrb[0].mxu0
      %6611 = vmatprep.mubr.bf16.mxu0 0
      %6612 = vmatmul.mubr.bf16.gmra.mrb[0].mxu0 %v6520
      %v6613 = vpop.f32.mrb[0].mxu0
      %v6614 = vadd.f32 %v6545, %v6613
      %v6615 = vpop.f32.mrb[0].mxu0
      %v6616 = vpop.f32.mrb[0].mxu0
      %v6617 = vadd.f32 %v6545, %v6616
      %v6618 = vpop.f32.mrb[0].mxu0
      %6619 = vmatprep.mubr.bf16.mxu0 0
      %6620 = vmatmul.mubr.bf16.gmra.mrb[0].mxu0 %v6521
      %v6621 = vpop.f32.mrb[0].mxu0
      %v6622 = vadd.f32 %v6545, %v6621
      %v6623 = vpop.f32.mrb[0].mxu0
      %v6624 = vpop.f32.mrb[0].mxu0
      %v6625 = vadd.f32 %v6545, %v6624
      %v6626 = vpop.f32.mrb[0].mxu0
      %6627 = vmatprep.mubr.bf16.mxu0 0
      %6628 = vmatmul.mubr.bf16.gmra.mrb[0].mxu0 %v6522
      %v6629 = vpop.f32.mrb[0].mxu0
      %v6630 = vadd.f32 %v6545, %v6629
      %v6631 = vpop.f32.mrb[0].mxu0
      %v6632 = vpop.f32.mrb[0].mxu0
      %v6633 = vadd.f32 %v6545, %v6632
      %v6634 = vpop.f32.mrb[0].mxu0
      %6635 = vmatprep.mubr.bf16.mxu0 0
      %6636 = vmatmul.mubr.bf16.gmra.mrb[0].mxu0 %v6523
      %v6637 = vpop.f32.mrb[0].mxu0
      %v6638 = vadd.f32 %v6545, %v6637
      %v6639 = vpop.f32.mrb[0].mxu0
      %v6640 = vpop.f32.mrb[0].mxu0
      %v6641 = vadd.f32 %v6545, %v6640
      %v6642 = vpop.f32.mrb[0].mxu0
      %6643 = vmatprep.mubr.bf16.mxu0 0
      %6644 = vmatmul.mubr.bf16.gmra.mrb[0].mxu0 %v6524
      %v6645 = vpop.f32.mrb[0].mxu0
      %v6646 = vadd.f32 %v6545, %v6645
      %v6647 = vpop.f32.mrb[0].mxu0
      %v6648 = vpop.f32.mrb[0].mxu0
      %v6649 = vadd.f32 %v6545, %v6648
      %v6650 = vpop.f32.mrb[0].mxu0
      %6651 = vmatprep.mubr.bf16.mxu0 0
      %6652 = vmatmul.mubr.bf16.gmra.mrb[0].mxu0 %v6525
      %v6653 = vpop.f32.mrb[0].mxu0
      %v6654 = vadd.f32 %v6545, %v6653
      %v6655 = vpop.f32.mrb[0].mxu0
      %v6656 = vpop.f32.mrb[0].mxu0
      %v6657 = vadd.f32 %v6545, %v6656
      %v6658 = vpop.f32.mrb[0].mxu0
      %6659 = vmatprep.mubr.bf16.mxu0 0
      %6660 = vmatmul.mubr.bf16.gmra.mrb[0].mxu0 %v6526
      %v6661 = vpop.f32.mrb[0].mxu0
      %v6662 = vadd.f32 %v6545, %v6661
      %v6663 = vpop.f32.mrb[0].mxu0
      %v6664 = vpop.f32.mrb[0].mxu0
      %v6665 = vadd.f32 %v6545, %v6664
      %v6666 = vpop.f32.mrb[0].mxu0
      %6667 = vmatprep.mubr.bf16.mxu0 0
      %6668 = vmatmul.mubr.bf16.gmra.mrb[0].mxu0 %v6527
      %v6669 = vpop.f32.mrb[0].mxu0
      %v6670 = vadd.f32 %v6545, %v6669
      %v6671 = vpop.f32.mrb[0].mxu0
      %v6672 = vpop.f32.mrb[0].mxu0
      %v6673 = vadd.f32 %v6545, %v6672
      %v6674 = vpop.f32.mrb[0].mxu0
      %6675 = vmatprep.mubr.bf16.mxu0 0
      %6676 = vmatmul.mubr.bf16.gmra.mrb[0].mxu0 %v6528
      %v6677 = vpop.f32.mrb[0].mxu0
      %v6678 = vadd.f32 %v6545, %v6677
      %v6679 = vpop.f32.mrb[0].mxu0
      %v6680 = vpop.f32.mrb[0].mxu0
      %v6681 = vadd.f32 %v6545, %v6680
      %v6682 = vpop.f32.mrb[0].mxu0
      %6683 = vmatprep.mubr.bf16.mxu0 0
      %6684 = vmatmul.mubr.bf16.gmra.mrb[0].mxu0 %v6529
      %v6685 = vpop.f32.mrb[0].mxu0
      %v6686 = vadd.f32 %v6545, %v6685
      %v6687 = vpop.f32.mrb[0].mxu0
      %v6688 = vpop.f32.mrb[0].mxu0
      %v6689 = vadd.f32 %v6545, %v6688
      %v6690 = vpop.f32.mrb[0].mxu0
      %6691 = vmatprep.mubr.bf16.mxu0 0
      %6692 = vmatmul.mubr.bf16.gmra.mrb[0].mxu0 %v6530
      %v6693 = vpop.f32.mrb[0].mxu0
      %v6694 = vadd.f32 %v6545, %v6693
      %v6695 = vpop.f32.mrb[0].mxu0
      %v6696 = vpop.f32.mrb[0].mxu0
      %v6697 = vadd.f32 %v6545, %v6696
      %v6698 = vpop.f32.mrb[0].mxu0
      %6699 = vmatprep.mubr.bf16.mxu0 0
      %6700 = vmatmul.mubr.bf16.gmra.mrb[0].mxu0 %v6531
      %v6701 = vpop.f32.mrb[0].mxu0
      %v6702 = vadd.f32 %v6545, %v6701
      %v6703 = vpop.f32.mrb[0].mxu0
      %v6704 = vpop.f32.mrb[0].mxu0
      %v6705 = vadd.f32 %v6545, %v6704
      %v6706 = vpop.f32.mrb[0].mxu0
      %6707 = vdwg.mxu0
      %v6708 = vmul.f32 %v6582, 0.5
      %v6709 = vmul.f32 %v6585, 0.5
      %v6710 = vmul.f32 %v6590, 0.5
      %v6711 = vmul.f32 %v6593, 0.5
      %v6712 = vmul.f32 %v6598, 0.5
      %v6713 = vmul.f32 %v6601, 0.5
      %v6714 = vmul.f32 %v6606, 0.5
      %v6715 = vmul.f32 %v6609, 0.5
      %v6716 = vmul.f32 %v6614, 0.5
      %v6717 = vmul.f32 %v6617, 0.5
      %v6718 = vmul.f32 %v6622, 0.5
      %v6719 = vmul.f32 %v6625, 0.5
      %v6720 = vmul.f32 %v6630, 0.5
      %v6721 = vmul.f32 %v6633, 0.5
      %v6722 = vmul.f32 %v6638, 0.5
      %v6723 = vmul.f32 %v6641, 0.5
      %v6724 = vmul.f32 %v6646, 0.5
      %v6725 = vmul.f32 %v6649, 0.5
      %v6726 = vmul.f32 %v6654, 0.5
      %v6727 = vmul.f32 %v6657, 0.5
      %v6728 = vmul.f32 %v6662, 0.5
      %v6729 = vmul.f32 %v6665, 0.5
      %v6730 = vmul.f32 %v6670, 0.5
      %v6731 = vmul.f32 %v6673, 0.5
      %v6732 = vmul.f32 %v6678, 0.5
      %v6733 = vmul.f32 %v6681, 0.5
      %v6734 = vmul.f32 %v6686, 0.5
      %v6735 = vmul.f32 %v6689, 0.5
      %v6736 = vmul.f32 %v6694, 0.5
      %v6737 = vmul.f32 %v6697, 0.5
      %v6738 = vmul.f32 %v6702, 0.5
      %v6739 = vmul.f32 %v6705, 0.5
      %v6740 = vmul.f32 %v6582, 0.70710677
      %v6741 = vmul.f32 %v6585, 0.70710677
      %v6742 = vmul.f32 %v6590, 0.70710677
      %v6743 = vmul.f32 %v6593, 0.70710677
      %v6744 = vmul.f32 %v6598, 0.70710677
      %v6745 = vmul.f32 %v6601, 0.70710677
      %v6746 = vmul.f32 %v6606, 0.70710677
      %v6747 = vmul.f32 %v6609, 0.70710677
      %v6748 = vmul.f32 %v6614, 0.70710677
      %v6749 = vmul.f32 %v6617, 0.70710677
      %v6750 = vmul.f32 %v6622, 0.70710677
      %v6751 = vmul.f32 %v6625, 0.70710677
      %v6752 = vmul.f32 %v6630, 0.70710677
      %v6753 = vmul.f32 %v6633, 0.70710677
      %v6754 = vmul.f32 %v6638, 0.70710677
      %v6755 = vmul.f32 %v6641, 0.70710677
      %v6756 = vmul.f32 %v6646, 0.70710677
      %v6757 = vmul.f32 %v6649, 0.70710677
      %v6758 = vmul.f32 %v6654, 0.70710677
      %v6759 = vmul.f32 %v6657, 0.70710677
      %v6760 = vmul.f32 %v6662, 0.70710677
      %v6761 = vmul.f32 %v6665, 0.70710677
      %v6762 = vmul.f32 %v6670, 0.70710677
      %v6763 = vmul.f32 %v6673, 0.70710677
      %v6764 = vmul.f32 %v6678, 0.70710677
      %v6765 = vmul.f32 %v6681, 0.70710677
      %v6766 = vmul.f32 %v6686, 0.70710677
      %v6767 = vmul.f32 %v6689, 0.70710677
      %v6768 = vmul.f32 %v6694, 0.70710677
      %v6769 = vmul.f32 %v6697, 0.70710677
      %v6770 = vmul.f32 %v6702, 0.70710677
      %v6771 = vmul.f32 %v6705, 0.70710677
      %v6772 = vmax.f32 %v6740, -4.0
      %v6773 = vmax.f32 %v6741, -4.0
      %v6774 = vmax.f32 %v6742, -4.0
      %v6775 = vmax.f32 %v6743, -4.0
      %v6776 = vmax.f32 %v6744, -4.0
      %v6777 = vmax.f32 %v6745, -4.0
      %v6778 = vmax.f32 %v6746, -4.0
      %v6779 = vmax.f32 %v6747, -4.0
      %v6780 = vmax.f32 %v6748, -4.0
      %v6781 = vmax.f32 %v6749, -4.0
      %v6782 = vmax.f32 %v6750, -4.0
      %v6783 = vmax.f32 %v6751, -4.0
      %v6784 = vmax.f32 %v6752, -4.0
      %v6785 = vmax.f32 %v6753, -4.0
      %v6786 = vmax.f32 %v6754, -4.0
      %v6787 = vmax.f32 %v6755, -4.0
      %v6788 = vmax.f32 %v6756, -4.0
      %v6789 = vmax.f32 %v6757, -4.0
      %v6790 = vmax.f32 %v6758, -4.0
      %v6791 = vmax.f32 %v6759, -4.0
      %v6792 = vmax.f32 %v6760, -4.0
      %v6793 = vmax.f32 %v6761, -4.0
      %v6794 = vmax.f32 %v6762, -4.0
      %v6795 = vmax.f32 %v6763, -4.0
      %v6796 = vmax.f32 %v6764, -4.0
      %v6797 = vmax.f32 %v6765, -4.0
      %v6798 = vmax.f32 %v6766, -4.0
      %v6799 = vmax.f32 %v6767, -4.0
      %v6800 = vmax.f32 %v6768, -4.0
      %v6801 = vmax.f32 %v6769, -4.0
      %v6802 = vmax.f32 %v6770, -4.0
      %v6803 = vmax.f32 %v6771, -4.0
      %v6804 = vmin.f32 %v6772, 4.0
      %v6805 = vmin.f32 %v6773, 4.0
      %v6806 = vmin.f32 %v6774, 4.0
      %v6807 = vmin.f32 %v6775, 4.0
      %v6808 = vmin.f32 %v6776, 4.0
      %v6809 = vmin.f32 %v6777, 4.0
      %v6810 = vmin.f32 %v6778, 4.0
      %v6811 = vmin.f32 %v6779, 4.0
      %v6812 = vmin.f32 %v6780, 4.0
      %v6813 = vmin.f32 %v6781, 4.0
      %v6814 = vmin.f32 %v6782, 4.0
      %v6815 = vmin.f32 %v6783, 4.0
      %v6816 = vmin.f32 %v6784, 4.0
      %v6817 = vmin.f32 %v6785, 4.0
      %v6818 = vmin.f32 %v6786, 4.0
      %v6819 = vmin.f32 %v6787, 4.0
      %v6820 = vmin.f32 %v6788, 4.0
      %v6821 = vmin.f32 %v6789, 4.0
      %v6822 = vmin.f32 %v6790, 4.0
      %v6823 = vmin.f32 %v6791, 4.0
      %v6824 = vmin.f32 %v6792, 4.0
      %v6825 = vmin.f32 %v6793, 4.0
      %v6826 = vmin.f32 %v6794, 4.0
      %v6827 = vmin.f32 %v6795, 4.0
      %v6828 = vmin.f32 %v6796, 4.0
      %v6829 = vmin.f32 %v6797, 4.0
      %v6830 = vmin.f32 %v6798, 4.0
      %v6831 = vmin.f32 %v6799, 4.0
      %v6832 = vmin.f32 %v6800, 4.0
      %v6833 = vmin.f32 %v6801, 4.0
      %v6834 = vmin.f32 %v6802, 4.0
      %v6835 = vmin.f32 %v6803, 4.0
      %v6836 = vmul.f32 %v6804, %v6804
      %v6837 = vmul.f32 %v6805, %v6805
      %v6838 = vmul.f32 %v6806, %v6806
      %v6839 = vmul.f32 %v6807, %v6807
      %v6840 = vmul.f32 %v6808, %v6808
      %v6841 = vmul.f32 %v6809, %v6809
      %v6842 = vmul.f32 %v6810, %v6810
      %v6843 = vmul.f32 %v6811, %v6811
      %v6844 = vmul.f32 %v6812, %v6812
      %v6845 = vmul.f32 %v6813, %v6813
      %v6846 = vmul.f32 %v6814, %v6814
      %v6847 = vmul.f32 %v6815, %v6815
      %v6848 = vmul.f32 %v6816, %v6816
      %v6849 = vmul.f32 %v6817, %v6817
      %v6850 = vmul.f32 %v6818, %v6818
      %v6851 = vmul.f32 %v6819, %v6819
      %v6852 = vmul.f32 %v6820, %v6820
      %v6853 = vmul.f32 %v6821, %v6821
      %v6854 = vmul.f32 %v6822, %v6822
      %v6855 = vmul.f32 %v6823, %v6823
      %v6856 = vmul.f32 %v6824, %v6824
      %v6857 = vmul.f32 %v6825, %v6825
      %v6858 = vmul.f32 %v6826, %v6826
      %v6859 = vmul.f32 %v6827, %v6827
      %v6860 = vmul.f32 %v6828, %v6828
      %v6861 = vmul.f32 %v6829, %v6829
      %v6862 = vmul.f32 %v6830, %v6830
      %v6863 = vmul.f32 %v6831, %v6831
      %v6864 = vmul.f32 %v6832, %v6832
      %v6865 = vmul.f32 %v6833, %v6833
      %v6866 = vmul.f32 %v6834, %v6834
      %v6867 = vmul.f32 %v6835, %v6835
      %v6868 = vmul.f32 %v6836, 0.00022905065
      %v6869 = vmul.f32 %v6837, 0.00022905065
      %v6870 = vmul.f32 %v6838, 0.00022905065
      %v6871 = vmul.f32 %v6839, 0.00022905065
      %v6872 = vmul.f32 %v6840, 0.00022905065
      %v6873 = vmul.f32 %v6841, 0.00022905065
      %v6874 = vmul.f32 %v6842, 0.00022905065
      %v6875 = vmul.f32 %v6843, 0.00022905065
      %v6876 = vmul.f32 %v6844, 0.00022905065
      %v6877 = vmul.f32 %v6845, 0.00022905065
      %v6878 = vmul.f32 %v6846, 0.00022905065
      %v6879 = vmul.f32 %v6847, 0.00022905065
      %v6880 = vmul.f32 %v6848, 0.00022905065
      %v6881 = vmul.f32 %v6849, 0.00022905065
      %v6882 = vmul.f32 %v6850, 0.00022905065
      %v6883 = vmul.f32 %v6851, 0.00022905065
      %v6884 = vmul.f32 %v6852, 0.00022905065
      %v6885 = vmul.f32 %v6853, 0.00022905065
      %v6886 = vmul.f32 %v6854, 0.00022905065
      %v6887 = vmul.f32 %v6855, 0.00022905065
      %v6888 = vmul.f32 %v6856, 0.00022905065
      %v6889 = vmul.f32 %v6857, 0.00022905065
      %v6890 = vmul.f32 %v6858, 0.00022905065
      %v6891 = vmul.f32 %v6859, 0.00022905065
      %v6892 = vmul.f32 %v6860, 0.00022905065
      %v6893 = vmul.f32 %v6861, 0.00022905065
      %v6894 = vmul.f32 %v6862, 0.00022905065
      %v6895 = vmul.f32 %v6863, 0.00022905065
      %v6896 = vmul.f32 %v6864, 0.00022905065
      %v6897 = vmul.f32 %v6865, 0.00022905065
      %v6898 = vmul.f32 %v6866, 0.00022905065
      %v6899 = vmul.f32 %v6867, 0.00022905065
      %v6900 = vadd.f32 %v6868, 0.003408291
      %v6901 = vadd.f32 %v6869, 0.003408291
      %v6902 = vadd.f32 %v6870, 0.003408291
      %v6903 = vadd.f32 %v6871, 0.003408291
      %v6904 = vadd.f32 %v6872, 0.003408291
      %v6905 = vadd.f32 %v6873, 0.003408291
      %v6906 = vadd.f32 %v6874, 0.003408291
      %v6907 = vadd.f32 %v6875, 0.003408291
      %v6908 = vadd.f32 %v6876, 0.003408291
      %v6909 = vadd.f32 %v6877, 0.003408291
      %v6910 = vadd.f32 %v6878, 0.003408291
      %v6911 = vadd.f32 %v6879, 0.003408291
      %v6912 = vadd.f32 %v6880, 0.003408291
      %v6913 = vadd.f32 %v6881, 0.003408291
      %v6914 = vadd.f32 %v6882, 0.003408291
      %v6915 = vadd.f32 %v6883, 0.003408291
      %v6916 = vadd.f32 %v6884, 0.003408291
      %v6917 = vadd.f32 %v6885, 0.003408291
      %v6918 = vadd.f32 %v6886, 0.003408291
      %v6919 = vadd.f32 %v6887, 0.003408291
      %v6920 = vadd.f32 %v6888, 0.003408291
      %v6921 = vadd.f32 %v6889, 0.003408291
      %v6922 = vadd.f32 %v6890, 0.003408291
      %v6923 = vadd.f32 %v6891, 0.003408291
      %v6924 = vadd.f32 %v6892, 0.003408291
      %v6925 = vadd.f32 %v6893, 0.003408291
      %v6926 = vadd.f32 %v6894, 0.003408291
      %v6927 = vadd.f32 %v6895, 0.003408291
      %v6928 = vadd.f32 %v6896, 0.003408291
      %v6929 = vadd.f32 %v6897, 0.003408291
      %v6930 = vadd.f32 %v6898, 0.003408291
      %v6931 = vadd.f32 %v6899, 0.003408291
      %v6932 = vmul.f32 %v6900, %v6836
      %v6933 = vmul.f32 %v6901, %v6837
      %v6934 = vmul.f32 %v6902, %v6838
      %v6935 = vmul.f32 %v6903, %v6839
      %v6936 = vmul.f32 %v6904, %v6840
      %v6937 = vmul.f32 %v6905, %v6841
      %v6938 = vmul.f32 %v6906, %v6842
      %v6939 = vmul.f32 %v6907, %v6843
      %v6940 = vmul.f32 %v6908, %v6844
      %v6941 = vmul.f32 %v6909, %v6845
      %v6942 = vmul.f32 %v6910, %v6846
      %v6943 = vmul.f32 %v6911, %v6847
      %v6944 = vmul.f32 %v6912, %v6848
      %v6945 = vmul.f32 %v6913, %v6849
      %v6946 = vmul.f32 %v6914, %v6850
      %v6947 = vmul.f32 %v6915, %v6851
      %v6948 = vmul.f32 %v6916, %v6852
      %v6949 = vmul.f32 %v6917, %v6853
      %v6950 = vmul.f32 %v6918, %v6854
      %v6951 = vmul.f32 %v6919, %v6855
      %v6952 = vmul.f32 %v6920, %v6856
      %v6953 = vmul.f32 %v6921, %v6857
      %v6954 = vmul.f32 %v6922, %v6858
      %v6955 = vmul.f32 %v6923, %v6859
      %v6956 = vmul.f32 %v6924, %v6860
      %v6957 = vmul.f32 %v6925, %v6861
      %v6958 = vmul.f32 %v6926, %v6862
      %v6959 = vmul.f32 %v6927, %v6863
      %v6960 = vmul.f32 %v6928, %v6864
      %v6961 = vmul.f32 %v6929, %v6865
      %v6962 = vmul.f32 %v6930, %v6866
      %v6963 = vmul.f32 %v6931, %v6867
      %v6964 = vadd.f32 %v6932, 0.050955694
      %v6965 = vadd.f32 %v6933, 0.050955694
      %v6966 = vadd.f32 %v6934, 0.050955694
      %v6967 = vadd.f32 %v6935, 0.050955694
      %v6968 = vadd.f32 %v6936, 0.050955694
      %v6969 = vadd.f32 %v6937, 0.050955694
      %v6970 = vadd.f32 %v6938, 0.050955694
      %v6971 = vadd.f32 %v6939, 0.050955694
      %v6972 = vadd.f32 %v6940, 0.050955694
      %v6973 = vadd.f32 %v6941, 0.050955694
      %v6974 = vadd.f32 %v6942, 0.050955694
      %v6975 = vadd.f32 %v6943, 0.050955694
      %v6976 = vadd.f32 %v6944, 0.050955694
      %v6977 = vadd.f32 %v6945, 0.050955694
      %v6978 = vadd.f32 %v6946, 0.050955694
      %v6979 = vadd.f32 %v6947, 0.050955694
      %v6980 = vadd.f32 %v6948, 0.050955694
      %v6981 = vadd.f32 %v6949, 0.050955694
      %v6982 = vadd.f32 %v6950, 0.050955694
      %v6983 = vadd.f32 %v6951, 0.050955694
      %v6984 = vadd.f32 %v6952, 0.050955694
      %v6985 = vadd.f32 %v6953, 0.050955694
      %v6986 = vadd.f32 %v6954, 0.050955694
      %v6987 = vadd.f32 %v6955, 0.050955694
      %v6988 = vadd.f32 %v6956, 0.050955694
      %v6989 = vadd.f32 %v6957, 0.050955694
      %v6990 = vadd.f32 %v6958, 0.050955694
      %v6991 = vadd.f32 %v6959, 0.050955694
      %v6992 = vadd.f32 %v6960, 0.050955694
      %v6993 = vadd.f32 %v6961, 0.050955694
      %v6994 = vadd.f32 %v6962, 0.050955694
      %v6995 = vadd.f32 %v6963, 0.050955694
      %v6996 = vmul.f32 %v6964, %v6836
      %v6997 = vmul.f32 %v6965, %v6837
      %v6998 = vmul.f32 %v6966, %v6838
      %v6999 = vmul.f32 %v6967, %v6839
      %v7000 = vmul.f32 %v6968, %v6840
      %v7001 = vmul.f32 %v6969, %v6841
      %v7002 = vmul.f32 %v6970, %v6842
      %v7003 = vmul.f32 %v6971, %v6843
      %v7004 = vmul.f32 %v6972, %v6844
      %v7005 = vmul.f32 %v6973, %v6845
      %v7006 = vmul.f32 %v6974, %v6846
      %v7007 = vmul.f32 %v6975, %v6847
      %v7008 = vmul.f32 %v6976, %v6848
      %v7009 = vmul.f32 %v6977, %v6849
      %v7010 = vmul.f32 %v6978, %v6850
      %v7011 = vmul.f32 %v6979, %v6851
      %v7012 = vmul.f32 %v6980, %v6852
      %v7013 = vmul.f32 %v6981, %v6853
      %v7014 = vmul.f32 %v6982, %v6854
      %v7015 = vmul.f32 %v6983, %v6855
      %v7016 = vmul.f32 %v6984, %v6856
      %v7017 = vmul.f32 %v6985, %v6857
      %v7018 = vmul.f32 %v6986, %v6858
      %v7019 = vmul.f32 %v6987, %v6859
      %v7020 = vmul.f32 %v6988, %v6860
      %v7021 = vmul.f32 %v6989, %v6861
      %v7022 = vmul.f32 %v6990, %v6862
      %v7023 = vmul.f32 %v6991, %v6863
      %v7024 = vmul.f32 %v6992, %v6864
      %v7025 = vmul.f32 %v6993, %v6865
      %v7026 = vmul.f32 %v6994, %v6866
      %v7027 = vmul.f32 %v6995, %v6867
      %v7028 = vadd.f32 %v6996, 0.18520832
      %v7029 = vadd.f32 %v6997, 0.18520832
      %v7030 = vadd.f32 %v6998, 0.18520832
      %v7031 = vadd.f32 %v6999, 0.18520832
      %v7032 = vadd.f32 %v7000, 0.18520832
      %v7033 = vadd.f32 %v7001, 0.18520832
      %v7034 = vadd.f32 %v7002, 0.18520832
      %v7035 = vadd.f32 %v7003, 0.18520832
      %v7036 = vadd.f32 %v7004, 0.18520832
      %v7037 = vadd.f32 %v7005, 0.18520832
      %v7038 = vadd.f32 %v7006, 0.18520832
      %v7039 = vadd.f32 %v7007, 0.18520832
      %v7040 = vadd.f32 %v7008, 0.18520832
      %v7041 = vadd.f32 %v7009, 0.18520832
      %v7042 = vadd.f32 %v7010, 0.18520832
      %v7043 = vadd.f32 %v7011, 0.18520832
      %v7044 = vadd.f32 %v7012, 0.18520832
      %v7045 = vadd.f32 %v7013, 0.18520832
      %v7046 = vadd.f32 %v7014, 0.18520832
      %v7047 = vadd.f32 %v7015, 0.18520832
      %v7048 = vadd.f32 %v7016, 0.18520832
      %v7049 = vadd.f32 %v7017, 0.18520832
      %v7050 = vadd.f32 %v7018, 0.18520832
      %v7051 = vadd.f32 %v7019, 0.18520832
      %v7052 = vadd.f32 %v7020, 0.18520832
      %v7053 = vadd.f32 %v7021, 0.18520832
      %v7054 = vadd.f32 %v7022, 0.18520832
      %v7055 = vadd.f32 %v7023, 0.18520832
      %v7056 = vadd.f32 %v7024, 0.18520832
      %v7057 = vadd.f32 %v7025, 0.18520832
      %v7058 = vadd.f32 %v7026, 0.18520832
      %v7059 = vadd.f32 %v7027, 0.18520832
      %v7060 = vmul.f32 %v7028, %v6836
      %v7061 = vmul.f32 %v7029, %v6837
      %v7062 = vmul.f32 %v7030, %v6838
      %v7063 = vmul.f32 %v7031, %v6839
      %v7064 = vmul.f32 %v7032, %v6840
      %v7065 = vmul.f32 %v7033, %v6841
      %v7066 = vmul.f32 %v7034, %v6842
      %v7067 = vmul.f32 %v7035, %v6843
      %v7068 = vmul.f32 %v7036, %v6844
      %v7069 = vmul.f32 %v7037, %v6845
      %v7070 = vmul.f32 %v7038, %v6846
      %v7071 = vmul.f32 %v7039, %v6847
      %v7072 = vmul.f32 %v7040, %v6848
      %v7073 = vmul.f32 %v7041, %v6849
      %v7074 = vmul.f32 %v7042, %v6850
      %v7075 = vmul.f32 %v7043, %v6851
      %v7076 = vmul.f32 %v7044, %v6852
      %v7077 = vmul.f32 %v7045, %v6853
      %v7078 = vmul.f32 %v7046, %v6854
      %v7079 = vmul.f32 %v7047, %v6855
      %v7080 = vmul.f32 %v7048, %v6856
      %v7081 = vmul.f32 %v7049, %v6857
      %v7082 = vmul.f32 %v7050, %v6858
      %v7083 = vmul.f32 %v7051, %v6859
      %v7084 = vmul.f32 %v7052, %v6860
      %v7085 = vmul.f32 %v7053, %v6861
      %v7086 = vmul.f32 %v7054, %v6862
      %v7087 = vmul.f32 %v7055, %v6863
      %v7088 = vmul.f32 %v7056, %v6864
      %v7089 = vmul.f32 %v7057, %v6865
      %v7090 = vmul.f32 %v7058, %v6866
      %v7091 = vmul.f32 %v7059, %v6867
      %v7092 = vadd.f32 %v7060, 1.1283791
      %v7093 = vadd.f32 %v7061, 1.1283791
      %v7094 = vadd.f32 %v7062, 1.1283791
      %v7095 = vadd.f32 %v7063, 1.1283791
      %v7096 = vadd.f32 %v7064, 1.1283791
      %v7097 = vadd.f32 %v7065, 1.1283791
      %v7098 = vadd.f32 %v7066, 1.1283791
      %v7099 = vadd.f32 %v7067, 1.1283791
      %v7100 = vadd.f32 %v7068, 1.1283791
      %v7101 = vadd.f32 %v7069, 1.1283791
      %v7102 = vadd.f32 %v7070, 1.1283791
      %v7103 = vadd.f32 %v7071, 1.1283791
      %v7104 = vadd.f32 %v7072, 1.1283791
      %v7105 = vadd.f32 %v7073, 1.1283791
      %v7106 = vadd.f32 %v7074, 1.1283791
      %v7107 = vadd.f32 %v7075, 1.1283791
      %v7108 = vadd.f32 %v7076, 1.1283791
      %v7109 = vadd.f32 %v7077, 1.1283791
      %v7110 = vadd.f32 %v7078, 1.1283791
      %v7111 = vadd.f32 %v7079, 1.1283791
      %v7112 = vadd.f32 %v7080, 1.1283791
      %v7113 = vadd.f32 %v7081, 1.1283791
      %v7114 = vadd.f32 %v7082, 1.1283791
      %v7115 = vadd.f32 %v7083, 1.1283791
      %v7116 = vadd.f32 %v7084, 1.1283791
      %v7117 = vadd.f32 %v7085, 1.1283791
      %v7118 = vadd.f32 %v7086, 1.1283791
      %v7119 = vadd.f32 %v7087, 1.1283791
      %v7120 = vadd.f32 %v7088, 1.1283791
      %v7121 = vadd.f32 %v7089, 1.1283791
      %v7122 = vadd.f32 %v7090, 1.1283791
      %v7123 = vadd.f32 %v7091, 1.1283791
      %v7124 = vmul.f32 %v6836, -1.1791603e-07
      %v7125 = vmul.f32 %v6837, -1.1791603e-07
      %v7126 = vmul.f32 %v6838, -1.1791603e-07
      %v7127 = vmul.f32 %v6839, -1.1791603e-07
      %v7128 = vmul.f32 %v6840, -1.1791603e-07
      %v7129 = vmul.f32 %v6841, -1.1791603e-07
      %v7130 = vmul.f32 %v6842, -1.1791603e-07
      %v7131 = vmul.f32 %v6843, -1.1791603e-07
      %v7132 = vmul.f32 %v6844, -1.1791603e-07
      %v7133 = vmul.f32 %v6845, -1.1791603e-07
      %v7134 = vmul.f32 %v6846, -1.1791603e-07
      %v7135 = vmul.f32 %v6847, -1.1791603e-07
      %v7136 = vmul.f32 %v6848, -1.1791603e-07
      %v7137 = vmul.f32 %v6849, -1.1791603e-07
      %v7138 = vmul.f32 %v6850, -1.1791603e-07
      %v7139 = vmul.f32 %v6851, -1.1791603e-07
      %v7140 = vmul.f32 %v6852, -1.1791603e-07
      %v7141 = vmul.f32 %v6853, -1.1791603e-07
      %v7142 = vmul.f32 %v6854, -1.1791603e-07
      %v7143 = vmul.f32 %v6855, -1.1791603e-07
      %v7144 = vmul.f32 %v6856, -1.1791603e-07
      %v7145 = vmul.f32 %v6857, -1.1791603e-07
      %v7146 = vmul.f32 %v6858, -1.1791603e-07
      %v7147 = vmul.f32 %v6859, -1.1791603e-07
      %v7148 = vmul.f32 %v6860, -1.1791603e-07
      %v7149 = vmul.f32 %v6861, -1.1791603e-07
      %v7150 = vmul.f32 %v6862, -1.1791603e-07
      %v7151 = vmul.f32 %v6863, -1.1791603e-07
      %v7152 = vmul.f32 %v6864, -1.1791603e-07
      %v7153 = vmul.f32 %v6865, -1.1791603e-07
      %v7154 = vmul.f32 %v6866, -1.1791603e-07
      %v7155 = vmul.f32 %v6867, -1.1791603e-07
      %v7156 = vadd.f32 %v7124, 2.3547966e-05
      %v7157 = vadd.f32 %v7125, 2.3547966e-05
      %v7158 = vadd.f32 %v7126, 2.3547966e-05
      %v7159 = vadd.f32 %v7127, 2.3547966e-05
      %v7160 = vadd.f32 %v7128, 2.3547966e-05
      %v7161 = vadd.f32 %v7129, 2.3547966e-05
      %v7162 = vadd.f32 %v7130, 2.3547966e-05
      %v7163 = vadd.f32 %v7131, 2.3547966e-05
      %v7164 = vadd.f32 %v7132, 2.3547966e-05
      %v7165 = vadd.f32 %v7133, 2.3547966e-05
      %v7166 = vadd.f32 %v7134, 2.3547966e-05
      %v7167 = vadd.f32 %v7135, 2.3547966e-05
      %v7168 = vadd.f32 %v7136, 2.3547966e-05
      %v7169 = vadd.f32 %v7137, 2.3547966e-05
      %v7170 = vadd.f32 %v7138, 2.3547966e-05
      %v7171 = vadd.f32 %v7139, 2.3547966e-05
      %v7172 = vadd.f32 %v7140, 2.3547966e-05
      %v7173 = vadd.f32 %v7141, 2.3547966e-05
      %v7174 = vadd.f32 %v7142, 2.3547966e-05
      %v7175 = vadd.f32 %v7143, 2.3547966e-05
      %v7176 = vadd.f32 %v7144, 2.3547966e-05
      %v7177 = vadd.f32 %v7145, 2.3547966e-05
      %v7178 = vadd.f32 %v7146, 2.3547966e-05
      %v7179 = vadd.f32 %v7147, 2.3547966e-05
      %v7180 = vadd.f32 %v7148, 2.3547966e-05
      %v7181 = vadd.f32 %v7149, 2.3547966e-05
      %v7182 = vadd.f32 %v7150, 2.3547966e-05
      %v7183 = vadd.f32 %v7151, 2.3547966e-05
      %v7184 = vadd.f32 %v7152, 2.3547966e-05
      %v7185 = vadd.f32 %v7153, 2.3547966e-05
      %v7186 = vadd.f32 %v7154, 2.3547966e-05
      %v7187 = vadd.f32 %v7155, 2.3547966e-05
      %v7188 = vmul.f32 %v7156, %v6836
      %v7189 = vmul.f32 %v7157, %v6837
      %v7190 = vmul.f32 %v7158, %v6838
      %v7191 = vmul.f32 %v7159, %v6839
      %v7192 = vmul.f32 %v7160, %v6840
      %v7193 = vmul.f32 %v7161, %v6841
      %v7194 = vmul.f32 %v7162, %v6842
      %v7195 = vmul.f32 %v7163, %v6843
      %v7196 = vmul.f32 %v7164, %v6844
      %v7197 = vmul.f32 %v7165, %v6845
      %v7198 = vmul.f32 %v7166, %v6846
      %v7199 = vmul.f32 %v7167, %v6847
      %v7200 = vmul.f32 %v7168, %v6848
      %v7201 = vmul.f32 %v7169, %v6849
      %v7202 = vmul.f32 %v7170, %v6850
      %v7203 = vmul.f32 %v7171, %v6851
      %v7204 = vmul.f32 %v7172, %v6852
      %v7205 = vmul.f32 %v7173, %v6853
      %v7206 = vmul.f32 %v7174, %v6854
      %v7207 = vmul.f32 %v7175, %v6855
      %v7208 = vmul.f32 %v7176, %v6856
      %v7209 = vmul.f32 %v7177, %v6857
      %v7210 = vmul.f32 %v7178, %v6858
      %v7211 = vmul.f32 %v7179, %v6859
      %v7212 = vmul.f32 %v7180, %v6860
      %v7213 = vmul.f32 %v7181, %v6861
      %v7214 = vmul.f32 %v7182, %v6862
      %v7215 = vmul.f32 %v7183, %v6863
      %v7216 = vmul.f32 %v7184, %v6864
      %v7217 = vmul.f32 %v7185, %v6865
      %v7218 = vmul.f32 %v7186, %v6866
      %v7219 = vmul.f32 %v7187, %v6867
      %v7220 = vadd.f32 %v7188, 0.0010179626
      %v7221 = vadd.f32 %v7189, 0.0010179626
      %v7222 = vadd.f32 %v7190, 0.0010179626
      %v7223 = vadd.f32 %v7191, 0.0010179626
      %v7224 = vadd.f32 %v7192, 0.0010179626
      %v7225 = vadd.f32 %v7193, 0.0010179626
      %v7226 = vadd.f32 %v7194, 0.0010179626
      %v7227 = vadd.f32 %v7195, 0.0010179626
      %v7228 = vadd.f32 %v7196, 0.0010179626
      %v7229 = vadd.f32 %v7197, 0.0010179626
      %v7230 = vadd.f32 %v7198, 0.0010179626
      %v7231 = vadd.f32 %v7199, 0.0010179626
      %v7232 = vadd.f32 %v7200, 0.0010179626
      %v7233 = vadd.f32 %v7201, 0.0010179626
      %v7234 = vadd.f32 %v7202, 0.0010179626
      %v7235 = vadd.f32 %v7203, 0.0010179626
      %v7236 = vadd.f32 %v7204, 0.0010179626
      %v7237 = vadd.f32 %v7205, 0.0010179626
      %v7238 = vadd.f32 %v7206, 0.0010179626
      %v7239 = vadd.f32 %v7207, 0.0010179626
      %v7240 = vadd.f32 %v7208, 0.0010179626
      %v7241 = vadd.f32 %v7209, 0.0010179626
      %v7242 = vadd.f32 %v7210, 0.0010179626
      %v7243 = vadd.f32 %v7211, 0.0010179626
      %v7244 = vadd.f32 %v7212, 0.0010179626
      %v7245 = vadd.f32 %v7213, 0.0010179626
      %v7246 = vadd.f32 %v7214, 0.0010179626
      %v7247 = vadd.f32 %v7215, 0.0010179626
      %v7248 = vadd.f32 %v7216, 0.0010179626
      %v7249 = vadd.f32 %v7217, 0.0010179626
      %v7250 = vadd.f32 %v7218, 0.0010179626
      %v7251 = vadd.f32 %v7219, 0.0010179626
      %v7252 = vmul.f32 %v7220, %v6836
      %v7253 = vmul.f32 %v7221, %v6837
      %v7254 = vmul.f32 %v7222, %v6838
      %v7255 = vmul.f32 %v7223, %v6839
      %v7256 = vmul.f32 %v7224, %v6840
      %v7257 = vmul.f32 %v7225, %v6841
      %v7258 = vmul.f32 %v7226, %v6842
      %v7259 = vmul.f32 %v7227, %v6843
      %v7260 = vmul.f32 %v7228, %v6844
      %v7261 = vmul.f32 %v7229, %v6845
      %v7262 = vmul.f32 %v7230, %v6846
      %v7263 = vmul.f32 %v7231, %v6847
      %v7264 = vmul.f32 %v7232, %v6848
      %v7265 = vmul.f32 %v7233, %v6849
      %v7266 = vmul.f32 %v7234, %v6850
      %v7267 = vmul.f32 %v7235, %v6851
      %v7268 = vmul.f32 %v7236, %v6852
      %v7269 = vmul.f32 %v7237, %v6853
      %v7270 = vmul.f32 %v7238, %v6854
      %v7271 = vmul.f32 %v7239, %v6855
      %v7272 = vmul.f32 %v7240, %v6856
      %v7273 = vmul.f32 %v7241, %v6857
      %v7274 = vmul.f32 %v7242, %v6858
      %v7275 = vmul.f32 %v7243, %v6859
      %v7276 = vmul.f32 %v7244, %v6860
      %v7277 = vmul.f32 %v7245, %v6861
      %v7278 = vmul.f32 %v7246, %v6862
      %v7279 = vmul.f32 %v7247, %v6863
      %v7280 = vmul.f32 %v7248, %v6864
      %v7281 = vmul.f32 %v7249, %v6865
      %v7282 = vmul.f32 %v7250, %v6866
      %v7283 = vmul.f32 %v7251, %v6867
      %v7284 = vadd.f32 %v7252, 0.01407047
      %v7285 = vadd.f32 %v7253, 0.01407047
      %v7286 = vadd.f32 %v7254, 0.01407047
      %v7287 = vadd.f32 %v7255, 0.01407047
      %v7288 = vadd.f32 %v7256, 0.01407047
      %v7289 = vadd.f32 %v7257, 0.01407047
      %v7290 = vadd.f32 %v7258, 0.01407047
      %v7291 = vadd.f32 %v7259, 0.01407047
      %v7292 = vadd.f32 %v7260, 0.01407047
      %v7293 = vadd.f32 %v7261, 0.01407047
      %v7294 = vadd.f32 %v7262, 0.01407047
      %v7295 = vadd.f32 %v7263, 0.01407047
      %v7296 = vadd.f32 %v7264, 0.01407047
      %v7297 = vadd.f32 %v7265, 0.01407047
      %v7298 = vadd.f32 %v7266, 0.01407047
      %v7299 = vadd.f32 %v7267, 0.01407047
      %v7300 = vadd.f32 %v7268, 0.01407047
      %v7301 = vadd.f32 %v7269, 0.01407047
      %v7302 = vadd.f32 %v7270, 0.01407047
      %v7303 = vadd.f32 %v7271, 0.01407047
      %v7304 = vadd.f32 %v7272, 0.01407047
      %v7305 = vadd.f32 %v7273, 0.01407047
      %v7306 = vadd.f32 %v7274, 0.01407047
      %v7307 = vadd.f32 %v7275, 0.01407047
      %v7308 = vadd.f32 %v7276, 0.01407047
      %v7309 = vadd.f32 %v7277, 0.01407047
      %v7310 = vadd.f32 %v7278, 0.01407047
      %v7311 = vadd.f32 %v7279, 0.01407047
      %v7312 = vadd.f32 %v7280, 0.01407047
      %v7313 = vadd.f32 %v7281, 0.01407047
      %v7314 = vadd.f32 %v7282, 0.01407047
      %v7315 = vadd.f32 %v7283, 0.01407047
      %v7316 = vmul.f32 %v7284, %v6836
      %v7317 = vmul.f32 %v7285, %v6837
      %v7318 = vmul.f32 %v7286, %v6838
      %v7319 = vmul.f32 %v7287, %v6839
      %v7320 = vmul.f32 %v7288, %v6840
      %v7321 = vmul.f32 %v7289, %v6841
      %v7322 = vmul.f32 %v7290, %v6842
      %v7323 = vmul.f32 %v7291, %v6843
      %v7324 = vmul.f32 %v7292, %v6844
      %v7325 = vmul.f32 %v7293, %v6845
      %v7326 = vmul.f32 %v7294, %v6846
      %v7327 = vmul.f32 %v7295, %v6847
      %v7328 = vmul.f32 %v7296, %v6848
      %v7329 = vmul.f32 %v7297, %v6849
      %v7330 = vmul.f32 %v7298, %v6850
      %v7331 = vmul.f32 %v7299, %v6851
      %v7332 = vmul.f32 %v7300, %v6852
      %v7333 = vmul.f32 %v7301, %v6853
      %v7334 = vmul.f32 %v7302, %v6854
      %v7335 = vmul.f32 %v7303, %v6855
      %v7336 = vmul.f32 %v7304, %v6856
      %v7337 = vmul.f32 %v7305, %v6857
      %v7338 = vmul.f32 %v7306, %v6858
      %v7339 = vmul.f32 %v7307, %v6859
      %v7340 = vmul.f32 %v7308, %v6860
      %v7341 = vmul.f32 %v7309, %v6861
      %v7342 = vmul.f32 %v7310, %v6862
      %v7343 = vmul.f32 %v7311, %v6863
      %v7344 = vmul.f32 %v7312, %v6864
      %v7345 = vmul.f32 %v7313, %v6865
      %v7346 = vmul.f32 %v7314, %v6866
      %v7347 = vmul.f32 %v7315, %v6867
      %v7348 = vadd.f32 %v7316, 0.11098505
      %v7349 = vadd.f32 %v7317, 0.11098505
      %v7350 = vadd.f32 %v7318, 0.11098505
      %v7351 = vadd.f32 %v7319, 0.11098505
      %v7352 = vadd.f32 %v7320, 0.11098505
      %v7353 = vadd.f32 %v7321, 0.11098505
      %v7354 = vadd.f32 %v7322, 0.11098505
      %v7355 = vadd.f32 %v7323, 0.11098505
      %v7356 = vadd.f32 %v7324, 0.11098505
      %v7357 = vadd.f32 %v7325, 0.11098505
      %v7358 = vadd.f32 %v7326, 0.11098505
      %v7359 = vadd.f32 %v7327, 0.11098505
      %v7360 = vadd.f32 %v7328, 0.11098505
      %v7361 = vadd.f32 %v7329, 0.11098505
      %v7362 = vadd.f32 %v7330, 0.11098505
      %v7363 = vadd.f32 %v7331, 0.11098505
      %v7364 = vadd.f32 %v7332, 0.11098505
      %v7365 = vadd.f32 %v7333, 0.11098505
      %v7366 = vadd.f32 %v7334, 0.11098505
      %v7367 = vadd.f32 %v7335, 0.11098505
      %v7368 = vadd.f32 %v7336, 0.11098505
      %v7369 = vadd.f32 %v7337, 0.11098505
      %v7370 = vadd.f32 %v7338, 0.11098505
      %v7371 = vadd.f32 %v7339, 0.11098505
      %v7372 = vadd.f32 %v7340, 0.11098505
      %v7373 = vadd.f32 %v7341, 0.11098505
      %v7374 = vadd.f32 %v7342, 0.11098505
      %v7375 = vadd.f32 %v7343, 0.11098505
      %v7376 = vadd.f32 %v7344, 0.11098505
      %v7377 = vadd.f32 %v7345, 0.11098505
      %v7378 = vadd.f32 %v7346, 0.11098505
      %v7379 = vadd.f32 %v7347, 0.11098505
      %v7380 = vmul.f32 %v7348, %v6836
      %v7381 = vmul.f32 %v7349, %v6837
      %v7382 = vmul.f32 %v7350, %v6838
      %v7383 = vmul.f32 %v7351, %v6839
      %v7384 = vmul.f32 %v7352, %v6840
      %v7385 = vmul.f32 %v7353, %v6841
      %v7386 = vmul.f32 %v7354, %v6842
      %v7387 = vmul.f32 %v7355, %v6843
      %v7388 = vmul.f32 %v7356, %v6844
      %v7389 = vmul.f32 %v7357, %v6845
      %v7390 = vmul.f32 %v7358, %v6846
      %v7391 = vmul.f32 %v7359, %v6847
      %v7392 = vmul.f32 %v7360, %v6848
      %v7393 = vmul.f32 %v7361, %v6849
      %v7394 = vmul.f32 %v7362, %v6850
      %v7395 = vmul.f32 %v7363, %v6851
      %v7396 = vmul.f32 %v7364, %v6852
      %v7397 = vmul.f32 %v7365, %v6853
      %v7398 = vmul.f32 %v7366, %v6854
      %v7399 = vmul.f32 %v7367, %v6855
      %v7400 = vmul.f32 %v7368, %v6856
      %v7401 = vmul.f32 %v7369, %v6857
      %v7402 = vmul.f32 %v7370, %v6858
      %v7403 = vmul.f32 %v7371, %v6859
      %v7404 = vmul.f32 %v7372, %v6860
      %v7405 = vmul.f32 %v7373, %v6861
      %v7406 = vmul.f32 %v7374, %v6862
      %v7407 = vmul.f32 %v7375, %v6863
      %v7408 = vmul.f32 %v7376, %v6864
      %v7409 = vmul.f32 %v7377, %v6865
      %v7410 = vmul.f32 %v7378, %v6866
      %v7411 = vmul.f32 %v7379, %v6867
      %v7412 = vadd.f32 %v7380, 0.49746925
      %v7413 = vadd.f32 %v7381, 0.49746925
      %v7414 = vadd.f32 %v7382, 0.49746925
      %v7415 = vadd.f32 %v7383, 0.49746925
      %v7416 = vadd.f32 %v7384, 0.49746925
      %v7417 = vadd.f32 %v7385, 0.49746925
      %v7418 = vadd.f32 %v7386, 0.49746925
      %v7419 = vadd.f32 %v7387, 0.49746925
      %v7420 = vadd.f32 %v7388, 0.49746925
      %v7421 = vadd.f32 %v7389, 0.49746925
      %v7422 = vadd.f32 %v7390, 0.49746925
      %v7423 = vadd.f32 %v7391, 0.49746925
      %v7424 = vadd.f32 %v7392, 0.49746925
      %v7425 = vadd.f32 %v7393, 0.49746925
      %v7426 = vadd.f32 %v7394, 0.49746925
      %v7427 = vadd.f32 %v7395, 0.49746925
      %v7428 = vadd.f32 %v7396, 0.49746925
      %v7429 = vadd.f32 %v7397, 0.49746925
      %v7430 = vadd.f32 %v7398, 0.49746925
      %v7431 = vadd.f32 %v7399, 0.49746925
      %v7432 = vadd.f32 %v7400, 0.49746925
      %v7433 = vadd.f32 %v7401, 0.49746925
      %v7434 = vadd.f32 %v7402, 0.49746925
      %v7435 = vadd.f32 %v7403, 0.49746925
      %v7436 = vadd.f32 %v7404, 0.49746925
      %v7437 = vadd.f32 %v7405, 0.49746925
      %v7438 = vadd.f32 %v7406, 0.49746925
      %v7439 = vadd.f32 %v7407, 0.49746925
      %v7440 = vadd.f32 %v7408, 0.49746925
      %v7441 = vadd.f32 %v7409, 0.49746925
      %v7442 = vadd.f32 %v7410, 0.49746925
      %v7443 = vadd.f32 %v7411, 0.49746925
      %v7444 = vmul.f32 %v7412, %v6836
      %v7445 = vmul.f32 %v7413, %v6837
      %v7446 = vmul.f32 %v7414, %v6838
      %v7447 = vmul.f32 %v7415, %v6839
      %v7448 = vmul.f32 %v7416, %v6840
      %v7449 = vmul.f32 %v7417, %v6841
      %v7450 = vmul.f32 %v7418, %v6842
      %v7451 = vmul.f32 %v7419, %v6843
      %v7452 = vmul.f32 %v7420, %v6844
      %v7453 = vmul.f32 %v7421, %v6845
      %v7454 = vmul.f32 %v7422, %v6846
      %v7455 = vmul.f32 %v7423, %v6847
      %v7456 = vmul.f32 %v7424, %v6848
      %v7457 = vmul.f32 %v7425, %v6849
      %v7458 = vmul.f32 %v7426, %v6850
      %v7459 = vmul.f32 %v7427, %v6851
      %v7460 = vmul.f32 %v7428, %v6852
      %v7461 = vmul.f32 %v7429, %v6853
      %v7462 = vmul.f32 %v7430, %v6854
      %v7463 = vmul.f32 %v7431, %v6855
      %v7464 = vmul.f32 %v7432, %v6856
      %v7465 = vmul.f32 %v7433, %v6857
      %v7466 = vmul.f32 %v7434, %v6858
      %v7467 = vmul.f32 %v7435, %v6859
      %v7468 = vmul.f32 %v7436, %v6860
      %v7469 = vmul.f32 %v7437, %v6861
      %v7470 = vmul.f32 %v7438, %v6862
      %v7471 = vmul.f32 %v7439, %v6863
      %v7472 = vmul.f32 %v7440, %v6864
      %v7473 = vmul.f32 %v7441, %v6865
      %v7474 = vmul.f32 %v7442, %v6866
      %v7475 = vmul.f32 %v7443, %v6867
      %v7476 = vadd.f32 %v7444, 1.0
      %v7477 = vadd.f32 %v7445, 1.0
      %v7478 = vadd.f32 %v7446, 1.0
      %v7479 = vadd.f32 %v7447, 1.0
      %v7480 = vadd.f32 %v7448, 1.0
      %v7481 = vadd.f32 %v7449, 1.0
      %v7482 = vadd.f32 %v7450, 1.0
      %v7483 = vadd.f32 %v7451, 1.0
      %v7484 = vadd.f32 %v7452, 1.0
      %v7485 = vadd.f32 %v7453, 1.0
      %v7486 = vadd.f32 %v7454, 1.0
      %v7487 = vadd.f32 %v7455, 1.0
      %v7488 = vadd.f32 %v7456, 1.0
      %v7489 = vadd.f32 %v7457, 1.0
      %v7490 = vadd.f32 %v7458, 1.0
      %v7491 = vadd.f32 %v7459, 1.0
      %v7492 = vadd.f32 %v7460, 1.0
      %v7493 = vadd.f32 %v7461, 1.0
      %v7494 = vadd.f32 %v7462, 1.0
      %v7495 = vadd.f32 %v7463, 1.0
      %v7496 = vadd.f32 %v7464, 1.0
      %v7497 = vadd.f32 %v7465, 1.0
      %v7498 = vadd.f32 %v7466, 1.0
      %v7499 = vadd.f32 %v7467, 1.0
      %v7500 = vadd.f32 %v7468, 1.0
      %v7501 = vadd.f32 %v7469, 1.0
      %v7502 = vadd.f32 %v7470, 1.0
      %v7503 = vadd.f32 %v7471, 1.0
      %v7504 = vadd.f32 %v7472, 1.0
      %v7505 = vadd.f32 %v7473, 1.0
      %v7506 = vadd.f32 %v7474, 1.0
      %v7507 = vadd.f32 %v7475, 1.0
      %v7508 = vrcp.pop %v7476
      %v7509 = vrcp.pop %v7477
      %v7510 = vrcp.pop %v7478
      %v7511 = vrcp.pop %v7479
      %v7512 = vrcp.pop %v7480
      %v7513 = vrcp.pop %v7481
      %v7514 = vrcp.pop %v7482
      %v7515 = vrcp.pop %v7483
      %v7516 = vrcp.pop %v7484
      %v7517 = vrcp.pop %v7485
      %v7518 = vrcp.pop %v7486
      %v7519 = vrcp.pop %v7487
      %v7520 = vrcp.pop %v7488
      %v7521 = vrcp.pop %v7489
      %v7522 = vrcp.pop %v7490
      %v7523 = vrcp.pop %v7491
      %v7524 = vrcp.pop %v7492
      %v7525 = vrcp.pop %v7493
      %v7526 = vrcp.pop %v7494
      %v7527 = vrcp.pop %v7495
      %v7528 = vrcp.pop %v7496
      %v7529 = vrcp.pop %v7497
      %v7530 = vrcp.pop %v7498
      %v7531 = vrcp.pop %v7499
      %v7532 = vrcp.pop %v7500
      %v7533 = vrcp.pop %v7501
      %v7534 = vrcp.pop %v7502
      %v7535 = vrcp.pop %v7503
      %v7536 = vrcp.pop %v7504
      %v7537 = vrcp.pop %v7505
      %v7538 = vrcp.pop %v7506
      %v7539 = vrcp.pop %v7507
      %v7540 = vmul.f32 %v7476, %v7508
      %v7541 = vmul.f32 %v7477, %v7509
      %v7542 = vmul.f32 %v7478, %v7510
      %v7543 = vmul.f32 %v7479, %v7511
      %v7544 = vmul.f32 %v7480, %v7512
      %v7545 = vmul.f32 %v7481, %v7513
      %v7546 = vmul.f32 %v7482, %v7514
      %v7547 = vmul.f32 %v7483, %v7515
      %v7548 = vmul.f32 %v7484, %v7516
      %v7549 = vmul.f32 %v7485, %v7517
      %v7550 = vmul.f32 %v7486, %v7518
      %v7551 = vmul.f32 %v7487, %v7519
      %v7552 = vmul.f32 %v7488, %v7520
      %v7553 = vmul.f32 %v7489, %v7521
      %v7554 = vmul.f32 %v7490, %v7522
      %v7555 = vmul.f32 %v7491, %v7523
      %v7556 = vmul.f32 %v7492, %v7524
      %v7557 = vmul.f32 %v7493, %v7525
      %v7558 = vmul.f32 %v7494, %v7526
      %v7559 = vmul.f32 %v7495, %v7527
      %v7560 = vmul.f32 %v7496, %v7528
      %v7561 = vmul.f32 %v7497, %v7529
      %v7562 = vmul.f32 %v7498, %v7530
      %v7563 = vmul.f32 %v7499, %v7531
      %v7564 = vmul.f32 %v7500, %v7532
      %v7565 = vmul.f32 %v7501, %v7533
      %v7566 = vmul.f32 %v7502, %v7534
      %v7567 = vmul.f32 %v7503, %v7535
      %v7568 = vmul.f32 %v7504, %v7536
      %v7569 = vmul.f32 %v7505, %v7537
      %v7570 = vmul.f32 %v7506, %v7538
      %v7571 = vmul.f32 %v7507, %v7539
      %v7572 = vsub.f32 2.0, %v7540
      %v7573 = vsub.f32 2.0, %v7541
      %v7574 = vsub.f32 2.0, %v7542
      %v7575 = vsub.f32 2.0, %v7543
      %v7576 = vsub.f32 2.0, %v7544
      %v7577 = vsub.f32 2.0, %v7545
      %v7578 = vsub.f32 2.0, %v7546
      %v7579 = vsub.f32 2.0, %v7547
      %v7580 = vsub.f32 2.0, %v7548
      %v7581 = vsub.f32 2.0, %v7549
      %v7582 = vsub.f32 2.0, %v7550
      %v7583 = vsub.f32 2.0, %v7551
      %v7584 = vsub.f32 2.0, %v7552
      %v7585 = vsub.f32 2.0, %v7553
      %v7586 = vsub.f32 2.0, %v7554
      %v7587 = vsub.f32 2.0, %v7555
      %v7588 = vsub.f32 2.0, %v7556
      %v7589 = vsub.f32 2.0, %v7557
      %v7590 = vsub.f32 2.0, %v7558
      %v7591 = vsub.f32 2.0, %v7559
      %v7592 = vsub.f32 2.0, %v7560
      %v7593 = vsub.f32 2.0, %v7561
      %v7594 = vsub.f32 2.0, %v7562
      %v7595 = vsub.f32 2.0, %v7563
      %v7596 = vsub.f32 2.0, %v7564
      %v7597 = vsub.f32 2.0, %v7565
      %v7598 = vsub.f32 2.0, %v7566
      %v7599 = vsub.f32 2.0, %v7567
      %v7600 = vsub.f32 2.0, %v7568
      %v7601 = vsub.f32 2.0, %v7569
      %v7602 = vsub.f32 2.0, %v7570
      %v7603 = vsub.f32 2.0, %v7571
      %v7604 = vmul.f32 %v7508, %v7572
      %v7605 = vmul.f32 %v7509, %v7573
      %v7606 = vmul.f32 %v7510, %v7574
      %v7607 = vmul.f32 %v7511, %v7575
      %v7608 = vmul.f32 %v7512, %v7576
      %v7609 = vmul.f32 %v7513, %v7577
      %v7610 = vmul.f32 %v7514, %v7578
      %v7611 = vmul.f32 %v7515, %v7579
      %v7612 = vmul.f32 %v7516, %v7580
      %v7613 = vmul.f32 %v7517, %v7581
      %v7614 = vmul.f32 %v7518, %v7582
      %v7615 = vmul.f32 %v7519, %v7583
      %v7616 = vmul.f32 %v7520, %v7584
      %v7617 = vmul.f32 %v7521, %v7585
      %v7618 = vmul.f32 %v7522, %v7586
      %v7619 = vmul.f32 %v7523, %v7587
      %v7620 = vmul.f32 %v7524, %v7588
      %v7621 = vmul.f32 %v7525, %v7589
      %v7622 = vmul.f32 %v7526, %v7590
      %v7623 = vmul.f32 %v7527, %v7591
      %v7624 = vmul.f32 %v7528, %v7592
      %v7625 = vmul.f32 %v7529, %v7593
      %v7626 = vmul.f32 %v7530, %v7594
      %v7627 = vmul.f32 %v7531, %v7595
      %v7628 = vmul.f32 %v7532, %v7596
      %v7629 = vmul.f32 %v7533, %v7597
      %v7630 = vmul.f32 %v7534, %v7598
      %v7631 = vmul.f32 %v7535, %v7599
      %v7632 = vmul.f32 %v7536, %v7600
      %v7633 = vmul.f32 %v7537, %v7601
      %v7634 = vmul.f32 %v7538, %v7602
      %v7635 = vmul.f32 %v7539, %v7603
      %v7636 = vmul.f32 %v6804, %v7092
      %v7637 = vmul.f32 %v6805, %v7093
      %v7638 = vmul.f32 %v6806, %v7094
      %v7639 = vmul.f32 %v6807, %v7095
      %v7640 = vmul.f32 %v6808, %v7096
      %v7641 = vmul.f32 %v6809, %v7097
      %v7642 = vmul.f32 %v6810, %v7098
      %v7643 = vmul.f32 %v6811, %v7099
      %v7644 = vmul.f32 %v6812, %v7100
      %v7645 = vmul.f32 %v6813, %v7101
      %v7646 = vmul.f32 %v6814, %v7102
      %v7647 = vmul.f32 %v6815, %v7103
      %v7648 = vmul.f32 %v6816, %v7104
      %v7649 = vmul.f32 %v6817, %v7105
      %v7650 = vmul.f32 %v6818, %v7106
      %v7651 = vmul.f32 %v6819, %v7107
      %v7652 = vmul.f32 %v6820, %v7108
      %v7653 = vmul.f32 %v6821, %v7109
      %v7654 = vmul.f32 %v6822, %v7110
      %v7655 = vmul.f32 %v6823, %v7111
      %v7656 = vmul.f32 %v6824, %v7112
      %v7657 = vmul.f32 %v6825, %v7113
      %v7658 = vmul.f32 %v6826, %v7114
      %v7659 = vmul.f32 %v6827, %v7115
      %v7660 = vmul.f32 %v6828, %v7116
      %v7661 = vmul.f32 %v6829, %v7117
      %v7662 = vmul.f32 %v6830, %v7118
      %v7663 = vmul.f32 %v6831, %v7119
      %v7664 = vmul.f32 %v6832, %v7120
      %v7665 = vmul.f32 %v6833, %v7121
      %v7666 = vmul.f32 %v6834, %v7122
      %v7667 = vmul.f32 %v6835, %v7123
      %v7668 = vmul.f32 %v7636, %v7604
      %v7669 = vmul.f32 %v7637, %v7605
      %v7670 = vmul.f32 %v7638, %v7606
      %v7671 = vmul.f32 %v7639, %v7607
      %v7672 = vmul.f32 %v7640, %v7608
      %v7673 = vmul.f32 %v7641, %v7609
      %v7674 = vmul.f32 %v7642, %v7610
      %v7675 = vmul.f32 %v7643, %v7611
      %v7676 = vmul.f32 %v7644, %v7612
      %v7677 = vmul.f32 %v7645, %v7613
      %v7678 = vmul.f32 %v7646, %v7614
      %v7679 = vmul.f32 %v7647, %v7615
      %v7680 = vmul.f32 %v7648, %v7616
      %v7681 = vmul.f32 %v7649, %v7617
      %v7682 = vmul.f32 %v7650, %v7618
      %v7683 = vmul.f32 %v7651, %v7619
      %v7684 = vmul.f32 %v7652, %v7620
      %v7685 = vmul.f32 %v7653, %v7621
      %v7686 = vmul.f32 %v7654, %v7622
      %v7687 = vmul.f32 %v7655, %v7623
      %v7688 = vmul.f32 %v7656, %v7624
      %v7689 = vmul.f32 %v7657, %v7625
      %v7690 = vmul.f32 %v7658, %v7626
      %v7691 = vmul.f32 %v7659, %v7627
      %v7692 = vmul.f32 %v7660, %v7628
      %v7693 = vmul.f32 %v7661, %v7629
      %v7694 = vmul.f32 %v7662, %v7630
      %v7695 = vmul.f32 %v7663, %v7631
      %v7696 = vmul.f32 %v7664, %v7632
      %v7697 = vmul.f32 %v7665, %v7633
      %v7698 = vmul.f32 %v7666, %v7634
      %v7699 = vmul.f32 %v7667, %v7635
      %v7700 = vadd.f32 %v7668, 1.0
      %v7701 = vadd.f32 %v7669, 1.0
      %v7702 = vadd.f32 %v7670, 1.0
      %v7703 = vadd.f32 %v7671, 1.0
      %v7704 = vadd.f32 %v7672, 1.0
      %v7705 = vadd.f32 %v7673, 1.0
      %v7706 = vadd.f32 %v7674, 1.0
      %v7707 = vadd.f32 %v7675, 1.0
      %v7708 = vadd.f32 %v7676, 1.0
      %v7709 = vadd.f32 %v7677, 1.0
      %v7710 = vadd.f32 %v7678, 1.0
      %v7711 = vadd.f32 %v7679, 1.0
      %v7712 = vadd.f32 %v7680, 1.0
      %v7713 = vadd.f32 %v7681, 1.0
      %v7714 = vadd.f32 %v7682, 1.0
      %v7715 = vadd.f32 %v7683, 1.0
      %v7716 = vadd.f32 %v7684, 1.0
      %v7717 = vadd.f32 %v7685, 1.0
      %v7718 = vadd.f32 %v7686, 1.0
      %v7719 = vadd.f32 %v7687, 1.0
      %v7720 = vadd.f32 %v7688, 1.0
      %v7721 = vadd.f32 %v7689, 1.0
      %v7722 = vadd.f32 %v7690, 1.0
      %v7723 = vadd.f32 %v7691, 1.0
      %v7724 = vadd.f32 %v7692, 1.0
      %v7725 = vadd.f32 %v7693, 1.0
      %v7726 = vadd.f32 %v7694, 1.0
      %v7727 = vadd.f32 %v7695, 1.0
      %v7728 = vadd.f32 %v7696, 1.0
      %v7729 = vadd.f32 %v7697, 1.0
      %v7730 = vadd.f32 %v7698, 1.0
      %v7731 = vadd.f32 %v7699, 1.0
      %v7732 = vmul.f32 %v6708, %v7700
      %v7733 = vmul.f32 %v6709, %v7701
      %v7734 = vmul.f32 %v6710, %v7702
      %v7735 = vmul.f32 %v6711, %v7703
      %v7736 = vmul.f32 %v6712, %v7704
      %v7737 = vmul.f32 %v6713, %v7705
      %v7738 = vmul.f32 %v6714, %v7706
      %v7739 = vmul.f32 %v6715, %v7707
      %v7740 = vmul.f32 %v6716, %v7708
      %v7741 = vmul.f32 %v6717, %v7709
      %v7742 = vmul.f32 %v6718, %v7710
      %v7743 = vmul.f32 %v6719, %v7711
      %v7744 = vmul.f32 %v6720, %v7712
      %v7745 = vmul.f32 %v6721, %v7713
      %v7746 = vmul.f32 %v6722, %v7714
      %v7747 = vmul.f32 %v6723, %v7715
      %v7748 = vmul.f32 %v6724, %v7716
      %v7749 = vmul.f32 %v6725, %v7717
      %v7750 = vmul.f32 %v6726, %v7718
      %v7751 = vmul.f32 %v6727, %v7719
      %v7752 = vmul.f32 %v6728, %v7720
      %v7753 = vmul.f32 %v6729, %v7721
      %v7754 = vmul.f32 %v6730, %v7722
      %v7755 = vmul.f32 %v6731, %v7723
      %v7756 = vmul.f32 %v6732, %v7724
      %v7757 = vmul.f32 %v6733, %v7725
      %v7758 = vmul.f32 %v6734, %v7726
      %v7759 = vmul.f32 %v6735, %v7727
      %v7760 = vmul.f32 %v6736, %v7728
      %v7761 = vmul.f32 %v6737, %v7729
      %v7762 = vmul.f32 %v6738, %v7730
      %v7763 = vmul.f32 %v6739, %v7731
      %v7764 = vld [vmem:[%s8] sm:$0xff]
      %v7765 = vld [vmem:[%s8 + $0x8] sm:$0xff]
      %v7766 = vld [vmem:[%s8 + $0x10] sm:$0xff]
      %v7767 = vld [vmem:[%s8 + $0x18] sm:$0xff]
      %v7768 = vld [vmem:[%s8 + $0x20] sm:$0xff]
      %v7769 = vld [vmem:[%s8 + $0x28] sm:$0xff]
      %v7770 = vld [vmem:[%s8 + $0x30] sm:$0xff]
      %v7771 = vld [vmem:[%s8 + $0x38] sm:$0xff]
      %v7772 = vld [vmem:[%s8 + $0x40] sm:$0xff]
      %v7773 = vld [vmem:[%s8 + $0x48] sm:$0xff]
      %v7774 = vld [vmem:[%s8 + $0x50] sm:$0xff]
      %v7775 = vld [vmem:[%s8 + $0x58] sm:$0xff]
      %v7776 = vld [vmem:[%s8 + $0x60] sm:$0xff]
      %v7777 = vld [vmem:[%s8 + $0x68] sm:$0xff]
      %v7778 = vld [vmem:[%s8 + $0x70] sm:$0xff]
      %v7779 = vld [vmem:[%s8 + $0x78] sm:$0xff]
      %v7780 = vpack.c.bf16 %v7733, %v7732
      %v7781 = vpack.c.bf16 %v7735, %v7734
      %v7782 = vpack.c.bf16 %v7737, %v7736
      %v7783 = vpack.c.bf16 %v7739, %v7738
      %v7784 = vpack.c.bf16 %v7741, %v7740
      %v7785 = vpack.c.bf16 %v7743, %v7742
      %v7786 = vpack.c.bf16 %v7745, %v7744
      %v7787 = vpack.c.bf16 %v7747, %v7746
      %v7788 = vpack.c.bf16 %v7749, %v7748
      %v7789 = vpack.c.bf16 %v7751, %v7750
      %v7790 = vpack.c.bf16 %v7753, %v7752
      %v7791 = vpack.c.bf16 %v7755, %v7754
      %v7792 = vpack.c.bf16 %v7757, %v7756
      %v7793 = vpack.c.bf16 %v7759, %v7758
      %v7794 = vpack.c.bf16 %v7761, %v7760
      %v7795 = vpack.c.bf16 %v7763, %v7762
      %v7796 = vpack.c.bf16 %v7765, %v7764
      %v7797 = vpack.c.bf16 %v7767, %v7766
      %v7798 = vpack.c.bf16 %v7769, %v7768
      %v7799 = vpack.c.bf16 %v7771, %v7770
      %v7800 = vpack.c.bf16 %v7773, %v7772
      %v7801 = vpack.c.bf16 %v7775, %v7774
      %v7802 = vpack.c.bf16 %v7777, %v7776
      %v7803 = vpack.c.bf16 %v7779, %v7778
      %v7804 = vld [vmem:[%s9] sm:$0x1]
      %v7806 = vlaneseq
      %v7807 = vshrl.u32 %v7806, 7
      %v7808 = vsub.s32 0, %v7807
      %v7809 = vrot.slane %v7804, %v7808
      %7811 = vmatprep.subr.bf16.mxu0 0
      %7812 = vmatpush1.bf16.msra.mxu0 %v7796
      %7813 = vmatprep.subr.bf16.mxu0 0
      %7814 = vmatpush1.bf16.msra.mxu0 %v7797
      %7815 = vmatprep.subr.bf16.mxu0 0
      %7816 = vmatpush1.bf16.msra.mxu0 %v7798
      %7817 = vmatprep.subr.bf16.mxu0 0
      %7818 = vmatpush1.bf16.msra.mxu0 %v7799
      %7819 = vmatprep.subr.bf16.mxu0 0
      %7820 = vmatpush1.bf16.msra.mxu0 %v7800
      %7821 = vmatprep.subr.bf16.mxu0 0
      %7822 = vmatpush1.bf16.msra.mxu0 %v7801
      %7823 = vmatprep.subr.bf16.mxu0 0
      %7824 = vmatpush1.bf16.msra.mxu0 %v7802
      %7825 = vmatprep.subr.bf16.mxu0 0
      %7826 = vmatpush1.bf16.msra.mxu0 %v7803
      %7827 = vmatprep.subr.bf16.mxu0 0
      %7828 = vmatpush1.bf16.msra.mxu0 0
      %7829 = vmatprep.subr.bf16.mxu0 0
      %7830 = vmatpush1.bf16.msra.mxu0 0
      %7831 = vmatprep.subr.bf16.mxu0 0
      %7832 = vmatpush1.bf16.msra.mxu0 0
      %7833 = vmatprep.subr.bf16.mxu0 0
      %7834 = vmatpush1.bf16.msra.mxu0 0
      %7835 = vmatprep.subr.bf16.mxu0 0
      %7836 = vmatpush1.bf16.msra.mxu0 0
      %7837 = vmatprep.subr.bf16.mxu0 0
      %7838 = vmatpush1.bf16.msra.mxu0 0
      %7839 = vmatprep.subr.bf16.mxu0 0
      %7840 = vmatpush1.bf16.msra.mxu0 0
      %7841 = vmatprep.subr.bf16.mxu0 0
      %7842 = vmatpush1.bf16.msra.mxu0 0
      %7843 = vmatprep.mubr.bf16.mxu0 0
      %7844 = vmatmul.mubr.bf16.gmra.mrb[0].mxu0 %v7780
      %v7845 = vpop.f32.mrb[0].mxu0
      %v7846 = vadd.f32 %v7809, %v7845
      %v7847 = vpop.f32.mrb[0].mxu0
      %v7848 = vpop.f32.mrb[0].mxu0
      %v7849 = vadd.f32 %v7809, %v7848
      %v7850 = vpop.f32.mrb[0].mxu0
      %7851 = vmatprep.mubr.bf16.mxu0 0
      %7852 = vmatmul.mubr.bf16.gmra.mrb[0].mxu0 %v7781
      %v7853 = vpop.f32.mrb[0].mxu0
      %v7854 = vadd.f32 %v7809, %v7853
      %v7855 = vpop.f32.mrb[0].mxu0
      %v7856 = vpop.f32.mrb[0].mxu0
      %v7857 = vadd.f32 %v7809, %v7856
      %v7858 = vpop.f32.mrb[0].mxu0
      %7859 = vmatprep.mubr.bf16.mxu0 0
      %7860 = vmatmul.mubr.bf16.gmra.mrb[0].mxu0 %v7782
      %v7861 = vpop.f32.mrb[0].mxu0
      %v7862 = vadd.f32 %v7809, %v7861
      %v7863 = vpop.f32.mrb[0].mxu0
      %v7864 = vpop.f32.mrb[0].mxu0
      %v7865 = vadd.f32 %v7809, %v7864
      %v7866 = vpop.f32.mrb[0].mxu0
      %7867 = vmatprep.mubr.bf16.mxu0 0
      %7868 = vmatmul.mubr.bf16.gmra.mrb[0].mxu0 %v7783
      %v7869 = vpop.f32.mrb[0].mxu0
      %v7870 = vadd.f32 %v7809, %v7869
      %v7871 = vpop.f32.mrb[0].mxu0
      %v7872 = vpop.f32.mrb[0].mxu0
      %v7873 = vadd.f32 %v7809, %v7872
      %v7874 = vpop.f32.mrb[0].mxu0
      %7875 = vmatprep.mubr.bf16.mxu0 0
      %7876 = vmatmul.mubr.bf16.gmra.mrb[0].mxu0 %v7784
      %v7877 = vpop.f32.mrb[0].mxu0
      %v7878 = vadd.f32 %v7809, %v7877
      %v7879 = vpop.f32.mrb[0].mxu0
      %v7880 = vpop.f32.mrb[0].mxu0
      %v7881 = vadd.f32 %v7809, %v7880
      %v7882 = vpop.f32.mrb[0].mxu0
      %7883 = vmatprep.mubr.bf16.mxu0 0
      %7884 = vmatmul.mubr.bf16.gmra.mrb[0].mxu0 %v7785
      %v7885 = vpop.f32.mrb[0].mxu0
      %v7886 = vadd.f32 %v7809, %v7885
      %v7887 = vpop.f32.mrb[0].mxu0
      %v7888 = vpop.f32.mrb[0].mxu0
      %v7889 = vadd.f32 %v7809, %v7888
      %v7890 = vpop.f32.mrb[0].mxu0
      %7891 = vmatprep.mubr.bf16.mxu0 0
      %7892 = vmatmul.mubr.bf16.gmra.mrb[0].mxu0 %v7786
      %v7893 = vpop.f32.mrb[0].mxu0
      %v7894 = vadd.f32 %v7809, %v7893
      %v7895 = vpop.f32.mrb[0].mxu0
      %v7896 = vpop.f32.mrb[0].mxu0
      %v7897 = vadd.f32 %v7809, %v7896
      %v7898 = vpop.f32.mrb[0].mxu0
      %7899 = vmatprep.mubr.bf16.mxu0 0
      %7900 = vmatmul.mubr.bf16.gmra.mrb[0].mxu0 %v7787
      %v7901 = vpop.f32.mrb[0].mxu0
      %v7902 = vadd.f32 %v7809, %v7901
      %v7903 = vpop.f32.mrb[0].mxu0
      %v7904 = vpop.f32.mrb[0].mxu0
      %v7905 = vadd.f32 %v7809, %v7904
      %v7906 = vpop.f32.mrb[0].mxu0
      %7907 = vmatprep.mubr.bf16.mxu0 0
      %7908 = vmatmul.mubr.bf16.gmra.mrb[0].mxu0 %v7788
      %v7909 = vpop.f32.mrb[0].mxu0
      %v7910 = vadd.f32 %v7809, %v7909
      %v7911 = vpop.f32.mrb[0].mxu0
      %v7912 = vpop.f32.mrb[0].mxu0
      %v7913 = vadd.f32 %v7809, %v7912
      %v7914 = vpop.f32.mrb[0].mxu0
      %7915 = vmatprep.mubr.bf16.mxu0 0
      %7916 = vmatmul.mubr.bf16.gmra.mrb[0].mxu0 %v7789
      %v7917 = vpop.f32.mrb[0].mxu0
      %v7918 = vadd.f32 %v7809, %v7917
      %v7919 = vpop.f32.mrb[0].mxu0
      %v7920 = vpop.f32.mrb[0].mxu0
      %v7921 = vadd.f32 %v7809, %v7920
      %v7922 = vpop.f32.mrb[0].mxu0
      %7923 = vmatprep.mubr.bf16.mxu0 0
      %7924 = vmatmul.mubr.bf16.gmra.mrb[0].mxu0 %v7790
      %v7925 = vpop.f32.mrb[0].mxu0
      %v7926 = vadd.f32 %v7809, %v7925
      %v7927 = vpop.f32.mrb[0].mxu0
      %v7928 = vpop.f32.mrb[0].mxu0
      %v7929 = vadd.f32 %v7809, %v7928
      %v7930 = vpop.f32.mrb[0].mxu0
      %7931 = vmatprep.mubr.bf16.mxu0 0
      %7932 = vmatmul.mubr.bf16.gmra.mrb[0].mxu0 %v7791
      %v7933 = vpop.f32.mrb[0].mxu0
      %v7934 = vadd.f32 %v7809, %v7933
      %v7935 = vpop.f32.mrb[0].mxu0
      %v7936 = vpop.f32.mrb[0].mxu0
      %v7937 = vadd.f32 %v7809, %v7936
      %v7938 = vpop.f32.mrb[0].mxu0
      %7939 = vmatprep.mubr.bf16.mxu0 0
      %7940 = vmatmul.mubr.bf16.gmra.mrb[0].mxu0 %v7792
      %v7941 = vpop.f32.mrb[0].mxu0
      %v7942 = vadd.f32 %v7809, %v7941
      %v7943 = vpop.f32.mrb[0].mxu0
      %v7944 = vpop.f32.mrb[0].mxu0
      %v7945 = vadd.f32 %v7809, %v7944
      %v7946 = vpop.f32.mrb[0].mxu0
      %7947 = vmatprep.mubr.bf16.mxu0 0
      %7948 = vmatmul.mubr.bf16.gmra.mrb[0].mxu0 %v7793
      %v7949 = vpop.f32.mrb[0].mxu0
      %v7950 = vadd.f32 %v7809, %v7949
      %v7951 = vpop.f32.mrb[0].mxu0
      %v7952 = vpop.f32.mrb[0].mxu0
      %v7953 = vadd.f32 %v7809, %v7952
      %v7954 = vpop.f32.mrb[0].mxu0
      %7955 = vmatprep.mubr.bf16.mxu0 0
      %7956 = vmatmul.mubr.bf16.gmra.mrb[0].mxu0 %v7794
      %v7957 = vpop.f32.mrb[0].mxu0
      %v7958 = vadd.f32 %v7809, %v7957
      %v7959 = vpop.f32.mrb[0].mxu0
      %v7960 = vpop.f32.mrb[0].mxu0
      %v7961 = vadd.f32 %v7809, %v7960
      %v7962 = vpop.f32.mrb[0].mxu0
      %7963 = vmatprep.mubr.bf16.mxu0 0
      %7964 = vmatmul.mubr.bf16.gmra.mrb[0].mxu0 %v7795
      %v7965 = vpop.f32.mrb[0].mxu0
      %v7966 = vadd.f32 %v7809, %v7965
      %v7967 = vpop.f32.mrb[0].mxu0
      %v7968 = vpop.f32.mrb[0].mxu0
      %v7969 = vadd.f32 %v7809, %v7968
      %v7970 = vpop.f32.mrb[0].mxu0
      %7971 = vdwg.mxu0
      %v7972 = vld [vmem:[#allocation2 + $0x28] sm:$0xff]
      %v7973 = vld [vmem:[#allocation2 + $0x30] sm:$0xff]
      %v7974 = vld [vmem:[#allocation2 + $0x38] sm:$0xff]
      %v7975 = vld [vmem:[#allocation2 + $0x40] sm:$0xff]
      %v7976 = vld [vmem:[#allocation2 + $0x48] sm:$0xff]
      %v7977 = vld [vmem:[#allocation2 + $0x50] sm:$0xff]
      %v7978 = vld [vmem:[#allocation2 + $0x58] sm:$0xff]
      %v7979 = vld [vmem:[#allocation2 + $0x60] sm:$0xff]
      %v7980 = vld [vmem:[#allocation2 + $0x68] sm:$0xff]
      %v7981 = vld [vmem:[#allocation2 + $0x70] sm:$0xff]
      %v7982 = vld [vmem:[#allocation2 + $0x78] sm:$0xff]
      %v7983 = vld [vmem:[#allocation2 + $0x80] sm:$0xff]
      %v7984 = vld [vmem:[#allocation2 + $0x88] sm:$0xff]
      %v7985 = vld [vmem:[#allocation2 + $0x90] sm:$0xff]
      %v7986 = vld [vmem:[#allocation2 + $0x98] sm:$0xff]
      %v7987 = vld [vmem:[#allocation2 + $0xa0] sm:$0xff]
      %v7988 = vld [vmem:[#allocation2 + $0xa8] sm:$0xff]
      %v7989 = vld [vmem:[#allocation2 + $0xb0] sm:$0xff]
      %v7990 = vld [vmem:[#allocation2 + $0xb8] sm:$0xff]
      %v7991 = vld [vmem:[#allocation2 + $0xc0] sm:$0xff]
      %v7992 = vld [vmem:[#allocation2 + $0xc8] sm:$0xff]
      %v7993 = vld [vmem:[#allocation2 + $0xd0] sm:$0xff]
      %v7994 = vld [vmem:[#allocation2 + $0xd8] sm:$0xff]
      %v7995 = vld [vmem:[#allocation2 + $0xe0] sm:$0xff]
      %v7996 = vld [vmem:[#allocation2 + $0xe8] sm:$0xff]
      %v7997 = vld [vmem:[#allocation2 + $0xf0] sm:$0xff]
      %v7998 = vld [vmem:[#allocation2 + $0xf8] sm:$0xff]
      %v7999 = vld [vmem:[#allocation2 + $0x100] sm:$0xff]
      %v8000 = vld [vmem:[#allocation2 + $0x108] sm:$0xff]
      %v8001 = vld [vmem:[#allocation2 + $0x110] sm:$0xff]
      %v8002 = vld [vmem:[#allocation2 + $0x118] sm:$0xff]
      %v8003 = vld [vmem:[#allocation2 + $0x120] sm:$0xff]
      %v8004 = vadd.f32 %v7846, %v7972
      %v8005 = vadd.f32 %v7849, %v7973
      %v8006 = vadd.f32 %v7854, %v7974
      %v8007 = vadd.f32 %v7857, %v7975
      %v8008 = vadd.f32 %v7862, %v7976
      %v8009 = vadd.f32 %v7865, %v7977
      %v8010 = vadd.f32 %v7870, %v7978
      %v8011 = vadd.f32 %v7873, %v7979
      %v8012 = vadd.f32 %v7878, %v7980
      %v8013 = vadd.f32 %v7881, %v7981
      %v8014 = vadd.f32 %v7886, %v7982
      %v8015 = vadd.f32 %v7889, %v7983
      %v8016 = vadd.f32 %v7894, %v7984
      %v8017 = vadd.f32 %v7897, %v7985
      %v8018 = vadd.f32 %v7902, %v7986
      %v8019 = vadd.f32 %v7905, %v7987
      %v8020 = vadd.f32 %v7910, %v7988
      %v8021 = vadd.f32 %v7913, %v7989
      %v8022 = vadd.f32 %v7918, %v7990
      %v8023 = vadd.f32 %v7921, %v7991
      %v8024 = vadd.f32 %v7926, %v7992
      %v8025 = vadd.f32 %v7929, %v7993
      %v8026 = vadd.f32 %v7934, %v7994
      %v8027 = vadd.f32 %v7937, %v7995
      %v8028 = vadd.f32 %v7942, %v7996
      %v8029 = vadd.f32 %v7945, %v7997
      %v8030 = vadd.f32 %v7950, %v7998
      %v8031 = vadd.f32 %v7953, %v7999
      %v8032 = vadd.f32 %v7958, %v8000
      %v8033 = vadd.f32 %v7961, %v8001
      %v8034 = vadd.f32 %v7966, %v8002
      %v8035 = vadd.f32 %v7969, %v8003
      %8036 = vst [vmem:[%s321] sm:$0xff] %v8004
      %8037 = vst [vmem:[%s321 + $0x8] sm:$0xff] %v8005
      %8038 = vst [vmem:[%s321 + $0x10] sm:$0xff] %v8006
      %8039 = vst [vmem:[%s321 + $0x18] sm:$0xff] %v8007
      %8040 = vst [vmem:[%s321 + $0x20] sm:$0xff] %v8008
      %8041 = vst [vmem:[%s321 + $0x28] sm:$0xff] %v8009
      %8042 = vst [vmem:[%s321 + $0x30] sm:$0xff] %v8010
      %8043 = vst [vmem:[%s321 + $0x38] sm:$0xff] %v8011
      %8044 = vst [vmem:[%s321 + $0x40] sm:$0xff] %v8012
      %8045 = vst [vmem:[%s321 + $0x48] sm:$0xff] %v8013
      %8046 = vst [vmem:[%s321 + $0x50] sm:$0xff] %v8014
      %8047 = vst [vmem:[%s321 + $0x58] sm:$0xff] %v8015
      %8048 = vst [vmem:[%s321 + $0x60] sm:$0xff] %v8016
      %8049 = vst [vmem:[%s321 + $0x68] sm:$0xff] %v8017
      %8050 = vst [vmem:[%s321 + $0x70] sm:$0xff] %v8018
      %8051 = vst [vmem:[%s321 + $0x78] sm:$0xff] %v8019
      %8052 = vst [vmem:[%s321 + $0x80] sm:$0xff] %v8020
      %8053 = vst [vmem:[%s321 + $0x88] sm:$0xff] %v8021
      %8054 = vst [vmem:[%s321 + $0x90] sm:$0xff] %v8022
      %8055 = vst [vmem:[%s321 + $0x98] sm:$0xff] %v8023
      %8056 = vst [vmem:[%s321 + $0xa0] sm:$0xff] %v8024
      %8057 = vst [vmem:[%s321 + $0xa8] sm:$0xff] %v8025
      %8058 = vst [vmem:[%s321 + $0xb0] sm:$0xff] %v8026
      %8059 = vst [vmem:[%s321 + $0xb8] sm:$0xff] %v8027
      %8060 = vst [vmem:[%s321 + $0xc0] sm:$0xff] %v8028
      %8061 = vst [vmem:[%s321 + $0xc8] sm:$0xff] %v8029
      %8062 = vst [vmem:[%s321 + $0xd0] sm:$0xff] %v8030
      %8063 = vst [vmem:[%s321 + $0xd8] sm:$0xff] %v8031
      %8064 = vst [vmem:[%s321 + $0xe0] sm:$0xff] %v8032
      %8065 = vst [vmem:[%s321 + $0xe8] sm:$0xff] %v8033
      %8066 = vst [vmem:[%s321 + $0xf0] sm:$0xff] %v8034
      %8067 = vst [vmem:[%s321 + $0xf8] sm:$0xff] %v8035
      %v8068 = vld [vmem:[#allocation3 + $0x28] sm:$0xff]
      %v8069 = vld [vmem:[#allocation3 + $0x30] sm:$0xff]
      %v8070 = vld [vmem:[#allocation3 + $0x38] sm:$0xff]
      %v8071 = vld [vmem:[#allocation3 + $0x40] sm:$0xff]
      %v8072 = vld [vmem:[#allocation3 + $0x48] sm:$0xff]
      %v8073 = vld [vmem:[#allocation3 + $0x50] sm:$0xff]
      %v8074 = vld [vmem:[#allocation3 + $0x58] sm:$0xff]
      %v8075 = vld [vmem:[#allocation3 + $0x60] sm:$0xff]
      %v8076 = vld [vmem:[#allocation3 + $0x68] sm:$0xff]
      %v8077 = vld [vmem:[#allocation3 + $0x70] sm:$0xff]
      %v8078 = vld [vmem:[#allocation3 + $0x78] sm:$0xff]
      %v8079 = vld [vmem:[#allocation3 + $0x80] sm:$0xff]
      %v8080 = vld [vmem:[#allocation3 + $0x88] sm:$0xff]
      %v8081 = vld [vmem:[#allocation3 + $0x90] sm:$0xff]
      %v8082 = vld [vmem:[#allocation3 + $0x98] sm:$0xff]
      %v8083 = vld [vmem:[#allocation3 + $0xa0] sm:$0xff]
      %v8084 = vld [vmem:[#allocation3 + $0xa8] sm:$0xff]
      %v8085 = vld [vmem:[#allocation3 + $0xb0] sm:$0xff]
      %v8086 = vld [vmem:[#allocation3 + $0xb8] sm:$0xff]
      %v8087 = vld [vmem:[#allocation3 + $0xc0] sm:$0xff]
      %v8088 = vld [vmem:[#allocation3 + $0xc8] sm:$0xff]
      %v8089 = vld [vmem:[#allocation3 + $0xd0] sm:$0xff]
      %v8090 = vld [vmem:[#allocation3 + $0xd8] sm:$0xff]
      %v8091 = vld [vmem:[#allocation3 + $0xe0] sm:$0xff]
      %v8092 = vld [vmem:[#allocation3 + $0xe8] sm:$0xff]
      %v8093 = vld [vmem:[#allocation3 + $0xf0] sm:$0xff]
      %v8094 = vld [vmem:[#allocation3 + $0xf8] sm:$0xff]
      %v8095 = vld [vmem:[#allocation3 + $0x100] sm:$0xff]
      %v8096 = vld [vmem:[#allocation3 + $0x108] sm:$0xff]
      %v8097 = vld [vmem:[#allocation3 + $0x110] sm:$0xff]
      %v8098 = vld [vmem:[#allocation3 + $0x118] sm:$0xff]
      %v8099 = vld [vmem:[#allocation3 + $0x120] sm:$0xff]
      %8101 = vset.pattern.permute.xlu0 0
      %8102 = vperm.xlu0 %8101, %v8068
      %v8103 = vpop.permute.xlu0 %8102
      %8106 = vset.pattern.permute.xlu0 0
      %8107 = vperm.xlu0 %8106, %v8069
      %v8108 = vpop.permute.xlu0 %8107
      %8111 = vset.pattern.permute.xlu0 0
      %8112 = vperm.xlu0 %8111, %v8070
      %v8113 = vpop.permute.xlu0 %8112
      %8116 = vset.pattern.permute.xlu0 0
      %8117 = vperm.xlu0 %8116, %v8071
      %v8118 = vpop.permute.xlu0 %8117
      %8121 = vset.pattern.permute.xlu0 0
      %8122 = vperm.xlu0 %8121, %v8072
      %v8123 = vpop.permute.xlu0 %8122
      %8126 = vset.pattern.permute.xlu0 0
      %8127 = vperm.xlu0 %8126, %v8073
      %v8128 = vpop.permute.xlu0 %8127
      %8131 = vset.pattern.permute.xlu0 0
      %8132 = vperm.xlu0 %8131, %v8074
      %v8133 = vpop.permute.xlu0 %8132
      %8136 = vset.pattern.permute.xlu0 0
      %8137 = vperm.xlu0 %8136, %v8075
      %v8138 = vpop.permute.xlu0 %8137
      %8141 = vset.pattern.permute.xlu0 0
      %8142 = vperm.xlu0 %8141, %v8076
      %v8143 = vpop.permute.xlu0 %8142
      %8146 = vset.pattern.permute.xlu0 0
      %8147 = vperm.xlu0 %8146, %v8077
      %v8148 = vpop.permute.xlu0 %8147
      %8151 = vset.pattern.permute.xlu0 0
      %8152 = vperm.xlu0 %8151, %v8078
      %v8153 = vpop.permute.xlu0 %8152
      %8156 = vset.pattern.permute.xlu0 0
      %8157 = vperm.xlu0 %8156, %v8079
      %v8158 = vpop.permute.xlu0 %8157
      %8161 = vset.pattern.permute.xlu0 0
      %8162 = vperm.xlu0 %8161, %v8080
      %v8163 = vpop.permute.xlu0 %8162
      %8166 = vset.pattern.permute.xlu0 0
      %8167 = vperm.xlu0 %8166, %v8081
      %v8168 = vpop.permute.xlu0 %8167
      %8171 = vset.pattern.permute.xlu0 0
      %8172 = vperm.xlu0 %8171, %v8082
      %v8173 = vpop.permute.xlu0 %8172
      %8176 = vset.pattern.permute.xlu0 0
      %8177 = vperm.xlu0 %8176, %v8083
      %v8178 = vpop.permute.xlu0 %8177
      %8181 = vset.pattern.permute.xlu0 0
      %8182 = vperm.xlu0 %8181, %v8084
      %v8183 = vpop.permute.xlu0 %8182
      %8186 = vset.pattern.permute.xlu0 0
      %8187 = vperm.xlu0 %8186, %v8085
      %v8188 = vpop.permute.xlu0 %8187
      %8191 = vset.pattern.permute.xlu0 0
      %8192 = vperm.xlu0 %8191, %v8086
      %v8193 = vpop.permute.xlu0 %8192
      %8196 = vset.pattern.permute.xlu0 0
      %8197 = vperm.xlu0 %8196, %v8087
      %v8198 = vpop.permute.xlu0 %8197
      %8201 = vset.pattern.permute.xlu0 0
      %8202 = vperm.xlu0 %8201, %v8088
      %v8203 = vpop.permute.xlu0 %8202
      %8206 = vset.pattern.permute.xlu0 0
      %8207 = vperm.xlu0 %8206, %v8089
      %v8208 = vpop.permute.xlu0 %8207
      %8211 = vset.pattern.permute.xlu0 0
      %8212 = vperm.xlu0 %8211, %v8090
      %v8213 = vpop.permute.xlu0 %8212
      %8216 = vset.pattern.permute.xlu0 0
      %8217 = vperm.xlu0 %8216, %v8091
      %v8218 = vpop.permute.xlu0 %8217
      %8221 = vset.pattern.permute.xlu0 0
      %8222 = vperm.xlu0 %8221, %v8092
      %v8223 = vpop.permute.xlu0 %8222
      %8226 = vset.pattern.permute.xlu0 0
      %8227 = vperm.xlu0 %8226, %v8093
      %v8228 = vpop.permute.xlu0 %8227
      %8231 = vset.pattern.permute.xlu0 0
      %8232 = vperm.xlu0 %8231, %v8094
      %v8233 = vpop.permute.xlu0 %8232
      %8236 = vset.pattern.permute.xlu0 0
      %8237 = vperm.xlu0 %8236, %v8095
      %v8238 = vpop.permute.xlu0 %8237
      %8241 = vset.pattern.permute.xlu0 0
      %8242 = vperm.xlu0 %8241, %v8096
      %v8243 = vpop.permute.xlu0 %8242
      %8246 = vset.pattern.permute.xlu0 0
      %8247 = vperm.xlu0 %8246, %v8097
      %v8248 = vpop.permute.xlu0 %8247
      %8251 = vset.pattern.permute.xlu0 0
      %8252 = vperm.xlu0 %8251, %v8098
      %v8253 = vpop.permute.xlu0 %8252
      %8256 = vset.pattern.permute.xlu0 0
      %8257 = vperm.xlu0 %8256, %v8099
      %v8258 = vpop.permute.xlu0 %8257
      %v8260 = vmul.f32 %v8004, %v8103
      %v8261 = vmul.f32 %v8005, %v8108
      %v8262 = vmul.f32 %v8006, %v8113
      %v8263 = vmul.f32 %v8007, %v8118
      %v8264 = vmul.f32 %v8008, %v8123
      %v8265 = vmul.f32 %v8009, %v8128
      %v8266 = vmul.f32 %v8010, %v8133
      %v8267 = vmul.f32 %v8011, %v8138
      %v8268 = vmul.f32 %v8012, %v8143
      %v8269 = vmul.f32 %v8013, %v8148
      %v8270 = vmul.f32 %v8014, %v8153
      %v8271 = vmul.f32 %v8015, %v8158
      %v8272 = vmul.f32 %v8016, %v8163
      %v8273 = vmul.f32 %v8017, %v8168
      %v8274 = vmul.f32 %v8018, %v8173
      %v8275 = vmul.f32 %v8019, %v8178
      %v8276 = vmul.f32 %v8020, %v8183
      %v8277 = vmul.f32 %v8021, %v8188
      %v8278 = vmul.f32 %v8022, %v8193
      %v8279 = vmul.f32 %v8023, %v8198
      %v8280 = vmul.f32 %v8024, %v8203
      %v8281 = vmul.f32 %v8025, %v8208
      %v8282 = vmul.f32 %v8026, %v8213
      %v8283 = vmul.f32 %v8027, %v8218
      %v8284 = vmul.f32 %v8028, %v8223
      %v8285 = vmul.f32 %v8029, %v8228
      %v8286 = vmul.f32 %v8030, %v8233
      %v8287 = vmul.f32 %v8031, %v8238
      %v8288 = vmul.f32 %v8032, %v8243
      %v8289 = vmul.f32 %v8033, %v8248
      %v8290 = vmul.f32 %v8034, %v8253
      %v8291 = vmul.f32 %v8035, %v8258
      %8292 = vst [vmem:[%s326] sm:$0xff] 0.0
      %v8293 = vadd.f32 %v8260, %v8261
      %v8294 = vadd.f32 %v8293, %v8262
      %v8295 = vadd.f32 %v8294, %v8263
      %v8296 = vadd.f32 %v8295, %v8264
      %v8297 = vadd.f32 %v8296, %v8265
      %v8298 = vadd.f32 %v8297, %v8266
      %v8299 = vadd.f32 %v8298, %v8267
      %v8300 = vadd.f32 %v8299, %v8268
      %v8301 = vadd.f32 %v8300, %v8269
      %v8302 = vadd.f32 %v8301, %v8270
      %v8303 = vadd.f32 %v8302, %v8271
      %v8304 = vadd.f32 %v8303, %v8272
      %v8305 = vadd.f32 %v8304, %v8273
      %v8306 = vadd.f32 %v8305, %v8274
      %v8307 = vadd.f32 %v8306, %v8275
      %v8308 = vadd.f32 %v8307, %v8276
      %v8309 = vadd.f32 %v8308, %v8277
      %v8310 = vadd.f32 %v8309, %v8278
      %v8311 = vadd.f32 %v8310, %v8279
      %v8312 = vadd.f32 %v8311, %v8280
      %v8313 = vadd.f32 %v8312, %v8281
      %v8314 = vadd.f32 %v8313, %v8282
      %v8315 = vadd.f32 %v8314, %v8283
      %v8316 = vadd.f32 %v8315, %v8284
      %v8317 = vadd.f32 %v8316, %v8285
      %v8318 = vadd.f32 %v8317, %v8286
      %v8319 = vadd.f32 %v8318, %v8287
      %v8320 = vadd.f32 %v8319, %v8288
      %v8321 = vadd.f32 %v8320, %v8289
      %v8322 = vadd.f32 %v8321, %v8290
      %v8323 = vadd.f32 %v8322, %v8291
      %v8324 = vrot.slane %v8323, 4
      %v8325 = vadd.f32 %v8323, %v8324
      %v8326 = vrot.slane %v8325, 2
      %v8327 = vadd.f32 %v8325, %v8326
      %v8328 = vrot.slane %v8327, 1
      %v8329 = vadd.f32 %v8327, %v8328
      %8330 = vst [vmem:[%s326] sm:$0x1] %v8329
      %v8331 = vmul.f32 %v8260, %v8260
      %v8332 = vmul.f32 %v8261, %v8261
      %v8333 = vmul.f32 %v8262, %v8262
      %v8334 = vmul.f32 %v8263, %v8263
      %v8335 = vmul.f32 %v8264, %v8264
      %v8336 = vmul.f32 %v8265, %v8265
      %v8337 = vmul.f32 %v8266, %v8266
      %v8338 = vmul.f32 %v8267, %v8267
      %v8339 = vmul.f32 %v8268, %v8268
      %v8340 = vmul.f32 %v8269, %v8269
      %v8341 = vmul.f32 %v8270, %v8270
      %v8342 = vmul.f32 %v8271, %v8271
      %v8343 = vmul.f32 %v8272, %v8272
      %v8344 = vmul.f32 %v8273, %v8273
      %v8345 = vmul.f32 %v8274, %v8274
      %v8346 = vmul.f32 %v8275, %v8275
      %v8347 = vmul.f32 %v8276, %v8276
      %v8348 = vmul.f32 %v8277, %v8277
      %v8349 = vmul.f32 %v8278, %v8278
      %v8350 = vmul.f32 %v8279, %v8279
      %v8351 = vmul.f32 %v8280, %v8280
      %v8352 = vmul.f32 %v8281, %v8281
      %v8353 = vmul.f32 %v8282, %v8282
      %v8354 = vmul.f32 %v8283, %v8283
      %v8355 = vmul.f32 %v8284, %v8284
      %v8356 = vmul.f32 %v8285, %v8285
      %v8357 = vmul.f32 %v8286, %v8286
      %v8358 = vmul.f32 %v8287, %v8287
      %v8359 = vmul.f32 %v8288, %v8288
      %v8360 = vmul.f32 %v8289, %v8289
      %v8361 = vmul.f32 %v8290, %v8290
      %v8362 = vmul.f32 %v8291, %v8291
      %v8363 = vadd.f32 %v8331, %v8332
      %v8364 = vadd.f32 %v8363, %v8333
      %v8365 = vadd.f32 %v8364, %v8334
      %v8366 = vadd.f32 %v8365, %v8335
      %v8367 = vadd.f32 %v8366, %v8336
      %v8368 = vadd.f32 %v8367, %v8337
      %v8369 = vadd.f32 %v8368, %v8338
      %v8370 = vadd.f32 %v8369, %v8339
      %v8371 = vadd.f32 %v8370, %v8340
      %v8372 = vadd.f32 %v8371, %v8341
      %v8373 = vadd.f32 %v8372, %v8342
      %v8374 = vadd.f32 %v8373, %v8343
      %v8375 = vadd.f32 %v8374, %v8344
      %v8376 = vadd.f32 %v8375, %v8345
      %v8377 = vadd.f32 %v8376, %v8346
      %v8378 = vadd.f32 %v8377, %v8347
      %v8379 = vadd.f32 %v8378, %v8348
      %v8380 = vadd.f32 %v8379, %v8349
      %v8381 = vadd.f32 %v8380, %v8350
      %v8382 = vadd.f32 %v8381, %v8351
      %v8383 = vadd.f32 %v8382, %v8352
      %v8384 = vadd.f32 %v8383, %v8353
      %v8385 = vadd.f32 %v8384, %v8354
      %v8386 = vadd.f32 %v8385, %v8355
      %v8387 = vadd.f32 %v8386, %v8356
      %v8388 = vadd.f32 %v8387, %v8357
      %v8389 = vadd.f32 %v8388, %v8358
      %v8390 = vadd.f32 %v8389, %v8359
      %v8391 = vadd.f32 %v8390, %v8360
      %v8392 = vadd.f32 %v8391, %v8361
      %v8393 = vadd.f32 %v8392, %v8362
      %v8394 = vrot.slane %v8393, 4
      %v8395 = vadd.f32 %v8393, %v8394
      %v8396 = vrot.slane %v8395, 2
      %v8397 = vadd.f32 %v8395, %v8396
      %v8398 = vrot.slane %v8397, 1
      %v8399 = vadd.f32 %v8397, %v8398
      %8400 = vst [vmem:[%s326 + $0x1] sm:$0x1] %v8399
      %s8401 = smul.u32 32, %s23
      %p8402 = scmp.lt.s32.totalorder %s8401, 95
      %s8403 = scalar_select %p8402, %s8401, 95
      %s8404 = smul.addr %s8403, 8
      %s8405 = scalar_lea.vmem %s10, %s8404
      %p8406 = scmp.lt.s32.totalorder %s23, 2
      %s8407 = scalar_select %p8406, %s23, 2
      %s8408 = smul.addr %s8407, 8
      %s8409 = scalar_lea.vmem %s11, %s8408
      // Predicated region
      $region121: #{encoding_block_forward.2} parent=51 // pred_check
        %p8410 = pneg %p209
      $region122: #{encoding_block_forward.2} parent=51 // pred_check_branch
        %8412 = sbr.rel (%p8410) target = $region124
      $region123: #{encoding_block_forward.2} parent=51 // pred_region
        %s8413 = smul.u32 32, %s23
      $region124: #{encoding_block_forward.2} parent=51 // pred_fallthru
        _
      // Predicated region
      $region125: #{encoding_block_forward.2} parent=51 // pred_check
        %p8414 = pneg %p235
      $region126: #{encoding_block_forward.2} parent=51 // pred_check_branch
        %8416 = sbr.rel (%p8414) target = $region128
      $region127: #{encoding_block_forward.2} parent=51 // pred_region
        _
      $region128: #{encoding_block_forward.2} parent=51 // pred_fallthru
        _
    $region52: #{encoding_block_forward.2} parent=5 // pred_fallthru
      _
    %p8417 = scmp.le.s32.totalorder 2, %s18
    // Predicated region
    $region129: #{encoding_block_forward.2} parent=5 // pred_check
      %p8418 = pneg %p8417
    $region130: #{encoding_block_forward.2} parent=5 // pred_check_branch
      %8420 = sbr.rel (%p8418) target = $region132
    $region131: #{encoding_block_forward.2} parent=5 // pred_region
      %s8421 = ssub.s32 %s18, 2
      // Predicated region
      $region133: #{encoding_block_forward.2} parent=131 // pred_check
        %p8422 = pneg %p215
      $region134: #{encoding_block_forward.2} parent=131 // pred_check_branch
        %8424 = sbr.rel (%p8422) target = $region136
      $region135: #{encoding_block_forward.2} parent=131 // pred_region
        %s8425 = smul.u32 32, %s24
        %p8426 = scmp.lt.s32.totalorder %s8425, 95
        %s8427 = scalar_select %p8426, %s8425, 95
        %s8428 = smul.addr %s8427, 8
        %s8429 = scalar_lea.vmem %s10, %s8428
      $region136: #{encoding_block_forward.2} parent=131 // pred_fallthru
        _
      // Predicated region
      $region137: #{encoding_block_forward.2} parent=131 // pred_check
        %p8430 = pneg %p241
      $region138: #{encoding_block_forward.2} parent=131 // pred_check_branch
        %8432 = sbr.rel (%p8430) target = $region140
      $region139: #{encoding_block_forward.2} parent=131 // pred_region
        %p8433 = scmp.lt.s32.totalorder %s24, 2
        %s8434 = scalar_select %p8433, %s24, 2
        %s8435 = smul.addr %s8434, 8
        %s8436 = scalar_lea.vmem %s11, %s8435
      $region140: #{encoding_block_forward.2} parent=131 // pred_fallthru
        _
    $region132: #{encoding_block_forward.2} parent=5 // pred_fallthru
      _
  $region6: #{encoding_block_forward.2} parent=0 // loop_footer
    %s22 = sadd.s32 1, %s18
  $region7: #{encoding_block_forward.2} parent=0 // loop_footer_branch
    %17 = sbr.rel target = $region3
  $region8: #{encoding_block_forward.2} parent=0 // loop_exit
    _
  %8437 = vsyncmov [#allocation6]
  %s8438 = vpop.sfrf %8437
  %p8439 = scmp.eq.s32.totalorder %s8438, 0
  %p8440 = pneg %p8439
  %8442 = shalt.err (%p8440)
  %s8443 = scalar_lea.sflag [#allocation6], 1
  %8444 = vsyncmov %s8443
  %s8445 = vpop.sfrf %8444
  %p8446 = scmp.eq.s32.totalorder %s8445, 0
  %p8447 = pneg %p8446
  %8449 = shalt.err (%p8447)

</llo_original>
